<compile_context>
chip_gen: v7x
topology: tpu7x:2x2x1
jax: 0.10.0
libtpu: 0.0.40
codegen_flags: <defaults>
</compile_context>

<pallas_src>
import functools

import jax
import jax.numpy as jnp
from jax.experimental import pallas as pl
from jax.experimental.pallas import tpu as pltpu


_VMEM_SPEC = pl.BlockSpec(memory_space=pltpu.MemorySpace.VMEM)
_DP = 128            # padded hidden width (lane-aligned)


def _apply_act(x, act):
    if act == "relu":
        return jnp.maximum(x, 0.0)
    if act == "sigmoid":
        return jax.nn.sigmoid(x)
    if act == "tanh":
        return jnp.tanh(x)
    return x


# ----------------------------------------------------------------------------
# Fused conv-matmul kernel (single VMEM block, channel-major / lane-dense out)
#   o(Cout, M) = act(w(Cout, K) @ cols(K, M) + b(Cout, 1))
# ----------------------------------------------------------------------------
def _conv_mm_kernel(w_ref, c_ref, b_ref, o_ref, *, act):
    acc = jnp.dot(w_ref[...], c_ref[...], preferred_element_type=jnp.float32)
    o_ref[...] = _apply_act(acc + b_ref[...], act)


def conv_matmul(wm, cols, b, act="none"):
    """wm: (Cout, K) bf16, cols: (K, M), b: (Cout,) -> (Cout, M) f32."""
    Cout = wm.shape[0]
    M = cols.shape[1]
    return pl.pallas_call(
        functools.partial(_conv_mm_kernel, act=act),
        out_shape=jax.ShapeDtypeStruct((Cout, M), jnp.float32),
        in_specs=[_VMEM_SPEC, _VMEM_SPEC, _VMEM_SPEC],
        out_specs=_VMEM_SPEC,
    )(wm.astype(jnp.bfloat16), cols.astype(jnp.bfloat16),
      b.reshape(Cout, 1).astype(jnp.float32))


# ----------------------------------------------------------------------------
# Channel-major conv / transposed-conv glue
# ----------------------------------------------------------------------------
def im2col_cm(x_cm, kh, kw, stride, padding):
    """Channel-major im2col: x (C, N, H, W) -> cols (C*kh*kw, N*OH*OW).
    Row order matches w.reshape(Cout, Cin*kh*kw); the large N*OH*OW dim lands
    on lanes so the conv-matmul output is lane-dense and feeds the next layer
    without any transpose.
    # TODO(synk): for big feature maps fold the patch build into the matmul
    # kernel (shifted in-kernel slices) to avoid the kh*kw HBM expansion; at
    # these sizes the buffers are a few hundred KB and XLA-fused.
    """
    C, N, H, W = x_cm.shape
    if padding:
        x_cm = jnp.pad(x_cm, ((0, 0), (0, 0),
                              (padding, padding), (padding, padding)))
    Hp, Wp = x_cm.shape[2], x_cm.shape[3]
    OH = (Hp - kh) // stride + 1
    OW = (Wp - kw) // stride + 1
    taps = []
    for i in range(kh):
        for j in range(kw):
            taps.append(x_cm[:, :, i:i + stride * OH:stride,
                             j:j + stride * OW:stride])
    cols = jnp.stack(taps, axis=1)                    # (C, kh*kw, N, OH, OW)
    return cols.reshape(C * kh * kw, N * OH * OW), OH, OW


def conv2d_cm(x_cm, wm, b, *, stride, padding, act, kh=3, kw=3):
    """Channel-major conv: x (Cin,N,H,W), wm (Cout,Cin*kh*kw) -> (Cout,N,OH,OW)."""
    Cout = wm.shape[0]
    N = x_cm.shape[1]
    cols, OH, OW = im2col_cm(x_cm, kh, kw, stride, padding)
    out = conv_matmul(wm, cols, b, act=act)           # (Cout, N*OH*OW) lane-dense
    return out.reshape(Cout, N, OH, OW)


def conv_transpose2d_cm(x_cm, wm, b, *, stride=2, act="relu", kh=3, kw=3):
    """Channel-major ConvTranspose2d without zero-insertion:
    x (Cin, N, H, W), wm (Cout*kh*kw, Cin) -> (Cout, N, OH, OW).
    One patch matmul produces per-input-pixel output taps; the 9-tap strided
    scatter-add (col2im), bias and ReLU stay in XLA-fused glue.
    # TODO(synk): fold col2im + bias + relu into the matmul kernel epilogue
    # (VMEM-scratch accumulate) once strided in-kernel stores are validated on
    # all target generations; at these sizes it is a handful of fused ops.
    """
    Cin, N, H, W = x_cm.shape
    Cout = wm.shape[0] // (kh * kw)
    OH = (H - 1) * stride + kh
    OW = (W - 1) * stride + kw
    patches = conv_matmul(wm, x_cm.reshape(Cin, N * H * W),
                          jnp.zeros((Cout * kh * kw,), jnp.float32), act="none")
    patches = patches.reshape(Cout, kh, kw, N, H, W)
    out = jnp.zeros((Cout, N, OH, OW), jnp.float32)
    for ki in range(kh):
        for kj in range(kw):
            out = out.at[:, :, ki:ki + stride * H:stride,
                         kj:kj + stride * W:stride].add(patches[:, ki, kj])
    out = out + b.reshape(Cout, 1, 1, 1)
    return _apply_act(out, act)


# ----------------------------------------------------------------------------
# One-time weight preprocessing helpers (outside the jitted forward)
# ----------------------------------------------------------------------------
def conv_to_dense(w, H, W, padding=1):
    """Dense D (Cin*H*W, Cout*OH*OW) such that a stride-1, pad-`padding` conv
    satisfies  conv(x).reshape(B,-1) == x.reshape(B,-1) @ D  (channel-major
    flattening).  Weight-only preprocessing; runs once, eagerly."""
    Cout, Cin, kh, kw = w.shape
    basis = jnp.eye(Cin * H * W, dtype=jnp.float32).reshape(Cin * H * W, Cin, H, W)
    out = jax.lax.conv_general_dilated(
        basis, w.astype(jnp.float32), window_strides=(1, 1),
        padding=[(padding, padding), (padding, padding)],
        dimension_numbers=("NCHW", "OIHW", "NCHW"))
    return out.reshape(Cin * H * W, -1)


def prepare_params(params, H1, W1, Dp=_DP):
    """conv->matmul reshapes, dense lowering of the tiny-bottleneck GRU convs,
    gate packing, zero-padding Dh -> Dp=128 lanes, bf16 casts.  Called ONCE per
    parameter set, outside the jitted forward.

    # TODO(synk): the dense (Dh,*) lowering is only valid for the tiny 3x3
    # bottleneck; the large-bottleneck config (flat_dim=3872) must keep the
    # conv form (a dense matrix would not fit v7x's 64 MiB VMEM).
    """
    f32, bf16 = jnp.float32, jnp.bfloat16
    chid = params["gru1"]["w_c"].shape[0]
    sp = H1 * W1
    Dh = chid * sp
    assert Dh <= Dp

    def gate_pad(m):
        ng = m.shape[-1] // Dh
        m = m.reshape(m.shape[:-1] + (ng, Dh))
        m = jnp.pad(m, [(0, 0)] * (m.ndim - 1) + [(0, Dp - Dh)])
        return m.reshape(m.shape[:-2] + (ng * Dp,))

    def row_pad(m):
        return jnp.pad(m, ((0, Dp - Dh), (0, 0)))

    def gru_mats(g, cin, pad_x_rows):
        # x-part of gate+candidate convs as one dense matrix (bias separate).
        wx = jnp.concatenate([g["w_g"][:, :cin], g["w_c"][:, :cin]], axis=0)
        dx = gate_pad(conv_to_dense(wx, H1, W1))                  # (cin*sp, 3*Dp)
        if pad_x_rows:
            dx = row_pad(dx)
        bx = gate_pad(jnp.repeat(jnp.concatenate([g["b_g"], g["b_c"]]), sp))
        # h-part: keep Wrh||Wuh fused as one (Dp, 2*Dp) matrix.
        wh = row_pad(gate_pad(conv_to_dense(g["w_g"][:, cin:], H1, W1)))
        wc = row_pad(gate_pad(conv_to_dense(g["w_c"][:, cin:], H1, W1)))
        return (dx.astype(bf16), bx.reshape(1, -1).astype(f32),
                wh.astype(bf16), wc.astype(bf16))

    cin1 = params["gru1"]["w_g"].shape[1] - chid
    cin2 = params["gru2"]["w_g"].shape[1] - chid
    dx1, bx1, wh1, wc1 = gru_mats(params["gru1"], cin1, pad_x_rows=False)
    dx2, bx2, wh2, wc2 = gru_mats(params["gru2"], cin2, pad_x_rows=True)

    wfc = jnp.pad(params["fc1_w"].T, ((0, Dp - Dh), (0, Dp - Dh))).astype(bf16)
    bfc = jnp.pad(params["fc1_b"], (0, Dp - Dh)).reshape(1, Dp).astype(f32)

    e1, e2 = params["enc1_w"], params["enc2_w"]
    d1, d2 = params["dec1_w"], params["dec2_w"]
    return {
        # spatial encoder (matmul-ready, channel-major output layout)
        "enc1_wm": e1.reshape(e1.shape[0], -1).astype(bf16), "enc1_b": params["enc1_b"],
        "enc2_wm": e2.reshape(e2.shape[0], -1).astype(bf16), "enc2_b": params["enc2_b"],
        # fused temporal encoder-decoder
        "dx1": dx1, "bx1": bx1, "wh1": wh1, "wc1": wc1,
        "wfc": wfc, "bfc": bfc,
        "dx2": dx2, "bx2": bx2, "wh2": wh2, "wc2": wc2,
        # spatial decoder (transposed conv as patch matmul)
        "dec1_wm": d1.transpose(1, 2, 3, 0).reshape(-1, d1.shape[0]).astype(bf16),
        "dec1_b": params["dec1_b"],
        "dec2_wm": d2.transpose(1, 2, 3, 0).reshape(-1, d2.shape[0]).astype(bf16),
        "dec2_b": params["dec2_b"],
    }


# ----------------------------------------------------------------------------
# Fused temporal encoder-decoder: GRU-1 + fc1 + GRU-2 in ONE pallas_call.
# ----------------------------------------------------------------------------
def _temporal_kernel(xs_ref, dx1_ref, bx1_ref, wh1_ref, wc1_ref,
                     wfc_ref, bfc_ref, dx2_ref, bx2_ref, wh2_ref, wc2_ref,
                     out2_ref, enc_ref):
    """All T steps of GRU-1, fc1(+tanh), all T steps of GRU-2, fully on-chip.

    The recurrence is fully unrolled (T is small & static); matmul operands go
    to the MXU in bf16 while accumulation and the gate epilogues stay f32.
    Hidden vectors are zero-padded from Dh to Dp=128 lanes; the padded tail
    stays exactly zero through every update ((1-sig(0))*0 + sig(0)*tanh(0)=0).
    """
    T, B, _ = xs_ref.shape
    Dp = wc1_ref.shape[0]

    dx1 = dx1_ref[...]
    bx1 = bx1_ref[...]
    wh1 = wh1_ref[...]
    wc1 = wc1_ref[...]
    dx2 = dx2_ref[...]
    bx2 = bx2_ref[...]
    wh2 = wh2_ref[...]
    wc2 = wc2_ref[...]

    def gru_step(h, xg, wh, wc):
        # h (B, Dp) f32; xg (B, 3*Dp) f32 (x-part with gate biases folded in).
        ru = jnp.dot(h.astype(jnp.bfloat16), wh,
                     preferred_element_type=jnp.float32)          # (B, 2*Dp)
        r = jax.nn.sigmoid(xg[:, :Dp] + ru[:, :Dp])
        u = jax.nn.sigmoid(xg[:, Dp:2 * Dp] + ru[:, Dp:])
        c = jnp.tanh(xg[:, 2 * Dp:]
                     + jnp.dot((r * h).astype(jnp.bfloat16), wc,
                               preferred_element_type=jnp.float32))
        return (1.0 - u) * h + u * c

    # --- ConvGRU-1 (x-part conv pre-lowered to a dense matmul) ---
    h = jnp.zeros((B, Dp), jnp.float32)
    out1 = []
    for t in range(T):                        # fully unrolled recurrence
        xg = jnp.dot(xs_ref[t], dx1, preferred_element_type=jnp.float32) + bx1
        h = gru_step(h, xg, wh1, wc1)
        out1.append(h)

    enc_ref[...] = h                          # bottleneck = final GRU-1 hidden

    # --- fc1 + tanh -> initial hidden of GRU-2 ---
    h2 = jnp.tanh(jnp.dot(h.astype(jnp.bfloat16), wfc_ref[...],
                          preferred_element_type=jnp.float32) + bfc_ref[...])

    # --- ConvGRU-2 (input = GRU-1 output sequence, kept on-chip) ---
    for t in range(T):
        xg = jnp.dot(out1[t].astype(jnp.bfloat16), dx2,
                     preferred_element_type=jnp.float32) + bx2
        h2 = gru_step(h2, xg, wh2, wc2)
        out2_ref[t] = h2


def temporal_encdec(xseq, pp):
    """xseq: (T, B, Dx) bf16 encoder features -> (out2 (T,B,Dp), enc (B,Dp))."""
    T, B, _ = xseq.shape
    Dp = pp["wc1"].shape[0]
    out2, enc = pl.pallas_call(
        _temporal_kernel,
        out_shape=(jax.ShapeDtypeStruct((T, B, Dp), jnp.float32),
                   jax.ShapeDtypeStruct((B, Dp), jnp.float32)),
        in_specs=[_VMEM_SPEC] * 11,
        out_specs=(_VMEM_SPEC, _VMEM_SPEC),
    )(xseq, pp["dx1"], pp["bx1"], pp["wh1"], pp["wc1"],
      pp["wfc"], pp["bfc"], pp["dx2"], pp["bx2"], pp["wh2"], pp["wc2"])
    return out2, enc


# ----------------------------------------------------------------------------
# Model forward
# ----------------------------------------------------------------------------
def st_autoencoder_g6(x, pp):
    """x: (B, Cin, T, H, W) NCDHW -> (output (B, 1, T, Ho, Wo), bottleneck)."""
    B, Cin, T, H, W = x.shape
    F = B * T

    # --- spatial encoder: Conv3d k=(1,3,3) s=(1,2,2) == per-frame Conv2d ---
    x_cm = x.transpose(1, 0, 2, 3, 4).reshape(Cin, F, H, W)       # channel-major
    h1 = conv2d_cm(x_cm, pp["enc1_wm"], pp["enc1_b"],
                   stride=2, padding=0, act="relu")               # (128, F, 7, 7)
    # TODO(synk): enc1+enc2 could be fused into a single pallas_call with
    # in-kernel patch gathers; skipped here (enc1's K=9 matmul is not the
    # bottleneck and strided in-kernel slices need per-generation validation).
    h2 = conv2d_cm(h1, pp["enc2_wm"], pp["enc2_b"],
                   stride=2, padding=0, act="relu")               # (32, F, 3, 3)
    C1, _, H1, W1 = h2.shape
    chid = pp["dec1_wm"].shape[1]
    Dh = chid * H1 * W1

    # --- fused temporal encoder-decoder (GRU-1 + fc1 + GRU-2, ONE kernel) ---
    xseq = (h2.transpose(1, 0, 2, 3).reshape(B, T, C1 * H1 * W1)
              .transpose(1, 0, 2).astype(jnp.bfloat16))           # (T, B, 288)
    out2, enc = temporal_encdec(xseq, pp)
    bottleneck = enc[:, :Dh].reshape(B, chid, H1, W1)

    # --- spatial decoder: ConvTranspose3d k=(1,3,3) s=(1,2,2) == per-frame ---
    frames = (out2[:, :, :Dh].transpose(1, 0, 2)
              .reshape(F, chid, H1, W1).transpose(1, 0, 2, 3))    # (chid, F, 3, 3)
    d1 = conv_transpose2d_cm(frames, pp["dec1_wm"], pp["dec1_b"],
                             stride=2, act="relu")                # (128, F, 7, 7)
    d2 = conv_transpose2d_cm(d1, pp["dec2_wm"], pp["dec2_b"],
                             stride=2, act="relu")                # (1, F, 15, 15)
    Co, _, Ho, Wo = d2.shape
    out = d2.reshape(Co, B, T, Ho, Wo).transpose(1, 0, 2, 3, 4)   # (B, 1, T, Ho, Wo)
    return out, bottleneck


# ----------------------------------------------------------------------------
# Deterministic parameter init (torch layouts)
# ----------------------------------------------------------------------------
def init_params(key, in_channel, gru_in, gru_hidden, bottleneck_hw):
    ks = jax.random.split(key, 16)
    nrm = lambda k, s: (0.1 * jax.random.normal(k, s, jnp.float32))
    zeros = lambda s: jnp.zeros(s, jnp.float32)
    hw = bottleneck_hw
    flat_dim = gru_hidden * hw * hw
    return {
        "enc1_w": nrm(ks[0], (128, in_channel, 3, 3)), "enc1_b": zeros((128,)),
        "enc2_w": nrm(ks[1], (32, 128, 3, 3)),         "enc2_b": zeros((32,)),
        "gru1": {
            "w_g": nrm(ks[2], (2 * gru_hidden, gru_in + gru_hidden, 3, 3)),
            "b_g": zeros((2 * gru_hidden,)),
            "w_c": nrm(ks[3], (gru_hidden, gru_in + gru_hidden, 3, 3)),
            "b_c": zeros((gru_hidden,)),
        },
        "gru2": {
            "w_g": nrm(ks[4], (2 * gru_hidden, 2 * gru_hidden, 3, 3)),
            "b_g": zeros((2 * gru_hidden,)),
            "w_c": nrm(ks[5], (gru_hidden, 2 * gru_hidden, 3, 3)),
            "b_c": zeros((gru_hidden,)),
        },
        "fc1_w": nrm(ks[6], (flat_dim, flat_dim)), "fc1_b": zeros((flat_dim,)),
        "dec1_w": nrm(ks[7], (gru_hidden, 128, 3, 3)), "dec1_b": zeros((128,)),
        "dec2_w": nrm(ks[8], (128, 1, 3, 3)),          "dec2_b": zeros((1,)),
    }


# ----------------------------------------------------------------------------
if __name__ == "__main__":
    B, Cin, T, H, W = 2, 1, 4, 16, 16           # small NCDHW input
    GRU_IN, GRU_HID = 32, 8                     # 32 from encoder, hidden_dim=8
    BOTTLENECK_HW = 3                           # encoder spatial: 16 -> 7 -> 3

    key = jax.random.PRNGKey(0)
    kx, kp = jax.random.split(key)
    x = jax.random.normal(kx, (B, Cin, T, H, W), jnp.float32)
    params = init_params(kp, Cin, GRU_IN, GRU_HID, BOTTLENECK_HW)

    # One-time weight preprocessing (dense GRU matrices, packing, bf16 casts),
    # outside the jitted forward.
    prepped = prepare_params(params, BOTTLENECK_HW, BOTTLENECK_HW)

    fwd = jax.jit(st_autoencoder_g6)
    output, bottleneck = fwd(x, prepped)
    jax.block_until_ready(output)
    jax.block_until_ready(bottleneck)

    assert output.shape == (B, 1, T, 15, 15), output.shape
    assert bottleneck.shape == (B, GRU_HID, BOTTLENECK_HW, BOTTLENECK_HW), bottleneck.shape
    assert bool(jnp.all(jnp.isfinite(output))) and bool(jnp.all(jnp.isfinite(bottleneck)))
    print("KERNEL_OK")
</pallas_src>

<mosaic_0001>
module attributes {stable_mosaic.version = 11 : i64} {
  func.func @_conv_mm_kernel(%arg0: memref<128x9xbf16, #tpu.memory_space<vmem>>, %arg1: memref<9x392xbf16, #tpu.memory_space<vmem>>, %arg2: memref<128x1xf32, #tpu.memory_space<vmem>>, %arg3: memref<128x392xf32, #tpu.memory_space<vmem>>) attributes {dimension_semantics = [], scalar_prefetch = 0 : i64, scratch_operands = 0 : i64, tpu.core_type = #tpu.core_type<tc>} {
    %c0 = arith.constant 0 : index
    %c0_0 = arith.constant 0 : index
    %0 = vector.load %arg0[%c0, %c0_0] : memref<128x9xbf16, #tpu.memory_space<vmem>>, vector<128x9xbf16>
    %c0_1 = arith.constant 0 : index
    %c0_2 = arith.constant 0 : index
    %1 = vector.load %arg1[%c0_1, %c0_2] : memref<9x392xbf16, #tpu.memory_space<vmem>>, vector<9x392xbf16>
    %cst = arith.constant dense<0.000000e+00> : vector<128x392xf32>
    %2 = tpu.matmul %0, %1, %cst {dimension_numbers = #tpu.dot_dimension_numbers<[1], [0], [0], [1], [0, 0, 1, 1], [], []>} : vector<128x9xbf16>, vector<9x392xbf16>, vector<128x392xf32> -> vector<128x392xf32>
    %c0_3 = arith.constant 0 : index
    %c0_4 = arith.constant 0 : index
    %3 = vector.load %arg2[%c0_3, %c0_4] : memref<128x1xf32, #tpu.memory_space<vmem>>, vector<128x1xf32>
    %4 = vector.broadcast %3 : vector<128x1xf32> to vector<128x392xf32>
    %5 = arith.addf %2, %4 : vector<128x392xf32>
    %cst_5 = arith.constant 0.000000e+00 : f32
    %6 = vector.broadcast %cst_5 : f32 to vector<128x392xf32>
    %7 = arith.maximumf %5, %6 : vector<128x392xf32>
    %c0_6 = arith.constant 0 : index
    %c0_7 = arith.constant 0 : index
    %8 = vector.load %arg3[%c0_6, %c0_7] : memref<128x392xf32, #tpu.memory_space<vmem>>, vector<128x392xf32>
    tpu.vector_store %arg3[%c0_6, %c0_7], %7 {strides = array<i32>} : memref<128x392xf32, #tpu.memory_space<vmem>>, vector<128x392xf32>,
    return
  }
}

module attributes {stable_mosaic.version = 11 : i64} {
  func.func @_conv_mm_kernel(%arg0: memref<32x1152xbf16, #tpu.memory_space<vmem>>, %arg1: memref<1152x72xbf16, #tpu.memory_space<vmem>>, %arg2: memref<32x1xf32, #tpu.memory_space<vmem>>, %arg3: memref<32x72xf32, #tpu.memory_space<vmem>>) attributes {dimension_semantics = [], scalar_prefetch = 0 : i64, scratch_operands = 0 : i64, tpu.core_type = #tpu.core_type<tc>} {
    %c0 = arith.constant 0 : index
    %c0_0 = arith.constant 0 : index
    %0 = vector.load %arg0[%c0, %c0_0] : memref<32x1152xbf16, #tpu.memory_space<vmem>>, vector<32x1152xbf16>
    %c0_1 = arith.constant 0 : index
    %c0_2 = arith.constant 0 : index
    %1 = vector.load %arg1[%c0_1, %c0_2] : memref<1152x72xbf16, #tpu.memory_space<vmem>>, vector<1152x72xbf16>
    %cst = arith.constant dense<0.000000e+00> : vector<32x72xf32>
    %2 = tpu.matmul %0, %1, %cst {dimension_numbers = #tpu.dot_dimension_numbers<[1], [0], [0], [1], [0, 0, 1, 1], [], []>} : vector<32x1152xbf16>, vector<1152x72xbf16>, vector<32x72xf32> -> vector<32x72xf32>
    %c0_3 = arith.constant 0 : index
    %c0_4 = arith.constant 0 : index
    %3 = vector.load %arg2[%c0_3, %c0_4] : memref<32x1xf32, #tpu.memory_space<vmem>>, vector<32x1xf32>
    %4 = vector.broadcast %3 : vector<32x1xf32> to vector<32x72xf32>
    %5 = arith.addf %2, %4 : vector<32x72xf32>
    %cst_5 = arith.constant 0.000000e+00 : f32
    %6 = vector.broadcast %cst_5 : f32 to vector<32x72xf32>
    %7 = arith.maximumf %5, %6 : vector<32x72xf32>
    %c0_6 = arith.constant 0 : index
    %c0_7 = arith.constant 0 : index
    %8 = vector.load %arg3[%c0_6, %c0_7] : memref<32x72xf32, #tpu.memory_space<vmem>>, vector<32x72xf32>
    tpu.vector_store %arg3[%c0_6, %c0_7], %7 {strides = array<i32>} : memref<32x72xf32, #tpu.memory_space<vmem>>, vector<32x72xf32>,
    return
  }
}

module attributes {stable_mosaic.version = 11 : i64} {
  func.func @_temporal_kernel(%arg0: memref<4x2x288xbf16, #tpu.memory_space<vmem>>, %arg1: memref<288x384xbf16, #tpu.memory_space<vmem>>, %arg2: memref<1x384xf32, #tpu.memory_space<vmem>>, %arg3: memref<128x256xbf16, #tpu.memory_space<vmem>>, %arg4: memref<128x128xbf16, #tpu.memory_space<vmem>>, %arg5: memref<128x128xbf16, #tpu.memory_space<vmem>>, %arg6: memref<1x128xf32, #tpu.memory_space<vmem>>, %arg7: memref<128x384xbf16, #tpu.memory_space<vmem>>, %arg8: memref<1x384xf32, #tpu.memory_space<vmem>>, %arg9: memref<128x256xbf16, #tpu.memory_space<vmem>>, %arg10: memref<128x128xbf16, #tpu.memory_space<vmem>>, %arg11: memref<4x2x128xf32, #tpu.memory_space<vmem>>, %arg12: memref<2x128xf32, #tpu.memory_space<vmem>>) attributes {dimension_semantics = [], scalar_prefetch = 0 : i64, scratch_operands = 0 : i64, tpu.core_type = #tpu.core_type<tc>} {
    %c0 = arith.constant 0 : index
    %c0_0 = arith.constant 0 : index
    %0 = vector.load %arg1[%c0, %c0_0] : memref<288x384xbf16, #tpu.memory_space<vmem>>, vector<288x384xbf16>
    %c0_1 = arith.constant 0 : index
    %c0_2 = arith.constant 0 : index
    %1 = vector.load %arg2[%c0_1, %c0_2] : memref<1x384xf32, #tpu.memory_space<vmem>>, vector<1x384xf32>
    %c0_3 = arith.constant 0 : index
    %c0_4 = arith.constant 0 : index
    %2 = vector.load %arg3[%c0_3, %c0_4] : memref<128x256xbf16, #tpu.memory_space<vmem>>, vector<128x256xbf16>
    %c0_5 = arith.constant 0 : index
    %c0_6 = arith.constant 0 : index
    %3 = vector.load %arg4[%c0_5, %c0_6] : memref<128x128xbf16, #tpu.memory_space<vmem>>, vector<128x128xbf16>
    %c0_7 = arith.constant 0 : index
    %c0_8 = arith.constant 0 : index
    %4 = vector.load %arg7[%c0_7, %c0_8] : memref<128x384xbf16, #tpu.memory_space<vmem>>, vector<128x384xbf16>
    %c0_9 = arith.constant 0 : index
    %c0_10 = arith.constant 0 : index
    %5 = vector.load %arg8[%c0_9, %c0_10] : memref<1x384xf32, #tpu.memory_space<vmem>>, vector<1x384xf32>
    %c0_11 = arith.constant 0 : index
    %c0_12 = arith.constant 0 : index
    %6 = vector.load %arg9[%c0_11, %c0_12] : memref<128x256xbf16, #tpu.memory_space<vmem>>, vector<128x256xbf16>
    %c0_13 = arith.constant 0 : index
    %c0_14 = arith.constant 0 : index
    %7 = vector.load %arg10[%c0_13, %c0_14] : memref<128x128xbf16, #tpu.memory_space<vmem>>, vector<128x128xbf16>
    %cst = arith.constant 0.000000e+00 : f32
    %8 = vector.broadcast %cst : f32 to vector<2x128xf32>
    %c0_15 = arith.constant 0 : index
    %c0_16 = arith.constant 0 : index
    %c0_17 = arith.constant 0 : index
    %9 = vector.load %arg0[%c0_15, %c0_16, %c0_17] : memref<4x2x288xbf16, #tpu.memory_space<vmem>>, vector<1x2x288xbf16>
    %10 = vector.shape_cast %9 : vector<1x2x288xbf16> to vector<2x288xbf16>
    %cst_18 = arith.constant dense<0.000000e+00> : vector<2x384xf32>
    %11 = tpu.matmul %10, %0, %cst_18 {dimension_numbers = #tpu.dot_dimension_numbers<[1], [0], [0], [1], [0, 0, 1, 1], [], []>} : vector<2x288xbf16>, vector<288x384xbf16>, vector<2x384xf32> -> vector<2x384xf32>
    %12 = vector.broadcast %1 : vector<1x384xf32> to vector<2x384xf32>
    %13 = arith.addf %11, %12 : vector<2x384xf32>
    %14 = arith.truncf %8 : vector<2x128xf32> to vector<2x128xbf16>
    %cst_19 = arith.constant dense<0.000000e+00> : vector<2x256xf32>
    %15 = tpu.matmul %14, %2, %cst_19 {dimension_numbers = #tpu.dot_dimension_numbers<[1], [0], [0], [1], [0, 0, 1, 1], [], []>} : vector<2x128xbf16>, vector<128x256xbf16>, vector<2x256xf32> -> vector<2x256xf32>
    %16 = vector.extract_strided_slice %13 {offsets = [0, 0], sizes = [2, 128], strides = [1, 1]} : vector<2x384xf32> to vector<2x128xf32>
    %17 = vector.extract_strided_slice %15 {offsets = [0, 0], sizes = [2, 128], strides = [1, 1]} : vector<2x256xf32> to vector<2x128xf32>
    %18 = arith.addf %16, %17 : vector<2x128xf32>
    %19 = arith.negf %18 : vector<2x128xf32>
    %20 = math.exp %19 : vector<2x128xf32>
    %cst_20 = arith.constant 1.000000e+00 : f32
    %21 = vector.broadcast %cst_20 : f32 to vector<2x128xf32>
    %22 = arith.addf %21, %20 : vector<2x128xf32>
    %23 = arith.divf %21, %22 : vector<2x128xf32>
    %24 = vector.extract_strided_slice %13 {offsets = [0, 128], sizes = [2, 128], strides = [1, 1]} : vector<2x384xf32> to vector<2x128xf32>
    %25 = vector.extract_strided_slice %15 {offsets = [0, 128], sizes = [2, 128], strides = [1, 1]} : vector<2x256xf32> to vector<2x128xf32>
    %26 = arith.addf %24, %25 : vector<2x128xf32>
    %27 = arith.negf %26 : vector<2x128xf32>
    %28 = math.exp %27 : vector<2x128xf32>
    %cst_21 = arith.constant 1.000000e+00 : f32
    %29 = vector.broadcast %cst_21 : f32 to vector<2x128xf32>
    %30 = arith.addf %29, %28 : vector<2x128xf32>
    %31 = arith.divf %29, %30 : vector<2x128xf32>
    %32 = vector.extract_strided_slice %13 {offsets = [0, 256], sizes = [2, 128], strides = [1, 1]} : vector<2x384xf32> to vector<2x128xf32>
    %33 = arith.mulf %23, %8 : vector<2x128xf32>
    %34 = arith.truncf %33 : vector<2x128xf32> to vector<2x128xbf16>
    %cst_22 = arith.constant dense<0.000000e+00> : vector<2x128xf32>
    %35 = tpu.matmul %34, %3, %cst_22 {dimension_numbers = #tpu.dot_dimension_numbers<[1], [0], [0], [1], [0, 0, 1, 1], [], []>} : vector<2x128xbf16>, vector<128x128xbf16>, vector<2x128xf32> -> vector<2x128xf32>
    %36 = arith.addf %32, %35 : vector<2x128xf32>
    %37 = math.tanh %36 : vector<2x128xf32>
    %cst_23 = arith.constant 1.000000e+00 : f32
    %38 = vector.broadcast %cst_23 : f32 to vector<2x128xf32>
    %39 = arith.subf %38, %31 : vector<2x128xf32>
    %40 = arith.mulf %39, %8 : vector<2x128xf32>
    %41 = arith.mulf %31, %37 : vector<2x128xf32>
    %42 = arith.addf %40, %41 : vector<2x128xf32>
    %c1 = arith.constant 1 : index
    %c0_24 = arith.constant 0 : index
    %c0_25 = arith.constant 0 : index
    %43 = vector.load %arg0[%c1, %c0_24, %c0_25] : memref<4x2x288xbf16, #tpu.memory_space<vmem>>, vector<1x2x288xbf16>
    %44 = vector.shape_cast %43 : vector<1x2x288xbf16> to vector<2x288xbf16>
    %cst_26 = arith.constant dense<0.000000e+00> : vector<2x384xf32>
    %45 = tpu.matmul %44, %0, %cst_26 {dimension_numbers = #tpu.dot_dimension_numbers<[1], [0], [0], [1], [0, 0, 1, 1], [], []>} : vector<2x288xbf16>, vector<288x384xbf16>, vector<2x384xf32> -> vector<2x384xf32>
    %46 = vector.broadcast %1 : vector<1x384xf32> to vector<2x384xf32>
    %47 = arith.addf %45, %46 : vector<2x384xf32>
    %48 = arith.truncf %42 : vector<2x128xf32> to vector<2x128xbf16>
    %cst_27 = arith.constant dense<0.000000e+00> : vector<2x256xf32>
    %49 = tpu.matmul %48, %2, %cst_27 {dimension_numbers = #tpu.dot_dimension_numbers<[1], [0], [0], [1], [0, 0, 1, 1], [], []>} : vector<2x128xbf16>, vector<128x256xbf16>, vector<2x256xf32> -> vector<2x256xf32>
    %50 = vector.extract_strided_slice %47 {offsets = [0, 0], sizes = [2, 128], strides = [1, 1]} : vector<2x384xf32> to vector<2x128xf32>
    %51 = vector.extract_strided_slice %49 {offsets = [0, 0], sizes = [2, 128], strides = [1, 1]} : vector<2x256xf32> to vector<2x128xf32>
    %52 = arith.addf %50, %51 : vector<2x128xf32>
    %53 = arith.negf %52 : vector<2x128xf32>
    %54 = math.exp %53 : vector<2x128xf32>
    %cst_28 = arith.constant 1.000000e+00 : f32
    %55 = vector.broadcast %cst_28 : f32 to vector<2x128xf32>
    %56 = arith.addf %55, %54 : vector<2x128xf32>
    %57 = arith.divf %55, %56 : vector<2x128xf32>
    %58 = vector.extract_strided_slice %47 {offsets = [0, 128], sizes = [2, 128], strides = [1, 1]} : vector<2x384xf32> to vector<2x128xf32>
    %59 = vector.extract_strided_slice %49 {offsets = [0, 128], sizes = [2, 128], strides = [1, 1]} : vector<2x256xf32> to vector<2x128xf32>
    %60 = arith.addf %58, %59 : vector<2x128xf32>
    %61 = arith.negf %60 : vector<2x128xf32>
    %62 = math.exp %61 : vector<2x128xf32>
    %cst_29 = arith.constant 1.000000e+00 : f32
    %63 = vector.broadcast %cst_29 : f32 to vector<2x128xf32>
    %64 = arith.addf %63, %62 : vector<2x128xf32>
    %65 = arith.divf %63, %64 : vector<2x128xf32>
    %66 = vector.extract_strided_slice %47 {offsets = [0, 256], sizes = [2, 128], strides = [1, 1]} : vector<2x384xf32> to vector<2x128xf32>
    %67 = arith.mulf %57, %42 : vector<2x128xf32>
    %68 = arith.truncf %67 : vector<2x128xf32> to vector<2x128xbf16>
    %cst_30 = arith.constant dense<0.000000e+00> : vector<2x128xf32>
    %69 = tpu.matmul %68, %3, %cst_30 {dimension_numbers = #tpu.dot_dimension_numbers<[1], [0], [0], [1], [0, 0, 1, 1], [], []>} : vector<2x128xbf16>, vector<128x128xbf16>, vector<2x128xf32> -> vector<2x128xf32>
    %70 = arith.addf %66, %69 : vector<2x128xf32>
    %71 = math.tanh %70 : vector<2x128xf32>
    %cst_31 = arith.constant 1.000000e+00 : f32
    %72 = vector.broadcast %cst_31 : f32 to vector<2x128xf32>
    %73 = arith.subf %72, %65 : vector<2x128xf32>
    %74 = arith.mulf %73, %42 : vector<2x128xf32>
    %75 = arith.mulf %65, %71 : vector<2x128xf32>
    %76 = arith.addf %74, %75 : vector<2x128xf32>
    %c2 = arith.constant 2 : index
    %c0_32 = arith.constant 0 : index
    %c0_33 = arith.constant 0 : index
    %77 = vector.load %arg0[%c2, %c0_32, %c0_33] : memref<4x2x288xbf16, #tpu.memory_space<vmem>>, vector<1x2x288xbf16>
    %78 = vector.shape_cast %77 : vector<1x2x288xbf16> to vector<2x288xbf16>
    %cst_34 = arith.constant dense<0.000000e+00> : vector<2x384xf32>
    %79 = tpu.matmul %78, %0, %cst_34 {dimension_numbers = #tpu.dot_dimension_numbers<[1], [0], [0], [1], [0, 0, 1, 1], [], []>} : vector<2x288xbf16>, vector<288x384xbf16>, vector<2x384xf32> -> vector<2x384xf32>
    %80 = vector.broadcast %1 : vector<1x384xf32> to vector<2x384xf32>
    %81 = arith.addf %79, %80 : vector<2x384xf32>
    %82 = arith.truncf %76 : vector<2x128xf32> to vector<2x128xbf16>
    %cst_35 = arith.constant dense<0.000000e+00> : vector<2x256xf32>
    %83 = tpu.matmul %82, %2, %cst_35 {dimension_numbers = #tpu.dot_dimension_numbers<[1], [0], [0], [1], [0, 0, 1, 1], [], []>} : vector<2x128xbf16>, vector<128x256xbf16>, vector<2x256xf32> -> vector<2x256xf32>
    %84 = vector.extract_strided_slice %81 {offsets = [0, 0], sizes = [2, 128], strides = [1, 1]} : vector<2x384xf32> to vector<2x128xf32>
    %85 = vector.extract_strided_slice %83 {offsets = [0, 0], sizes = [2, 128], strides = [1, 1]} : vector<2x256xf32> to vector<2x128xf32>
    %86 = arith.addf %84, %85 : vector<2x128xf32>
    %87 = arith.negf %86 : vector<2x128xf32>
    %88 = math.exp %87 : vector<2x128xf32>
    %cst_36 = arith.constant 1.000000e+00 : f32
    %89 = vector.broadcast %cst_36 : f32 to vector<2x128xf32>
    %90 = arith.addf %89, %88 : vector<2x128xf32>
    %91 = arith.divf %89, %90 : vector<2x128xf32>
    %92 = vector.extract_strided_slice %81 {offsets = [0, 128], sizes = [2, 128], strides = [1, 1]} : vector<2x384xf32> to vector<2x128xf32>
    %93 = vector.extract_strided_slice %83 {offsets = [0, 128], sizes = [2, 128], strides = [1, 1]} : vector<2x256xf32> to vector<2x128xf32>
    %94 = arith.addf %92, %93 : vector<2x128xf32>
    %95 = arith.negf %94 : vector<2x128xf32>
    %96 = math.exp %95 : vector<2x128xf32>
    %cst_37 = arith.constant 1.000000e+00 : f32
    %97 = vector.broadcast %cst_37 : f32 to vector<2x128xf32>
    %98 = arith.addf %97, %96 : vector<2x128xf32>
    %99 = arith.divf %97, %98 : vector<2x128xf32>
    %100 = vector.extract_strided_slice %81 {offsets = [0, 256], sizes = [2, 128], strides = [1, 1]} : vector<2x384xf32> to vector<2x128xf32>
    %101 = arith.mulf %91, %76 : vector<2x128xf32>
    %102 = arith.truncf %101 : vector<2x128xf32> to vector<2x128xbf16>
    %cst_38 = arith.constant dense<0.000000e+00> : vector<2x128xf32>
    %103 = tpu.matmul %102, %3, %cst_38 {dimension_numbers = #tpu.dot_dimension_numbers<[1], [0], [0], [1], [0, 0, 1, 1], [], []>} : vector<2x128xbf16>, vector<128x128xbf16>, vector<2x128xf32> -> vector<2x128xf32>
    %104 = arith.addf %100, %103 : vector<2x128xf32>
    %105 = math.tanh %104 : vector<2x128xf32>
    %cst_39 = arith.constant 1.000000e+00 : f32
    %106 = vector.broadcast %cst_39 : f32 to vector<2x128xf32>
    %107 = arith.subf %106, %99 : vector<2x128xf32>
    %108 = arith.mulf %107, %76 : vector<2x128xf32>
    %109 = arith.mulf %99, %105 : vector<2x128xf32>
    %110 = arith.addf %108, %109 : vector<2x128xf32>
    %c3 = arith.constant 3 : index
    %c0_40 = arith.constant 0 : index
    %c0_41 = arith.constant 0 : index
    %111 = vector.load %arg0[%c3, %c0_40, %c0_41] : memref<4x2x288xbf16, #tpu.memory_space<vmem>>, vector<1x2x288xbf16>
    %112 = vector.shape_cast %111 : vector<1x2x288xbf16> to vector<2x288xbf16>
    %cst_42 = arith.constant dense<0.000000e+00> : vector<2x384xf32>
    %113 = tpu.matmul %112, %0, %cst_42 {dimension_numbers = #tpu.dot_dimension_numbers<[1], [0], [0], [1], [0, 0, 1, 1], [], []>} : vector<2x288xbf16>, vector<288x384xbf16>, vector<2x384xf32> -> vector<2x384xf32>
    %114 = vector.broadcast %1 : vector<1x384xf32> to vector<2x384xf32>
    %115 = arith.addf %113, %114 : vector<2x384xf32>
    %116 = arith.truncf %110 : vector<2x128xf32> to vector<2x128xbf16>
    %cst_43 = arith.constant dense<0.000000e+00> : vector<2x256xf32>
    %117 = tpu.matmul %116, %2, %cst_43 {dimension_numbers = #tpu.dot_dimension_numbers<[1], [0], [0], [1], [0, 0, 1, 1], [], []>} : vector<2x128xbf16>, vector<128x256xbf16>, vector<2x256xf32> -> vector<2x256xf32>
    %118 = vector.extract_strided_slice %115 {offsets = [0, 0], sizes = [2, 128], strides = [1, 1]} : vector<2x384xf32> to vector<2x128xf32>
    %119 = vector.extract_strided_slice %117 {offsets = [0, 0], sizes = [2, 128], strides = [1, 1]} : vector<2x256xf32> to vector<2x128xf32>
    %120 = arith.addf %118, %119 : vector<2x128xf32>
    %121 = arith.negf %120 : vector<2x128xf32>
    %122 = math.exp %121 : vector<2x128xf32>
    %cst_44 = arith.constant 1.000000e+00 : f32
    %123 = vector.broadcast %cst_44 : f32 to vector<2x128xf32>
    %124 = arith.addf %123, %122 : vector<2x128xf32>
    %125 = arith.divf %123, %124 : vector<2x128xf32>
    %126 = vector.extract_strided_slice %115 {offsets = [0, 128], sizes = [2, 128], strides = [1, 1]} : vector<2x384xf32> to vector<2x128xf32>
    %127 = vector.extract_strided_slice %117 {offsets = [0, 128], sizes = [2, 128], strides = [1, 1]} : vector<2x256xf32> to vector<2x128xf32>
    %128 = arith.addf %126, %127 : vector<2x128xf32>
    %129 = arith.negf %128 : vector<2x128xf32>
    %130 = math.exp %129 : vector<2x128xf32>
    %cst_45 = arith.constant 1.000000e+00 : f32
    %131 = vector.broadcast %cst_45 : f32 to vector<2x128xf32>
    %132 = arith.addf %131, %130 : vector<2x128xf32>
    %133 = arith.divf %131, %132 : vector<2x128xf32>
    %134 = vector.extract_strided_slice %115 {offsets = [0, 256], sizes = [2, 128], strides = [1, 1]} : vector<2x384xf32> to vector<2x128xf32>
    %135 = arith.mulf %125, %110 : vector<2x128xf32>
    %136 = arith.truncf %135 : vector<2x128xf32> to vector<2x128xbf16>
    %cst_46 = arith.constant dense<0.000000e+00> : vector<2x128xf32>
    %137 = tpu.matmul %136, %3, %cst_46 {dimension_numbers = #tpu.dot_dimension_numbers<[1], [0], [0], [1], [0, 0, 1, 1], [], []>} : vector<2x128xbf16>, vector<128x128xbf16>, vector<2x128xf32> -> vector<2x128xf32>
    %138 = arith.addf %134, %137 : vector<2x128xf32>
    %139 = math.tanh %138 : vector<2x128xf32>
    %cst_47 = arith.constant 1.000000e+00 : f32
    %140 = vector.broadcast %cst_47 : f32 to vector<2x128xf32>
    %141 = arith.subf %140, %133 : vector<2x128xf32>
    %142 = arith.mulf %141, %110 : vector<2x128xf32>
    %143 = arith.mulf %133, %139 : vector<2x128xf32>
    %144 = arith.addf %142, %143 : vector<2x128xf32>
    %c0_48 = arith.constant 0 : index
    %c0_49 = arith.constant 0 : index
    %145 = vector.load %arg12[%c0_48, %c0_49] : memref<2x128xf32, #tpu.memory_space<vmem>>, vector<2x128xf32>
    tpu.vector_store %arg12[%c0_48, %c0_49], %144 {strides = array<i32>} : memref<2x128xf32, #tpu.memory_space<vmem>>, vector<2x128xf32>,
    %146 = arith.truncf %144 : vector<2x128xf32> to vector<2x128xbf16>
    %c0_50 = arith.constant 0 : index
    %c0_51 = arith.constant 0 : index
    %147 = vector.load %arg5[%c0_50, %c0_51] : memref<128x128xbf16, #tpu.memory_space<vmem>>, vector<128x128xbf16>
    %cst_52 = arith.constant dense<0.000000e+00> : vector<2x128xf32>
    %148 = tpu.matmul %146, %147, %cst_52 {dimension_numbers = #tpu.dot_dimension_numbers<[1], [0], [0], [1], [0, 0, 1, 1], [], []>} : vector<2x128xbf16>, vector<128x128xbf16>, vector<2x128xf32> -> vector<2x128xf32>
    %c0_53 = arith.constant 0 : index
    %c0_54 = arith.constant 0 : index
    %149 = vector.load %arg6[%c0_53, %c0_54] : memref<1x128xf32, #tpu.memory_space<vmem>>, vector<1x128xf32>
    %150 = vector.broadcast %149 : vector<1x128xf32> to vector<2x128xf32>
    %151 = arith.addf %148, %150 : vector<2x128xf32>
    %152 = math.tanh %151 : vector<2x128xf32>
    %153 = arith.truncf %42 : vector<2x128xf32> to vector<2x128xbf16>
    %cst_55 = arith.constant dense<0.000000e+00> : vector<2x384xf32>
    %154 = tpu.matmul %153, %4, %cst_55 {dimension_numbers = #tpu.dot_dimension_numbers<[1], [0], [0], [1], [0, 0, 1, 1], [], []>} : vector<2x128xbf16>, vector<128x384xbf16>, vector<2x384xf32> -> vector<2x384xf32>
    %155 = vector.broadcast %5 : vector<1x384xf32> to vector<2x384xf32>
    %156 = arith.addf %154, %155 : vector<2x384xf32>
    %157 = arith.truncf %152 : vector<2x128xf32> to vector<2x128xbf16>
    %cst_56 = arith.constant dense<0.000000e+00> : vector<2x256xf32>
    %158 = tpu.matmul %157, %6, %cst_56 {dimension_numbers = #tpu.dot_dimension_numbers<[1], [0], [0], [1], [0, 0, 1, 1], [], []>} : vector<2x128xbf16>, vector<128x256xbf16>, vector<2x256xf32> -> vector<2x256xf32>
    %159 = vector.extract_strided_slice %156 {offsets = [0, 0], sizes = [2, 128], strides = [1, 1]} : vector<2x384xf32> to vector<2x128xf32>
    %160 = vector.extract_strided_slice %158 {offsets = [0, 0], sizes = [2, 128], strides = [1, 1]} : vector<2x256xf32> to vector<2x128xf32>
    %161 = arith.addf %159, %160 : vector<2x128xf32>
    %162 = arith.negf %161 : vector<2x128xf32>
    %163 = math.exp %162 : vector<2x128xf32>
    %cst_57 = arith.constant 1.000000e+00 : f32
    %164 = vector.broadcast %cst_57 : f32 to vector<2x128xf32>
    %165 = arith.addf %164, %163 : vector<2x128xf32>
    %166 = arith.divf %164, %165 : vector<2x128xf32>
    %167 = vector.extract_strided_slice %156 {offsets = [0, 128], sizes = [2, 128], strides = [1, 1]} : vector<2x384xf32> to vector<2x128xf32>
    %168 = vector.extract_strided_slice %158 {offsets = [0, 128], sizes = [2, 128], strides = [1, 1]} : vector<2x256xf32> to vector<2x128xf32>
    %169 = arith.addf %167, %168 : vector<2x128xf32>
    %170 = arith.negf %169 : vector<2x128xf32>
    %171 = math.exp %170 : vector<2x128xf32>
    %cst_58 = arith.constant 1.000000e+00 : f32
    %172 = vector.broadcast %cst_58 : f32 to vector<2x128xf32>
    %173 = arith.addf %172, %171 : vector<2x128xf32>
    %174 = arith.divf %172, %173 : vector<2x128xf32>
    %175 = vector.extract_strided_slice %156 {offsets = [0, 256], sizes = [2, 128], strides = [1, 1]} : vector<2x384xf32> to vector<2x128xf32>
    %176 = arith.mulf %166, %152 : vector<2x128xf32>
    %177 = arith.truncf %176 : vector<2x128xf32> to vector<2x128xbf16>
    %cst_59 = arith.constant dense<0.000000e+00> : vector<2x128xf32>
    %178 = tpu.matmul %177, %7, %cst_59 {dimension_numbers = #tpu.dot_dimension_numbers<[1], [0], [0], [1], [0, 0, 1, 1], [], []>} : vector<2x128xbf16>, vector<128x128xbf16>, vector<2x128xf32> -> vector<2x128xf32>
    %179 = arith.addf %175, %178 : vector<2x128xf32>
    %180 = math.tanh %179 : vector<2x128xf32>
    %cst_60 = arith.constant 1.000000e+00 : f32
    %181 = vector.broadcast %cst_60 : f32 to vector<2x128xf32>
    %182 = arith.subf %181, %174 : vector<2x128xf32>
    %183 = arith.mulf %182, %152 : vector<2x128xf32>
    %184 = arith.mulf %174, %180 : vector<2x128xf32>
    %185 = arith.addf %183, %184 : vector<2x128xf32>
    %c0_61 = arith.constant 0 : index
    %c0_62 = arith.constant 0 : index
    %c0_63 = arith.constant 0 : index
    %186 = vector.load %arg11[%c0_61, %c0_62, %c0_63] : memref<4x2x128xf32, #tpu.memory_space<vmem>>, vector<1x2x128xf32>
    %187 = vector.shape_cast %186 : vector<1x2x128xf32> to vector<2x128xf32>
    %188 = vector.shape_cast %185 : vector<2x128xf32> to vector<1x2x128xf32>
    tpu.vector_store %arg11[%c0_61, %c0_62, %c0_63], %188 {strides = array<i32>} : memref<4x2x128xf32, #tpu.memory_space<vmem>>, vector<1x2x128xf32>,
    %189 = arith.truncf %76 : vector<2x128xf32> to vector<2x128xbf16>
    %cst_64 = arith.constant dense<0.000000e+00> : vector<2x384xf32>
    %190 = tpu.matmul %189, %4, %cst_64 {dimension_numbers = #tpu.dot_dimension_numbers<[1], [0], [0], [1], [0, 0, 1, 1], [], []>} : vector<2x128xbf16>, vector<128x384xbf16>, vector<2x384xf32> -> vector<2x384xf32>
    %191 = vector.broadcast %5 : vector<1x384xf32> to vector<2x384xf32>
    %192 = arith.addf %190, %191 : vector<2x384xf32>
    %193 = arith.truncf %185 : vector<2x128xf32> to vector<2x128xbf16>
    %cst_65 = arith.constant dense<0.000000e+00> : vector<2x256xf32>
    %194 = tpu.matmul %193, %6, %cst_65 {dimension_numbers = #tpu.dot_dimension_numbers<[1], [0], [0], [1], [0, 0, 1, 1], [], []>} : vector<2x128xbf16>, vector<128x256xbf16>, vector<2x256xf32> -> vector<2x256xf32>
    %195 = vector.extract_strided_slice %192 {offsets = [0, 0], sizes = [2, 128], strides = [1, 1]} : vector<2x384xf32> to vector<2x128xf32>
    %196 = vector.extract_strided_slice %194 {offsets = [0, 0], sizes = [2, 128], strides = [1, 1]} : vector<2x256xf32> to vector<2x128xf32>
    %197 = arith.addf %195, %196 : vector<2x128xf32>
    %198 = arith.negf %197 : vector<2x128xf32>
    %199 = math.exp %198 : vector<2x128xf32>
    %cst_66 = arith.constant 1.000000e+00 : f32
    %200 = vector.broadcast %cst_66 : f32 to vector<2x128xf32>
    %201 = arith.addf %200, %199 : vector<2x128xf32>
    %202 = arith.divf %200, %201 : vector<2x128xf32>
    %203 = vector.extract_strided_slice %192 {offsets = [0, 128], sizes = [2, 128], strides = [1, 1]} : vector<2x384xf32> to vector<2x128xf32>
    %204 = vector.extract_strided_slice %194 {offsets = [0, 128], sizes = [2, 128], strides = [1, 1]} : vector<2x256xf32> to vector<2x128xf32>
    %205 = arith.addf %203, %204 : vector<2x128xf32>
    %206 = arith.negf %205 : vector<2x128xf32>
    %207 = math.exp %206 : vector<2x128xf32>
    %cst_67 = arith.constant 1.000000e+00 : f32
    %208 = vector.broadcast %cst_67 : f32 to vector<2x128xf32>
    %209 = arith.addf %208, %207 : vector<2x128xf32>
    %210 = arith.divf %208, %209 : vector<2x128xf32>
    %211 = vector.extract_strided_slice %192 {offsets = [0, 256], sizes = [2, 128], strides = [1, 1]} : vector<2x384xf32> to vector<2x128xf32>
    %212 = arith.mulf %202, %185 : vector<2x128xf32>
    %213 = arith.truncf %212 : vector<2x128xf32> to vector<2x128xbf16>
    %cst_68 = arith.constant dense<0.000000e+00> : vector<2x128xf32>
    %214 = tpu.matmul %213, %7, %cst_68 {dimension_numbers = #tpu.dot_dimension_numbers<[1], [0], [0], [1], [0, 0, 1, 1], [], []>} : vector<2x128xbf16>, vector<128x128xbf16>, vector<2x128xf32> -> vector<2x128xf32>
    %215 = arith.addf %211, %214 : vector<2x128xf32>
    %216 = math.tanh %215 : vector<2x128xf32>
    %cst_69 = arith.constant 1.000000e+00 : f32
    %217 = vector.broadcast %cst_69 : f32 to vector<2x128xf32>
    %218 = arith.subf %217, %210 : vector<2x128xf32>
    %219 = arith.mulf %218, %185 : vector<2x128xf32>
    %220 = arith.mulf %210, %216 : vector<2x128xf32>
    %221 = arith.addf %219, %220 : vector<2x128xf32>
    %c1_70 = arith.constant 1 : index
    %c0_71 = arith.constant 0 : index
    %c0_72 = arith.constant 0 : index
    %222 = vector.load %arg11[%c1_70, %c0_71, %c0_72] : memref<4x2x128xf32, #tpu.memory_space<vmem>>, vector<1x2x128xf32>
    %223 = vector.shape_cast %222 : vector<1x2x128xf32> to vector<2x128xf32>
    %224 = vector.shape_cast %221 : vector<2x128xf32> to vector<1x2x128xf32>
    tpu.vector_store %arg11[%c1_70, %c0_71, %c0_72], %224 {strides = array<i32>} : memref<4x2x128xf32, #tpu.memory_space<vmem>>, vector<1x2x128xf32>,
    %225 = arith.truncf %110 : vector<2x128xf32> to vector<2x128xbf16>
    %cst_73 = arith.constant dense<0.000000e+00> : vector<2x384xf32>
    %226 = tpu.matmul %225, %4, %cst_73 {dimension_numbers = #tpu.dot_dimension_numbers<[1], [0], [0], [1], [0, 0, 1, 1], [], []>} : vector<2x128xbf16>, vector<128x384xbf16>, vector<2x384xf32> -> vector<2x384xf32>
    %227 = vector.broadcast %5 : vector<1x384xf32> to vector<2x384xf32>
    %228 = arith.addf %226, %227 : vector<2x384xf32>
    %229 = arith.truncf %221 : vector<2x128xf32> to vector<2x128xbf16>
    %cst_74 = arith.constant dense<0.000000e+00> : vector<2x256xf32>
    %230 = tpu.matmul %229, %6, %cst_74 {dimension_numbers = #tpu.dot_dimension_numbers<[1], [0], [0], [1], [0, 0, 1, 1], [], []>} : vector<2x128xbf16>, vector<128x256xbf16>, vector<2x256xf32> -> vector<2x256xf32>
    %231 = vector.extract_strided_slice %228 {offsets = [0, 0], sizes = [2, 128], strides = [1, 1]} : vector<2x384xf32> to vector<2x128xf32>
    %232 = vector.extract_strided_slice %230 {offsets = [0, 0], sizes = [2, 128], strides = [1, 1]} : vector<2x256xf32> to vector<2x128xf32>
    %233 = arith.addf %231, %232 : vector<2x128xf32>
    %234 = arith.negf %233 : vector<2x128xf32>
    %235 = math.exp %234 : vector<2x128xf32>
    %cst_75 = arith.constant 1.000000e+00 : f32
    %236 = vector.broadcast %cst_75 : f32 to vector<2x128xf32>
    %237 = arith.addf %236, %235 : vector<2x128xf32>
    %238 = arith.divf %236, %237 : vector<2x128xf32>
    %239 = vector.extract_strided_slice %228 {offsets = [0, 128], sizes = [2, 128], strides = [1, 1]} : vector<2x384xf32> to vector<2x128xf32>
    %240 = vector.extract_strided_slice %230 {offsets = [0, 128], sizes = [2, 128], strides = [1, 1]} : vector<2x256xf32> to vector<2x128xf32>
    %241 = arith.addf %239, %240 : vector<2x128xf32>
    %242 = arith.negf %241 : vector<2x128xf32>
    %243 = math.exp %242 : vector<2x128xf32>
    %cst_76 = arith.constant 1.000000e+00 : f32
    %244 = vector.broadcast %cst_76 : f32 to vector<2x128xf32>
    %245 = arith.addf %244, %243 : vector<2x128xf32>
    %246 = arith.divf %244, %245 : vector<2x128xf32>
    %247 = vector.extract_strided_slice %228 {offsets = [0, 256], sizes = [2, 128], strides = [1, 1]} : vector<2x384xf32> to vector<2x128xf32>
    %248 = arith.mulf %238, %221 : vector<2x128xf32>
    %249 = arith.truncf %248 : vector<2x128xf32> to vector<2x128xbf16>
    %cst_77 = arith.constant dense<0.000000e+00> : vector<2x128xf32>
    %250 = tpu.matmul %249, %7, %cst_77 {dimension_numbers = #tpu.dot_dimension_numbers<[1], [0], [0], [1], [0, 0, 1, 1], [], []>} : vector<2x128xbf16>, vector<128x128xbf16>, vector<2x128xf32> -> vector<2x128xf32>
    %251 = arith.addf %247, %250 : vector<2x128xf32>
    %252 = math.tanh %251 : vector<2x128xf32>
    %cst_78 = arith.constant 1.000000e+00 : f32
    %253 = vector.broadcast %cst_78 : f32 to vector<2x128xf32>
    %254 = arith.subf %253, %246 : vector<2x128xf32>
    %255 = arith.mulf %254, %221 : vector<2x128xf32>
    %256 = arith.mulf %246, %252 : vector<2x128xf32>
    %257 = arith.addf %255, %256 : vector<2x128xf32>
    %c2_79 = arith.constant 2 : index
    %c0_80 = arith.constant 0 : index
    %c0_81 = arith.constant 0 : index
    %258 = vector.load %arg11[%c2_79, %c0_80, %c0_81] : memref<4x2x128xf32, #tpu.memory_space<vmem>>, vector<1x2x128xf32>
    %259 = vector.shape_cast %258 : vector<1x2x128xf32> to vector<2x128xf32>
    %260 = vector.shape_cast %257 : vector<2x128xf32> to vector<1x2x128xf32>
    tpu.vector_store %arg11[%c2_79, %c0_80, %c0_81], %260 {strides = array<i32>} : memref<4x2x128xf32, #tpu.memory_space<vmem>>, vector<1x2x128xf32>,
    %261 = arith.truncf %144 : vector<2x128xf32> to vector<2x128xbf16>
    %cst_82 = arith.constant dense<0.000000e+00> : vector<2x384xf32>
    %262 = tpu.matmul %261, %4, %cst_82 {dimension_numbers = #tpu.dot_dimension_numbers<[1], [0], [0], [1], [0, 0, 1, 1], [], []>} : vector<2x128xbf16>, vector<128x384xbf16>, vector<2x384xf32> -> vector<2x384xf32>
    %263 = vector.broadcast %5 : vector<1x384xf32> to vector<2x384xf32>
    %264 = arith.addf %262, %263 : vector<2x384xf32>
    %265 = arith.truncf %257 : vector<2x128xf32> to vector<2x128xbf16>
    %cst_83 = arith.constant dense<0.000000e+00> : vector<2x256xf32>
    %266 = tpu.matmul %265, %6, %cst_83 {dimension_numbers = #tpu.dot_dimension_numbers<[1], [0], [0], [1], [0, 0, 1, 1], [], []>} : vector<2x128xbf16>, vector<128x256xbf16>, vector<2x256xf32> -> vector<2x256xf32>
    %267 = vector.extract_strided_slice %264 {offsets = [0, 0], sizes = [2, 128], strides = [1, 1]} : vector<2x384xf32> to vector<2x128xf32>
    %268 = vector.extract_strided_slice %266 {offsets = [0, 0], sizes = [2, 128], strides = [1, 1]} : vector<2x256xf32> to vector<2x128xf32>
    %269 = arith.addf %267, %268 : vector<2x128xf32>
    %270 = arith.negf %269 : vector<2x128xf32>
    %271 = math.exp %270 : vector<2x128xf32>
    %cst_84 = arith.constant 1.000000e+00 : f32
    %272 = vector.broadcast %cst_84 : f32 to vector<2x128xf32>
    %273 = arith.addf %272, %271 : vector<2x128xf32>
    %274 = arith.divf %272, %273 : vector<2x128xf32>
    %275 = vector.extract_strided_slice %264 {offsets = [0, 128], sizes = [2, 128], strides = [1, 1]} : vector<2x384xf32> to vector<2x128xf32>
    %276 = vector.extract_strided_slice %266 {offsets = [0, 128], sizes = [2, 128], strides = [1, 1]} : vector<2x256xf32> to vector<2x128xf32>
    %277 = arith.addf %275, %276 : vector<2x128xf32>
    %278 = arith.negf %277 : vector<2x128xf32>
    %279 = math.exp %278 : vector<2x128xf32>
    %cst_85 = arith.constant 1.000000e+00 : f32
    %280 = vector.broadcast %cst_85 : f32 to vector<2x128xf32>
    %281 = arith.addf %280, %279 : vector<2x128xf32>
    %282 = arith.divf %280, %281 : vector<2x128xf32>
    %283 = vector.extract_strided_slice %264 {offsets = [0, 256], sizes = [2, 128], strides = [1, 1]} : vector<2x384xf32> to vector<2x128xf32>
    %284 = arith.mulf %274, %257 : vector<2x128xf32>
    %285 = arith.truncf %284 : vector<2x128xf32> to vector<2x128xbf16>
    %cst_86 = arith.constant dense<0.000000e+00> : vector<2x128xf32>
    %286 = tpu.matmul %285, %7, %cst_86 {dimension_numbers = #tpu.dot_dimension_numbers<[1], [0], [0], [1], [0, 0, 1, 1], [], []>} : vector<2x128xbf16>, vector<128x128xbf16>, vector<2x128xf32> -> vector<2x128xf32>
    %287 = arith.addf %283, %286 : vector<2x128xf32>
    %288 = math.tanh %287 : vector<2x128xf32>
    %cst_87 = arith.constant 1.000000e+00 : f32
    %289 = vector.broadcast %cst_87 : f32 to vector<2x128xf32>
    %290 = arith.subf %289, %282 : vector<2x128xf32>
    %291 = arith.mulf %290, %257 : vector<2x128xf32>
    %292 = arith.mulf %282, %288 : vector<2x128xf32>
    %293 = arith.addf %291, %292 : vector<2x128xf32>
    %c3_88 = arith.constant 3 : index
    %c0_89 = arith.constant 0 : index
    %c0_90 = arith.constant 0 : index
    %294 = vector.load %arg11[%c3_88, %c0_89, %c0_90] : memref<4x2x128xf32, #tpu.memory_space<vmem>>, vector<1x2x128xf32>
    %295 = vector.shape_cast %294 : vector<1x2x128xf32> to vector<2x128xf32>
    %296 = vector.shape_cast %293 : vector<2x128xf32> to vector<1x2x128xf32>
    tpu.vector_store %arg11[%c3_88, %c0_89, %c0_90], %296 {strides = array<i32>} : memref<4x2x128xf32, #tpu.memory_space<vmem>>, vector<1x2x128xf32>,
    return
  }
}

module attributes {stable_mosaic.version = 11 : i64} {
  func.func @_conv_mm_kernel(%arg0: memref<1152x8xbf16, #tpu.memory_space<vmem>>, %arg1: memref<8x72xbf16, #tpu.memory_space<vmem>>, %arg2: memref<1152x1xf32, #tpu.memory_space<vmem>>, %arg3: memref<1152x72xf32, #tpu.memory_space<vmem>>) attributes {dimension_semantics = [], scalar_prefetch = 0 : i64, scratch_operands = 0 : i64, tpu.core_type = #tpu.core_type<tc>} {
    %c0 = arith.constant 0 : index
    %c0_0 = arith.constant 0 : index
    %0 = vector.load %arg0[%c0, %c0_0] : memref<1152x8xbf16, #tpu.memory_space<vmem>>, vector<1152x8xbf16>
    %c0_1 = arith.constant 0 : index
    %c0_2 = arith.constant 0 : index
    %1 = vector.load %arg1[%c0_1, %c0_2] : memref<8x72xbf16, #tpu.memory_space<vmem>>, vector<8x72xbf16>
    %cst = arith.constant dense<0.000000e+00> : vector<1152x72xf32>
    %2 = tpu.matmul %0, %1, %cst {dimension_numbers = #tpu.dot_dimension_numbers<[1], [0], [0], [1], [0, 0, 1, 1], [], []>} : vector<1152x8xbf16>, vector<8x72xbf16>, vector<1152x72xf32> -> vector<1152x72xf32>
    %c0_3 = arith.constant 0 : index
    %c0_4 = arith.constant 0 : index
    %3 = vector.load %arg2[%c0_3, %c0_4] : memref<1152x1xf32, #tpu.memory_space<vmem>>, vector<1152x1xf32>
    %4 = vector.broadcast %3 : vector<1152x1xf32> to vector<1152x72xf32>
    %5 = arith.addf %2, %4 : vector<1152x72xf32>
    %c0_5 = arith.constant 0 : index
    %c0_6 = arith.constant 0 : index
    %6 = vector.load %arg3[%c0_5, %c0_6] : memref<1152x72xf32, #tpu.memory_space<vmem>>, vector<1152x72xf32>
    tpu.vector_store %arg3[%c0_5, %c0_6], %5 {strides = array<i32>} : memref<1152x72xf32, #tpu.memory_space<vmem>>, vector<1152x72xf32>,
    return
  }
}

module attributes {stable_mosaic.version = 11 : i64} {
  func.func @_conv_mm_kernel(%arg0: memref<9x128xbf16, #tpu.memory_space<vmem>>, %arg1: memref<128x392xbf16, #tpu.memory_space<vmem>>, %arg2: memref<9x1xf32, #tpu.memory_space<vmem>>, %arg3: memref<9x392xf32, #tpu.memory_space<vmem>>) attributes {dimension_semantics = [], scalar_prefetch = 0 : i64, scratch_operands = 0 : i64, tpu.core_type = #tpu.core_type<tc>} {
    %c0 = arith.constant 0 : index
    %c0_0 = arith.constant 0 : index
    %0 = vector.load %arg0[%c0, %c0_0] : memref<9x128xbf16, #tpu.memory_space<vmem>>, vector<9x128xbf16>
    %c0_1 = arith.constant 0 : index
    %c0_2 = arith.constant 0 : index
    %1 = vector.load %arg1[%c0_1, %c0_2] : memref<128x392xbf16, #tpu.memory_space<vmem>>, vector<128x392xbf16>
    %cst = arith.constant dense<0.000000e+00> : vector<9x392xf32>
    %2 = tpu.matmul %0, %1, %cst {dimension_numbers = #tpu.dot_dimension_numbers<[1], [0], [0], [1], [0, 0, 1, 1], [], []>} : vector<9x128xbf16>, vector<128x392xbf16>, vector<9x392xf32> -> vector<9x392xf32>
    %c0_3 = arith.constant 0 : index
    %c0_4 = arith.constant 0 : index
    %3 = vector.load %arg2[%c0_3, %c0_4] : memref<9x1xf32, #tpu.memory_space<vmem>>, vector<9x1xf32>
    %4 = vector.broadcast %3 : vector<9x1xf32> to vector<9x392xf32>
    %5 = arith.addf %2, %4 : vector<9x392xf32>
    %c0_5 = arith.constant 0 : index
    %c0_6 = arith.constant 0 : index
    %6 = vector.load %arg3[%c0_5, %c0_6] : memref<9x392xf32, #tpu.memory_space<vmem>>, vector<9x392xf32>
    tpu.vector_store %arg3[%c0_5, %c0_6], %5 {strides = array<i32>} : memref<9x392xf32, #tpu.memory_space<vmem>>, vector<9x392xf32>,
    return
  }
}

</mosaic_0001>

<llo_original>
// kernel: st_autoencoder_g6.5
$region0: #{st_autoencoder_g6.5}
  #allocation0 [shape = 'u32[]', space=smem, size = 0x4, offset = 0x4, fixed_abs, tag = 'smem constant byte address 0x4 - core index']
  #allocation1 [shape = 'u32[144,128]{1,0:T(1,128)}', space=vmem, size = 0x12000, scoped, tag = 'internal scratch']
  %s0 = inlined_call_operand.vmem [shape: bf16[128,9], index: 0, kind: input, shape index: {}]
  %s1 = inlined_call_operand.vmem [shape: bf16[9,392], index: 1, kind: input, shape index: {}]
  %s2 = inlined_call_operand.vmem [shape: f32[128,1], index: 2, kind: input, shape index: {}]
  %s3 = inlined_call_operand.vmem [shape: f32[128,392], index: 3, kind: output, shape index: {}]
  %s4 = sld [smem:[#allocation0]]
  $region22: #{st_autoencoder_g6.5} parent=0
    _
  %s6 = ssub.s32 1, %s4
  %s7 = scalar_select 0, %s6, %s4
  // Predicated region
  $region2: #{st_autoencoder_g6.5} parent=0 // pred_check
    _
  $region3: #{st_autoencoder_g6.5} parent=0 // pred_check_branch
    %9 = sbr.rel (0) target = $region5
  $region4: #{st_autoencoder_g6.5} parent=0 // pred_region
    _
  $region5: #{st_autoencoder_g6.5} parent=0 // pred_fallthru
    _
  // Predicated region
  $region6: #{st_autoencoder_g6.5} parent=0 // pred_check
    _
  $region7: #{st_autoencoder_g6.5} parent=0 // pred_check_branch
    %11 = sbr.rel (0) target = $region9
  $region8: #{st_autoencoder_g6.5} parent=0 // pred_region
    _
  $region9: #{st_autoencoder_g6.5} parent=0 // pred_fallthru
    _
  // Predicated region
  $region10: #{st_autoencoder_g6.5} parent=0 // pred_check
    _
  $region11: #{st_autoencoder_g6.5} parent=0 // pred_check_branch
    %13 = sbr.rel (0) target = $region13
  $region12: #{st_autoencoder_g6.5} parent=0 // pred_region
    _
  $region13: #{st_autoencoder_g6.5} parent=0 // pred_fallthru
    _
  %v15 = vld [vmem:[%s0] sm:$0xf]
  %v16 = vld [vmem:[%s0 + $0x4] sm:$0xf]
  %v17 = vld [vmem:[%s0 + $0x8] sm:$0xf]
  %v18 = vld [vmem:[%s0 + $0xc] sm:$0xf]
  %v19 = vld [vmem:[%s0 + $0x10] sm:$0xf]
  %v20 = vld [vmem:[%s0 + $0x14] sm:$0xf]
  %v21 = vld [vmem:[%s0 + $0x18] sm:$0xf]
  %v22 = vld [vmem:[%s0 + $0x1c] sm:$0xf]
  %v23 = vld [vmem:[%s0 + $0x20] sm:$0xf]
  %v24 = vld [vmem:[%s0 + $0x24] sm:$0xf]
  %v25 = vld [vmem:[%s0 + $0x28] sm:$0xf]
  %v26 = vld [vmem:[%s0 + $0x2c] sm:$0xf]
  %v27 = vld [vmem:[%s0 + $0x30] sm:$0xf]
  %v28 = vld [vmem:[%s0 + $0x34] sm:$0xf]
  %v29 = vld [vmem:[%s0 + $0x38] sm:$0xf]
  %v30 = vld [vmem:[%s0 + $0x3c] sm:$0xf]
  %v31 = vld [vmem:[%s1] sm:$0xff]
  %v32 = vld [vmem:[%s1 + $0x8] sm:$0xff]
  %v33 = vld [vmem:[%s1 + $0x10] sm:$0x11]
  %v34 = vld [vmem:[%s1 + $0x18] sm:$0x11]
  %v35 = vld [vmem:[%s2] sm:$0xff]
  %v36 = vld [vmem:[%s2 + $0x8] sm:$0xff]
  %v37 = vld [vmem:[%s2 + $0x10] sm:$0xff]
  %v38 = vld [vmem:[%s2 + $0x18] sm:$0xff]
  %v39 = vld [vmem:[%s2 + $0x20] sm:$0xff]
  %v40 = vld [vmem:[%s2 + $0x28] sm:$0xff]
  %v41 = vld [vmem:[%s2 + $0x30] sm:$0xff]
  %v42 = vld [vmem:[%s2 + $0x38] sm:$0xff]
  %v43 = vld [vmem:[%s2 + $0x40] sm:$0xff]
  %v44 = vld [vmem:[%s2 + $0x48] sm:$0xff]
  %v45 = vld [vmem:[%s2 + $0x50] sm:$0xff]
  %v46 = vld [vmem:[%s2 + $0x58] sm:$0xff]
  %v47 = vld [vmem:[%s2 + $0x60] sm:$0xff]
  %v48 = vld [vmem:[%s2 + $0x68] sm:$0xff]
  %v49 = vld [vmem:[%s2 + $0x70] sm:$0xff]
  %v50 = vld [vmem:[%s2 + $0x78] sm:$0xff]
  %52 = vset.pattern.permute.xlu0 0
  %53 = vperm.xlu0 %52, %v35
  %v54 = vpop.permute.xlu0 %53
  %57 = vset.pattern.permute.xlu0 0
  %58 = vperm.xlu0 %57, %v36
  %v59 = vpop.permute.xlu0 %58
  %62 = vset.pattern.permute.xlu0 0
  %63 = vperm.xlu0 %62, %v37
  %v64 = vpop.permute.xlu0 %63
  %67 = vset.pattern.permute.xlu0 0
  %68 = vperm.xlu0 %67, %v38
  %v69 = vpop.permute.xlu0 %68
  %72 = vset.pattern.permute.xlu0 0
  %73 = vperm.xlu0 %72, %v39
  %v74 = vpop.permute.xlu0 %73
  %77 = vset.pattern.permute.xlu0 0
  %78 = vperm.xlu0 %77, %v40
  %v79 = vpop.permute.xlu0 %78
  %82 = vset.pattern.permute.xlu0 0
  %83 = vperm.xlu0 %82, %v41
  %v84 = vpop.permute.xlu0 %83
  %87 = vset.pattern.permute.xlu0 0
  %88 = vperm.xlu0 %87, %v42
  %v89 = vpop.permute.xlu0 %88
  %92 = vset.pattern.permute.xlu0 0
  %93 = vperm.xlu0 %92, %v43
  %v94 = vpop.permute.xlu0 %93
  %97 = vset.pattern.permute.xlu0 0
  %98 = vperm.xlu0 %97, %v44
  %v99 = vpop.permute.xlu0 %98
  %102 = vset.pattern.permute.xlu0 0
  %103 = vperm.xlu0 %102, %v45
  %v104 = vpop.permute.xlu0 %103
  %107 = vset.pattern.permute.xlu0 0
  %108 = vperm.xlu0 %107, %v46
  %v109 = vpop.permute.xlu0 %108
  %112 = vset.pattern.permute.xlu0 0
  %113 = vperm.xlu0 %112, %v47
  %v114 = vpop.permute.xlu0 %113
  %117 = vset.pattern.permute.xlu0 0
  %118 = vperm.xlu0 %117, %v48
  %v119 = vpop.permute.xlu0 %118
  %122 = vset.pattern.permute.xlu0 0
  %123 = vperm.xlu0 %122, %v49
  %v124 = vpop.permute.xlu0 %123
  %127 = vset.pattern.permute.xlu0 0
  %128 = vperm.xlu0 %127, %v50
  %v129 = vpop.permute.xlu0 %128
  %v147 = vunpack.c.l.b16 %v15
  %v148 = vunpack.c.l.b16 %v16
  %v149 = vunpack.c.l.b16 %v17
  %v150 = vunpack.c.l.b16 %v18
  %v151 = vunpack.c.l.b16 %v19
  %v152 = vunpack.c.l.b16 %v20
  %v153 = vunpack.c.l.b16 %v21
  %v154 = vunpack.c.l.b16 %v22
  %v155 = vunpack.c.l.b16 %v23
  %v156 = vunpack.c.l.b16 %v24
  %v157 = vunpack.c.l.b16 %v25
  %v158 = vunpack.c.l.b16 %v26
  %v159 = vunpack.c.l.b16 %v27
  %v160 = vunpack.c.l.b16 %v28
  %v161 = vunpack.c.l.b16 %v29
  %v162 = vunpack.c.l.b16 %v30
  %v163 = vpack.c.b16 %v148, %v147
  %v164 = vpack.c.b16 %v150, %v149
  %v165 = vpack.c.b16 %v152, %v151
  %v166 = vpack.c.b16 %v154, %v153
  %v167 = vpack.c.b16 %v156, %v155
  %v168 = vpack.c.b16 %v158, %v157
  %v169 = vpack.c.b16 %v160, %v159
  %v170 = vpack.c.b16 %v162, %v161
  %v175 = vunpack.c.l.b16 %v31
  %v176 = vunpack.c.h.b16 %v31
  %v177 = vunpack.c.l.b16 %v32
  %v178 = vunpack.c.h.b16 %v32
  %v179 = vunpack.c.l.b16 %v33
  %v180 = vunpack.c.h.b16 %v33
  %v181 = vunpack.c.l.b16 %v34
  %v182 = vunpack.c.h.b16 %v34
  %v183 = vpack.c.b16 %v179, %v175
  %v184 = vpack.c.b16 %v180, %v176
  %v185 = vpack.c.b16 %v181, %v177
  %v186 = vpack.c.b16 %v182, %v178
  %vm187 = vcmask 72704
  %v189 = vsel %vm187, %v163, 0
  %v192 = vsel %vm187, %v164, 0
  %v195 = vsel %vm187, %v165, 0
  %v198 = vsel %vm187, %v166, 0
  %v201 = vsel %vm187, %v167, 0
  %v204 = vsel %vm187, %v168, 0
  %v207 = vsel %vm187, %v169, 0
  %v210 = vsel %vm187, %v170, 0
  %vm212 = vcmask 1043456
  %vm213 = vcmask 1044480
  %v214 = vsel %vm212, 4294967295, 65535
  %v215 = vsel %vm213, %v214, 0
  %v217 = vand.u32 %v183, %v215
  %v220 = vand.u32 %v184, %v215
  %v223 = vand.u32 %v185, %v215
  %v226 = vand.u32 %v186, %v215
  %228 = vmatprep.subr.bf16.mxu0 %v220
  %229 = vmatpush1.bf16.msra.mxu0 %v217
  %230 = vmatprep.subr.bf16.mxu0 0
  %231 = vmatpush1.bf16.msra.mxu0 0
  %232 = vmatprep.subr.bf16.mxu0 0
  %233 = vmatpush1.bf16.msra.mxu0 0
  %234 = vmatprep.subr.bf16.mxu0 0
  %235 = vmatpush1.bf16.msra.mxu0 0
  %236 = vmatprep.subr.bf16.mxu0 0
  %237 = vmatpush1.bf16.msra.mxu0 0
  %238 = vmatprep.subr.bf16.mxu0 0
  %239 = vmatpush1.bf16.msra.mxu0 0
  %240 = vmatprep.subr.bf16.mxu0 0
  %241 = vmatpush1.bf16.msra.mxu0 0
  %242 = vmatprep.subr.bf16.mxu0 0
  %243 = vmatpush1.bf16.msra.mxu0 0
  %244 = vmatprep.subr.bf16.mxu0 0
  %245 = vmatpush1.bf16.msra.mxu0 0
  %246 = vmatprep.subr.bf16.mxu0 0
  %247 = vmatpush1.bf16.msra.mxu0 0
  %248 = vmatprep.subr.bf16.mxu0 0
  %249 = vmatpush1.bf16.msra.mxu0 0
  %250 = vmatprep.subr.bf16.mxu0 0
  %251 = vmatpush1.bf16.msra.mxu0 0
  %252 = vmatprep.subr.bf16.mxu0 0
  %253 = vmatpush1.bf16.msra.mxu0 0
  %254 = vmatprep.subr.bf16.mxu0 0
  %255 = vmatpush1.bf16.msra.mxu0 0
  %256 = vmatprep.subr.bf16.mxu0 0
  %257 = vmatpush1.bf16.msra.mxu0 0
  %258 = vmatprep.subr.bf16.mxu0 0
  %259 = vmatpush1.bf16.msra.mxu0 0
  %260 = vmatprep.mubr.bf16.mxu0 0
  %261 = vmatmul.mubr.bf16.gmra.mrb[0].mxu0 %v189
  %v262 = vpop.f32.mrb[0].mxu0
  %v263 = vadd.f32 %v54, %v262
  %v264 = vpop.f32.mrb[0].mxu0
  %v265 = vadd.f32 %v54, %v264
  %v266 = vpop.f32.mrb[0].mxu0
  %v267 = vadd.f32 %v59, %v266
  %v268 = vpop.f32.mrb[0].mxu0
  %v269 = vadd.f32 %v59, %v268
  %270 = vmatprep.mubr.bf16.mxu0 0
  %271 = vmatmul.mubr.bf16.gmra.mrb[0].mxu0 %v192
  %v272 = vpop.f32.mrb[0].mxu0
  %v273 = vadd.f32 %v64, %v272
  %v274 = vpop.f32.mrb[0].mxu0
  %v275 = vadd.f32 %v64, %v274
  %v276 = vpop.f32.mrb[0].mxu0
  %v277 = vadd.f32 %v69, %v276
  %v278 = vpop.f32.mrb[0].mxu0
  %v279 = vadd.f32 %v69, %v278
  %280 = vmatprep.mubr.bf16.mxu0 0
  %281 = vmatmul.mubr.bf16.gmra.mrb[0].mxu0 %v195
  %v282 = vpop.f32.mrb[0].mxu0
  %v283 = vadd.f32 %v74, %v282
  %v284 = vpop.f32.mrb[0].mxu0
  %v285 = vadd.f32 %v74, %v284
  %v286 = vpop.f32.mrb[0].mxu0
  %v287 = vadd.f32 %v79, %v286
  %v288 = vpop.f32.mrb[0].mxu0
  %v289 = vadd.f32 %v79, %v288
  %290 = vmatprep.mubr.bf16.mxu0 0
  %291 = vmatmul.mubr.bf16.gmra.mrb[0].mxu0 %v198
  %v292 = vpop.f32.mrb[0].mxu0
  %v293 = vadd.f32 %v84, %v292
  %v294 = vpop.f32.mrb[0].mxu0
  %v295 = vadd.f32 %v84, %v294
  %v296 = vpop.f32.mrb[0].mxu0
  %v297 = vadd.f32 %v89, %v296
  %v298 = vpop.f32.mrb[0].mxu0
  %v299 = vadd.f32 %v89, %v298
  %300 = vmatprep.mubr.bf16.mxu0 0
  %301 = vmatmul.mubr.bf16.gmra.mrb[0].mxu0 %v201
  %v302 = vpop.f32.mrb[0].mxu0
  %v303 = vadd.f32 %v94, %v302
  %v304 = vpop.f32.mrb[0].mxu0
  %v305 = vadd.f32 %v94, %v304
  %v306 = vpop.f32.mrb[0].mxu0
  %v307 = vadd.f32 %v99, %v306
  %v308 = vpop.f32.mrb[0].mxu0
  %v309 = vadd.f32 %v99, %v308
  %310 = vmatprep.mubr.bf16.mxu0 0
  %311 = vmatmul.mubr.bf16.gmra.mrb[0].mxu0 %v204
  %v312 = vpop.f32.mrb[0].mxu0
  %v313 = vadd.f32 %v104, %v312
  %v314 = vpop.f32.mrb[0].mxu0
  %v315 = vadd.f32 %v104, %v314
  %v316 = vpop.f32.mrb[0].mxu0
  %v317 = vadd.f32 %v109, %v316
  %v318 = vpop.f32.mrb[0].mxu0
  %v319 = vadd.f32 %v109, %v318
  %320 = vmatprep.mubr.bf16.mxu0 0
  %321 = vmatmul.mubr.bf16.gmra.mrb[0].mxu0 %v207
  %v322 = vpop.f32.mrb[0].mxu0
  %v323 = vadd.f32 %v114, %v322
  %v324 = vpop.f32.mrb[0].mxu0
  %v325 = vadd.f32 %v114, %v324
  %v326 = vpop.f32.mrb[0].mxu0
  %v327 = vadd.f32 %v119, %v326
  %v328 = vpop.f32.mrb[0].mxu0
  %v329 = vadd.f32 %v119, %v328
  %330 = vmatprep.mubr.bf16.mxu0 0
  %331 = vmatmul.mubr.bf16.gmra.mrb[0].mxu0 %v210
  %v332 = vpop.f32.mrb[0].mxu0
  %v333 = vadd.f32 %v124, %v332
  %v334 = vpop.f32.mrb[0].mxu0
  %v335 = vadd.f32 %v124, %v334
  %v336 = vpop.f32.mrb[0].mxu0
  %v337 = vadd.f32 %v129, %v336
  %v338 = vpop.f32.mrb[0].mxu0
  %v339 = vadd.f32 %v129, %v338
  %340 = vdwg.mxu0
  %341 = vmatprep.subr.bf16.mxu0 %v226
  %342 = vmatpush1.bf16.msra.mxu0 %v223
  %343 = vmatprep.subr.bf16.mxu0 0
  %344 = vmatpush1.bf16.msra.mxu0 0
  %345 = vmatprep.subr.bf16.mxu0 0
  %346 = vmatpush1.bf16.msra.mxu0 0
  %347 = vmatprep.subr.bf16.mxu0 0
  %348 = vmatpush1.bf16.msra.mxu0 0
  %349 = vmatprep.subr.bf16.mxu0 0
  %350 = vmatpush1.bf16.msra.mxu0 0
  %351 = vmatprep.subr.bf16.mxu0 0
  %352 = vmatpush1.bf16.msra.mxu0 0
  %353 = vmatprep.subr.bf16.mxu0 0
  %354 = vmatpush1.bf16.msra.mxu0 0
  %355 = vmatprep.subr.bf16.mxu0 0
  %356 = vmatpush1.bf16.msra.mxu0 0
  %357 = vmatprep.subr.bf16.mxu0 0
  %358 = vmatpush1.bf16.msra.mxu0 0
  %359 = vmatprep.subr.bf16.mxu0 0
  %360 = vmatpush1.bf16.msra.mxu0 0
  %361 = vmatprep.subr.bf16.mxu0 0
  %362 = vmatpush1.bf16.msra.mxu0 0
  %363 = vmatprep.subr.bf16.mxu0 0
  %364 = vmatpush1.bf16.msra.mxu0 0
  %365 = vmatprep.subr.bf16.mxu0 0
  %366 = vmatpush1.bf16.msra.mxu0 0
  %367 = vmatprep.subr.bf16.mxu0 0
  %368 = vmatpush1.bf16.msra.mxu0 0
  %369 = vmatprep.subr.bf16.mxu0 0
  %370 = vmatpush1.bf16.msra.mxu0 0
  %371 = vmatprep.subr.bf16.mxu0 0
  %372 = vmatpush1.bf16.msra.mxu0 0
  %373 = vmatprep.mubr.bf16.mxu0 0
  %374 = vmatmul.mubr.bf16.gmra.mrb[0].mxu0 %v189
  %v375 = vpop.f32.mrb[0].mxu0
  %v376 = vadd.f32 %v54, %v375
  %v377 = vpop.f32.mrb[0].mxu0
  %v378 = vadd.f32 %v54, %v377
  %v379 = vpop.f32.mrb[0].mxu0
  %v380 = vadd.f32 %v59, %v379
  %v381 = vpop.f32.mrb[0].mxu0
  %v382 = vadd.f32 %v59, %v381
  %383 = vmatprep.mubr.bf16.mxu0 0
  %384 = vmatmul.mubr.bf16.gmra.mrb[0].mxu0 %v192
  %v385 = vpop.f32.mrb[0].mxu0
  %v386 = vadd.f32 %v64, %v385
  %v387 = vpop.f32.mrb[0].mxu0
  %v388 = vadd.f32 %v64, %v387
  %v389 = vpop.f32.mrb[0].mxu0
  %v390 = vadd.f32 %v69, %v389
  %v391 = vpop.f32.mrb[0].mxu0
  %v392 = vadd.f32 %v69, %v391
  %393 = vmatprep.mubr.bf16.mxu0 0
  %394 = vmatmul.mubr.bf16.gmra.mrb[0].mxu0 %v195
  %v395 = vpop.f32.mrb[0].mxu0
  %v396 = vadd.f32 %v74, %v395
  %v397 = vpop.f32.mrb[0].mxu0
  %v398 = vadd.f32 %v74, %v397
  %v399 = vpop.f32.mrb[0].mxu0
  %v400 = vadd.f32 %v79, %v399
  %v401 = vpop.f32.mrb[0].mxu0
  %v402 = vadd.f32 %v79, %v401
  %403 = vmatprep.mubr.bf16.mxu0 0
  %404 = vmatmul.mubr.bf16.gmra.mrb[0].mxu0 %v198
  %v405 = vpop.f32.mrb[0].mxu0
  %v406 = vadd.f32 %v84, %v405
  %v407 = vpop.f32.mrb[0].mxu0
  %v408 = vadd.f32 %v84, %v407
  %v409 = vpop.f32.mrb[0].mxu0
  %v410 = vadd.f32 %v89, %v409
  %v411 = vpop.f32.mrb[0].mxu0
  %v412 = vadd.f32 %v89, %v411
  %413 = vmatprep.mubr.bf16.mxu0 0
  %414 = vmatmul.mubr.bf16.gmra.mrb[0].mxu0 %v201
  %v415 = vpop.f32.mrb[0].mxu0
  %v416 = vadd.f32 %v94, %v415
  %v417 = vpop.f32.mrb[0].mxu0
  %v418 = vadd.f32 %v94, %v417
  %v419 = vpop.f32.mrb[0].mxu0
  %v420 = vadd.f32 %v99, %v419
  %v421 = vpop.f32.mrb[0].mxu0
  %v422 = vadd.f32 %v99, %v421
  %423 = vmatprep.mubr.bf16.mxu0 0
  %424 = vmatmul.mubr.bf16.gmra.mrb[0].mxu0 %v204
  %v425 = vpop.f32.mrb[0].mxu0
  %v426 = vadd.f32 %v104, %v425
  %v427 = vpop.f32.mrb[0].mxu0
  %v428 = vadd.f32 %v104, %v427
  %v429 = vpop.f32.mrb[0].mxu0
  %v430 = vadd.f32 %v109, %v429
  %v431 = vpop.f32.mrb[0].mxu0
  %v432 = vadd.f32 %v109, %v431
  %433 = vmatprep.mubr.bf16.mxu0 0
  %434 = vmatmul.mubr.bf16.gmra.mrb[0].mxu0 %v207
  %v435 = vpop.f32.mrb[0].mxu0
  %v436 = vadd.f32 %v114, %v435
  %v437 = vpop.f32.mrb[0].mxu0
  %v438 = vadd.f32 %v114, %v437
  %v439 = vpop.f32.mrb[0].mxu0
  %v440 = vadd.f32 %v119, %v439
  %v441 = vpop.f32.mrb[0].mxu0
  %v442 = vadd.f32 %v119, %v441
  %443 = vmatprep.mubr.bf16.mxu0 0
  %444 = vmatmul.mubr.bf16.gmra.mrb[0].mxu0 %v210
  %v445 = vpop.f32.mrb[0].mxu0
  %v446 = vadd.f32 %v124, %v445
  %v447 = vpop.f32.mrb[0].mxu0
  %v448 = vadd.f32 %v124, %v447
  %v449 = vpop.f32.mrb[0].mxu0
  %v450 = vadd.f32 %v129, %v449
  %v451 = vpop.f32.mrb[0].mxu0
  %v452 = vadd.f32 %v129, %v451
  %453 = vdwg.mxu0
  %v454 = vmax.f32 %v263, 0.0
  %v455 = vmax.f32 %v265, 0.0
  %v456 = vmax.f32 %v376, 0.0
  %v457 = vmax.f32 %v378, 0.0
  %v458 = vmax.f32 %v267, 0.0
  %v459 = vmax.f32 %v269, 0.0
  %v460 = vmax.f32 %v380, 0.0
  %v461 = vmax.f32 %v382, 0.0
  %v462 = vmax.f32 %v273, 0.0
  %v463 = vmax.f32 %v275, 0.0
  %v464 = vmax.f32 %v386, 0.0
  %v465 = vmax.f32 %v388, 0.0
  %v466 = vmax.f32 %v277, 0.0
  %v467 = vmax.f32 %v279, 0.0
  %v468 = vmax.f32 %v390, 0.0
  %v469 = vmax.f32 %v392, 0.0
  %v470 = vmax.f32 %v283, 0.0
  %v471 = vmax.f32 %v285, 0.0
  %v472 = vmax.f32 %v396, 0.0
  %v473 = vmax.f32 %v398, 0.0
  %v474 = vmax.f32 %v287, 0.0
  %v475 = vmax.f32 %v289, 0.0
  %v476 = vmax.f32 %v400, 0.0
  %v477 = vmax.f32 %v402, 0.0
  %v478 = vmax.f32 %v293, 0.0
  %v479 = vmax.f32 %v295, 0.0
  %v480 = vmax.f32 %v406, 0.0
  %v481 = vmax.f32 %v408, 0.0
  %v482 = vmax.f32 %v297, 0.0
  %v483 = vmax.f32 %v299, 0.0
  %v484 = vmax.f32 %v410, 0.0
  %v485 = vmax.f32 %v412, 0.0
  %v486 = vmax.f32 %v303, 0.0
  %v487 = vmax.f32 %v305, 0.0
  %v488 = vmax.f32 %v416, 0.0
  %v489 = vmax.f32 %v418, 0.0
  %v490 = vmax.f32 %v307, 0.0
  %v491 = vmax.f32 %v309, 0.0
  %v492 = vmax.f32 %v420, 0.0
  %v493 = vmax.f32 %v422, 0.0
  %v494 = vmax.f32 %v313, 0.0
  %v495 = vmax.f32 %v315, 0.0
  %v496 = vmax.f32 %v426, 0.0
  %v497 = vmax.f32 %v428, 0.0
  %v498 = vmax.f32 %v317, 0.0
  %v499 = vmax.f32 %v319, 0.0
  %v500 = vmax.f32 %v430, 0.0
  %v501 = vmax.f32 %v432, 0.0
  %v502 = vmax.f32 %v323, 0.0
  %v503 = vmax.f32 %v325, 0.0
  %v504 = vmax.f32 %v436, 0.0
  %v505 = vmax.f32 %v438, 0.0
  %v506 = vmax.f32 %v327, 0.0
  %v507 = vmax.f32 %v329, 0.0
  %v508 = vmax.f32 %v440, 0.0
  %v509 = vmax.f32 %v442, 0.0
  %v510 = vmax.f32 %v333, 0.0
  %v511 = vmax.f32 %v335, 0.0
  %v512 = vmax.f32 %v446, 0.0
  %v513 = vmax.f32 %v448, 0.0
  %v514 = vmax.f32 %v337, 0.0
  %v515 = vmax.f32 %v339, 0.0
  %v516 = vmax.f32 %v450, 0.0
  %v517 = vmax.f32 %v452, 0.0
  %518 = vst [vmem:[%s3] sm:$0xff] %v454
  %519 = vst [vmem:[%s3 + $0x8] sm:$0xff] %v455
  %520 = vst [vmem:[%s3 + $0x10] sm:$0xff] %v456
  %vm521 = vcmask 64512
  %522 = vst.msk [vmem:[%s3 + $0x18] sm:$0xff] %vm521, %v457
  %523 = vst [vmem:[%s3 + $0x20] sm:$0xff] %v458
  %524 = vst [vmem:[%s3 + $0x28] sm:$0xff] %v459
  %525 = vst [vmem:[%s3 + $0x30] sm:$0xff] %v460
  %526 = vst.msk [vmem:[%s3 + $0x38] sm:$0xff] %vm521, %v461
  %527 = vst [vmem:[%s3 + $0x40] sm:$0xff] %v462
  %528 = vst [vmem:[%s3 + $0x48] sm:$0xff] %v463
  %529 = vst [vmem:[%s3 + $0x50] sm:$0xff] %v464
  %530 = vst.msk [vmem:[%s3 + $0x58] sm:$0xff] %vm521, %v465
  %531 = vst [vmem:[%s3 + $0x60] sm:$0xff] %v466
  %532 = vst [vmem:[%s3 + $0x68] sm:$0xff] %v467
  %533 = vst [vmem:[%s3 + $0x70] sm:$0xff] %v468
  %534 = vst.msk [vmem:[%s3 + $0x78] sm:$0xff] %vm521, %v469
  %535 = vst [vmem:[%s3 + $0x80] sm:$0xff] %v470
  %536 = vst [vmem:[%s3 + $0x88] sm:$0xff] %v471
  %537 = vst [vmem:[%s3 + $0x90] sm:$0xff] %v472
  %538 = vst.msk [vmem:[%s3 + $0x98] sm:$0xff] %vm521, %v473
  %539 = vst [vmem:[%s3 + $0xa0] sm:$0xff] %v474
  %540 = vst [vmem:[%s3 + $0xa8] sm:$0xff] %v475
  %541 = vst [vmem:[%s3 + $0xb0] sm:$0xff] %v476
  %542 = vst.msk [vmem:[%s3 + $0xb8] sm:$0xff] %vm521, %v477
  %543 = vst [vmem:[%s3 + $0xc0] sm:$0xff] %v478
  %544 = vst [vmem:[%s3 + $0xc8] sm:$0xff] %v479
  %545 = vst [vmem:[%s3 + $0xd0] sm:$0xff] %v480
  %546 = vst.msk [vmem:[%s3 + $0xd8] sm:$0xff] %vm521, %v481
  %547 = vst [vmem:[%s3 + $0xe0] sm:$0xff] %v482
  %548 = vst [vmem:[%s3 + $0xe8] sm:$0xff] %v483
  %549 = vst [vmem:[%s3 + $0xf0] sm:$0xff] %v484
  %550 = vst.msk [vmem:[%s3 + $0xf8] sm:$0xff] %vm521, %v485
  %551 = vst [vmem:[%s3 + $0x100] sm:$0xff] %v486
  %552 = vst [vmem:[%s3 + $0x108] sm:$0xff] %v487
  %553 = vst [vmem:[%s3 + $0x110] sm:$0xff] %v488
  %554 = vst.msk [vmem:[%s3 + $0x118] sm:$0xff] %vm521, %v489
  %555 = vst [vmem:[%s3 + $0x120] sm:$0xff] %v490
  %556 = vst [vmem:[%s3 + $0x128] sm:$0xff] %v491
  %557 = vst [vmem:[%s3 + $0x130] sm:$0xff] %v492
  %558 = vst.msk [vmem:[%s3 + $0x138] sm:$0xff] %vm521, %v493
  %559 = vst [vmem:[%s3 + $0x140] sm:$0xff] %v494
  %560 = vst [vmem:[%s3 + $0x148] sm:$0xff] %v495
  %561 = vst [vmem:[%s3 + $0x150] sm:$0xff] %v496
  %562 = vst.msk [vmem:[%s3 + $0x158] sm:$0xff] %vm521, %v497
  %563 = vst [vmem:[%s3 + $0x160] sm:$0xff] %v498
  %564 = vst [vmem:[%s3 + $0x168] sm:$0xff] %v499
  %565 = vst [vmem:[%s3 + $0x170] sm:$0xff] %v500
  %566 = vst.msk [vmem:[%s3 + $0x178] sm:$0xff] %vm521, %v501
  %567 = vst [vmem:[%s3 + $0x180] sm:$0xff] %v502
  %568 = vst [vmem:[%s3 + $0x188] sm:$0xff] %v503
  %569 = vst [vmem:[%s3 + $0x190] sm:$0xff] %v504
  %570 = vst.msk [vmem:[%s3 + $0x198] sm:$0xff] %vm521, %v505
  %571 = vst [vmem:[%s3 + $0x1a0] sm:$0xff] %v506
  %572 = vst [vmem:[%s3 + $0x1a8] sm:$0xff] %v507
  %573 = vst [vmem:[%s3 + $0x1b0] sm:$0xff] %v508
  %574 = vst.msk [vmem:[%s3 + $0x1b8] sm:$0xff] %vm521, %v509
  %575 = vst [vmem:[%s3 + $0x1c0] sm:$0xff] %v510
  %576 = vst [vmem:[%s3 + $0x1c8] sm:$0xff] %v511
  %577 = vst [vmem:[%s3 + $0x1d0] sm:$0xff] %v512
  %578 = vst.msk [vmem:[%s3 + $0x1d8] sm:$0xff] %vm521, %v513
  %579 = vst [vmem:[%s3 + $0x1e0] sm:$0xff] %v514
  %580 = vst [vmem:[%s3 + $0x1e8] sm:$0xff] %v515
  %581 = vst [vmem:[%s3 + $0x1f0] sm:$0xff] %v516
  %582 = vst.msk [vmem:[%s3 + $0x1f8] sm:$0xff] %vm521, %v517
  // Predicated region
  $region14: #{st_autoencoder_g6.5} parent=0 // pred_check
    _
  $region15: #{st_autoencoder_g6.5} parent=0 // pred_check_branch
    %584 = sbr.rel (0) target = $region17
  $region16: #{st_autoencoder_g6.5} parent=0 // pred_region
    _
  $region17: #{st_autoencoder_g6.5} parent=0 // pred_fallthru
    _
  // Predicated region
  $region18: #{st_autoencoder_g6.5} parent=0 // pred_check
    _
  $region19: #{st_autoencoder_g6.5} parent=0 // pred_check_branch
    %586 = sbr.rel (0) target = $region21
  $region20: #{st_autoencoder_g6.5} parent=0 // pred_region
    _
  $region21: #{st_autoencoder_g6.5} parent=0 // pred_fallthru
    _

// kernel: st_autoencoder_g6.6
$region0: #{st_autoencoder_g6.6}
  #allocation0 [shape = 'u32[]', space=smem, size = 0x4, offset = 0x4, fixed_abs, tag = 'smem constant byte address 0x4 - core index']
  #allocation1 [shape = 'u32[144,128]{1,0:T(1,128)}', space=vmem, size = 0x12000, scoped, tag = 'internal scratch']
  %s0 = inlined_call_operand.vmem [shape: bf16[32,1152], index: 0, kind: input, shape index: {}]
  %s1 = inlined_call_operand.vmem [shape: bf16[1152,72], index: 1, kind: input, shape index: {}]
  %s2 = inlined_call_operand.vmem [shape: f32[32,1], index: 2, kind: input, shape index: {}]
  %s3 = inlined_call_operand.vmem [shape: f32[32,72], index: 3, kind: output, shape index: {}]
  %s4 = sld [smem:[#allocation0]]
  $region22: #{st_autoencoder_g6.6} parent=0
    _
  %s6 = ssub.s32 1, %s4
  %s7 = scalar_select 0, %s6, %s4
  // Predicated region
  $region2: #{st_autoencoder_g6.6} parent=0 // pred_check
    _
  $region3: #{st_autoencoder_g6.6} parent=0 // pred_check_branch
    %9 = sbr.rel (0) target = $region5
  $region4: #{st_autoencoder_g6.6} parent=0 // pred_region
    _
  $region5: #{st_autoencoder_g6.6} parent=0 // pred_fallthru
    _
  // Predicated region
  $region6: #{st_autoencoder_g6.6} parent=0 // pred_check
    _
  $region7: #{st_autoencoder_g6.6} parent=0 // pred_check_branch
    %11 = sbr.rel (0) target = $region9
  $region8: #{st_autoencoder_g6.6} parent=0 // pred_region
    _
  $region9: #{st_autoencoder_g6.6} parent=0 // pred_fallthru
    _
  // Predicated region
  $region10: #{st_autoencoder_g6.6} parent=0 // pred_check
    _
  $region11: #{st_autoencoder_g6.6} parent=0 // pred_check_branch
    %13 = sbr.rel (0) target = $region13
  $region12: #{st_autoencoder_g6.6} parent=0 // pred_region
    _
  $region13: #{st_autoencoder_g6.6} parent=0 // pred_fallthru
    _
  %v15 = vld [vmem:[%s0] sm:$0xff]
  %v16 = vld [vmem:[%s0 + $0x8] sm:$0xff]
  %v17 = vld [vmem:[%s0 + $0x10] sm:$0xff]
  %v18 = vld [vmem:[%s0 + $0x18] sm:$0xff]
  %v19 = vld [vmem:[%s0 + $0x20] sm:$0xf]
  %v20 = vld [vmem:[%s0 + $0x24] sm:$0xff]
  %v21 = vld [vmem:[%s0 + $0x2c] sm:$0xff]
  %v22 = vld [vmem:[%s0 + $0x34] sm:$0xff]
  %v23 = vld [vmem:[%s0 + $0x3c] sm:$0xff]
  %v24 = vld [vmem:[%s0 + $0x44] sm:$0xf]
  %v25 = vld [vmem:[%s0 + $0x48] sm:$0xff]
  %v26 = vld [vmem:[%s0 + $0x50] sm:$0xff]
  %v27 = vld [vmem:[%s0 + $0x58] sm:$0xff]
  %v28 = vld [vmem:[%s0 + $0x60] sm:$0xff]
  %v29 = vld [vmem:[%s0 + $0x68] sm:$0xf]
  %v30 = vld [vmem:[%s0 + $0x6c] sm:$0xff]
  %v31 = vld [vmem:[%s0 + $0x74] sm:$0xff]
  %v32 = vld [vmem:[%s0 + $0x7c] sm:$0xff]
  %v33 = vld [vmem:[%s0 + $0x84] sm:$0xff]
  %v34 = vld [vmem:[%s0 + $0x8c] sm:$0xf]
  %v35 = vld [vmem:[%s1] sm:$0xf]
  %v36 = vld [vmem:[%s1 + $0x4] sm:$0xf]
  %v37 = vld [vmem:[%s1 + $0x8] sm:$0xf]
  %v38 = vld [vmem:[%s1 + $0xc] sm:$0xf]
  %v39 = vld [vmem:[%s1 + $0x10] sm:$0xf]
  %v40 = vld [vmem:[%s1 + $0x14] sm:$0xf]
  %v41 = vld [vmem:[%s1 + $0x18] sm:$0xf]
  %v42 = vld [vmem:[%s1 + $0x1c] sm:$0xf]
  %v43 = vld [vmem:[%s1 + $0x20] sm:$0xf]
  %v44 = vld [vmem:[%s1 + $0x24] sm:$0xf]
  %v45 = vld [vmem:[%s1 + $0x28] sm:$0xf]
  %v46 = vld [vmem:[%s1 + $0x2c] sm:$0xf]
  %v47 = vld [vmem:[%s1 + $0x30] sm:$0xf]
  %v48 = vld [vmem:[%s1 + $0x34] sm:$0xf]
  %v49 = vld [vmem:[%s1 + $0x38] sm:$0xf]
  %v50 = vld [vmem:[%s1 + $0x3c] sm:$0xf]
  %v51 = vld [vmem:[%s1 + $0x40] sm:$0xf]
  %v52 = vld [vmem:[%s1 + $0x44] sm:$0xf]
  %v53 = vld [vmem:[%s1 + $0x48] sm:$0xf]
  %v54 = vld [vmem:[%s1 + $0x4c] sm:$0xf]
  %v55 = vld [vmem:[%s1 + $0x50] sm:$0xf]
  %v56 = vld [vmem:[%s1 + $0x54] sm:$0xf]
  %v57 = vld [vmem:[%s1 + $0x58] sm:$0xf]
  %v58 = vld [vmem:[%s1 + $0x5c] sm:$0xf]
  %v59 = vld [vmem:[%s1 + $0x60] sm:$0xf]
  %v60 = vld [vmem:[%s1 + $0x64] sm:$0xf]
  %v61 = vld [vmem:[%s1 + $0x68] sm:$0xf]
  %v62 = vld [vmem:[%s1 + $0x6c] sm:$0xf]
  %v63 = vld [vmem:[%s1 + $0x70] sm:$0xf]
  %v64 = vld [vmem:[%s1 + $0x74] sm:$0xf]
  %v65 = vld [vmem:[%s1 + $0x78] sm:$0xf]
  %v66 = vld [vmem:[%s1 + $0x7c] sm:$0xf]
  %v67 = vld [vmem:[%s1 + $0x80] sm:$0xf]
  %v68 = vld [vmem:[%s1 + $0x84] sm:$0xf]
  %v69 = vld [vmem:[%s1 + $0x88] sm:$0xf]
  %v70 = vld [vmem:[%s1 + $0x8c] sm:$0xf]
  %v71 = vld [vmem:[%s1 + $0x90] sm:$0xf]
  %v72 = vld [vmem:[%s1 + $0x94] sm:$0xf]
  %v73 = vld [vmem:[%s1 + $0x98] sm:$0xf]
  %v74 = vld [vmem:[%s1 + $0x9c] sm:$0xf]
  %v75 = vld [vmem:[%s1 + $0xa0] sm:$0xf]
  %v76 = vld [vmem:[%s1 + $0xa4] sm:$0xf]
  %v77 = vld [vmem:[%s1 + $0xa8] sm:$0xf]
  %v78 = vld [vmem:[%s1 + $0xac] sm:$0xf]
  %v79 = vld [vmem:[%s1 + $0xb0] sm:$0xf]
  %v80 = vld [vmem:[%s1 + $0xb4] sm:$0xf]
  %v81 = vld [vmem:[%s1 + $0xb8] sm:$0xf]
  %v82 = vld [vmem:[%s1 + $0xbc] sm:$0xf]
  %v83 = vld [vmem:[%s1 + $0xc0] sm:$0xf]
  %v84 = vld [vmem:[%s1 + $0xc4] sm:$0xf]
  %v85 = vld [vmem:[%s1 + $0xc8] sm:$0xf]
  %v86 = vld [vmem:[%s1 + $0xcc] sm:$0xf]
  %v87 = vld [vmem:[%s1 + $0xd0] sm:$0xf]
  %v88 = vld [vmem:[%s1 + $0xd4] sm:$0xf]
  %v89 = vld [vmem:[%s1 + $0xd8] sm:$0xf]
  %v90 = vld [vmem:[%s1 + $0xdc] sm:$0xf]
  %v91 = vld [vmem:[%s1 + $0xe0] sm:$0xf]
  %v92 = vld [vmem:[%s1 + $0xe4] sm:$0xf]
  %v93 = vld [vmem:[%s1 + $0xe8] sm:$0xf]
  %v94 = vld [vmem:[%s1 + $0xec] sm:$0xf]
  %v95 = vld [vmem:[%s1 + $0xf0] sm:$0xf]
  %v96 = vld [vmem:[%s1 + $0xf4] sm:$0xf]
  %v97 = vld [vmem:[%s1 + $0xf8] sm:$0xf]
  %v98 = vld [vmem:[%s1 + $0xfc] sm:$0xf]
  %v99 = vld [vmem:[%s1 + $0x100] sm:$0xf]
  %v100 = vld [vmem:[%s1 + $0x104] sm:$0xf]
  %v101 = vld [vmem:[%s1 + $0x108] sm:$0xf]
  %v102 = vld [vmem:[%s1 + $0x10c] sm:$0xf]
  %v103 = vld [vmem:[%s1 + $0x110] sm:$0xf]
  %v104 = vld [vmem:[%s1 + $0x114] sm:$0xf]
  %v105 = vld [vmem:[%s1 + $0x118] sm:$0xf]
  %v106 = vld [vmem:[%s1 + $0x11c] sm:$0xf]
  %v107 = vld [vmem:[%s1 + $0x120] sm:$0xf]
  %v108 = vld [vmem:[%s1 + $0x124] sm:$0xf]
  %v109 = vld [vmem:[%s1 + $0x128] sm:$0xf]
  %v110 = vld [vmem:[%s1 + $0x12c] sm:$0xf]
  %v111 = vld [vmem:[%s1 + $0x130] sm:$0xf]
  %v112 = vld [vmem:[%s1 + $0x134] sm:$0xf]
  %v113 = vld [vmem:[%s1 + $0x138] sm:$0xf]
  %v114 = vld [vmem:[%s1 + $0x13c] sm:$0xf]
  %v115 = vld [vmem:[%s1 + $0x140] sm:$0xf]
  %v116 = vld [vmem:[%s1 + $0x144] sm:$0xf]
  %v117 = vld [vmem:[%s1 + $0x148] sm:$0xf]
  %v118 = vld [vmem:[%s1 + $0x14c] sm:$0xf]
  %v119 = vld [vmem:[%s1 + $0x150] sm:$0xf]
  %v120 = vld [vmem:[%s1 + $0x154] sm:$0xf]
  %v121 = vld [vmem:[%s1 + $0x158] sm:$0xf]
  %v122 = vld [vmem:[%s1 + $0x15c] sm:$0xf]
  %v123 = vld [vmem:[%s1 + $0x160] sm:$0xf]
  %v124 = vld [vmem:[%s1 + $0x164] sm:$0xf]
  %v125 = vld [vmem:[%s1 + $0x168] sm:$0xf]
  %v126 = vld [vmem:[%s1 + $0x16c] sm:$0xf]
  %v127 = vld [vmem:[%s1 + $0x170] sm:$0xf]
  %v128 = vld [vmem:[%s1 + $0x174] sm:$0xf]
  %v129 = vld [vmem:[%s1 + $0x178] sm:$0xf]
  %v130 = vld [vmem:[%s1 + $0x17c] sm:$0xf]
  %v131 = vld [vmem:[%s1 + $0x180] sm:$0xf]
  %v132 = vld [vmem:[%s1 + $0x184] sm:$0xf]
  %v133 = vld [vmem:[%s1 + $0x188] sm:$0xf]
  %v134 = vld [vmem:[%s1 + $0x18c] sm:$0xf]
  %v135 = vld [vmem:[%s1 + $0x190] sm:$0xf]
  %v136 = vld [vmem:[%s1 + $0x194] sm:$0xf]
  %v137 = vld [vmem:[%s1 + $0x198] sm:$0xf]
  %v138 = vld [vmem:[%s1 + $0x19c] sm:$0xf]
  %v139 = vld [vmem:[%s1 + $0x1a0] sm:$0xf]
  %v140 = vld [vmem:[%s1 + $0x1a4] sm:$0xf]
  %v141 = vld [vmem:[%s1 + $0x1a8] sm:$0xf]
  %v142 = vld [vmem:[%s1 + $0x1ac] sm:$0xf]
  %v143 = vld [vmem:[%s1 + $0x1b0] sm:$0xf]
  %v144 = vld [vmem:[%s1 + $0x1b4] sm:$0xf]
  %v145 = vld [vmem:[%s1 + $0x1b8] sm:$0xf]
  %v146 = vld [vmem:[%s1 + $0x1bc] sm:$0xf]
  %v147 = vld [vmem:[%s1 + $0x1c0] sm:$0xf]
  %v148 = vld [vmem:[%s1 + $0x1c4] sm:$0xf]
  %v149 = vld [vmem:[%s1 + $0x1c8] sm:$0xf]
  %v150 = vld [vmem:[%s1 + $0x1cc] sm:$0xf]
  %v151 = vld [vmem:[%s1 + $0x1d0] sm:$0xf]
  %v152 = vld [vmem:[%s1 + $0x1d4] sm:$0xf]
  %v153 = vld [vmem:[%s1 + $0x1d8] sm:$0xf]
  %v154 = vld [vmem:[%s1 + $0x1dc] sm:$0xf]
  %v155 = vld [vmem:[%s1 + $0x1e0] sm:$0xf]
  %v156 = vld [vmem:[%s1 + $0x1e4] sm:$0xf]
  %v157 = vld [vmem:[%s1 + $0x1e8] sm:$0xf]
  %v158 = vld [vmem:[%s1 + $0x1ec] sm:$0xf]
  %v159 = vld [vmem:[%s1 + $0x1f0] sm:$0xf]
  %v160 = vld [vmem:[%s1 + $0x1f4] sm:$0xf]
  %v161 = vld [vmem:[%s1 + $0x1f8] sm:$0xf]
  %v162 = vld [vmem:[%s1 + $0x1fc] sm:$0xf]
  %v163 = vld [vmem:[%s1 + $0x200] sm:$0xf]
  %v164 = vld [vmem:[%s1 + $0x204] sm:$0xf]
  %v165 = vld [vmem:[%s1 + $0x208] sm:$0xf]
  %v166 = vld [vmem:[%s1 + $0x20c] sm:$0xf]
  %v167 = vld [vmem:[%s1 + $0x210] sm:$0xf]
  %v168 = vld [vmem:[%s1 + $0x214] sm:$0xf]
  %v169 = vld [vmem:[%s1 + $0x218] sm:$0xf]
  %v170 = vld [vmem:[%s1 + $0x21c] sm:$0xf]
  %v171 = vld [vmem:[%s1 + $0x220] sm:$0xf]
  %v172 = vld [vmem:[%s1 + $0x224] sm:$0xf]
  %v173 = vld [vmem:[%s1 + $0x228] sm:$0xf]
  %v174 = vld [vmem:[%s1 + $0x22c] sm:$0xf]
  %v175 = vld [vmem:[%s1 + $0x230] sm:$0xf]
  %v176 = vld [vmem:[%s1 + $0x234] sm:$0xf]
  %v177 = vld [vmem:[%s1 + $0x238] sm:$0xf]
  %v178 = vld [vmem:[%s1 + $0x23c] sm:$0xf]
  %v179 = vld [vmem:[%s2] sm:$0xff]
  %v180 = vld [vmem:[%s2 + $0x8] sm:$0xff]
  %v181 = vld [vmem:[%s2 + $0x10] sm:$0xff]
  %v182 = vld [vmem:[%s2 + $0x18] sm:$0xff]
  %184 = vset.pattern.permute.xlu0 0
  %185 = vperm.xlu0 %184, %v179
  %v186 = vpop.permute.xlu0 %185
  %189 = vset.pattern.permute.xlu0 0
  %190 = vperm.xlu0 %189, %v180
  %v191 = vpop.permute.xlu0 %190
  %194 = vset.pattern.permute.xlu0 0
  %195 = vperm.xlu0 %194, %v181
  %v196 = vpop.permute.xlu0 %195
  %199 = vset.pattern.permute.xlu0 0
  %200 = vperm.xlu0 %199, %v182
  %v201 = vpop.permute.xlu0 %200
  %v223 = vunpack.c.l.b16 %v15
  %v224 = vunpack.c.h.b16 %v15
  %v225 = vunpack.c.l.b16 %v16
  %v226 = vunpack.c.h.b16 %v16
  %v227 = vunpack.c.l.b16 %v17
  %v228 = vunpack.c.h.b16 %v17
  %v229 = vunpack.c.l.b16 %v18
  %v230 = vunpack.c.h.b16 %v18
  %v231 = vunpack.c.l.b16 %v19
  %v232 = vunpack.c.l.b16 %v20
  %v233 = vunpack.c.h.b16 %v20
  %v234 = vunpack.c.l.b16 %v21
  %v235 = vunpack.c.h.b16 %v21
  %v236 = vunpack.c.l.b16 %v22
  %v237 = vunpack.c.h.b16 %v22
  %v238 = vunpack.c.l.b16 %v23
  %v239 = vunpack.c.h.b16 %v23
  %v240 = vunpack.c.l.b16 %v24
  %v241 = vunpack.c.l.b16 %v25
  %v242 = vunpack.c.h.b16 %v25
  %v243 = vunpack.c.l.b16 %v26
  %v244 = vunpack.c.h.b16 %v26
  %v245 = vunpack.c.l.b16 %v27
  %v246 = vunpack.c.h.b16 %v27
  %v247 = vunpack.c.l.b16 %v28
  %v248 = vunpack.c.h.b16 %v28
  %v249 = vunpack.c.l.b16 %v29
  %v250 = vunpack.c.l.b16 %v30
  %v251 = vunpack.c.h.b16 %v30
  %v252 = vunpack.c.l.b16 %v31
  %v253 = vunpack.c.h.b16 %v31
  %v254 = vunpack.c.l.b16 %v32
  %v255 = vunpack.c.h.b16 %v32
  %v256 = vunpack.c.l.b16 %v33
  %v257 = vunpack.c.h.b16 %v33
  %v258 = vunpack.c.l.b16 %v34
  %v259 = vpack.c.b16 %v232, %v223
  %v260 = vpack.c.b16 %v233, %v224
  %v261 = vpack.c.b16 %v234, %v225
  %v262 = vpack.c.b16 %v235, %v226
  %v263 = vpack.c.b16 %v236, %v227
  %v264 = vpack.c.b16 %v237, %v228
  %v265 = vpack.c.b16 %v238, %v229
  %v266 = vpack.c.b16 %v239, %v230
  %v267 = vpack.c.b16 %v240, %v231
  %v268 = vpack.c.b16 %v250, %v241
  %v269 = vpack.c.b16 %v251, %v242
  %v270 = vpack.c.b16 %v252, %v243
  %v271 = vpack.c.b16 %v253, %v244
  %v272 = vpack.c.b16 %v254, %v245
  %v273 = vpack.c.b16 %v255, %v246
  %v274 = vpack.c.b16 %v256, %v247
  %v275 = vpack.c.b16 %v257, %v248
  %v276 = vpack.c.b16 %v258, %v249
  %v439 = vunpack.c.l.b16 %v35
  %v440 = vunpack.c.l.b16 %v36
  %v441 = vunpack.c.l.b16 %v37
  %v442 = vunpack.c.l.b16 %v38
  %v443 = vunpack.c.l.b16 %v39
  %v444 = vunpack.c.l.b16 %v40
  %v445 = vunpack.c.l.b16 %v41
  %v446 = vunpack.c.l.b16 %v42
  %v447 = vunpack.c.l.b16 %v43
  %v448 = vunpack.c.l.b16 %v44
  %v449 = vunpack.c.l.b16 %v45
  %v450 = vunpack.c.l.b16 %v46
  %v451 = vunpack.c.l.b16 %v47
  %v452 = vunpack.c.l.b16 %v48
  %v453 = vunpack.c.l.b16 %v49
  %v454 = vunpack.c.l.b16 %v50
  %v455 = vunpack.c.l.b16 %v51
  %v456 = vunpack.c.l.b16 %v52
  %v457 = vunpack.c.l.b16 %v53
  %v458 = vunpack.c.l.b16 %v54
  %v459 = vunpack.c.l.b16 %v55
  %v460 = vunpack.c.l.b16 %v56
  %v461 = vunpack.c.l.b16 %v57
  %v462 = vunpack.c.l.b16 %v58
  %v463 = vunpack.c.l.b16 %v59
  %v464 = vunpack.c.l.b16 %v60
  %v465 = vunpack.c.l.b16 %v61
  %v466 = vunpack.c.l.b16 %v62
  %v467 = vunpack.c.l.b16 %v63
  %v468 = vunpack.c.l.b16 %v64
  %v469 = vunpack.c.l.b16 %v65
  %v470 = vunpack.c.l.b16 %v66
  %v471 = vunpack.c.l.b16 %v67
  %v472 = vunpack.c.l.b16 %v68
  %v473 = vunpack.c.l.b16 %v69
  %v474 = vunpack.c.l.b16 %v70
  %v475 = vunpack.c.l.b16 %v71
  %v476 = vunpack.c.l.b16 %v72
  %v477 = vunpack.c.l.b16 %v73
  %v478 = vunpack.c.l.b16 %v74
  %v479 = vunpack.c.l.b16 %v75
  %v480 = vunpack.c.l.b16 %v76
  %v481 = vunpack.c.l.b16 %v77
  %v482 = vunpack.c.l.b16 %v78
  %v483 = vunpack.c.l.b16 %v79
  %v484 = vunpack.c.l.b16 %v80
  %v485 = vunpack.c.l.b16 %v81
  %v486 = vunpack.c.l.b16 %v82
  %v487 = vunpack.c.l.b16 %v83
  %v488 = vunpack.c.l.b16 %v84
  %v489 = vunpack.c.l.b16 %v85
  %v490 = vunpack.c.l.b16 %v86
  %v491 = vunpack.c.l.b16 %v87
  %v492 = vunpack.c.l.b16 %v88
  %v493 = vunpack.c.l.b16 %v89
  %v494 = vunpack.c.l.b16 %v90
  %v495 = vunpack.c.l.b16 %v91
  %v496 = vunpack.c.l.b16 %v92
  %v497 = vunpack.c.l.b16 %v93
  %v498 = vunpack.c.l.b16 %v94
  %v499 = vunpack.c.l.b16 %v95
  %v500 = vunpack.c.l.b16 %v96
  %v501 = vunpack.c.l.b16 %v97
  %v502 = vunpack.c.l.b16 %v98
  %v503 = vunpack.c.l.b16 %v99
  %v504 = vunpack.c.l.b16 %v100
  %v505 = vunpack.c.l.b16 %v101
  %v506 = vunpack.c.l.b16 %v102
  %v507 = vunpack.c.l.b16 %v103
  %v508 = vunpack.c.l.b16 %v104
  %v509 = vunpack.c.l.b16 %v105
  %v510 = vunpack.c.l.b16 %v106
  %v511 = vunpack.c.l.b16 %v107
  %v512 = vunpack.c.l.b16 %v108
  %v513 = vunpack.c.l.b16 %v109
  %v514 = vunpack.c.l.b16 %v110
  %v515 = vunpack.c.l.b16 %v111
  %v516 = vunpack.c.l.b16 %v112
  %v517 = vunpack.c.l.b16 %v113
  %v518 = vunpack.c.l.b16 %v114
  %v519 = vunpack.c.l.b16 %v115
  %v520 = vunpack.c.l.b16 %v116
  %v521 = vunpack.c.l.b16 %v117
  %v522 = vunpack.c.l.b16 %v118
  %v523 = vunpack.c.l.b16 %v119
  %v524 = vunpack.c.l.b16 %v120
  %v525 = vunpack.c.l.b16 %v121
  %v526 = vunpack.c.l.b16 %v122
  %v527 = vunpack.c.l.b16 %v123
  %v528 = vunpack.c.l.b16 %v124
  %v529 = vunpack.c.l.b16 %v125
  %v530 = vunpack.c.l.b16 %v126
  %v531 = vunpack.c.l.b16 %v127
  %v532 = vunpack.c.l.b16 %v128
  %v533 = vunpack.c.l.b16 %v129
  %v534 = vunpack.c.l.b16 %v130
  %v535 = vunpack.c.l.b16 %v131
  %v536 = vunpack.c.l.b16 %v132
  %v537 = vunpack.c.l.b16 %v133
  %v538 = vunpack.c.l.b16 %v134
  %v539 = vunpack.c.l.b16 %v135
  %v540 = vunpack.c.l.b16 %v136
  %v541 = vunpack.c.l.b16 %v137
  %v542 = vunpack.c.l.b16 %v138
  %v543 = vunpack.c.l.b16 %v139
  %v544 = vunpack.c.l.b16 %v140
  %v545 = vunpack.c.l.b16 %v141
  %v546 = vunpack.c.l.b16 %v142
  %v547 = vunpack.c.l.b16 %v143
  %v548 = vunpack.c.l.b16 %v144
  %v549 = vunpack.c.l.b16 %v145
  %v550 = vunpack.c.l.b16 %v146
  %v551 = vunpack.c.l.b16 %v147
  %v552 = vunpack.c.l.b16 %v148
  %v553 = vunpack.c.l.b16 %v149
  %v554 = vunpack.c.l.b16 %v150
  %v555 = vunpack.c.l.b16 %v151
  %v556 = vunpack.c.l.b16 %v152
  %v557 = vunpack.c.l.b16 %v153
  %v558 = vunpack.c.l.b16 %v154
  %v559 = vunpack.c.l.b16 %v155
  %v560 = vunpack.c.l.b16 %v156
  %v561 = vunpack.c.l.b16 %v157
  %v562 = vunpack.c.l.b16 %v158
  %v563 = vunpack.c.l.b16 %v159
  %v564 = vunpack.c.l.b16 %v160
  %v565 = vunpack.c.l.b16 %v161
  %v566 = vunpack.c.l.b16 %v162
  %v567 = vunpack.c.l.b16 %v163
  %v568 = vunpack.c.l.b16 %v164
  %v569 = vunpack.c.l.b16 %v165
  %v570 = vunpack.c.l.b16 %v166
  %v571 = vunpack.c.l.b16 %v167
  %v572 = vunpack.c.l.b16 %v168
  %v573 = vunpack.c.l.b16 %v169
  %v574 = vunpack.c.l.b16 %v170
  %v575 = vunpack.c.l.b16 %v171
  %v576 = vunpack.c.l.b16 %v172
  %v577 = vunpack.c.l.b16 %v173
  %v578 = vunpack.c.l.b16 %v174
  %v579 = vunpack.c.l.b16 %v175
  %v580 = vunpack.c.l.b16 %v176
  %v581 = vunpack.c.l.b16 %v177
  %v582 = vunpack.c.l.b16 %v178
  %v583 = vpack.c.b16 %v440, %v439
  %v584 = vpack.c.b16 %v442, %v441
  %v585 = vpack.c.b16 %v444, %v443
  %v586 = vpack.c.b16 %v446, %v445
  %v587 = vpack.c.b16 %v448, %v447
  %v588 = vpack.c.b16 %v450, %v449
  %v589 = vpack.c.b16 %v452, %v451
  %v590 = vpack.c.b16 %v454, %v453
  %v591 = vpack.c.b16 %v456, %v455
  %v592 = vpack.c.b16 %v458, %v457
  %v593 = vpack.c.b16 %v460, %v459
  %v594 = vpack.c.b16 %v462, %v461
  %v595 = vpack.c.b16 %v464, %v463
  %v596 = vpack.c.b16 %v466, %v465
  %v597 = vpack.c.b16 %v468, %v467
  %v598 = vpack.c.b16 %v470, %v469
  %v599 = vpack.c.b16 %v472, %v471
  %v600 = vpack.c.b16 %v474, %v473
  %v601 = vpack.c.b16 %v476, %v475
  %v602 = vpack.c.b16 %v478, %v477
  %v603 = vpack.c.b16 %v480, %v479
  %v604 = vpack.c.b16 %v482, %v481
  %v605 = vpack.c.b16 %v484, %v483
  %v606 = vpack.c.b16 %v486, %v485
  %v607 = vpack.c.b16 %v488, %v487
  %v608 = vpack.c.b16 %v490, %v489
  %v609 = vpack.c.b16 %v492, %v491
  %v610 = vpack.c.b16 %v494, %v493
  %v611 = vpack.c.b16 %v496, %v495
  %v612 = vpack.c.b16 %v498, %v497
  %v613 = vpack.c.b16 %v500, %v499
  %v614 = vpack.c.b16 %v502, %v501
  %v615 = vpack.c.b16 %v504, %v503
  %v616 = vpack.c.b16 %v506, %v505
  %v617 = vpack.c.b16 %v508, %v507
  %v618 = vpack.c.b16 %v510, %v509
  %v619 = vpack.c.b16 %v512, %v511
  %v620 = vpack.c.b16 %v514, %v513
  %v621 = vpack.c.b16 %v516, %v515
  %v622 = vpack.c.b16 %v518, %v517
  %v623 = vpack.c.b16 %v520, %v519
  %v624 = vpack.c.b16 %v522, %v521
  %v625 = vpack.c.b16 %v524, %v523
  %v626 = vpack.c.b16 %v526, %v525
  %v627 = vpack.c.b16 %v528, %v527
  %v628 = vpack.c.b16 %v530, %v529
  %v629 = vpack.c.b16 %v532, %v531
  %v630 = vpack.c.b16 %v534, %v533
  %v631 = vpack.c.b16 %v536, %v535
  %v632 = vpack.c.b16 %v538, %v537
  %v633 = vpack.c.b16 %v540, %v539
  %v634 = vpack.c.b16 %v542, %v541
  %v635 = vpack.c.b16 %v544, %v543
  %v636 = vpack.c.b16 %v546, %v545
  %v637 = vpack.c.b16 %v548, %v547
  %v638 = vpack.c.b16 %v550, %v549
  %v639 = vpack.c.b16 %v552, %v551
  %v640 = vpack.c.b16 %v554, %v553
  %v641 = vpack.c.b16 %v556, %v555
  %v642 = vpack.c.b16 %v558, %v557
  %v643 = vpack.c.b16 %v560, %v559
  %v644 = vpack.c.b16 %v562, %v561
  %v645 = vpack.c.b16 %v564, %v563
  %v646 = vpack.c.b16 %v566, %v565
  %v647 = vpack.c.b16 %v568, %v567
  %v648 = vpack.c.b16 %v570, %v569
  %v649 = vpack.c.b16 %v572, %v571
  %v650 = vpack.c.b16 %v574, %v573
  %v651 = vpack.c.b16 %v576, %v575
  %v652 = vpack.c.b16 %v578, %v577
  %v653 = vpack.c.b16 %v580, %v579
  %v654 = vpack.c.b16 %v582, %v581
  %727 = vmatprep.subr.bf16.mxu0 0
  %728 = vmatpush1.bf16.msra.mxu0 %v583
  %729 = vmatprep.subr.bf16.mxu0 0
  %730 = vmatpush1.bf16.msra.mxu0 %v584
  %731 = vmatprep.subr.bf16.mxu0 0
  %732 = vmatpush1.bf16.msra.mxu0 %v585
  %733 = vmatprep.subr.bf16.mxu0 0
  %734 = vmatpush1.bf16.msra.mxu0 %v586
  %735 = vmatprep.subr.bf16.mxu0 0
  %736 = vmatpush1.bf16.msra.mxu0 %v587
  %737 = vmatprep.subr.bf16.mxu0 0
  %738 = vmatpush1.bf16.msra.mxu0 %v588
  %739 = vmatprep.subr.bf16.mxu0 0
  %740 = vmatpush1.bf16.msra.mxu0 %v589
  %741 = vmatprep.subr.bf16.mxu0 0
  %742 = vmatpush1.bf16.msra.mxu0 %v590
  %743 = vmatprep.subr.bf16.mxu0 0
  %744 = vmatpush1.bf16.msra.mxu0 %v591
  %745 = vmatprep.subr.bf16.mxu0 0
  %746 = vmatpush1.bf16.msra.mxu0 %v592
  %747 = vmatprep.subr.bf16.mxu0 0
  %748 = vmatpush1.bf16.msra.mxu0 %v593
  %749 = vmatprep.subr.bf16.mxu0 0
  %750 = vmatpush1.bf16.msra.mxu0 %v594
  %751 = vmatprep.subr.bf16.mxu0 0
  %752 = vmatpush1.bf16.msra.mxu0 %v595
  %753 = vmatprep.subr.bf16.mxu0 0
  %754 = vmatpush1.bf16.msra.mxu0 %v596
  %755 = vmatprep.subr.bf16.mxu0 0
  %756 = vmatpush1.bf16.msra.mxu0 %v597
  %757 = vmatprep.subr.bf16.mxu0 0
  %758 = vmatpush1.bf16.msra.mxu0 %v598
  %759 = vmatprep.mubr.bf16.mxu0 %v260
  %760 = vmatmul.mubr.bf16.gmra.mrb[0].mxu0 %v259
  %v761 = vpop.f32.mrb[0].mxu0
  %v762 = vadd.f32 %v186, %v761
  %v763 = vpop.f32.mrb[0].mxu0
  %v764 = vpop.f32.mrb[0].mxu0
  %v765 = vadd.f32 %v191, %v764
  %v766 = vpop.f32.mrb[0].mxu0
  %767 = vmatprep.mubr.bf16.mxu0 %v269
  %768 = vmatmul.mubr.bf16.gmra.mrb[0].mxu0 %v268
  %v769 = vpop.f32.mrb[0].mxu0
  %v770 = vadd.f32 %v196, %v769
  %v771 = vpop.f32.mrb[0].mxu0
  %v772 = vpop.f32.mrb[0].mxu0
  %v773 = vadd.f32 %v201, %v772
  %v774 = vpop.f32.mrb[0].mxu0
  %775 = vdwg.mxu0
  %776 = vmatprep.subr.bf16.mxu0 0
  %777 = vmatpush1.bf16.msra.mxu0 %v599
  %778 = vmatprep.subr.bf16.mxu0 0
  %779 = vmatpush1.bf16.msra.mxu0 %v600
  %780 = vmatprep.subr.bf16.mxu0 0
  %781 = vmatpush1.bf16.msra.mxu0 %v601
  %782 = vmatprep.subr.bf16.mxu0 0
  %783 = vmatpush1.bf16.msra.mxu0 %v602
  %784 = vmatprep.subr.bf16.mxu0 0
  %785 = vmatpush1.bf16.msra.mxu0 %v603
  %786 = vmatprep.subr.bf16.mxu0 0
  %787 = vmatpush1.bf16.msra.mxu0 %v604
  %788 = vmatprep.subr.bf16.mxu0 0
  %789 = vmatpush1.bf16.msra.mxu0 %v605
  %790 = vmatprep.subr.bf16.mxu0 0
  %791 = vmatpush1.bf16.msra.mxu0 %v606
  %792 = vmatprep.subr.bf16.mxu0 0
  %793 = vmatpush1.bf16.msra.mxu0 %v607
  %794 = vmatprep.subr.bf16.mxu0 0
  %795 = vmatpush1.bf16.msra.mxu0 %v608
  %796 = vmatprep.subr.bf16.mxu0 0
  %797 = vmatpush1.bf16.msra.mxu0 %v609
  %798 = vmatprep.subr.bf16.mxu0 0
  %799 = vmatpush1.bf16.msra.mxu0 %v610
  %800 = vmatprep.subr.bf16.mxu0 0
  %801 = vmatpush1.bf16.msra.mxu0 %v611
  %802 = vmatprep.subr.bf16.mxu0 0
  %803 = vmatpush1.bf16.msra.mxu0 %v612
  %804 = vmatprep.subr.bf16.mxu0 0
  %805 = vmatpush1.bf16.msra.mxu0 %v613
  %806 = vmatprep.subr.bf16.mxu0 0
  %807 = vmatpush1.bf16.msra.mxu0 %v614
  %808 = vmatprep.mubr.bf16.mxu0 %v262
  %809 = vmatmul.mubr.bf16.gmra.mrb[0].mxu0 %v261
  %v810 = vpop.f32.mrb[0].mxu0
  %v811 = vadd.f32 %v762, %v810
  %v812 = vpop.f32.mrb[0].mxu0
  %v813 = vpop.f32.mrb[0].mxu0
  %v814 = vadd.f32 %v765, %v813
  %v815 = vpop.f32.mrb[0].mxu0
  %816 = vmatprep.mubr.bf16.mxu0 %v271
  %817 = vmatmul.mubr.bf16.gmra.mrb[0].mxu0 %v270
  %v818 = vpop.f32.mrb[0].mxu0
  %v819 = vadd.f32 %v770, %v818
  %v820 = vpop.f32.mrb[0].mxu0
  %v821 = vpop.f32.mrb[0].mxu0
  %v822 = vadd.f32 %v773, %v821
  %v823 = vpop.f32.mrb[0].mxu0
  %824 = vdwg.mxu0
  %825 = vmatprep.subr.bf16.mxu0 0
  %826 = vmatpush1.bf16.msra.mxu0 %v615
  %827 = vmatprep.subr.bf16.mxu0 0
  %828 = vmatpush1.bf16.msra.mxu0 %v616
  %829 = vmatprep.subr.bf16.mxu0 0
  %830 = vmatpush1.bf16.msra.mxu0 %v617
  %831 = vmatprep.subr.bf16.mxu0 0
  %832 = vmatpush1.bf16.msra.mxu0 %v618
  %833 = vmatprep.subr.bf16.mxu0 0
  %834 = vmatpush1.bf16.msra.mxu0 %v619
  %835 = vmatprep.subr.bf16.mxu0 0
  %836 = vmatpush1.bf16.msra.mxu0 %v620
  %837 = vmatprep.subr.bf16.mxu0 0
  %838 = vmatpush1.bf16.msra.mxu0 %v621
  %839 = vmatprep.subr.bf16.mxu0 0
  %840 = vmatpush1.bf16.msra.mxu0 %v622
  %841 = vmatprep.subr.bf16.mxu0 0
  %842 = vmatpush1.bf16.msra.mxu0 %v623
  %843 = vmatprep.subr.bf16.mxu0 0
  %844 = vmatpush1.bf16.msra.mxu0 %v624
  %845 = vmatprep.subr.bf16.mxu0 0
  %846 = vmatpush1.bf16.msra.mxu0 %v625
  %847 = vmatprep.subr.bf16.mxu0 0
  %848 = vmatpush1.bf16.msra.mxu0 %v626
  %849 = vmatprep.subr.bf16.mxu0 0
  %850 = vmatpush1.bf16.msra.mxu0 %v627
  %851 = vmatprep.subr.bf16.mxu0 0
  %852 = vmatpush1.bf16.msra.mxu0 %v628
  %853 = vmatprep.subr.bf16.mxu0 0
  %854 = vmatpush1.bf16.msra.mxu0 %v629
  %855 = vmatprep.subr.bf16.mxu0 0
  %856 = vmatpush1.bf16.msra.mxu0 %v630
  %857 = vmatprep.mubr.bf16.mxu0 %v264
  %858 = vmatmul.mubr.bf16.gmra.mrb[0].mxu0 %v263
  %v859 = vpop.f32.mrb[0].mxu0
  %v860 = vadd.f32 %v811, %v859
  %v861 = vpop.f32.mrb[0].mxu0
  %v862 = vpop.f32.mrb[0].mxu0
  %v863 = vadd.f32 %v814, %v862
  %v864 = vpop.f32.mrb[0].mxu0
  %865 = vmatprep.mubr.bf16.mxu0 %v273
  %866 = vmatmul.mubr.bf16.gmra.mrb[0].mxu0 %v272
  %v867 = vpop.f32.mrb[0].mxu0
  %v868 = vadd.f32 %v819, %v867
  %v869 = vpop.f32.mrb[0].mxu0
  %v870 = vpop.f32.mrb[0].mxu0
  %v871 = vadd.f32 %v822, %v870
  %v872 = vpop.f32.mrb[0].mxu0
  %873 = vdwg.mxu0
  %874 = vmatprep.subr.bf16.mxu0 0
  %875 = vmatpush1.bf16.msra.mxu0 %v631
  %876 = vmatprep.subr.bf16.mxu0 0
  %877 = vmatpush1.bf16.msra.mxu0 %v632
  %878 = vmatprep.subr.bf16.mxu0 0
  %879 = vmatpush1.bf16.msra.mxu0 %v633
  %880 = vmatprep.subr.bf16.mxu0 0
  %881 = vmatpush1.bf16.msra.mxu0 %v634
  %882 = vmatprep.subr.bf16.mxu0 0
  %883 = vmatpush1.bf16.msra.mxu0 %v635
  %884 = vmatprep.subr.bf16.mxu0 0
  %885 = vmatpush1.bf16.msra.mxu0 %v636
  %886 = vmatprep.subr.bf16.mxu0 0
  %887 = vmatpush1.bf16.msra.mxu0 %v637
  %888 = vmatprep.subr.bf16.mxu0 0
  %889 = vmatpush1.bf16.msra.mxu0 %v638
  %890 = vmatprep.subr.bf16.mxu0 0
  %891 = vmatpush1.bf16.msra.mxu0 %v639
  %892 = vmatprep.subr.bf16.mxu0 0
  %893 = vmatpush1.bf16.msra.mxu0 %v640
  %894 = vmatprep.subr.bf16.mxu0 0
  %895 = vmatpush1.bf16.msra.mxu0 %v641
  %896 = vmatprep.subr.bf16.mxu0 0
  %897 = vmatpush1.bf16.msra.mxu0 %v642
  %898 = vmatprep.subr.bf16.mxu0 0
  %899 = vmatpush1.bf16.msra.mxu0 %v643
  %900 = vmatprep.subr.bf16.mxu0 0
  %901 = vmatpush1.bf16.msra.mxu0 %v644
  %902 = vmatprep.subr.bf16.mxu0 0
  %903 = vmatpush1.bf16.msra.mxu0 %v645
  %904 = vmatprep.subr.bf16.mxu0 0
  %905 = vmatpush1.bf16.msra.mxu0 %v646
  %906 = vmatprep.mubr.bf16.mxu0 %v266
  %907 = vmatmul.mubr.bf16.gmra.mrb[0].mxu0 %v265
  %v908 = vpop.f32.mrb[0].mxu0
  %v909 = vadd.f32 %v860, %v908
  %v910 = vpop.f32.mrb[0].mxu0
  %v911 = vpop.f32.mrb[0].mxu0
  %v912 = vadd.f32 %v863, %v911
  %v913 = vpop.f32.mrb[0].mxu0
  %914 = vmatprep.mubr.bf16.mxu0 %v275
  %915 = vmatmul.mubr.bf16.gmra.mrb[0].mxu0 %v274
  %v916 = vpop.f32.mrb[0].mxu0
  %v917 = vadd.f32 %v868, %v916
  %v918 = vpop.f32.mrb[0].mxu0
  %v919 = vpop.f32.mrb[0].mxu0
  %v920 = vadd.f32 %v871, %v919
  %v921 = vpop.f32.mrb[0].mxu0
  %922 = vdwg.mxu0
  %923 = vmatprep.subr.bf16.mxu0 0
  %924 = vmatpush1.bf16.msra.mxu0 %v647
  %925 = vmatprep.subr.bf16.mxu0 0
  %926 = vmatpush1.bf16.msra.mxu0 %v648
  %927 = vmatprep.subr.bf16.mxu0 0
  %928 = vmatpush1.bf16.msra.mxu0 %v649
  %929 = vmatprep.subr.bf16.mxu0 0
  %930 = vmatpush1.bf16.msra.mxu0 %v650
  %931 = vmatprep.subr.bf16.mxu0 0
  %932 = vmatpush1.bf16.msra.mxu0 %v651
  %933 = vmatprep.subr.bf16.mxu0 0
  %934 = vmatpush1.bf16.msra.mxu0 %v652
  %935 = vmatprep.subr.bf16.mxu0 0
  %936 = vmatpush1.bf16.msra.mxu0 %v653
  %937 = vmatprep.subr.bf16.mxu0 0
  %938 = vmatpush1.bf16.msra.mxu0 %v654
  %939 = vmatprep.subr.bf16.mxu0 0
  %940 = vmatpush1.bf16.msra.mxu0 0
  %941 = vmatprep.subr.bf16.mxu0 0
  %942 = vmatpush1.bf16.msra.mxu0 0
  %943 = vmatprep.subr.bf16.mxu0 0
  %944 = vmatpush1.bf16.msra.mxu0 0
  %945 = vmatprep.subr.bf16.mxu0 0
  %946 = vmatpush1.bf16.msra.mxu0 0
  %947 = vmatprep.subr.bf16.mxu0 0
  %948 = vmatpush1.bf16.msra.mxu0 0
  %949 = vmatprep.subr.bf16.mxu0 0
  %950 = vmatpush1.bf16.msra.mxu0 0
  %951 = vmatprep.subr.bf16.mxu0 0
  %952 = vmatpush1.bf16.msra.mxu0 0
  %953 = vmatprep.subr.bf16.mxu0 0
  %954 = vmatpush1.bf16.msra.mxu0 0
  %955 = vmatprep.mubr.bf16.mxu0 0
  %956 = vmatmul.mubr.bf16.gmra.mrb[0].mxu0 %v267
  %v957 = vpop.f32.mrb[0].mxu0
  %v958 = vadd.f32 %v909, %v957
  %v959 = vpop.f32.mrb[0].mxu0
  %v960 = vpop.f32.mrb[0].mxu0
  %v961 = vadd.f32 %v912, %v960
  %v962 = vpop.f32.mrb[0].mxu0
  %963 = vmatprep.mubr.bf16.mxu0 0
  %964 = vmatmul.mubr.bf16.gmra.mrb[0].mxu0 %v276
  %v965 = vpop.f32.mrb[0].mxu0
  %v966 = vadd.f32 %v917, %v965
  %v967 = vpop.f32.mrb[0].mxu0
  %v968 = vpop.f32.mrb[0].mxu0
  %v969 = vadd.f32 %v920, %v968
  %v970 = vpop.f32.mrb[0].mxu0
  %971 = vdwg.mxu0
  %v972 = vmax.f32 %v958, 0.0
  %v973 = vmax.f32 %v961, 0.0
  %v974 = vmax.f32 %v966, 0.0
  %v975 = vmax.f32 %v969, 0.0
  %vm976 = vcmask 588800
  %977 = vst.msk [vmem:[%s3] sm:$0xff] %vm976, %v972
  %978 = vst.msk [vmem:[%s3 + $0x8] sm:$0xff] %vm976, %v973
  %979 = vst.msk [vmem:[%s3 + $0x10] sm:$0xff] %vm976, %v974
  %980 = vst.msk [vmem:[%s3 + $0x18] sm:$0xff] %vm976, %v975
  // Predicated region
  $region14: #{st_autoencoder_g6.6} parent=0 // pred_check
    _
  $region15: #{st_autoencoder_g6.6} parent=0 // pred_check_branch
    %982 = sbr.rel (0) target = $region17
  $region16: #{st_autoencoder_g6.6} parent=0 // pred_region
    _
  $region17: #{st_autoencoder_g6.6} parent=0 // pred_fallthru
    _
  // Predicated region
  $region18: #{st_autoencoder_g6.6} parent=0 // pred_check
    _
  $region19: #{st_autoencoder_g6.6} parent=0 // pred_check_branch
    %984 = sbr.rel (0) target = $region21
  $region20: #{st_autoencoder_g6.6} parent=0 // pred_region
    _
  $region21: #{st_autoencoder_g6.6} parent=0 // pred_fallthru
    _

// kernel: st_autoencoder_g6.7
$region0: #{st_autoencoder_g6.7}
  #allocation0 [shape = 'u32[]', space=smem, size = 0x4, offset = 0x4, fixed_abs, tag = 'smem constant byte address 0x4 - core index']
  #allocation1 [shape = 'u32[144,128]{1,0:T(1,128)}', space=vmem, size = 0x12000, scoped, tag = 'internal scratch']
  %s0 = inlined_call_operand.vmem [shape: bf16[4,2,288], index: 0, kind: input, shape index: {}]
  %s1 = inlined_call_operand.vmem [shape: bf16[288,384], index: 1, kind: input, shape index: {}]
  %s2 = inlined_call_operand.vmem [shape: f32[1,384], index: 2, kind: input, shape index: {}]
  %s3 = inlined_call_operand.vmem [shape: bf16[128,256], index: 3, kind: input, shape index: {}]
  %s4 = inlined_call_operand.vmem [shape: bf16[128,128], index: 4, kind: input, shape index: {}]
  %s5 = inlined_call_operand.vmem [shape: bf16[128,128], index: 5, kind: input, shape index: {}]
  %s6 = inlined_call_operand.vmem [shape: f32[1,128], index: 6, kind: input, shape index: {}]
  %s7 = inlined_call_operand.vmem [shape: bf16[128,384], index: 7, kind: input, shape index: {}]
  %s8 = inlined_call_operand.vmem [shape: f32[1,384], index: 8, kind: input, shape index: {}]
  %s9 = inlined_call_operand.vmem [shape: bf16[128,256], index: 9, kind: input, shape index: {}]
  %s10 = inlined_call_operand.vmem [shape: bf16[128,128], index: 10, kind: input, shape index: {}]
  %s11 = inlined_call_operand.vmem [shape: f32[4,2,128], index: 11, kind: output, shape index: {0}]
  %s12 = inlined_call_operand.vmem [shape: f32[2,128], index: 12, kind: output, shape index: {1}]
  %13 = xla_tuple %s11, %s12
  %s14 = sld [smem:[#allocation0]]
  $region62: #{st_autoencoder_g6.7} parent=0
    _
  %s16 = ssub.s32 1, %s14
  %s17 = scalar_select 0, %s16, %s14
  // Predicated region
  $region2: #{st_autoencoder_g6.7} parent=0 // pred_check
    _
  $region3: #{st_autoencoder_g6.7} parent=0 // pred_check_branch
    %19 = sbr.rel (0) target = $region5
  $region4: #{st_autoencoder_g6.7} parent=0 // pred_region
    _
  $region5: #{st_autoencoder_g6.7} parent=0 // pred_fallthru
    _
  // Predicated region
  $region6: #{st_autoencoder_g6.7} parent=0 // pred_check
    _
  $region7: #{st_autoencoder_g6.7} parent=0 // pred_check_branch
    %21 = sbr.rel (0) target = $region9
  $region8: #{st_autoencoder_g6.7} parent=0 // pred_region
    _
  $region9: #{st_autoencoder_g6.7} parent=0 // pred_fallthru
    _
  // Predicated region
  $region10: #{st_autoencoder_g6.7} parent=0 // pred_check
    _
  $region11: #{st_autoencoder_g6.7} parent=0 // pred_check_branch
    %23 = sbr.rel (0) target = $region13
  $region12: #{st_autoencoder_g6.7} parent=0 // pred_region
    _
  $region13: #{st_autoencoder_g6.7} parent=0 // pred_fallthru
    _
  // Predicated region
  $region14: #{st_autoencoder_g6.7} parent=0 // pred_check
    _
  $region15: #{st_autoencoder_g6.7} parent=0 // pred_check_branch
    %25 = sbr.rel (0) target = $region17
  $region16: #{st_autoencoder_g6.7} parent=0 // pred_region
    _
  $region17: #{st_autoencoder_g6.7} parent=0 // pred_fallthru
    _
  // Predicated region
  $region18: #{st_autoencoder_g6.7} parent=0 // pred_check
    _
  $region19: #{st_autoencoder_g6.7} parent=0 // pred_check_branch
    %27 = sbr.rel (0) target = $region21
  $region20: #{st_autoencoder_g6.7} parent=0 // pred_region
    _
  $region21: #{st_autoencoder_g6.7} parent=0 // pred_fallthru
    _
  // Predicated region
  $region22: #{st_autoencoder_g6.7} parent=0 // pred_check
    _
  $region23: #{st_autoencoder_g6.7} parent=0 // pred_check_branch
    %29 = sbr.rel (0) target = $region25
  $region24: #{st_autoencoder_g6.7} parent=0 // pred_region
    _
  $region25: #{st_autoencoder_g6.7} parent=0 // pred_fallthru
    _
  // Predicated region
  $region26: #{st_autoencoder_g6.7} parent=0 // pred_check
    _
  $region27: #{st_autoencoder_g6.7} parent=0 // pred_check_branch
    %31 = sbr.rel (0) target = $region29
  $region28: #{st_autoencoder_g6.7} parent=0 // pred_region
    _
  $region29: #{st_autoencoder_g6.7} parent=0 // pred_fallthru
    _
  // Predicated region
  $region30: #{st_autoencoder_g6.7} parent=0 // pred_check
    _
  $region31: #{st_autoencoder_g6.7} parent=0 // pred_check_branch
    %33 = sbr.rel (0) target = $region33
  $region32: #{st_autoencoder_g6.7} parent=0 // pred_region
    _
  $region33: #{st_autoencoder_g6.7} parent=0 // pred_fallthru
    _
  // Predicated region
  $region34: #{st_autoencoder_g6.7} parent=0 // pred_check
    _
  $region35: #{st_autoencoder_g6.7} parent=0 // pred_check_branch
    %35 = sbr.rel (0) target = $region37
  $region36: #{st_autoencoder_g6.7} parent=0 // pred_region
    _
  $region37: #{st_autoencoder_g6.7} parent=0 // pred_fallthru
    _
  // Predicated region
  $region38: #{st_autoencoder_g6.7} parent=0 // pred_check
    _
  $region39: #{st_autoencoder_g6.7} parent=0 // pred_check_branch
    %37 = sbr.rel (0) target = $region41
  $region40: #{st_autoencoder_g6.7} parent=0 // pred_region
    _
  $region41: #{st_autoencoder_g6.7} parent=0 // pred_fallthru
    _
  // Predicated region
  $region42: #{st_autoencoder_g6.7} parent=0 // pred_check
    _
  $region43: #{st_autoencoder_g6.7} parent=0 // pred_check_branch
    %39 = sbr.rel (0) target = $region45
  $region44: #{st_autoencoder_g6.7} parent=0 // pred_region
    _
  $region45: #{st_autoencoder_g6.7} parent=0 // pred_fallthru
    _
  %v41 = vld [vmem:[%s1] sm:$0xff]
  %v42 = vld [vmem:[%s1 + $0x8] sm:$0xf]
  %v43 = vld [vmem:[%s1 + $0xc] sm:$0xff]
  %v44 = vld [vmem:[%s1 + $0x14] sm:$0xf]
  %v45 = vld [vmem:[%s1 + $0x18] sm:$0xff]
  %v46 = vld [vmem:[%s1 + $0x20] sm:$0xf]
  %v47 = vld [vmem:[%s1 + $0x24] sm:$0xff]
  %v48 = vld [vmem:[%s1 + $0x2c] sm:$0xf]
  %v49 = vld [vmem:[%s1 + $0x30] sm:$0xff]
  %v50 = vld [vmem:[%s1 + $0x38] sm:$0xf]
  %v51 = vld [vmem:[%s1 + $0x3c] sm:$0xff]
  %v52 = vld [vmem:[%s1 + $0x44] sm:$0xf]
  %v53 = vld [vmem:[%s1 + $0x48] sm:$0xff]
  %v54 = vld [vmem:[%s1 + $0x50] sm:$0xf]
  %v55 = vld [vmem:[%s1 + $0x54] sm:$0xff]
  %v56 = vld [vmem:[%s1 + $0x5c] sm:$0xf]
  %v57 = vld [vmem:[%s1 + $0x60] sm:$0xff]
  %v58 = vld [vmem:[%s1 + $0x68] sm:$0xf]
  %v59 = vld [vmem:[%s1 + $0x6c] sm:$0xff]
  %v60 = vld [vmem:[%s1 + $0x74] sm:$0xf]
  %v61 = vld [vmem:[%s1 + $0x78] sm:$0xff]
  %v62 = vld [vmem:[%s1 + $0x80] sm:$0xf]
  %v63 = vld [vmem:[%s1 + $0x84] sm:$0xff]
  %v64 = vld [vmem:[%s1 + $0x8c] sm:$0xf]
  %v65 = vld [vmem:[%s1 + $0x90] sm:$0xff]
  %v66 = vld [vmem:[%s1 + $0x98] sm:$0xf]
  %v67 = vld [vmem:[%s1 + $0x9c] sm:$0xff]
  %v68 = vld [vmem:[%s1 + $0xa4] sm:$0xf]
  %v69 = vld [vmem:[%s1 + $0xa8] sm:$0xff]
  %v70 = vld [vmem:[%s1 + $0xb0] sm:$0xf]
  %v71 = vld [vmem:[%s1 + $0xb4] sm:$0xff]
  %v72 = vld [vmem:[%s1 + $0xbc] sm:$0xf]
  %v73 = vld [vmem:[%s1 + $0xc0] sm:$0xff]
  %v74 = vld [vmem:[%s1 + $0xc8] sm:$0xf]
  %v75 = vld [vmem:[%s1 + $0xcc] sm:$0xff]
  %v76 = vld [vmem:[%s1 + $0xd4] sm:$0xf]
  %v77 = vld [vmem:[%s1 + $0xd8] sm:$0xff]
  %v78 = vld [vmem:[%s1 + $0xe0] sm:$0xf]
  %v79 = vld [vmem:[%s1 + $0xe4] sm:$0xff]
  %v80 = vld [vmem:[%s1 + $0xec] sm:$0xf]
  %v81 = vld [vmem:[%s1 + $0xf0] sm:$0xff]
  %v82 = vld [vmem:[%s1 + $0xf8] sm:$0xf]
  %v83 = vld [vmem:[%s1 + $0xfc] sm:$0xff]
  %v84 = vld [vmem:[%s1 + $0x104] sm:$0xf]
  %v85 = vld [vmem:[%s1 + $0x108] sm:$0xff]
  %v86 = vld [vmem:[%s1 + $0x110] sm:$0xf]
  %v87 = vld [vmem:[%s1 + $0x114] sm:$0xff]
  %v88 = vld [vmem:[%s1 + $0x11c] sm:$0xf]
  %v89 = vld [vmem:[%s1 + $0x120] sm:$0xff]
  %v90 = vld [vmem:[%s1 + $0x128] sm:$0xf]
  %v91 = vld [vmem:[%s1 + $0x12c] sm:$0xff]
  %v92 = vld [vmem:[%s1 + $0x134] sm:$0xf]
  %v93 = vld [vmem:[%s1 + $0x138] sm:$0xff]
  %v94 = vld [vmem:[%s1 + $0x140] sm:$0xf]
  %v95 = vld [vmem:[%s1 + $0x144] sm:$0xff]
  %v96 = vld [vmem:[%s1 + $0x14c] sm:$0xf]
  %v97 = vld [vmem:[%s1 + $0x150] sm:$0xff]
  %v98 = vld [vmem:[%s1 + $0x158] sm:$0xf]
  %v99 = vld [vmem:[%s1 + $0x15c] sm:$0xff]
  %v100 = vld [vmem:[%s1 + $0x164] sm:$0xf]
  %v101 = vld [vmem:[%s1 + $0x168] sm:$0xff]
  %v102 = vld [vmem:[%s1 + $0x170] sm:$0xf]
  %v103 = vld [vmem:[%s1 + $0x174] sm:$0xff]
  %v104 = vld [vmem:[%s1 + $0x17c] sm:$0xf]
  %v105 = vld [vmem:[%s1 + $0x180] sm:$0xff]
  %v106 = vld [vmem:[%s1 + $0x188] sm:$0xf]
  %v107 = vld [vmem:[%s1 + $0x18c] sm:$0xff]
  %v108 = vld [vmem:[%s1 + $0x194] sm:$0xf]
  %v109 = vld [vmem:[%s1 + $0x198] sm:$0xff]
  %v110 = vld [vmem:[%s1 + $0x1a0] sm:$0xf]
  %v111 = vld [vmem:[%s1 + $0x1a4] sm:$0xff]
  %v112 = vld [vmem:[%s1 + $0x1ac] sm:$0xf]
  %v113 = vld [vmem:[%s2] sm:$0x7]
  %v114 = vld [vmem:[%s3] sm:$0xff]
  %v115 = vld [vmem:[%s3 + $0x8] sm:$0xff]
  %v116 = vld [vmem:[%s3 + $0x10] sm:$0xff]
  %v117 = vld [vmem:[%s3 + $0x18] sm:$0xff]
  %v118 = vld [vmem:[%s3 + $0x20] sm:$0xff]
  %v119 = vld [vmem:[%s3 + $0x28] sm:$0xff]
  %v120 = vld [vmem:[%s3 + $0x30] sm:$0xff]
  %v121 = vld [vmem:[%s3 + $0x38] sm:$0xff]
  %v122 = vld [vmem:[%s3 + $0x40] sm:$0xff]
  %v123 = vld [vmem:[%s3 + $0x48] sm:$0xff]
  %v124 = vld [vmem:[%s3 + $0x50] sm:$0xff]
  %v125 = vld [vmem:[%s3 + $0x58] sm:$0xff]
  %v126 = vld [vmem:[%s3 + $0x60] sm:$0xff]
  %v127 = vld [vmem:[%s3 + $0x68] sm:$0xff]
  %v128 = vld [vmem:[%s3 + $0x70] sm:$0xff]
  %v129 = vld [vmem:[%s3 + $0x78] sm:$0xff]
  %v130 = vld [vmem:[%s4] sm:$0xf]
  %v131 = vld [vmem:[%s4 + $0x4] sm:$0xf]
  %v132 = vld [vmem:[%s4 + $0x8] sm:$0xf]
  %v133 = vld [vmem:[%s4 + $0xc] sm:$0xf]
  %v134 = vld [vmem:[%s4 + $0x10] sm:$0xf]
  %v135 = vld [vmem:[%s4 + $0x14] sm:$0xf]
  %v136 = vld [vmem:[%s4 + $0x18] sm:$0xf]
  %v137 = vld [vmem:[%s4 + $0x1c] sm:$0xf]
  %v138 = vld [vmem:[%s4 + $0x20] sm:$0xf]
  %v139 = vld [vmem:[%s4 + $0x24] sm:$0xf]
  %v140 = vld [vmem:[%s4 + $0x28] sm:$0xf]
  %v141 = vld [vmem:[%s4 + $0x2c] sm:$0xf]
  %v142 = vld [vmem:[%s4 + $0x30] sm:$0xf]
  %v143 = vld [vmem:[%s4 + $0x34] sm:$0xf]
  %v144 = vld [vmem:[%s4 + $0x38] sm:$0xf]
  %v145 = vld [vmem:[%s4 + $0x3c] sm:$0xf]
  %v146 = vld [vmem:[%s7] sm:$0xff]
  %v147 = vld [vmem:[%s7 + $0x8] sm:$0xf]
  %v148 = vld [vmem:[%s7 + $0xc] sm:$0xff]
  %v149 = vld [vmem:[%s7 + $0x14] sm:$0xf]
  %v150 = vld [vmem:[%s7 + $0x18] sm:$0xff]
  %v151 = vld [vmem:[%s7 + $0x20] sm:$0xf]
  %v152 = vld [vmem:[%s7 + $0x24] sm:$0xff]
  %v153 = vld [vmem:[%s7 + $0x2c] sm:$0xf]
  %v154 = vld [vmem:[%s7 + $0x30] sm:$0xff]
  %v155 = vld [vmem:[%s7 + $0x38] sm:$0xf]
  %v156 = vld [vmem:[%s7 + $0x3c] sm:$0xff]
  %v157 = vld [vmem:[%s7 + $0x44] sm:$0xf]
  %v158 = vld [vmem:[%s7 + $0x48] sm:$0xff]
  %v159 = vld [vmem:[%s7 + $0x50] sm:$0xf]
  %v160 = vld [vmem:[%s7 + $0x54] sm:$0xff]
  %v161 = vld [vmem:[%s7 + $0x5c] sm:$0xf]
  %v162 = vld [vmem:[%s7 + $0x60] sm:$0xff]
  %v163 = vld [vmem:[%s7 + $0x68] sm:$0xf]
  %v164 = vld [vmem:[%s7 + $0x6c] sm:$0xff]
  %v165 = vld [vmem:[%s7 + $0x74] sm:$0xf]
  %v166 = vld [vmem:[%s7 + $0x78] sm:$0xff]
  %v167 = vld [vmem:[%s7 + $0x80] sm:$0xf]
  %v168 = vld [vmem:[%s7 + $0x84] sm:$0xff]
  %v169 = vld [vmem:[%s7 + $0x8c] sm:$0xf]
  %v170 = vld [vmem:[%s7 + $0x90] sm:$0xff]
  %v171 = vld [vmem:[%s7 + $0x98] sm:$0xf]
  %v172 = vld [vmem:[%s7 + $0x9c] sm:$0xff]
  %v173 = vld [vmem:[%s7 + $0xa4] sm:$0xf]
  %v174 = vld [vmem:[%s7 + $0xa8] sm:$0xff]
  %v175 = vld [vmem:[%s7 + $0xb0] sm:$0xf]
  %v176 = vld [vmem:[%s7 + $0xb4] sm:$0xff]
  %v177 = vld [vmem:[%s7 + $0xbc] sm:$0xf]
  %v178 = vld [vmem:[%s8] sm:$0x7]
  %v179 = vld [vmem:[%s9] sm:$0xff]
  %v180 = vld [vmem:[%s9 + $0x8] sm:$0xff]
  %v181 = vld [vmem:[%s9 + $0x10] sm:$0xff]
  %v182 = vld [vmem:[%s9 + $0x18] sm:$0xff]
  %v183 = vld [vmem:[%s9 + $0x20] sm:$0xff]
  %v184 = vld [vmem:[%s9 + $0x28] sm:$0xff]
  %v185 = vld [vmem:[%s9 + $0x30] sm:$0xff]
  %v186 = vld [vmem:[%s9 + $0x38] sm:$0xff]
  %v187 = vld [vmem:[%s9 + $0x40] sm:$0xff]
  %v188 = vld [vmem:[%s9 + $0x48] sm:$0xff]
  %v189 = vld [vmem:[%s9 + $0x50] sm:$0xff]
  %v190 = vld [vmem:[%s9 + $0x58] sm:$0xff]
  %v191 = vld [vmem:[%s9 + $0x60] sm:$0xff]
  %v192 = vld [vmem:[%s9 + $0x68] sm:$0xff]
  %v193 = vld [vmem:[%s9 + $0x70] sm:$0xff]
  %v194 = vld [vmem:[%s9 + $0x78] sm:$0xff]
  %v195 = vld [vmem:[%s10] sm:$0xf]
  %v196 = vld [vmem:[%s10 + $0x4] sm:$0xf]
  %v197 = vld [vmem:[%s10 + $0x8] sm:$0xf]
  %v198 = vld [vmem:[%s10 + $0xc] sm:$0xf]
  %v199 = vld [vmem:[%s10 + $0x10] sm:$0xf]
  %v200 = vld [vmem:[%s10 + $0x14] sm:$0xf]
  %v201 = vld [vmem:[%s10 + $0x18] sm:$0xf]
  %v202 = vld [vmem:[%s10 + $0x1c] sm:$0xf]
  %v203 = vld [vmem:[%s10 + $0x20] sm:$0xf]
  %v204 = vld [vmem:[%s10 + $0x24] sm:$0xf]
  %v205 = vld [vmem:[%s10 + $0x28] sm:$0xf]
  %v206 = vld [vmem:[%s10 + $0x2c] sm:$0xf]
  %v207 = vld [vmem:[%s10 + $0x30] sm:$0xf]
  %v208 = vld [vmem:[%s10 + $0x34] sm:$0xf]
  %v209 = vld [vmem:[%s10 + $0x38] sm:$0xf]
  %v210 = vld [vmem:[%s10 + $0x3c] sm:$0xf]
  %v211 = vld [vmem:[%s0] sm:$0x7]
  %v213 = vlaneseq
  %v214 = vshrl.u32 %v213, 7
  %v215 = vsub.s32 0, %v214
  %v216 = vrot.slane %v113, %v215
  %v217 = vlaneseq
  %v218 = vshrl.u32 %v217, 7
  %v219 = vsub.s32 1, %v218
  %v220 = vrot.slane %v113, %v219
  %v221 = vlaneseq
  %v222 = vshrl.u32 %v221, 7
  %v223 = vsub.s32 2, %v222
  %v224 = vrot.slane %v113, %v223
  %v230 = vunpack.c.l.s4 1966171168
  %v231 = vunpack.c.0.s8 %v230
  %v232 = vlaneseq
  %v233 = vshrl.u32 %v232, 7
  %v234 = vsub.s32 %v231, %v233
  %v235 = vrot.slane %v211, %v234
  %v236 = vcombine.high %v235, %v235
  %v238 = vunpack.c.l.s4 1966171168
  %v239 = vunpack.c.0.s8 %v238
  %v240 = vlaneseq
  %v241 = vshrl.u32 %v240, 7
  %v242 = vsub.s32 %v239, %v241
  %v243 = vrot.slane %v235, %v242
  %v245 = vunpack.c.l.s4 1966171168
  %v246 = vunpack.c.0.s8 %v245
  %v247 = vlaneseq
  %v248 = vshrl.u32 %v247, 7
  %v249 = vsub.s32 %v246, %v248
  %v250 = vrot.slane %v236, %v249
  %v251 = vcombine.high %v243, %v243
  %v326 = vunpack.c.l.b16 %v41
  %v327 = vunpack.c.h.b16 %v41
  %v328 = vunpack.c.l.b16 %v42
  %v329 = vunpack.c.l.b16 %v43
  %v330 = vunpack.c.h.b16 %v43
  %v331 = vunpack.c.l.b16 %v44
  %v332 = vunpack.c.l.b16 %v45
  %v333 = vunpack.c.h.b16 %v45
  %v334 = vunpack.c.l.b16 %v46
  %v335 = vunpack.c.l.b16 %v47
  %v336 = vunpack.c.h.b16 %v47
  %v337 = vunpack.c.l.b16 %v48
  %v338 = vunpack.c.l.b16 %v49
  %v339 = vunpack.c.h.b16 %v49
  %v340 = vunpack.c.l.b16 %v50
  %v341 = vunpack.c.l.b16 %v51
  %v342 = vunpack.c.h.b16 %v51
  %v343 = vunpack.c.l.b16 %v52
  %v344 = vunpack.c.l.b16 %v53
  %v345 = vunpack.c.h.b16 %v53
  %v346 = vunpack.c.l.b16 %v54
  %v347 = vunpack.c.l.b16 %v55
  %v348 = vunpack.c.h.b16 %v55
  %v349 = vunpack.c.l.b16 %v56
  %v350 = vunpack.c.l.b16 %v57
  %v351 = vunpack.c.h.b16 %v57
  %v352 = vunpack.c.l.b16 %v58
  %v353 = vunpack.c.l.b16 %v59
  %v354 = vunpack.c.h.b16 %v59
  %v355 = vunpack.c.l.b16 %v60
  %v356 = vunpack.c.l.b16 %v61
  %v357 = vunpack.c.h.b16 %v61
  %v358 = vunpack.c.l.b16 %v62
  %v359 = vunpack.c.l.b16 %v63
  %v360 = vunpack.c.h.b16 %v63
  %v361 = vunpack.c.l.b16 %v64
  %v362 = vunpack.c.l.b16 %v65
  %v363 = vunpack.c.h.b16 %v65
  %v364 = vunpack.c.l.b16 %v66
  %v365 = vunpack.c.l.b16 %v67
  %v366 = vunpack.c.h.b16 %v67
  %v367 = vunpack.c.l.b16 %v68
  %v368 = vunpack.c.l.b16 %v69
  %v369 = vunpack.c.h.b16 %v69
  %v370 = vunpack.c.l.b16 %v70
  %v371 = vunpack.c.l.b16 %v71
  %v372 = vunpack.c.h.b16 %v71
  %v373 = vunpack.c.l.b16 %v72
  %v374 = vunpack.c.l.b16 %v73
  %v375 = vunpack.c.h.b16 %v73
  %v376 = vunpack.c.l.b16 %v74
  %v377 = vunpack.c.l.b16 %v75
  %v378 = vunpack.c.h.b16 %v75
  %v379 = vunpack.c.l.b16 %v76
  %v380 = vunpack.c.l.b16 %v77
  %v381 = vunpack.c.h.b16 %v77
  %v382 = vunpack.c.l.b16 %v78
  %v383 = vunpack.c.l.b16 %v79
  %v384 = vunpack.c.h.b16 %v79
  %v385 = vunpack.c.l.b16 %v80
  %v386 = vunpack.c.l.b16 %v81
  %v387 = vunpack.c.h.b16 %v81
  %v388 = vunpack.c.l.b16 %v82
  %v389 = vunpack.c.l.b16 %v83
  %v390 = vunpack.c.h.b16 %v83
  %v391 = vunpack.c.l.b16 %v84
  %v392 = vunpack.c.l.b16 %v85
  %v393 = vunpack.c.h.b16 %v85
  %v394 = vunpack.c.l.b16 %v86
  %v395 = vunpack.c.l.b16 %v87
  %v396 = vunpack.c.h.b16 %v87
  %v397 = vunpack.c.l.b16 %v88
  %v398 = vunpack.c.l.b16 %v89
  %v399 = vunpack.c.h.b16 %v89
  %v400 = vunpack.c.l.b16 %v90
  %v401 = vunpack.c.l.b16 %v91
  %v402 = vunpack.c.h.b16 %v91
  %v403 = vunpack.c.l.b16 %v92
  %v404 = vunpack.c.l.b16 %v93
  %v405 = vunpack.c.h.b16 %v93
  %v406 = vunpack.c.l.b16 %v94
  %v407 = vunpack.c.l.b16 %v95
  %v408 = vunpack.c.h.b16 %v95
  %v409 = vunpack.c.l.b16 %v96
  %v410 = vunpack.c.l.b16 %v97
  %v411 = vunpack.c.h.b16 %v97
  %v412 = vunpack.c.l.b16 %v98
  %v413 = vunpack.c.l.b16 %v99
  %v414 = vunpack.c.h.b16 %v99
  %v415 = vunpack.c.l.b16 %v100
  %v416 = vunpack.c.l.b16 %v101
  %v417 = vunpack.c.h.b16 %v101
  %v418 = vunpack.c.l.b16 %v102
  %v419 = vunpack.c.l.b16 %v103
  %v420 = vunpack.c.h.b16 %v103
  %v421 = vunpack.c.l.b16 %v104
  %v422 = vunpack.c.l.b16 %v105
  %v423 = vunpack.c.h.b16 %v105
  %v424 = vunpack.c.l.b16 %v106
  %v425 = vunpack.c.l.b16 %v107
  %v426 = vunpack.c.h.b16 %v107
  %v427 = vunpack.c.l.b16 %v108
  %v428 = vunpack.c.l.b16 %v109
  %v429 = vunpack.c.h.b16 %v109
  %v430 = vunpack.c.l.b16 %v110
  %v431 = vunpack.c.l.b16 %v111
  %v432 = vunpack.c.h.b16 %v111
  %v433 = vunpack.c.l.b16 %v112
  %v434 = vpack.c.b16 %v329, %v326
  %v435 = vpack.c.b16 %v330, %v327
  %v436 = vpack.c.b16 %v331, %v328
  %v437 = vpack.c.b16 %v335, %v332
  %v438 = vpack.c.b16 %v336, %v333
  %v439 = vpack.c.b16 %v337, %v334
  %v440 = vpack.c.b16 %v341, %v338
  %v441 = vpack.c.b16 %v342, %v339
  %v442 = vpack.c.b16 %v343, %v340
  %v443 = vpack.c.b16 %v347, %v344
  %v444 = vpack.c.b16 %v348, %v345
  %v445 = vpack.c.b16 %v349, %v346
  %v446 = vpack.c.b16 %v353, %v350
  %v447 = vpack.c.b16 %v354, %v351
  %v448 = vpack.c.b16 %v355, %v352
  %v449 = vpack.c.b16 %v359, %v356
  %v450 = vpack.c.b16 %v360, %v357
  %v451 = vpack.c.b16 %v361, %v358
  %v452 = vpack.c.b16 %v365, %v362
  %v453 = vpack.c.b16 %v366, %v363
  %v454 = vpack.c.b16 %v367, %v364
  %v455 = vpack.c.b16 %v371, %v368
  %v456 = vpack.c.b16 %v372, %v369
  %v457 = vpack.c.b16 %v373, %v370
  %v458 = vpack.c.b16 %v377, %v374
  %v459 = vpack.c.b16 %v378, %v375
  %v460 = vpack.c.b16 %v379, %v376
  %v461 = vpack.c.b16 %v383, %v380
  %v462 = vpack.c.b16 %v384, %v381
  %v463 = vpack.c.b16 %v385, %v382
  %v464 = vpack.c.b16 %v389, %v386
  %v465 = vpack.c.b16 %v390, %v387
  %v466 = vpack.c.b16 %v391, %v388
  %v467 = vpack.c.b16 %v395, %v392
  %v468 = vpack.c.b16 %v396, %v393
  %v469 = vpack.c.b16 %v397, %v394
  %v470 = vpack.c.b16 %v401, %v398
  %v471 = vpack.c.b16 %v402, %v399
  %v472 = vpack.c.b16 %v403, %v400
  %v473 = vpack.c.b16 %v407, %v404
  %v474 = vpack.c.b16 %v408, %v405
  %v475 = vpack.c.b16 %v409, %v406
  %v476 = vpack.c.b16 %v413, %v410
  %v477 = vpack.c.b16 %v414, %v411
  %v478 = vpack.c.b16 %v415, %v412
  %v479 = vpack.c.b16 %v419, %v416
  %v480 = vpack.c.b16 %v420, %v417
  %v481 = vpack.c.b16 %v421, %v418
  %v482 = vpack.c.b16 %v425, %v422
  %v483 = vpack.c.b16 %v426, %v423
  %v484 = vpack.c.b16 %v427, %v424
  %v485 = vpack.c.b16 %v431, %v428
  %v486 = vpack.c.b16 %v432, %v429
  %v487 = vpack.c.b16 %v433, %v430
  %vm542 = vcmask 261120
  %v544 = vsel %vm542, %v251, 0
  %546 = vmatprep.subr.bf16.mxu0 %v435
  %547 = vmatpush1.bf16.msra.mxu0 %v434
  %548 = vmatprep.subr.bf16.mxu0 %v438
  %549 = vmatpush1.bf16.msra.mxu0 %v437
  %550 = vmatprep.subr.bf16.mxu0 %v441
  %551 = vmatpush1.bf16.msra.mxu0 %v440
  %552 = vmatprep.subr.bf16.mxu0 %v444
  %553 = vmatpush1.bf16.msra.mxu0 %v443
  %554 = vmatprep.subr.bf16.mxu0 %v447
  %555 = vmatpush1.bf16.msra.mxu0 %v446
  %556 = vmatprep.subr.bf16.mxu0 %v450
  %557 = vmatpush1.bf16.msra.mxu0 %v449
  %558 = vmatprep.subr.bf16.mxu0 %v453
  %559 = vmatpush1.bf16.msra.mxu0 %v452
  %560 = vmatprep.subr.bf16.mxu0 %v456
  %561 = vmatpush1.bf16.msra.mxu0 %v455
  %562 = vmatprep.subr.bf16.mxu0 %v459
  %563 = vmatpush1.bf16.msra.mxu0 %v458
  %564 = vmatprep.subr.bf16.mxu0 %v462
  %565 = vmatpush1.bf16.msra.mxu0 %v461
  %566 = vmatprep.subr.bf16.mxu0 %v465
  %567 = vmatpush1.bf16.msra.mxu0 %v464
  %568 = vmatprep.subr.bf16.mxu0 %v468
  %569 = vmatpush1.bf16.msra.mxu0 %v467
  %570 = vmatprep.subr.bf16.mxu0 %v471
  %571 = vmatpush1.bf16.msra.mxu0 %v470
  %572 = vmatprep.subr.bf16.mxu0 %v474
  %573 = vmatpush1.bf16.msra.mxu0 %v473
  %574 = vmatprep.subr.bf16.mxu0 %v477
  %575 = vmatpush1.bf16.msra.mxu0 %v476
  %576 = vmatprep.subr.bf16.mxu0 %v480
  %577 = vmatpush1.bf16.msra.mxu0 %v479
  %578 = vmatprep.mubr.bf16.mxu0 %v250
  %579 = vmatmul.mubr.bf16.gmra.mrb[0].mxu0 %v243
  %v580 = vpop.f32.mrb[0].mxu0
  %v581 = vadd.f32 %v216, %v580
  %v582 = vpop.f32.mrb[0].mxu0
  %v583 = vadd.f32 %v220, %v582
  %v584 = vpop.f32.mrb[0].mxu0
  %v585 = vpop.f32.mrb[0].mxu0
  %586 = vdwg.mxu0
  %587 = vmatprep.subr.bf16.mxu0 %v483
  %588 = vmatpush1.bf16.msra.mxu0 %v482
  %589 = vmatprep.subr.bf16.mxu0 %v486
  %590 = vmatpush1.bf16.msra.mxu0 %v485
  %591 = vmatprep.subr.bf16.mxu0 0
  %592 = vmatpush1.bf16.msra.mxu0 0
  %593 = vmatprep.subr.bf16.mxu0 0
  %594 = vmatpush1.bf16.msra.mxu0 0
  %595 = vmatprep.subr.bf16.mxu0 0
  %596 = vmatpush1.bf16.msra.mxu0 0
  %597 = vmatprep.subr.bf16.mxu0 0
  %598 = vmatpush1.bf16.msra.mxu0 0
  %599 = vmatprep.subr.bf16.mxu0 0
  %600 = vmatpush1.bf16.msra.mxu0 0
  %601 = vmatprep.subr.bf16.mxu0 0
  %602 = vmatpush1.bf16.msra.mxu0 0
  %603 = vmatprep.subr.bf16.mxu0 0
  %604 = vmatpush1.bf16.msra.mxu0 0
  %605 = vmatprep.subr.bf16.mxu0 0
  %606 = vmatpush1.bf16.msra.mxu0 0
  %607 = vmatprep.subr.bf16.mxu0 0
  %608 = vmatpush1.bf16.msra.mxu0 0
  %609 = vmatprep.subr.bf16.mxu0 0
  %610 = vmatpush1.bf16.msra.mxu0 0
  %611 = vmatprep.subr.bf16.mxu0 0
  %612 = vmatpush1.bf16.msra.mxu0 0
  %613 = vmatprep.subr.bf16.mxu0 0
  %614 = vmatpush1.bf16.msra.mxu0 0
  %615 = vmatprep.subr.bf16.mxu0 0
  %616 = vmatpush1.bf16.msra.mxu0 0
  %617 = vmatprep.subr.bf16.mxu0 0
  %618 = vmatpush1.bf16.msra.mxu0 0
  %619 = vmatprep.mubr.bf16.mxu0 0
  %620 = vmatmul.mubr.bf16.gmra.mrb[0].mxu0 %v544
  %v621 = vpop.f32.mrb[0].mxu0
  %v622 = vadd.f32 %v581, %v621
  %v623 = vpop.f32.mrb[0].mxu0
  %v624 = vadd.f32 %v583, %v623
  %v625 = vpop.f32.mrb[0].mxu0
  %v626 = vpop.f32.mrb[0].mxu0
  %627 = vdwg.mxu0
  %628 = vmatprep.subr.bf16.mxu0 0
  %629 = vmatpush1.bf16.msra.mxu0 %v436
  %630 = vmatprep.subr.bf16.mxu0 0
  %631 = vmatpush1.bf16.msra.mxu0 %v439
  %632 = vmatprep.subr.bf16.mxu0 0
  %633 = vmatpush1.bf16.msra.mxu0 %v442
  %634 = vmatprep.subr.bf16.mxu0 0
  %635 = vmatpush1.bf16.msra.mxu0 %v445
  %636 = vmatprep.subr.bf16.mxu0 0
  %637 = vmatpush1.bf16.msra.mxu0 %v448
  %638 = vmatprep.subr.bf16.mxu0 0
  %639 = vmatpush1.bf16.msra.mxu0 %v451
  %640 = vmatprep.subr.bf16.mxu0 0
  %641 = vmatpush1.bf16.msra.mxu0 %v454
  %642 = vmatprep.subr.bf16.mxu0 0
  %643 = vmatpush1.bf16.msra.mxu0 %v457
  %644 = vmatprep.subr.bf16.mxu0 0
  %645 = vmatpush1.bf16.msra.mxu0 %v460
  %646 = vmatprep.subr.bf16.mxu0 0
  %647 = vmatpush1.bf16.msra.mxu0 %v463
  %648 = vmatprep.subr.bf16.mxu0 0
  %649 = vmatpush1.bf16.msra.mxu0 %v466
  %650 = vmatprep.subr.bf16.mxu0 0
  %651 = vmatpush1.bf16.msra.mxu0 %v469
  %652 = vmatprep.subr.bf16.mxu0 0
  %653 = vmatpush1.bf16.msra.mxu0 %v472
  %654 = vmatprep.subr.bf16.mxu0 0
  %655 = vmatpush1.bf16.msra.mxu0 %v475
  %656 = vmatprep.subr.bf16.mxu0 0
  %657 = vmatpush1.bf16.msra.mxu0 %v478
  %658 = vmatprep.subr.bf16.mxu0 0
  %659 = vmatpush1.bf16.msra.mxu0 %v481
  %660 = vmatprep.mubr.bf16.mxu0 %v250
  %661 = vmatmul.mubr.bf16.gmra.mrb[0].mxu0 %v243
  %v662 = vpop.f32.mrb[0].mxu0
  %v663 = vadd.f32 %v224, %v662
  %v664 = vpop.f32.mrb[0].mxu0
  %v665 = vpop.f32.mrb[0].mxu0
  %v666 = vpop.f32.mrb[0].mxu0
  %667 = vdwg.mxu0
  %668 = vmatprep.subr.bf16.mxu0 0
  %669 = vmatpush1.bf16.msra.mxu0 %v484
  %670 = vmatprep.subr.bf16.mxu0 0
  %671 = vmatpush1.bf16.msra.mxu0 %v487
  %672 = vmatprep.subr.bf16.mxu0 0
  %673 = vmatpush1.bf16.msra.mxu0 0
  %674 = vmatprep.subr.bf16.mxu0 0
  %675 = vmatpush1.bf16.msra.mxu0 0
  %676 = vmatprep.subr.bf16.mxu0 0
  %677 = vmatpush1.bf16.msra.mxu0 0
  %678 = vmatprep.subr.bf16.mxu0 0
  %679 = vmatpush1.bf16.msra.mxu0 0
  %680 = vmatprep.subr.bf16.mxu0 0
  %681 = vmatpush1.bf16.msra.mxu0 0
  %682 = vmatprep.subr.bf16.mxu0 0
  %683 = vmatpush1.bf16.msra.mxu0 0
  %684 = vmatprep.subr.bf16.mxu0 0
  %685 = vmatpush1.bf16.msra.mxu0 0
  %686 = vmatprep.subr.bf16.mxu0 0
  %687 = vmatpush1.bf16.msra.mxu0 0
  %688 = vmatprep.subr.bf16.mxu0 0
  %689 = vmatpush1.bf16.msra.mxu0 0
  %690 = vmatprep.subr.bf16.mxu0 0
  %691 = vmatpush1.bf16.msra.mxu0 0
  %692 = vmatprep.subr.bf16.mxu0 0
  %693 = vmatpush1.bf16.msra.mxu0 0
  %694 = vmatprep.subr.bf16.mxu0 0
  %695 = vmatpush1.bf16.msra.mxu0 0
  %696 = vmatprep.subr.bf16.mxu0 0
  %697 = vmatpush1.bf16.msra.mxu0 0
  %698 = vmatprep.subr.bf16.mxu0 0
  %699 = vmatpush1.bf16.msra.mxu0 0
  %700 = vmatprep.mubr.bf16.mxu0 0
  %701 = vmatmul.mubr.bf16.gmra.mrb[0].mxu0 %v544
  %v702 = vpop.f32.mrb[0].mxu0
  %v703 = vadd.f32 %v663, %v702
  %v704 = vpop.f32.mrb[0].mxu0
  %v705 = vpop.f32.mrb[0].mxu0
  %v706 = vpop.f32.mrb[0].mxu0
  %707 = vdwg.mxu0
  %v724 = vunpack.c.l.b16 %v114
  %v725 = vunpack.c.h.b16 %v114
  %v726 = vunpack.c.l.b16 %v115
  %v727 = vunpack.c.h.b16 %v115
  %v728 = vunpack.c.l.b16 %v116
  %v729 = vunpack.c.h.b16 %v116
  %v730 = vunpack.c.l.b16 %v117
  %v731 = vunpack.c.h.b16 %v117
  %v732 = vunpack.c.l.b16 %v118
  %v733 = vunpack.c.h.b16 %v118
  %v734 = vunpack.c.l.b16 %v119
  %v735 = vunpack.c.h.b16 %v119
  %v736 = vunpack.c.l.b16 %v120
  %v737 = vunpack.c.h.b16 %v120
  %v738 = vunpack.c.l.b16 %v121
  %v739 = vunpack.c.h.b16 %v121
  %v740 = vunpack.c.l.b16 %v122
  %v741 = vunpack.c.h.b16 %v122
  %v742 = vunpack.c.l.b16 %v123
  %v743 = vunpack.c.h.b16 %v123
  %v744 = vunpack.c.l.b16 %v124
  %v745 = vunpack.c.h.b16 %v124
  %v746 = vunpack.c.l.b16 %v125
  %v747 = vunpack.c.h.b16 %v125
  %v748 = vunpack.c.l.b16 %v126
  %v749 = vunpack.c.h.b16 %v126
  %v750 = vunpack.c.l.b16 %v127
  %v751 = vunpack.c.h.b16 %v127
  %v752 = vunpack.c.l.b16 %v128
  %v753 = vunpack.c.h.b16 %v128
  %v754 = vunpack.c.l.b16 %v129
  %v755 = vunpack.c.h.b16 %v129
  %v756 = vpack.c.b16 %v726, %v724
  %v757 = vpack.c.b16 %v727, %v725
  %v758 = vpack.c.b16 %v730, %v728
  %v759 = vpack.c.b16 %v731, %v729
  %v760 = vpack.c.b16 %v734, %v732
  %v761 = vpack.c.b16 %v735, %v733
  %v762 = vpack.c.b16 %v738, %v736
  %v763 = vpack.c.b16 %v739, %v737
  %v764 = vpack.c.b16 %v742, %v740
  %v765 = vpack.c.b16 %v743, %v741
  %v766 = vpack.c.b16 %v746, %v744
  %v767 = vpack.c.b16 %v747, %v745
  %v768 = vpack.c.b16 %v750, %v748
  %v769 = vpack.c.b16 %v751, %v749
  %v770 = vpack.c.b16 %v754, %v752
  %v771 = vpack.c.b16 %v755, %v753
  %788 = vmatprep.subr.bf16.mxu0 %v757
  %789 = vmatpush1.bf16.msra.mxu0 %v756
  %790 = vmatprep.subr.bf16.mxu0 %v759
  %791 = vmatpush1.bf16.msra.mxu0 %v758
  %792 = vmatprep.subr.bf16.mxu0 %v761
  %793 = vmatpush1.bf16.msra.mxu0 %v760
  %794 = vmatprep.subr.bf16.mxu0 %v763
  %795 = vmatpush1.bf16.msra.mxu0 %v762
  %796 = vmatprep.subr.bf16.mxu0 %v765
  %797 = vmatpush1.bf16.msra.mxu0 %v764
  %798 = vmatprep.subr.bf16.mxu0 %v767
  %799 = vmatpush1.bf16.msra.mxu0 %v766
  %800 = vmatprep.subr.bf16.mxu0 %v769
  %801 = vmatpush1.bf16.msra.mxu0 %v768
  %802 = vmatprep.subr.bf16.mxu0 %v771
  %803 = vmatpush1.bf16.msra.mxu0 %v770
  %804 = vmatprep.subr.bf16.mxu0 0
  %805 = vmatpush1.bf16.msra.mxu0 0
  %806 = vmatprep.subr.bf16.mxu0 0
  %807 = vmatpush1.bf16.msra.mxu0 0
  %808 = vmatprep.subr.bf16.mxu0 0
  %809 = vmatpush1.bf16.msra.mxu0 0
  %810 = vmatprep.subr.bf16.mxu0 0
  %811 = vmatpush1.bf16.msra.mxu0 0
  %812 = vmatprep.subr.bf16.mxu0 0
  %813 = vmatpush1.bf16.msra.mxu0 0
  %814 = vmatprep.subr.bf16.mxu0 0
  %815 = vmatpush1.bf16.msra.mxu0 0
  %816 = vmatprep.subr.bf16.mxu0 0
  %817 = vmatpush1.bf16.msra.mxu0 0
  %818 = vmatprep.subr.bf16.mxu0 0
  %819 = vmatpush1.bf16.msra.mxu0 0
  %820 = vmatprep.mubr.bf16.mxu0 0
  %821 = vmatmul.mubr.bf16.gmra.mrb[0].mxu0 0
  %v822 = vpop.f32.mrb[0].mxu0
  %v823 = vadd.f32 0.0, %v822
  %v824 = vpop.f32.mrb[0].mxu0
  %v825 = vadd.f32 0.0, %v824
  %v826 = vpop.f32.mrb[0].mxu0
  %v827 = vpop.f32.mrb[0].mxu0
  %828 = vdwg.mxu0
  %v829 = vadd.f32 %v622, %v823
  %v830 = vxor.u32 %v829, 2147483648
  %v831 = vmul.f32 %v830, 1.442695
  %v832 = vpow.pop %v831
  %v833 = vadd.f32 %v832, 1.0
  %v834 = vrcp.pop %v833
  %v835 = vmul.f32 1.0, %v834
  %v836 = vadd.f32 %v624, %v825
  %v837 = vxor.u32 %v836, 2147483648
  %v838 = vmul.f32 %v837, 1.442695
  %v839 = vpow.pop %v838
  %v840 = vadd.f32 %v839, 1.0
  %v841 = vrcp.pop %v840
  %v842 = vmul.f32 1.0, %v841
  %v843 = vmul.f32 %v835, 0.0
  %v844 = vpack.c.bf16 %v843, %v843
  %v861 = vunpack.c.l.b16 %v130
  %v862 = vunpack.c.l.b16 %v131
  %v863 = vunpack.c.l.b16 %v132
  %v864 = vunpack.c.l.b16 %v133
  %v865 = vunpack.c.l.b16 %v134
  %v866 = vunpack.c.l.b16 %v135
  %v867 = vunpack.c.l.b16 %v136
  %v868 = vunpack.c.l.b16 %v137
  %v869 = vunpack.c.l.b16 %v138
  %v870 = vunpack.c.l.b16 %v139
  %v871 = vunpack.c.l.b16 %v140
  %v872 = vunpack.c.l.b16 %v141
  %v873 = vunpack.c.l.b16 %v142
  %v874 = vunpack.c.l.b16 %v143
  %v875 = vunpack.c.l.b16 %v144
  %v876 = vunpack.c.l.b16 %v145
  %v877 = vpack.c.b16 %v862, %v861
  %v878 = vpack.c.b16 %v864, %v863
  %v879 = vpack.c.b16 %v866, %v865
  %v880 = vpack.c.b16 %v868, %v867
  %v881 = vpack.c.b16 %v870, %v869
  %v882 = vpack.c.b16 %v872, %v871
  %v883 = vpack.c.b16 %v874, %v873
  %v884 = vpack.c.b16 %v876, %v875
  %893 = vmatprep.subr.bf16.mxu0 0
  %894 = vmatpush1.bf16.msra.mxu0 %v877
  %895 = vmatprep.subr.bf16.mxu0 0
  %896 = vmatpush1.bf16.msra.mxu0 %v878
  %897 = vmatprep.subr.bf16.mxu0 0
  %898 = vmatpush1.bf16.msra.mxu0 %v879
  %899 = vmatprep.subr.bf16.mxu0 0
  %900 = vmatpush1.bf16.msra.mxu0 %v880
  %901 = vmatprep.subr.bf16.mxu0 0
  %902 = vmatpush1.bf16.msra.mxu0 %v881
  %903 = vmatprep.subr.bf16.mxu0 0
  %904 = vmatpush1.bf16.msra.mxu0 %v882
  %905 = vmatprep.subr.bf16.mxu0 0
  %906 = vmatpush1.bf16.msra.mxu0 %v883
  %907 = vmatprep.subr.bf16.mxu0 0
  %908 = vmatpush1.bf16.msra.mxu0 %v884
  %909 = vmatprep.subr.bf16.mxu0 0
  %910 = vmatpush1.bf16.msra.mxu0 0
  %911 = vmatprep.subr.bf16.mxu0 0
  %912 = vmatpush1.bf16.msra.mxu0 0
  %913 = vmatprep.subr.bf16.mxu0 0
  %914 = vmatpush1.bf16.msra.mxu0 0
  %915 = vmatprep.subr.bf16.mxu0 0
  %916 = vmatpush1.bf16.msra.mxu0 0
  %917 = vmatprep.subr.bf16.mxu0 0
  %918 = vmatpush1.bf16.msra.mxu0 0
  %919 = vmatprep.subr.bf16.mxu0 0
  %920 = vmatpush1.bf16.msra.mxu0 0
  %921 = vmatprep.subr.bf16.mxu0 0
  %922 = vmatpush1.bf16.msra.mxu0 0
  %923 = vmatprep.subr.bf16.mxu0 0
  %924 = vmatpush1.bf16.msra.mxu0 0
  %925 = vmatprep.mubr.bf16.mxu0 0
  %926 = vmatmul.mubr.bf16.gmra.mrb[0].mxu0 %v844
  %v927 = vpop.f32.mrb[0].mxu0
  %v928 = vadd.f32 0.0, %v927
  %v929 = vpop.f32.mrb[0].mxu0
  %v930 = vpop.f32.mrb[0].mxu0
  %v931 = vpop.f32.mrb[0].mxu0
  %932 = vdwg.mxu0
  %v933 = vadd.f32 %v703, %v928
  %v934 = vtanh.pop %v933
  %v935 = vsub.f32 1.0, %v842
  %v936 = vmul.f32 %v935, 0.0
  %v937 = vmul.f32 %v842, %v934
  %v938 = vadd.f32 %v936, %v937
  %s939 = scalar_lea.vmem %s0, 3
  %v940 = vld [vmem:[%s939] sm:$0x7]
  %v943 = vunpack.c.l.s4 1966171168
  %v944 = vunpack.c.0.s8 %v943
  %v945 = vlaneseq
  %v946 = vshrl.u32 %v945, 7
  %v947 = vsub.s32 %v944, %v946
  %v948 = vrot.slane %v940, %v947
  %v949 = vcombine.high %v948, %v948
  %v951 = vunpack.c.l.s4 1966171168
  %v952 = vunpack.c.0.s8 %v951
  %v953 = vlaneseq
  %v954 = vshrl.u32 %v953, 7
  %v955 = vsub.s32 %v952, %v954
  %v956 = vrot.slane %v948, %v955
  %v958 = vunpack.c.l.s4 1966171168
  %v959 = vunpack.c.0.s8 %v958
  %v960 = vlaneseq
  %v961 = vshrl.u32 %v960, 7
  %v962 = vsub.s32 %v959, %v961
  %v963 = vrot.slane %v949, %v962
  %v964 = vcombine.high %v956, %v956
  %v968 = vsel %vm542, %v964, 0
  %970 = vmatprep.subr.bf16.mxu0 %v435
  %971 = vmatpush1.bf16.msra.mxu0 %v434
  %972 = vmatprep.subr.bf16.mxu0 %v438
  %973 = vmatpush1.bf16.msra.mxu0 %v437
  %974 = vmatprep.subr.bf16.mxu0 %v441
  %975 = vmatpush1.bf16.msra.mxu0 %v440
  %976 = vmatprep.subr.bf16.mxu0 %v444
  %977 = vmatpush1.bf16.msra.mxu0 %v443
  %978 = vmatprep.subr.bf16.mxu0 %v447
  %979 = vmatpush1.bf16.msra.mxu0 %v446
  %980 = vmatprep.subr.bf16.mxu0 %v450
  %981 = vmatpush1.bf16.msra.mxu0 %v449
  %982 = vmatprep.subr.bf16.mxu0 %v453
  %983 = vmatpush1.bf16.msra.mxu0 %v452
  %984 = vmatprep.subr.bf16.mxu0 %v456
  %985 = vmatpush1.bf16.msra.mxu0 %v455
  %986 = vmatprep.subr.bf16.mxu0 %v459
  %987 = vmatpush1.bf16.msra.mxu0 %v458
  %988 = vmatprep.subr.bf16.mxu0 %v462
  %989 = vmatpush1.bf16.msra.mxu0 %v461
  %990 = vmatprep.subr.bf16.mxu0 %v465
  %991 = vmatpush1.bf16.msra.mxu0 %v464
  %992 = vmatprep.subr.bf16.mxu0 %v468
  %993 = vmatpush1.bf16.msra.mxu0 %v467
  %994 = vmatprep.subr.bf16.mxu0 %v471
  %995 = vmatpush1.bf16.msra.mxu0 %v470
  %996 = vmatprep.subr.bf16.mxu0 %v474
  %997 = vmatpush1.bf16.msra.mxu0 %v473
  %998 = vmatprep.subr.bf16.mxu0 %v477
  %999 = vmatpush1.bf16.msra.mxu0 %v476
  %1000 = vmatprep.subr.bf16.mxu0 %v480
  %1001 = vmatpush1.bf16.msra.mxu0 %v479
  %1002 = vmatprep.mubr.bf16.mxu0 %v963
  %1003 = vmatmul.mubr.bf16.gmra.mrb[0].mxu0 %v956
  %v1004 = vpop.f32.mrb[0].mxu0
  %v1005 = vadd.f32 %v216, %v1004
  %v1006 = vpop.f32.mrb[0].mxu0
  %v1007 = vadd.f32 %v220, %v1006
  %v1008 = vpop.f32.mrb[0].mxu0
  %v1009 = vpop.f32.mrb[0].mxu0
  %1010 = vdwg.mxu0
  %1011 = vmatprep.subr.bf16.mxu0 %v483
  %1012 = vmatpush1.bf16.msra.mxu0 %v482
  %1013 = vmatprep.subr.bf16.mxu0 %v486
  %1014 = vmatpush1.bf16.msra.mxu0 %v485
  %1015 = vmatprep.subr.bf16.mxu0 0
  %1016 = vmatpush1.bf16.msra.mxu0 0
  %1017 = vmatprep.subr.bf16.mxu0 0
  %1018 = vmatpush1.bf16.msra.mxu0 0
  %1019 = vmatprep.subr.bf16.mxu0 0
  %1020 = vmatpush1.bf16.msra.mxu0 0
  %1021 = vmatprep.subr.bf16.mxu0 0
  %1022 = vmatpush1.bf16.msra.mxu0 0
  %1023 = vmatprep.subr.bf16.mxu0 0
  %1024 = vmatpush1.bf16.msra.mxu0 0
  %1025 = vmatprep.subr.bf16.mxu0 0
  %1026 = vmatpush1.bf16.msra.mxu0 0
  %1027 = vmatprep.subr.bf16.mxu0 0
  %1028 = vmatpush1.bf16.msra.mxu0 0
  %1029 = vmatprep.subr.bf16.mxu0 0
  %1030 = vmatpush1.bf16.msra.mxu0 0
  %1031 = vmatprep.subr.bf16.mxu0 0
  %1032 = vmatpush1.bf16.msra.mxu0 0
  %1033 = vmatprep.subr.bf16.mxu0 0
  %1034 = vmatpush1.bf16.msra.mxu0 0
  %1035 = vmatprep.subr.bf16.mxu0 0
  %1036 = vmatpush1.bf16.msra.mxu0 0
  %1037 = vmatprep.subr.bf16.mxu0 0
  %1038 = vmatpush1.bf16.msra.mxu0 0
  %1039 = vmatprep.subr.bf16.mxu0 0
  %1040 = vmatpush1.bf16.msra.mxu0 0
  %1041 = vmatprep.subr.bf16.mxu0 0
  %1042 = vmatpush1.bf16.msra.mxu0 0
  %1043 = vmatprep.mubr.bf16.mxu0 0
  %1044 = vmatmul.mubr.bf16.gmra.mrb[0].mxu0 %v968
  %v1045 = vpop.f32.mrb[0].mxu0
  %v1046 = vadd.f32 %v1005, %v1045
  %v1047 = vpop.f32.mrb[0].mxu0
  %v1048 = vadd.f32 %v1007, %v1047
  %v1049 = vpop.f32.mrb[0].mxu0
  %v1050 = vpop.f32.mrb[0].mxu0
  %1051 = vdwg.mxu0
  %1052 = vmatprep.subr.bf16.mxu0 0
  %1053 = vmatpush1.bf16.msra.mxu0 %v436
  %1054 = vmatprep.subr.bf16.mxu0 0
  %1055 = vmatpush1.bf16.msra.mxu0 %v439
  %1056 = vmatprep.subr.bf16.mxu0 0
  %1057 = vmatpush1.bf16.msra.mxu0 %v442
  %1058 = vmatprep.subr.bf16.mxu0 0
  %1059 = vmatpush1.bf16.msra.mxu0 %v445
  %1060 = vmatprep.subr.bf16.mxu0 0
  %1061 = vmatpush1.bf16.msra.mxu0 %v448
  %1062 = vmatprep.subr.bf16.mxu0 0
  %1063 = vmatpush1.bf16.msra.mxu0 %v451
  %1064 = vmatprep.subr.bf16.mxu0 0
  %1065 = vmatpush1.bf16.msra.mxu0 %v454
  %1066 = vmatprep.subr.bf16.mxu0 0
  %1067 = vmatpush1.bf16.msra.mxu0 %v457
  %1068 = vmatprep.subr.bf16.mxu0 0
  %1069 = vmatpush1.bf16.msra.mxu0 %v460
  %1070 = vmatprep.subr.bf16.mxu0 0
  %1071 = vmatpush1.bf16.msra.mxu0 %v463
  %1072 = vmatprep.subr.bf16.mxu0 0
  %1073 = vmatpush1.bf16.msra.mxu0 %v466
  %1074 = vmatprep.subr.bf16.mxu0 0
  %1075 = vmatpush1.bf16.msra.mxu0 %v469
  %1076 = vmatprep.subr.bf16.mxu0 0
  %1077 = vmatpush1.bf16.msra.mxu0 %v472
  %1078 = vmatprep.subr.bf16.mxu0 0
  %1079 = vmatpush1.bf16.msra.mxu0 %v475
  %1080 = vmatprep.subr.bf16.mxu0 0
  %1081 = vmatpush1.bf16.msra.mxu0 %v478
  %1082 = vmatprep.subr.bf16.mxu0 0
  %1083 = vmatpush1.bf16.msra.mxu0 %v481
  %1084 = vmatprep.mubr.bf16.mxu0 %v963
  %1085 = vmatmul.mubr.bf16.gmra.mrb[0].mxu0 %v956
  %v1086 = vpop.f32.mrb[0].mxu0
  %v1087 = vadd.f32 %v224, %v1086
  %v1088 = vpop.f32.mrb[0].mxu0
  %v1089 = vpop.f32.mrb[0].mxu0
  %v1090 = vpop.f32.mrb[0].mxu0
  %1091 = vdwg.mxu0
  %1092 = vmatprep.subr.bf16.mxu0 0
  %1093 = vmatpush1.bf16.msra.mxu0 %v484
  %1094 = vmatprep.subr.bf16.mxu0 0
  %1095 = vmatpush1.bf16.msra.mxu0 %v487
  %1096 = vmatprep.subr.bf16.mxu0 0
  %1097 = vmatpush1.bf16.msra.mxu0 0
  %1098 = vmatprep.subr.bf16.mxu0 0
  %1099 = vmatpush1.bf16.msra.mxu0 0
  %1100 = vmatprep.subr.bf16.mxu0 0
  %1101 = vmatpush1.bf16.msra.mxu0 0
  %1102 = vmatprep.subr.bf16.mxu0 0
  %1103 = vmatpush1.bf16.msra.mxu0 0
  %1104 = vmatprep.subr.bf16.mxu0 0
  %1105 = vmatpush1.bf16.msra.mxu0 0
  %1106 = vmatprep.subr.bf16.mxu0 0
  %1107 = vmatpush1.bf16.msra.mxu0 0
  %1108 = vmatprep.subr.bf16.mxu0 0
  %1109 = vmatpush1.bf16.msra.mxu0 0
  %1110 = vmatprep.subr.bf16.mxu0 0
  %1111 = vmatpush1.bf16.msra.mxu0 0
  %1112 = vmatprep.subr.bf16.mxu0 0
  %1113 = vmatpush1.bf16.msra.mxu0 0
  %1114 = vmatprep.subr.bf16.mxu0 0
  %1115 = vmatpush1.bf16.msra.mxu0 0
  %1116 = vmatprep.subr.bf16.mxu0 0
  %1117 = vmatpush1.bf16.msra.mxu0 0
  %1118 = vmatprep.subr.bf16.mxu0 0
  %1119 = vmatpush1.bf16.msra.mxu0 0
  %1120 = vmatprep.subr.bf16.mxu0 0
  %1121 = vmatpush1.bf16.msra.mxu0 0
  %1122 = vmatprep.subr.bf16.mxu0 0
  %1123 = vmatpush1.bf16.msra.mxu0 0
  %1124 = vmatprep.mubr.bf16.mxu0 0
  %1125 = vmatmul.mubr.bf16.gmra.mrb[0].mxu0 %v968
  %v1126 = vpop.f32.mrb[0].mxu0
  %v1127 = vadd.f32 %v1087, %v1126
  %v1128 = vpop.f32.mrb[0].mxu0
  %v1129 = vpop.f32.mrb[0].mxu0
  %v1130 = vpop.f32.mrb[0].mxu0
  %1131 = vdwg.mxu0
  %v1132 = vpack.c.bf16 %v938, %v938
  %1133 = vmatprep.subr.bf16.mxu0 %v757
  %1134 = vmatpush1.bf16.msra.mxu0 %v756
  %1135 = vmatprep.subr.bf16.mxu0 %v759
  %1136 = vmatpush1.bf16.msra.mxu0 %v758
  %1137 = vmatprep.subr.bf16.mxu0 %v761
  %1138 = vmatpush1.bf16.msra.mxu0 %v760
  %1139 = vmatprep.subr.bf16.mxu0 %v763
  %1140 = vmatpush1.bf16.msra.mxu0 %v762
  %1141 = vmatprep.subr.bf16.mxu0 %v765
  %1142 = vmatpush1.bf16.msra.mxu0 %v764
  %1143 = vmatprep.subr.bf16.mxu0 %v767
  %1144 = vmatpush1.bf16.msra.mxu0 %v766
  %1145 = vmatprep.subr.bf16.mxu0 %v769
  %1146 = vmatpush1.bf16.msra.mxu0 %v768
  %1147 = vmatprep.subr.bf16.mxu0 %v771
  %1148 = vmatpush1.bf16.msra.mxu0 %v770
  %1149 = vmatprep.subr.bf16.mxu0 0
  %1150 = vmatpush1.bf16.msra.mxu0 0
  %1151 = vmatprep.subr.bf16.mxu0 0
  %1152 = vmatpush1.bf16.msra.mxu0 0
  %1153 = vmatprep.subr.bf16.mxu0 0
  %1154 = vmatpush1.bf16.msra.mxu0 0
  %1155 = vmatprep.subr.bf16.mxu0 0
  %1156 = vmatpush1.bf16.msra.mxu0 0
  %1157 = vmatprep.subr.bf16.mxu0 0
  %1158 = vmatpush1.bf16.msra.mxu0 0
  %1159 = vmatprep.subr.bf16.mxu0 0
  %1160 = vmatpush1.bf16.msra.mxu0 0
  %1161 = vmatprep.subr.bf16.mxu0 0
  %1162 = vmatpush1.bf16.msra.mxu0 0
  %1163 = vmatprep.subr.bf16.mxu0 0
  %1164 = vmatpush1.bf16.msra.mxu0 0
  %1165 = vmatprep.mubr.bf16.mxu0 0
  %1166 = vmatmul.mubr.bf16.gmra.mrb[0].mxu0 %v1132
  %v1167 = vpop.f32.mrb[0].mxu0
  %v1168 = vadd.f32 0.0, %v1167
  %v1169 = vpop.f32.mrb[0].mxu0
  %v1170 = vadd.f32 0.0, %v1169
  %v1171 = vpop.f32.mrb[0].mxu0
  %v1172 = vpop.f32.mrb[0].mxu0
  %1173 = vdwg.mxu0
  %v1174 = vadd.f32 %v1046, %v1168
  %v1175 = vxor.u32 %v1174, 2147483648
  %v1176 = vmul.f32 %v1175, 1.442695
  %v1177 = vpow.pop %v1176
  %v1178 = vadd.f32 %v1177, 1.0
  %v1179 = vrcp.pop %v1178
  %v1180 = vmul.f32 1.0, %v1179
  %v1181 = vadd.f32 %v1048, %v1170
  %v1182 = vxor.u32 %v1181, 2147483648
  %v1183 = vmul.f32 %v1182, 1.442695
  %v1184 = vpow.pop %v1183
  %v1185 = vadd.f32 %v1184, 1.0
  %v1186 = vrcp.pop %v1185
  %v1187 = vmul.f32 1.0, %v1186
  %v1188 = vmul.f32 %v1180, %v938
  %v1189 = vpack.c.bf16 %v1188, %v1188
  %1190 = vmatprep.subr.bf16.mxu0 0
  %1191 = vmatpush1.bf16.msra.mxu0 %v877
  %1192 = vmatprep.subr.bf16.mxu0 0
  %1193 = vmatpush1.bf16.msra.mxu0 %v878
  %1194 = vmatprep.subr.bf16.mxu0 0
  %1195 = vmatpush1.bf16.msra.mxu0 %v879
  %1196 = vmatprep.subr.bf16.mxu0 0
  %1197 = vmatpush1.bf16.msra.mxu0 %v880
  %1198 = vmatprep.subr.bf16.mxu0 0
  %1199 = vmatpush1.bf16.msra.mxu0 %v881
  %1200 = vmatprep.subr.bf16.mxu0 0
  %1201 = vmatpush1.bf16.msra.mxu0 %v882
  %1202 = vmatprep.subr.bf16.mxu0 0
  %1203 = vmatpush1.bf16.msra.mxu0 %v883
  %1204 = vmatprep.subr.bf16.mxu0 0
  %1205 = vmatpush1.bf16.msra.mxu0 %v884
  %1206 = vmatprep.subr.bf16.mxu0 0
  %1207 = vmatpush1.bf16.msra.mxu0 0
  %1208 = vmatprep.subr.bf16.mxu0 0
  %1209 = vmatpush1.bf16.msra.mxu0 0
  %1210 = vmatprep.subr.bf16.mxu0 0
  %1211 = vmatpush1.bf16.msra.mxu0 0
  %1212 = vmatprep.subr.bf16.mxu0 0
  %1213 = vmatpush1.bf16.msra.mxu0 0
  %1214 = vmatprep.subr.bf16.mxu0 0
  %1215 = vmatpush1.bf16.msra.mxu0 0
  %1216 = vmatprep.subr.bf16.mxu0 0
  %1217 = vmatpush1.bf16.msra.mxu0 0
  %1218 = vmatprep.subr.bf16.mxu0 0
  %1219 = vmatpush1.bf16.msra.mxu0 0
  %1220 = vmatprep.subr.bf16.mxu0 0
  %1221 = vmatpush1.bf16.msra.mxu0 0
  %1222 = vmatprep.mubr.bf16.mxu0 0
  %1223 = vmatmul.mubr.bf16.gmra.mrb[0].mxu0 %v1189
  %v1224 = vpop.f32.mrb[0].mxu0
  %v1225 = vadd.f32 0.0, %v1224
  %v1226 = vpop.f32.mrb[0].mxu0
  %v1227 = vpop.f32.mrb[0].mxu0
  %v1228 = vpop.f32.mrb[0].mxu0
  %1229 = vdwg.mxu0
  %v1230 = vadd.f32 %v1127, %v1225
  %v1231 = vtanh.pop %v1230
  %v1232 = vsub.f32 1.0, %v1187
  %v1233 = vmul.f32 %v1232, %v938
  %v1234 = vmul.f32 %v1187, %v1231
  %v1235 = vadd.f32 %v1233, %v1234
  %s1236 = scalar_lea.vmem %s0, 6
  %v1237 = vld [vmem:[%s1236] sm:$0x7]
  %v1240 = vunpack.c.l.s4 1966171168
  %v1241 = vunpack.c.0.s8 %v1240
  %v1242 = vlaneseq
  %v1243 = vshrl.u32 %v1242, 7
  %v1244 = vsub.s32 %v1241, %v1243
  %v1245 = vrot.slane %v1237, %v1244
  %v1246 = vcombine.high %v1245, %v1245
  %v1248 = vunpack.c.l.s4 1966171168
  %v1249 = vunpack.c.0.s8 %v1248
  %v1250 = vlaneseq
  %v1251 = vshrl.u32 %v1250, 7
  %v1252 = vsub.s32 %v1249, %v1251
  %v1253 = vrot.slane %v1245, %v1252
  %v1255 = vunpack.c.l.s4 1966171168
  %v1256 = vunpack.c.0.s8 %v1255
  %v1257 = vlaneseq
  %v1258 = vshrl.u32 %v1257, 7
  %v1259 = vsub.s32 %v1256, %v1258
  %v1260 = vrot.slane %v1246, %v1259
  %v1261 = vcombine.high %v1253, %v1253
  %v1265 = vsel %vm542, %v1261, 0
  %1267 = vmatprep.subr.bf16.mxu0 %v435
  %1268 = vmatpush1.bf16.msra.mxu0 %v434
  %1269 = vmatprep.subr.bf16.mxu0 %v438
  %1270 = vmatpush1.bf16.msra.mxu0 %v437
  %1271 = vmatprep.subr.bf16.mxu0 %v441
  %1272 = vmatpush1.bf16.msra.mxu0 %v440
  %1273 = vmatprep.subr.bf16.mxu0 %v444
  %1274 = vmatpush1.bf16.msra.mxu0 %v443
  %1275 = vmatprep.subr.bf16.mxu0 %v447
  %1276 = vmatpush1.bf16.msra.mxu0 %v446
  %1277 = vmatprep.subr.bf16.mxu0 %v450
  %1278 = vmatpush1.bf16.msra.mxu0 %v449
  %1279 = vmatprep.subr.bf16.mxu0 %v453
  %1280 = vmatpush1.bf16.msra.mxu0 %v452
  %1281 = vmatprep.subr.bf16.mxu0 %v456
  %1282 = vmatpush1.bf16.msra.mxu0 %v455
  %1283 = vmatprep.subr.bf16.mxu0 %v459
  %1284 = vmatpush1.bf16.msra.mxu0 %v458
  %1285 = vmatprep.subr.bf16.mxu0 %v462
  %1286 = vmatpush1.bf16.msra.mxu0 %v461
  %1287 = vmatprep.subr.bf16.mxu0 %v465
  %1288 = vmatpush1.bf16.msra.mxu0 %v464
  %1289 = vmatprep.subr.bf16.mxu0 %v468
  %1290 = vmatpush1.bf16.msra.mxu0 %v467
  %1291 = vmatprep.subr.bf16.mxu0 %v471
  %1292 = vmatpush1.bf16.msra.mxu0 %v470
  %1293 = vmatprep.subr.bf16.mxu0 %v474
  %1294 = vmatpush1.bf16.msra.mxu0 %v473
  %1295 = vmatprep.subr.bf16.mxu0 %v477
  %1296 = vmatpush1.bf16.msra.mxu0 %v476
  %1297 = vmatprep.subr.bf16.mxu0 %v480
  %1298 = vmatpush1.bf16.msra.mxu0 %v479
  %1299 = vmatprep.mubr.bf16.mxu0 %v1260
  %1300 = vmatmul.mubr.bf16.gmra.mrb[0].mxu0 %v1253
  %v1301 = vpop.f32.mrb[0].mxu0
  %v1302 = vadd.f32 %v216, %v1301
  %v1303 = vpop.f32.mrb[0].mxu0
  %v1304 = vadd.f32 %v220, %v1303
  %v1305 = vpop.f32.mrb[0].mxu0
  %v1306 = vpop.f32.mrb[0].mxu0
  %1307 = vdwg.mxu0
  %1308 = vmatprep.subr.bf16.mxu0 %v483
  %1309 = vmatpush1.bf16.msra.mxu0 %v482
  %1310 = vmatprep.subr.bf16.mxu0 %v486
  %1311 = vmatpush1.bf16.msra.mxu0 %v485
  %1312 = vmatprep.subr.bf16.mxu0 0
  %1313 = vmatpush1.bf16.msra.mxu0 0
  %1314 = vmatprep.subr.bf16.mxu0 0
  %1315 = vmatpush1.bf16.msra.mxu0 0
  %1316 = vmatprep.subr.bf16.mxu0 0
  %1317 = vmatpush1.bf16.msra.mxu0 0
  %1318 = vmatprep.subr.bf16.mxu0 0
  %1319 = vmatpush1.bf16.msra.mxu0 0
  %1320 = vmatprep.subr.bf16.mxu0 0
  %1321 = vmatpush1.bf16.msra.mxu0 0
  %1322 = vmatprep.subr.bf16.mxu0 0
  %1323 = vmatpush1.bf16.msra.mxu0 0
  %1324 = vmatprep.subr.bf16.mxu0 0
  %1325 = vmatpush1.bf16.msra.mxu0 0
  %1326 = vmatprep.subr.bf16.mxu0 0
  %1327 = vmatpush1.bf16.msra.mxu0 0
  %1328 = vmatprep.subr.bf16.mxu0 0
  %1329 = vmatpush1.bf16.msra.mxu0 0
  %1330 = vmatprep.subr.bf16.mxu0 0
  %1331 = vmatpush1.bf16.msra.mxu0 0
  %1332 = vmatprep.subr.bf16.mxu0 0
  %1333 = vmatpush1.bf16.msra.mxu0 0
  %1334 = vmatprep.subr.bf16.mxu0 0
  %1335 = vmatpush1.bf16.msra.mxu0 0
  %1336 = vmatprep.subr.bf16.mxu0 0
  %1337 = vmatpush1.bf16.msra.mxu0 0
  %1338 = vmatprep.subr.bf16.mxu0 0
  %1339 = vmatpush1.bf16.msra.mxu0 0
  %1340 = vmatprep.mubr.bf16.mxu0 0
  %1341 = vmatmul.mubr.bf16.gmra.mrb[0].mxu0 %v1265
  %v1342 = vpop.f32.mrb[0].mxu0
  %v1343 = vadd.f32 %v1302, %v1342
  %v1344 = vpop.f32.mrb[0].mxu0
  %v1345 = vadd.f32 %v1304, %v1344
  %v1346 = vpop.f32.mrb[0].mxu0
  %v1347 = vpop.f32.mrb[0].mxu0
  %1348 = vdwg.mxu0
  %1349 = vmatprep.subr.bf16.mxu0 0
  %1350 = vmatpush1.bf16.msra.mxu0 %v436
  %1351 = vmatprep.subr.bf16.mxu0 0
  %1352 = vmatpush1.bf16.msra.mxu0 %v439
  %1353 = vmatprep.subr.bf16.mxu0 0
  %1354 = vmatpush1.bf16.msra.mxu0 %v442
  %1355 = vmatprep.subr.bf16.mxu0 0
  %1356 = vmatpush1.bf16.msra.mxu0 %v445
  %1357 = vmatprep.subr.bf16.mxu0 0
  %1358 = vmatpush1.bf16.msra.mxu0 %v448
  %1359 = vmatprep.subr.bf16.mxu0 0
  %1360 = vmatpush1.bf16.msra.mxu0 %v451
  %1361 = vmatprep.subr.bf16.mxu0 0
  %1362 = vmatpush1.bf16.msra.mxu0 %v454
  %1363 = vmatprep.subr.bf16.mxu0 0
  %1364 = vmatpush1.bf16.msra.mxu0 %v457
  %1365 = vmatprep.subr.bf16.mxu0 0
  %1366 = vmatpush1.bf16.msra.mxu0 %v460
  %1367 = vmatprep.subr.bf16.mxu0 0
  %1368 = vmatpush1.bf16.msra.mxu0 %v463
  %1369 = vmatprep.subr.bf16.mxu0 0
  %1370 = vmatpush1.bf16.msra.mxu0 %v466
  %1371 = vmatprep.subr.bf16.mxu0 0
  %1372 = vmatpush1.bf16.msra.mxu0 %v469
  %1373 = vmatprep.subr.bf16.mxu0 0
  %1374 = vmatpush1.bf16.msra.mxu0 %v472
  %1375 = vmatprep.subr.bf16.mxu0 0
  %1376 = vmatpush1.bf16.msra.mxu0 %v475
  %1377 = vmatprep.subr.bf16.mxu0 0
  %1378 = vmatpush1.bf16.msra.mxu0 %v478
  %1379 = vmatprep.subr.bf16.mxu0 0
  %1380 = vmatpush1.bf16.msra.mxu0 %v481
  %1381 = vmatprep.mubr.bf16.mxu0 %v1260
  %1382 = vmatmul.mubr.bf16.gmra.mrb[0].mxu0 %v1253
  %v1383 = vpop.f32.mrb[0].mxu0
  %v1384 = vadd.f32 %v224, %v1383
  %v1385 = vpop.f32.mrb[0].mxu0
  %v1386 = vpop.f32.mrb[0].mxu0
  %v1387 = vpop.f32.mrb[0].mxu0
  %1388 = vdwg.mxu0
  %1389 = vmatprep.subr.bf16.mxu0 0
  %1390 = vmatpush1.bf16.msra.mxu0 %v484
  %1391 = vmatprep.subr.bf16.mxu0 0
  %1392 = vmatpush1.bf16.msra.mxu0 %v487
  %1393 = vmatprep.subr.bf16.mxu0 0
  %1394 = vmatpush1.bf16.msra.mxu0 0
  %1395 = vmatprep.subr.bf16.mxu0 0
  %1396 = vmatpush1.bf16.msra.mxu0 0
  %1397 = vmatprep.subr.bf16.mxu0 0
  %1398 = vmatpush1.bf16.msra.mxu0 0
  %1399 = vmatprep.subr.bf16.mxu0 0
  %1400 = vmatpush1.bf16.msra.mxu0 0
  %1401 = vmatprep.subr.bf16.mxu0 0
  %1402 = vmatpush1.bf16.msra.mxu0 0
  %1403 = vmatprep.subr.bf16.mxu0 0
  %1404 = vmatpush1.bf16.msra.mxu0 0
  %1405 = vmatprep.subr.bf16.mxu0 0
  %1406 = vmatpush1.bf16.msra.mxu0 0
  %1407 = vmatprep.subr.bf16.mxu0 0
  %1408 = vmatpush1.bf16.msra.mxu0 0
  %1409 = vmatprep.subr.bf16.mxu0 0
  %1410 = vmatpush1.bf16.msra.mxu0 0
  %1411 = vmatprep.subr.bf16.mxu0 0
  %1412 = vmatpush1.bf16.msra.mxu0 0
  %1413 = vmatprep.subr.bf16.mxu0 0
  %1414 = vmatpush1.bf16.msra.mxu0 0
  %1415 = vmatprep.subr.bf16.mxu0 0
  %1416 = vmatpush1.bf16.msra.mxu0 0
  %1417 = vmatprep.subr.bf16.mxu0 0
  %1418 = vmatpush1.bf16.msra.mxu0 0
  %1419 = vmatprep.subr.bf16.mxu0 0
  %1420 = vmatpush1.bf16.msra.mxu0 0
  %1421 = vmatprep.mubr.bf16.mxu0 0
  %1422 = vmatmul.mubr.bf16.gmra.mrb[0].mxu0 %v1265
  %v1423 = vpop.f32.mrb[0].mxu0
  %v1424 = vadd.f32 %v1384, %v1423
  %v1425 = vpop.f32.mrb[0].mxu0
  %v1426 = vpop.f32.mrb[0].mxu0
  %v1427 = vpop.f32.mrb[0].mxu0
  %1428 = vdwg.mxu0
  %v1429 = vpack.c.bf16 %v1235, %v1235
  %1430 = vmatprep.subr.bf16.mxu0 %v757
  %1431 = vmatpush1.bf16.msra.mxu0 %v756
  %1432 = vmatprep.subr.bf16.mxu0 %v759
  %1433 = vmatpush1.bf16.msra.mxu0 %v758
  %1434 = vmatprep.subr.bf16.mxu0 %v761
  %1435 = vmatpush1.bf16.msra.mxu0 %v760
  %1436 = vmatprep.subr.bf16.mxu0 %v763
  %1437 = vmatpush1.bf16.msra.mxu0 %v762
  %1438 = vmatprep.subr.bf16.mxu0 %v765
  %1439 = vmatpush1.bf16.msra.mxu0 %v764
  %1440 = vmatprep.subr.bf16.mxu0 %v767
  %1441 = vmatpush1.bf16.msra.mxu0 %v766
  %1442 = vmatprep.subr.bf16.mxu0 %v769
  %1443 = vmatpush1.bf16.msra.mxu0 %v768
  %1444 = vmatprep.subr.bf16.mxu0 %v771
  %1445 = vmatpush1.bf16.msra.mxu0 %v770
  %1446 = vmatprep.subr.bf16.mxu0 0
  %1447 = vmatpush1.bf16.msra.mxu0 0
  %1448 = vmatprep.subr.bf16.mxu0 0
  %1449 = vmatpush1.bf16.msra.mxu0 0
  %1450 = vmatprep.subr.bf16.mxu0 0
  %1451 = vmatpush1.bf16.msra.mxu0 0
  %1452 = vmatprep.subr.bf16.mxu0 0
  %1453 = vmatpush1.bf16.msra.mxu0 0
  %1454 = vmatprep.subr.bf16.mxu0 0
  %1455 = vmatpush1.bf16.msra.mxu0 0
  %1456 = vmatprep.subr.bf16.mxu0 0
  %1457 = vmatpush1.bf16.msra.mxu0 0
  %1458 = vmatprep.subr.bf16.mxu0 0
  %1459 = vmatpush1.bf16.msra.mxu0 0
  %1460 = vmatprep.subr.bf16.mxu0 0
  %1461 = vmatpush1.bf16.msra.mxu0 0
  %1462 = vmatprep.mubr.bf16.mxu0 0
  %1463 = vmatmul.mubr.bf16.gmra.mrb[0].mxu0 %v1429
  %v1464 = vpop.f32.mrb[0].mxu0
  %v1465 = vadd.f32 0.0, %v1464
  %v1466 = vpop.f32.mrb[0].mxu0
  %v1467 = vadd.f32 0.0, %v1466
  %v1468 = vpop.f32.mrb[0].mxu0
  %v1469 = vpop.f32.mrb[0].mxu0
  %1470 = vdwg.mxu0
  %v1471 = vadd.f32 %v1343, %v1465
  %v1472 = vxor.u32 %v1471, 2147483648
  %v1473 = vmul.f32 %v1472, 1.442695
  %v1474 = vpow.pop %v1473
  %v1475 = vadd.f32 %v1474, 1.0
  %v1476 = vrcp.pop %v1475
  %v1477 = vmul.f32 1.0, %v1476
  %v1478 = vadd.f32 %v1345, %v1467
  %v1479 = vxor.u32 %v1478, 2147483648
  %v1480 = vmul.f32 %v1479, 1.442695
  %v1481 = vpow.pop %v1480
  %v1482 = vadd.f32 %v1481, 1.0
  %v1483 = vrcp.pop %v1482
  %v1484 = vmul.f32 1.0, %v1483
  %v1485 = vmul.f32 %v1477, %v1235
  %v1486 = vpack.c.bf16 %v1485, %v1485
  %1487 = vmatprep.subr.bf16.mxu0 0
  %1488 = vmatpush1.bf16.msra.mxu0 %v877
  %1489 = vmatprep.subr.bf16.mxu0 0
  %1490 = vmatpush1.bf16.msra.mxu0 %v878
  %1491 = vmatprep.subr.bf16.mxu0 0
  %1492 = vmatpush1.bf16.msra.mxu0 %v879
  %1493 = vmatprep.subr.bf16.mxu0 0
  %1494 = vmatpush1.bf16.msra.mxu0 %v880
  %1495 = vmatprep.subr.bf16.mxu0 0
  %1496 = vmatpush1.bf16.msra.mxu0 %v881
  %1497 = vmatprep.subr.bf16.mxu0 0
  %1498 = vmatpush1.bf16.msra.mxu0 %v882
  %1499 = vmatprep.subr.bf16.mxu0 0
  %1500 = vmatpush1.bf16.msra.mxu0 %v883
  %1501 = vmatprep.subr.bf16.mxu0 0
  %1502 = vmatpush1.bf16.msra.mxu0 %v884
  %1503 = vmatprep.subr.bf16.mxu0 0
  %1504 = vmatpush1.bf16.msra.mxu0 0
  %1505 = vmatprep.subr.bf16.mxu0 0
  %1506 = vmatpush1.bf16.msra.mxu0 0
  %1507 = vmatprep.subr.bf16.mxu0 0
  %1508 = vmatpush1.bf16.msra.mxu0 0
  %1509 = vmatprep.subr.bf16.mxu0 0
  %1510 = vmatpush1.bf16.msra.mxu0 0
  %1511 = vmatprep.subr.bf16.mxu0 0
  %1512 = vmatpush1.bf16.msra.mxu0 0
  %1513 = vmatprep.subr.bf16.mxu0 0
  %1514 = vmatpush1.bf16.msra.mxu0 0
  %1515 = vmatprep.subr.bf16.mxu0 0
  %1516 = vmatpush1.bf16.msra.mxu0 0
  %1517 = vmatprep.subr.bf16.mxu0 0
  %1518 = vmatpush1.bf16.msra.mxu0 0
  %1519 = vmatprep.mubr.bf16.mxu0 0
  %1520 = vmatmul.mubr.bf16.gmra.mrb[0].mxu0 %v1486
  %v1521 = vpop.f32.mrb[0].mxu0
  %v1522 = vadd.f32 0.0, %v1521
  %v1523 = vpop.f32.mrb[0].mxu0
  %v1524 = vpop.f32.mrb[0].mxu0
  %v1525 = vpop.f32.mrb[0].mxu0
  %1526 = vdwg.mxu0
  %v1527 = vadd.f32 %v1424, %v1522
  %v1528 = vtanh.pop %v1527
  %v1529 = vsub.f32 1.0, %v1484
  %v1530 = vmul.f32 %v1529, %v1235
  %v1531 = vmul.f32 %v1484, %v1528
  %v1532 = vadd.f32 %v1530, %v1531
  %s1533 = scalar_lea.vmem %s0, 9
  %v1534 = vld [vmem:[%s1533] sm:$0x7]
  %v1537 = vunpack.c.l.s4 1966171168
  %v1538 = vunpack.c.0.s8 %v1537
  %v1539 = vlaneseq
  %v1540 = vshrl.u32 %v1539, 7
  %v1541 = vsub.s32 %v1538, %v1540
  %v1542 = vrot.slane %v1534, %v1541
  %v1543 = vcombine.high %v1542, %v1542
  %v1545 = vunpack.c.l.s4 1966171168
  %v1546 = vunpack.c.0.s8 %v1545
  %v1547 = vlaneseq
  %v1548 = vshrl.u32 %v1547, 7
  %v1549 = vsub.s32 %v1546, %v1548
  %v1550 = vrot.slane %v1542, %v1549
  %v1552 = vunpack.c.l.s4 1966171168
  %v1553 = vunpack.c.0.s8 %v1552
  %v1554 = vlaneseq
  %v1555 = vshrl.u32 %v1554, 7
  %v1556 = vsub.s32 %v1553, %v1555
  %v1557 = vrot.slane %v1543, %v1556
  %v1558 = vcombine.high %v1550, %v1550
  %v1562 = vsel %vm542, %v1558, 0
  %1564 = vmatprep.subr.bf16.mxu0 %v435
  %1565 = vmatpush1.bf16.msra.mxu0 %v434
  %1566 = vmatprep.subr.bf16.mxu0 %v438
  %1567 = vmatpush1.bf16.msra.mxu0 %v437
  %1568 = vmatprep.subr.bf16.mxu0 %v441
  %1569 = vmatpush1.bf16.msra.mxu0 %v440
  %1570 = vmatprep.subr.bf16.mxu0 %v444
  %1571 = vmatpush1.bf16.msra.mxu0 %v443
  %1572 = vmatprep.subr.bf16.mxu0 %v447
  %1573 = vmatpush1.bf16.msra.mxu0 %v446
  %1574 = vmatprep.subr.bf16.mxu0 %v450
  %1575 = vmatpush1.bf16.msra.mxu0 %v449
  %1576 = vmatprep.subr.bf16.mxu0 %v453
  %1577 = vmatpush1.bf16.msra.mxu0 %v452
  %1578 = vmatprep.subr.bf16.mxu0 %v456
  %1579 = vmatpush1.bf16.msra.mxu0 %v455
  %1580 = vmatprep.subr.bf16.mxu0 %v459
  %1581 = vmatpush1.bf16.msra.mxu0 %v458
  %1582 = vmatprep.subr.bf16.mxu0 %v462
  %1583 = vmatpush1.bf16.msra.mxu0 %v461
  %1584 = vmatprep.subr.bf16.mxu0 %v465
  %1585 = vmatpush1.bf16.msra.mxu0 %v464
  %1586 = vmatprep.subr.bf16.mxu0 %v468
  %1587 = vmatpush1.bf16.msra.mxu0 %v467
  %1588 = vmatprep.subr.bf16.mxu0 %v471
  %1589 = vmatpush1.bf16.msra.mxu0 %v470
  %1590 = vmatprep.subr.bf16.mxu0 %v474
  %1591 = vmatpush1.bf16.msra.mxu0 %v473
  %1592 = vmatprep.subr.bf16.mxu0 %v477
  %1593 = vmatpush1.bf16.msra.mxu0 %v476
  %1594 = vmatprep.subr.bf16.mxu0 %v480
  %1595 = vmatpush1.bf16.msra.mxu0 %v479
  %1596 = vmatprep.mubr.bf16.mxu0 %v1557
  %1597 = vmatmul.mubr.bf16.gmra.mrb[0].mxu0 %v1550
  %v1598 = vpop.f32.mrb[0].mxu0
  %v1599 = vadd.f32 %v216, %v1598
  %v1600 = vpop.f32.mrb[0].mxu0
  %v1601 = vadd.f32 %v220, %v1600
  %v1602 = vpop.f32.mrb[0].mxu0
  %v1603 = vpop.f32.mrb[0].mxu0
  %1604 = vdwg.mxu0
  %1605 = vmatprep.subr.bf16.mxu0 %v483
  %1606 = vmatpush1.bf16.msra.mxu0 %v482
  %1607 = vmatprep.subr.bf16.mxu0 %v486
  %1608 = vmatpush1.bf16.msra.mxu0 %v485
  %1609 = vmatprep.subr.bf16.mxu0 0
  %1610 = vmatpush1.bf16.msra.mxu0 0
  %1611 = vmatprep.subr.bf16.mxu0 0
  %1612 = vmatpush1.bf16.msra.mxu0 0
  %1613 = vmatprep.subr.bf16.mxu0 0
  %1614 = vmatpush1.bf16.msra.mxu0 0
  %1615 = vmatprep.subr.bf16.mxu0 0
  %1616 = vmatpush1.bf16.msra.mxu0 0
  %1617 = vmatprep.subr.bf16.mxu0 0
  %1618 = vmatpush1.bf16.msra.mxu0 0
  %1619 = vmatprep.subr.bf16.mxu0 0
  %1620 = vmatpush1.bf16.msra.mxu0 0
  %1621 = vmatprep.subr.bf16.mxu0 0
  %1622 = vmatpush1.bf16.msra.mxu0 0
  %1623 = vmatprep.subr.bf16.mxu0 0
  %1624 = vmatpush1.bf16.msra.mxu0 0
  %1625 = vmatprep.subr.bf16.mxu0 0
  %1626 = vmatpush1.bf16.msra.mxu0 0
  %1627 = vmatprep.subr.bf16.mxu0 0
  %1628 = vmatpush1.bf16.msra.mxu0 0
  %1629 = vmatprep.subr.bf16.mxu0 0
  %1630 = vmatpush1.bf16.msra.mxu0 0
  %1631 = vmatprep.subr.bf16.mxu0 0
  %1632 = vmatpush1.bf16.msra.mxu0 0
  %1633 = vmatprep.subr.bf16.mxu0 0
  %1634 = vmatpush1.bf16.msra.mxu0 0
  %1635 = vmatprep.subr.bf16.mxu0 0
  %1636 = vmatpush1.bf16.msra.mxu0 0
  %1637 = vmatprep.mubr.bf16.mxu0 0
  %1638 = vmatmul.mubr.bf16.gmra.mrb[0].mxu0 %v1562
  %v1639 = vpop.f32.mrb[0].mxu0
  %v1640 = vadd.f32 %v1599, %v1639
  %v1641 = vpop.f32.mrb[0].mxu0
  %v1642 = vadd.f32 %v1601, %v1641
  %v1643 = vpop.f32.mrb[0].mxu0
  %v1644 = vpop.f32.mrb[0].mxu0
  %1645 = vdwg.mxu0
  %1646 = vmatprep.subr.bf16.mxu0 0
  %1647 = vmatpush1.bf16.msra.mxu0 %v436
  %1648 = vmatprep.subr.bf16.mxu0 0
  %1649 = vmatpush1.bf16.msra.mxu0 %v439
  %1650 = vmatprep.subr.bf16.mxu0 0
  %1651 = vmatpush1.bf16.msra.mxu0 %v442
  %1652 = vmatprep.subr.bf16.mxu0 0
  %1653 = vmatpush1.bf16.msra.mxu0 %v445
  %1654 = vmatprep.subr.bf16.mxu0 0
  %1655 = vmatpush1.bf16.msra.mxu0 %v448
  %1656 = vmatprep.subr.bf16.mxu0 0
  %1657 = vmatpush1.bf16.msra.mxu0 %v451
  %1658 = vmatprep.subr.bf16.mxu0 0
  %1659 = vmatpush1.bf16.msra.mxu0 %v454
  %1660 = vmatprep.subr.bf16.mxu0 0
  %1661 = vmatpush1.bf16.msra.mxu0 %v457
  %1662 = vmatprep.subr.bf16.mxu0 0
  %1663 = vmatpush1.bf16.msra.mxu0 %v460
  %1664 = vmatprep.subr.bf16.mxu0 0
  %1665 = vmatpush1.bf16.msra.mxu0 %v463
  %1666 = vmatprep.subr.bf16.mxu0 0
  %1667 = vmatpush1.bf16.msra.mxu0 %v466
  %1668 = vmatprep.subr.bf16.mxu0 0
  %1669 = vmatpush1.bf16.msra.mxu0 %v469
  %1670 = vmatprep.subr.bf16.mxu0 0
  %1671 = vmatpush1.bf16.msra.mxu0 %v472
  %1672 = vmatprep.subr.bf16.mxu0 0
  %1673 = vmatpush1.bf16.msra.mxu0 %v475
  %1674 = vmatprep.subr.bf16.mxu0 0
  %1675 = vmatpush1.bf16.msra.mxu0 %v478
  %1676 = vmatprep.subr.bf16.mxu0 0
  %1677 = vmatpush1.bf16.msra.mxu0 %v481
  %1678 = vmatprep.mubr.bf16.mxu0 %v1557
  %1679 = vmatmul.mubr.bf16.gmra.mrb[0].mxu0 %v1550
  %v1680 = vpop.f32.mrb[0].mxu0
  %v1681 = vadd.f32 %v224, %v1680
  %v1682 = vpop.f32.mrb[0].mxu0
  %v1683 = vpop.f32.mrb[0].mxu0
  %v1684 = vpop.f32.mrb[0].mxu0
  %1685 = vdwg.mxu0
  %1686 = vmatprep.subr.bf16.mxu0 0
  %1687 = vmatpush1.bf16.msra.mxu0 %v484
  %1688 = vmatprep.subr.bf16.mxu0 0
  %1689 = vmatpush1.bf16.msra.mxu0 %v487
  %1690 = vmatprep.subr.bf16.mxu0 0
  %1691 = vmatpush1.bf16.msra.mxu0 0
  %1692 = vmatprep.subr.bf16.mxu0 0
  %1693 = vmatpush1.bf16.msra.mxu0 0
  %1694 = vmatprep.subr.bf16.mxu0 0
  %1695 = vmatpush1.bf16.msra.mxu0 0
  %1696 = vmatprep.subr.bf16.mxu0 0
  %1697 = vmatpush1.bf16.msra.mxu0 0
  %1698 = vmatprep.subr.bf16.mxu0 0
  %1699 = vmatpush1.bf16.msra.mxu0 0
  %1700 = vmatprep.subr.bf16.mxu0 0
  %1701 = vmatpush1.bf16.msra.mxu0 0
  %1702 = vmatprep.subr.bf16.mxu0 0
  %1703 = vmatpush1.bf16.msra.mxu0 0
  %1704 = vmatprep.subr.bf16.mxu0 0
  %1705 = vmatpush1.bf16.msra.mxu0 0
  %1706 = vmatprep.subr.bf16.mxu0 0
  %1707 = vmatpush1.bf16.msra.mxu0 0
  %1708 = vmatprep.subr.bf16.mxu0 0
  %1709 = vmatpush1.bf16.msra.mxu0 0
  %1710 = vmatprep.subr.bf16.mxu0 0
  %1711 = vmatpush1.bf16.msra.mxu0 0
  %1712 = vmatprep.subr.bf16.mxu0 0
  %1713 = vmatpush1.bf16.msra.mxu0 0
  %1714 = vmatprep.subr.bf16.mxu0 0
  %1715 = vmatpush1.bf16.msra.mxu0 0
  %1716 = vmatprep.subr.bf16.mxu0 0
  %1717 = vmatpush1.bf16.msra.mxu0 0
  %1718 = vmatprep.mubr.bf16.mxu0 0
  %1719 = vmatmul.mubr.bf16.gmra.mrb[0].mxu0 %v1562
  %v1720 = vpop.f32.mrb[0].mxu0
  %v1721 = vadd.f32 %v1681, %v1720
  %v1722 = vpop.f32.mrb[0].mxu0
  %v1723 = vpop.f32.mrb[0].mxu0
  %v1724 = vpop.f32.mrb[0].mxu0
  %1725 = vdwg.mxu0
  %v1726 = vpack.c.bf16 %v1532, %v1532
  %1727 = vmatprep.subr.bf16.mxu0 %v757
  %1728 = vmatpush1.bf16.msra.mxu0 %v756
  %1729 = vmatprep.subr.bf16.mxu0 %v759
  %1730 = vmatpush1.bf16.msra.mxu0 %v758
  %1731 = vmatprep.subr.bf16.mxu0 %v761
  %1732 = vmatpush1.bf16.msra.mxu0 %v760
  %1733 = vmatprep.subr.bf16.mxu0 %v763
  %1734 = vmatpush1.bf16.msra.mxu0 %v762
  %1735 = vmatprep.subr.bf16.mxu0 %v765
  %1736 = vmatpush1.bf16.msra.mxu0 %v764
  %1737 = vmatprep.subr.bf16.mxu0 %v767
  %1738 = vmatpush1.bf16.msra.mxu0 %v766
  %1739 = vmatprep.subr.bf16.mxu0 %v769
  %1740 = vmatpush1.bf16.msra.mxu0 %v768
  %1741 = vmatprep.subr.bf16.mxu0 %v771
  %1742 = vmatpush1.bf16.msra.mxu0 %v770
  %1743 = vmatprep.subr.bf16.mxu0 0
  %1744 = vmatpush1.bf16.msra.mxu0 0
  %1745 = vmatprep.subr.bf16.mxu0 0
  %1746 = vmatpush1.bf16.msra.mxu0 0
  %1747 = vmatprep.subr.bf16.mxu0 0
  %1748 = vmatpush1.bf16.msra.mxu0 0
  %1749 = vmatprep.subr.bf16.mxu0 0
  %1750 = vmatpush1.bf16.msra.mxu0 0
  %1751 = vmatprep.subr.bf16.mxu0 0
  %1752 = vmatpush1.bf16.msra.mxu0 0
  %1753 = vmatprep.subr.bf16.mxu0 0
  %1754 = vmatpush1.bf16.msra.mxu0 0
  %1755 = vmatprep.subr.bf16.mxu0 0
  %1756 = vmatpush1.bf16.msra.mxu0 0
  %1757 = vmatprep.subr.bf16.mxu0 0
  %1758 = vmatpush1.bf16.msra.mxu0 0
  %1759 = vmatprep.mubr.bf16.mxu0 0
  %1760 = vmatmul.mubr.bf16.gmra.mrb[0].mxu0 %v1726
  %v1761 = vpop.f32.mrb[0].mxu0
  %v1762 = vadd.f32 0.0, %v1761
  %v1763 = vpop.f32.mrb[0].mxu0
  %v1764 = vadd.f32 0.0, %v1763
  %v1765 = vpop.f32.mrb[0].mxu0
  %v1766 = vpop.f32.mrb[0].mxu0
  %1767 = vdwg.mxu0
  %v1768 = vadd.f32 %v1640, %v1762
  %v1769 = vxor.u32 %v1768, 2147483648
  %v1770 = vmul.f32 %v1769, 1.442695
  %v1771 = vpow.pop %v1770
  %v1772 = vadd.f32 %v1771, 1.0
  %v1773 = vrcp.pop %v1772
  %v1774 = vmul.f32 1.0, %v1773
  %v1775 = vadd.f32 %v1642, %v1764
  %v1776 = vxor.u32 %v1775, 2147483648
  %v1777 = vmul.f32 %v1776, 1.442695
  %v1778 = vpow.pop %v1777
  %v1779 = vadd.f32 %v1778, 1.0
  %v1780 = vrcp.pop %v1779
  %v1781 = vmul.f32 1.0, %v1780
  %v1782 = vmul.f32 %v1774, %v1532
  %v1783 = vpack.c.bf16 %v1782, %v1782
  %1784 = vmatprep.subr.bf16.mxu0 0
  %1785 = vmatpush1.bf16.msra.mxu0 %v877
  %1786 = vmatprep.subr.bf16.mxu0 0
  %1787 = vmatpush1.bf16.msra.mxu0 %v878
  %1788 = vmatprep.subr.bf16.mxu0 0
  %1789 = vmatpush1.bf16.msra.mxu0 %v879
  %1790 = vmatprep.subr.bf16.mxu0 0
  %1791 = vmatpush1.bf16.msra.mxu0 %v880
  %1792 = vmatprep.subr.bf16.mxu0 0
  %1793 = vmatpush1.bf16.msra.mxu0 %v881
  %1794 = vmatprep.subr.bf16.mxu0 0
  %1795 = vmatpush1.bf16.msra.mxu0 %v882
  %1796 = vmatprep.subr.bf16.mxu0 0
  %1797 = vmatpush1.bf16.msra.mxu0 %v883
  %1798 = vmatprep.subr.bf16.mxu0 0
  %1799 = vmatpush1.bf16.msra.mxu0 %v884
  %1800 = vmatprep.subr.bf16.mxu0 0
  %1801 = vmatpush1.bf16.msra.mxu0 0
  %1802 = vmatprep.subr.bf16.mxu0 0
  %1803 = vmatpush1.bf16.msra.mxu0 0
  %1804 = vmatprep.subr.bf16.mxu0 0
  %1805 = vmatpush1.bf16.msra.mxu0 0
  %1806 = vmatprep.subr.bf16.mxu0 0
  %1807 = vmatpush1.bf16.msra.mxu0 0
  %1808 = vmatprep.subr.bf16.mxu0 0
  %1809 = vmatpush1.bf16.msra.mxu0 0
  %1810 = vmatprep.subr.bf16.mxu0 0
  %1811 = vmatpush1.bf16.msra.mxu0 0
  %1812 = vmatprep.subr.bf16.mxu0 0
  %1813 = vmatpush1.bf16.msra.mxu0 0
  %1814 = vmatprep.subr.bf16.mxu0 0
  %1815 = vmatpush1.bf16.msra.mxu0 0
  %1816 = vmatprep.mubr.bf16.mxu0 0
  %1817 = vmatmul.mubr.bf16.gmra.mrb[0].mxu0 %v1783
  %v1818 = vpop.f32.mrb[0].mxu0
  %v1819 = vadd.f32 0.0, %v1818
  %v1820 = vpop.f32.mrb[0].mxu0
  %v1821 = vpop.f32.mrb[0].mxu0
  %v1822 = vpop.f32.mrb[0].mxu0
  %1823 = vdwg.mxu0
  %v1824 = vadd.f32 %v1721, %v1819
  %v1825 = vtanh.pop %v1824
  %v1826 = vsub.f32 1.0, %v1781
  %v1827 = vmul.f32 %v1826, %v1532
  %v1828 = vmul.f32 %v1781, %v1825
  %v1829 = vadd.f32 %v1827, %v1828
  %1830 = vst [vmem:[%s12] sm:$0x3] %v1829
  %v1831 = vpack.c.bf16 %v1829, %v1829
  %v1832 = vld [vmem:[%s5] sm:$0xf]
  %v1833 = vld [vmem:[%s5 + $0x4] sm:$0xf]
  %v1834 = vld [vmem:[%s5 + $0x8] sm:$0xf]
  %v1835 = vld [vmem:[%s5 + $0xc] sm:$0xf]
  %v1836 = vld [vmem:[%s5 + $0x10] sm:$0xf]
  %v1837 = vld [vmem:[%s5 + $0x14] sm:$0xf]
  %v1838 = vld [vmem:[%s5 + $0x18] sm:$0xf]
  %v1839 = vld [vmem:[%s5 + $0x1c] sm:$0xf]
  %v1840 = vld [vmem:[%s5 + $0x20] sm:$0xf]
  %v1841 = vld [vmem:[%s5 + $0x24] sm:$0xf]
  %v1842 = vld [vmem:[%s5 + $0x28] sm:$0xf]
  %v1843 = vld [vmem:[%s5 + $0x2c] sm:$0xf]
  %v1844 = vld [vmem:[%s5 + $0x30] sm:$0xf]
  %v1845 = vld [vmem:[%s5 + $0x34] sm:$0xf]
  %v1846 = vld [vmem:[%s5 + $0x38] sm:$0xf]
  %v1847 = vld [vmem:[%s5 + $0x3c] sm:$0xf]
  %v1848 = vld [vmem:[%s6] sm:$0x1]
  %v1850 = vlaneseq
  %v1851 = vshrl.u32 %v1850, 7
  %v1852 = vsub.s32 0, %v1851
  %v1853 = vrot.slane %v1848, %v1852
  %v1871 = vunpack.c.l.b16 %v1832
  %v1872 = vunpack.c.l.b16 %v1833
  %v1873 = vunpack.c.l.b16 %v1834
  %v1874 = vunpack.c.l.b16 %v1835
  %v1875 = vunpack.c.l.b16 %v1836
  %v1876 = vunpack.c.l.b16 %v1837
  %v1877 = vunpack.c.l.b16 %v1838
  %v1878 = vunpack.c.l.b16 %v1839
  %v1879 = vunpack.c.l.b16 %v1840
  %v1880 = vunpack.c.l.b16 %v1841
  %v1881 = vunpack.c.l.b16 %v1842
  %v1882 = vunpack.c.l.b16 %v1843
  %v1883 = vunpack.c.l.b16 %v1844
  %v1884 = vunpack.c.l.b16 %v1845
  %v1885 = vunpack.c.l.b16 %v1846
  %v1886 = vunpack.c.l.b16 %v1847
  %v1887 = vpack.c.b16 %v1872, %v1871
  %v1888 = vpack.c.b16 %v1874, %v1873
  %v1889 = vpack.c.b16 %v1876, %v1875
  %v1890 = vpack.c.b16 %v1878, %v1877
  %v1891 = vpack.c.b16 %v1880, %v1879
  %v1892 = vpack.c.b16 %v1882, %v1881
  %v1893 = vpack.c.b16 %v1884, %v1883
  %v1894 = vpack.c.b16 %v1886, %v1885
  %1903 = vmatprep.subr.bf16.mxu0 0
  %1904 = vmatpush1.bf16.msra.mxu0 %v1887
  %1905 = vmatprep.subr.bf16.mxu0 0
  %1906 = vmatpush1.bf16.msra.mxu0 %v1888
  %1907 = vmatprep.subr.bf16.mxu0 0
  %1908 = vmatpush1.bf16.msra.mxu0 %v1889
  %1909 = vmatprep.subr.bf16.mxu0 0
  %1910 = vmatpush1.bf16.msra.mxu0 %v1890
  %1911 = vmatprep.subr.bf16.mxu0 0
  %1912 = vmatpush1.bf16.msra.mxu0 %v1891
  %1913 = vmatprep.subr.bf16.mxu0 0
  %1914 = vmatpush1.bf16.msra.mxu0 %v1892
  %1915 = vmatprep.subr.bf16.mxu0 0
  %1916 = vmatpush1.bf16.msra.mxu0 %v1893
  %1917 = vmatprep.subr.bf16.mxu0 0
  %1918 = vmatpush1.bf16.msra.mxu0 %v1894
  %1919 = vmatprep.subr.bf16.mxu0 0
  %1920 = vmatpush1.bf16.msra.mxu0 0
  %1921 = vmatprep.subr.bf16.mxu0 0
  %1922 = vmatpush1.bf16.msra.mxu0 0
  %1923 = vmatprep.subr.bf16.mxu0 0
  %1924 = vmatpush1.bf16.msra.mxu0 0
  %1925 = vmatprep.subr.bf16.mxu0 0
  %1926 = vmatpush1.bf16.msra.mxu0 0
  %1927 = vmatprep.subr.bf16.mxu0 0
  %1928 = vmatpush1.bf16.msra.mxu0 0
  %1929 = vmatprep.subr.bf16.mxu0 0
  %1930 = vmatpush1.bf16.msra.mxu0 0
  %1931 = vmatprep.subr.bf16.mxu0 0
  %1932 = vmatpush1.bf16.msra.mxu0 0
  %1933 = vmatprep.subr.bf16.mxu0 0
  %1934 = vmatpush1.bf16.msra.mxu0 0
  %1935 = vmatprep.mubr.bf16.mxu0 0
  %1936 = vmatmul.mubr.bf16.gmra.mrb[0].mxu0 %v1831
  %v1937 = vpop.f32.mrb[0].mxu0
  %v1938 = vadd.f32 %v1853, %v1937
  %v1939 = vpop.f32.mrb[0].mxu0
  %v1940 = vpop.f32.mrb[0].mxu0
  %v1941 = vpop.f32.mrb[0].mxu0
  %1942 = vdwg.mxu0
  %v1943 = vtanh.pop %v1938
  %v1945 = vlaneseq
  %v1946 = vshrl.u32 %v1945, 7
  %v1947 = vsub.s32 0, %v1946
  %v1948 = vrot.slane %v178, %v1947
  %v1949 = vlaneseq
  %v1950 = vshrl.u32 %v1949, 7
  %v1951 = vsub.s32 1, %v1950
  %v1952 = vrot.slane %v178, %v1951
  %v1953 = vlaneseq
  %v1954 = vshrl.u32 %v1953, 7
  %v1955 = vsub.s32 2, %v1954
  %v1956 = vrot.slane %v178, %v1955
  %v1992 = vunpack.c.l.b16 %v146
  %v1993 = vunpack.c.h.b16 %v146
  %v1994 = vunpack.c.l.b16 %v147
  %v1995 = vunpack.c.l.b16 %v148
  %v1996 = vunpack.c.h.b16 %v148
  %v1997 = vunpack.c.l.b16 %v149
  %v1998 = vunpack.c.l.b16 %v150
  %v1999 = vunpack.c.h.b16 %v150
  %v2000 = vunpack.c.l.b16 %v151
  %v2001 = vunpack.c.l.b16 %v152
  %v2002 = vunpack.c.h.b16 %v152
  %v2003 = vunpack.c.l.b16 %v153
  %v2004 = vunpack.c.l.b16 %v154
  %v2005 = vunpack.c.h.b16 %v154
  %v2006 = vunpack.c.l.b16 %v155
  %v2007 = vunpack.c.l.b16 %v156
  %v2008 = vunpack.c.h.b16 %v156
  %v2009 = vunpack.c.l.b16 %v157
  %v2010 = vunpack.c.l.b16 %v158
  %v2011 = vunpack.c.h.b16 %v158
  %v2012 = vunpack.c.l.b16 %v159
  %v2013 = vunpack.c.l.b16 %v160
  %v2014 = vunpack.c.h.b16 %v160
  %v2015 = vunpack.c.l.b16 %v161
  %v2016 = vunpack.c.l.b16 %v162
  %v2017 = vunpack.c.h.b16 %v162
  %v2018 = vunpack.c.l.b16 %v163
  %v2019 = vunpack.c.l.b16 %v164
  %v2020 = vunpack.c.h.b16 %v164
  %v2021 = vunpack.c.l.b16 %v165
  %v2022 = vunpack.c.l.b16 %v166
  %v2023 = vunpack.c.h.b16 %v166
  %v2024 = vunpack.c.l.b16 %v167
  %v2025 = vunpack.c.l.b16 %v168
  %v2026 = vunpack.c.h.b16 %v168
  %v2027 = vunpack.c.l.b16 %v169
  %v2028 = vunpack.c.l.b16 %v170
  %v2029 = vunpack.c.h.b16 %v170
  %v2030 = vunpack.c.l.b16 %v171
  %v2031 = vunpack.c.l.b16 %v172
  %v2032 = vunpack.c.h.b16 %v172
  %v2033 = vunpack.c.l.b16 %v173
  %v2034 = vunpack.c.l.b16 %v174
  %v2035 = vunpack.c.h.b16 %v174
  %v2036 = vunpack.c.l.b16 %v175
  %v2037 = vunpack.c.l.b16 %v176
  %v2038 = vunpack.c.h.b16 %v176
  %v2039 = vunpack.c.l.b16 %v177
  %v2040 = vpack.c.b16 %v1995, %v1992
  %v2041 = vpack.c.b16 %v1996, %v1993
  %v2042 = vpack.c.b16 %v1997, %v1994
  %v2043 = vpack.c.b16 %v2001, %v1998
  %v2044 = vpack.c.b16 %v2002, %v1999
  %v2045 = vpack.c.b16 %v2003, %v2000
  %v2046 = vpack.c.b16 %v2007, %v2004
  %v2047 = vpack.c.b16 %v2008, %v2005
  %v2048 = vpack.c.b16 %v2009, %v2006
  %v2049 = vpack.c.b16 %v2013, %v2010
  %v2050 = vpack.c.b16 %v2014, %v2011
  %v2051 = vpack.c.b16 %v2015, %v2012
  %v2052 = vpack.c.b16 %v2019, %v2016
  %v2053 = vpack.c.b16 %v2020, %v2017
  %v2054 = vpack.c.b16 %v2021, %v2018
  %v2055 = vpack.c.b16 %v2025, %v2022
  %v2056 = vpack.c.b16 %v2026, %v2023
  %v2057 = vpack.c.b16 %v2027, %v2024
  %v2058 = vpack.c.b16 %v2031, %v2028
  %v2059 = vpack.c.b16 %v2032, %v2029
  %v2060 = vpack.c.b16 %v2033, %v2030
  %v2061 = vpack.c.b16 %v2037, %v2034
  %v2062 = vpack.c.b16 %v2038, %v2035
  %v2063 = vpack.c.b16 %v2039, %v2036
  %2088 = vmatprep.subr.bf16.mxu0 %v2041
  %2089 = vmatpush1.bf16.msra.mxu0 %v2040
  %2090 = vmatprep.subr.bf16.mxu0 %v2044
  %2091 = vmatpush1.bf16.msra.mxu0 %v2043
  %2092 = vmatprep.subr.bf16.mxu0 %v2047
  %2093 = vmatpush1.bf16.msra.mxu0 %v2046
  %2094 = vmatprep.subr.bf16.mxu0 %v2050
  %2095 = vmatpush1.bf16.msra.mxu0 %v2049
  %2096 = vmatprep.subr.bf16.mxu0 %v2053
  %2097 = vmatpush1.bf16.msra.mxu0 %v2052
  %2098 = vmatprep.subr.bf16.mxu0 %v2056
  %2099 = vmatpush1.bf16.msra.mxu0 %v2055
  %2100 = vmatprep.subr.bf16.mxu0 %v2059
  %2101 = vmatpush1.bf16.msra.mxu0 %v2058
  %2102 = vmatprep.subr.bf16.mxu0 %v2062
  %2103 = vmatpush1.bf16.msra.mxu0 %v2061
  %2104 = vmatprep.subr.bf16.mxu0 0
  %2105 = vmatpush1.bf16.msra.mxu0 0
  %2106 = vmatprep.subr.bf16.mxu0 0
  %2107 = vmatpush1.bf16.msra.mxu0 0
  %2108 = vmatprep.subr.bf16.mxu0 0
  %2109 = vmatpush1.bf16.msra.mxu0 0
  %2110 = vmatprep.subr.bf16.mxu0 0
  %2111 = vmatpush1.bf16.msra.mxu0 0
  %2112 = vmatprep.subr.bf16.mxu0 0
  %2113 = vmatpush1.bf16.msra.mxu0 0
  %2114 = vmatprep.subr.bf16.mxu0 0
  %2115 = vmatpush1.bf16.msra.mxu0 0
  %2116 = vmatprep.subr.bf16.mxu0 0
  %2117 = vmatpush1.bf16.msra.mxu0 0
  %2118 = vmatprep.subr.bf16.mxu0 0
  %2119 = vmatpush1.bf16.msra.mxu0 0
  %2120 = vmatprep.mubr.bf16.mxu0 0
  %2121 = vmatmul.mubr.bf16.gmra.mrb[0].mxu0 %v1132
  %v2122 = vpop.f32.mrb[0].mxu0
  %v2123 = vadd.f32 %v1948, %v2122
  %v2124 = vpop.f32.mrb[0].mxu0
  %v2125 = vadd.f32 %v1952, %v2124
  %v2126 = vpop.f32.mrb[0].mxu0
  %v2127 = vpop.f32.mrb[0].mxu0
  %2128 = vdwg.mxu0
  %2129 = vmatprep.subr.bf16.mxu0 0
  %2130 = vmatpush1.bf16.msra.mxu0 %v2042
  %2131 = vmatprep.subr.bf16.mxu0 0
  %2132 = vmatpush1.bf16.msra.mxu0 %v2045
  %2133 = vmatprep.subr.bf16.mxu0 0
  %2134 = vmatpush1.bf16.msra.mxu0 %v2048
  %2135 = vmatprep.subr.bf16.mxu0 0
  %2136 = vmatpush1.bf16.msra.mxu0 %v2051
  %2137 = vmatprep.subr.bf16.mxu0 0
  %2138 = vmatpush1.bf16.msra.mxu0 %v2054
  %2139 = vmatprep.subr.bf16.mxu0 0
  %2140 = vmatpush1.bf16.msra.mxu0 %v2057
  %2141 = vmatprep.subr.bf16.mxu0 0
  %2142 = vmatpush1.bf16.msra.mxu0 %v2060
  %2143 = vmatprep.subr.bf16.mxu0 0
  %2144 = vmatpush1.bf16.msra.mxu0 %v2063
  %2145 = vmatprep.subr.bf16.mxu0 0
  %2146 = vmatpush1.bf16.msra.mxu0 0
  %2147 = vmatprep.subr.bf16.mxu0 0
  %2148 = vmatpush1.bf16.msra.mxu0 0
  %2149 = vmatprep.subr.bf16.mxu0 0
  %2150 = vmatpush1.bf16.msra.mxu0 0
  %2151 = vmatprep.subr.bf16.mxu0 0
  %2152 = vmatpush1.bf16.msra.mxu0 0
  %2153 = vmatprep.subr.bf16.mxu0 0
  %2154 = vmatpush1.bf16.msra.mxu0 0
  %2155 = vmatprep.subr.bf16.mxu0 0
  %2156 = vmatpush1.bf16.msra.mxu0 0
  %2157 = vmatprep.subr.bf16.mxu0 0
  %2158 = vmatpush1.bf16.msra.mxu0 0
  %2159 = vmatprep.subr.bf16.mxu0 0
  %2160 = vmatpush1.bf16.msra.mxu0 0
  %2161 = vmatprep.mubr.bf16.mxu0 0
  %2162 = vmatmul.mubr.bf16.gmra.mrb[0].mxu0 %v1132
  %v2163 = vpop.f32.mrb[0].mxu0
  %v2164 = vadd.f32 %v1956, %v2163
  %v2165 = vpop.f32.mrb[0].mxu0
  %v2166 = vpop.f32.mrb[0].mxu0
  %v2167 = vpop.f32.mrb[0].mxu0
  %2168 = vdwg.mxu0
  %v2169 = vpack.c.bf16 %v1943, %v1943
  %v2186 = vunpack.c.l.b16 %v179
  %v2187 = vunpack.c.h.b16 %v179
  %v2188 = vunpack.c.l.b16 %v180
  %v2189 = vunpack.c.h.b16 %v180
  %v2190 = vunpack.c.l.b16 %v181
  %v2191 = vunpack.c.h.b16 %v181
  %v2192 = vunpack.c.l.b16 %v182
  %v2193 = vunpack.c.h.b16 %v182
  %v2194 = vunpack.c.l.b16 %v183
  %v2195 = vunpack.c.h.b16 %v183
  %v2196 = vunpack.c.l.b16 %v184
  %v2197 = vunpack.c.h.b16 %v184
  %v2198 = vunpack.c.l.b16 %v185
  %v2199 = vunpack.c.h.b16 %v185
  %v2200 = vunpack.c.l.b16 %v186
  %v2201 = vunpack.c.h.b16 %v186
  %v2202 = vunpack.c.l.b16 %v187
  %v2203 = vunpack.c.h.b16 %v187
  %v2204 = vunpack.c.l.b16 %v188
  %v2205 = vunpack.c.h.b16 %v188
  %v2206 = vunpack.c.l.b16 %v189
  %v2207 = vunpack.c.h.b16 %v189
  %v2208 = vunpack.c.l.b16 %v190
  %v2209 = vunpack.c.h.b16 %v190
  %v2210 = vunpack.c.l.b16 %v191
  %v2211 = vunpack.c.h.b16 %v191
  %v2212 = vunpack.c.l.b16 %v192
  %v2213 = vunpack.c.h.b16 %v192
  %v2214 = vunpack.c.l.b16 %v193
  %v2215 = vunpack.c.h.b16 %v193
  %v2216 = vunpack.c.l.b16 %v194
  %v2217 = vunpack.c.h.b16 %v194
  %v2218 = vpack.c.b16 %v2188, %v2186
  %v2219 = vpack.c.b16 %v2189, %v2187
  %v2220 = vpack.c.b16 %v2192, %v2190
  %v2221 = vpack.c.b16 %v2193, %v2191
  %v2222 = vpack.c.b16 %v2196, %v2194
  %v2223 = vpack.c.b16 %v2197, %v2195
  %v2224 = vpack.c.b16 %v2200, %v2198
  %v2225 = vpack.c.b16 %v2201, %v2199
  %v2226 = vpack.c.b16 %v2204, %v2202
  %v2227 = vpack.c.b16 %v2205, %v2203
  %v2228 = vpack.c.b16 %v2208, %v2206
  %v2229 = vpack.c.b16 %v2209, %v2207
  %v2230 = vpack.c.b16 %v2212, %v2210
  %v2231 = vpack.c.b16 %v2213, %v2211
  %v2232 = vpack.c.b16 %v2216, %v2214
  %v2233 = vpack.c.b16 %v2217, %v2215
  %2250 = vmatprep.subr.bf16.mxu0 %v2219
  %2251 = vmatpush1.bf16.msra.mxu0 %v2218
  %2252 = vmatprep.subr.bf16.mxu0 %v2221
  %2253 = vmatpush1.bf16.msra.mxu0 %v2220
  %2254 = vmatprep.subr.bf16.mxu0 %v2223
  %2255 = vmatpush1.bf16.msra.mxu0 %v2222
  %2256 = vmatprep.subr.bf16.mxu0 %v2225
  %2257 = vmatpush1.bf16.msra.mxu0 %v2224
  %2258 = vmatprep.subr.bf16.mxu0 %v2227
  %2259 = vmatpush1.bf16.msra.mxu0 %v2226
  %2260 = vmatprep.subr.bf16.mxu0 %v2229
  %2261 = vmatpush1.bf16.msra.mxu0 %v2228
  %2262 = vmatprep.subr.bf16.mxu0 %v2231
  %2263 = vmatpush1.bf16.msra.mxu0 %v2230
  %2264 = vmatprep.subr.bf16.mxu0 %v2233
  %2265 = vmatpush1.bf16.msra.mxu0 %v2232
  %2266 = vmatprep.subr.bf16.mxu0 0
  %2267 = vmatpush1.bf16.msra.mxu0 0
  %2268 = vmatprep.subr.bf16.mxu0 0
  %2269 = vmatpush1.bf16.msra.mxu0 0
  %2270 = vmatprep.subr.bf16.mxu0 0
  %2271 = vmatpush1.bf16.msra.mxu0 0
  %2272 = vmatprep.subr.bf16.mxu0 0
  %2273 = vmatpush1.bf16.msra.mxu0 0
  %2274 = vmatprep.subr.bf16.mxu0 0
  %2275 = vmatpush1.bf16.msra.mxu0 0
  %2276 = vmatprep.subr.bf16.mxu0 0
  %2277 = vmatpush1.bf16.msra.mxu0 0
  %2278 = vmatprep.subr.bf16.mxu0 0
  %2279 = vmatpush1.bf16.msra.mxu0 0
  %2280 = vmatprep.subr.bf16.mxu0 0
  %2281 = vmatpush1.bf16.msra.mxu0 0
  %2282 = vmatprep.mubr.bf16.mxu0 0
  %2283 = vmatmul.mubr.bf16.gmra.mrb[0].mxu0 %v2169
  %v2284 = vpop.f32.mrb[0].mxu0
  %v2285 = vadd.f32 0.0, %v2284
  %v2286 = vpop.f32.mrb[0].mxu0
  %v2287 = vadd.f32 0.0, %v2286
  %v2288 = vpop.f32.mrb[0].mxu0
  %v2289 = vpop.f32.mrb[0].mxu0
  %2290 = vdwg.mxu0
  %v2291 = vadd.f32 %v2123, %v2285
  %v2292 = vxor.u32 %v2291, 2147483648
  %v2293 = vmul.f32 %v2292, 1.442695
  %v2294 = vpow.pop %v2293
  %v2295 = vadd.f32 %v2294, 1.0
  %v2296 = vrcp.pop %v2295
  %v2297 = vmul.f32 1.0, %v2296
  %v2298 = vadd.f32 %v2125, %v2287
  %v2299 = vxor.u32 %v2298, 2147483648
  %v2300 = vmul.f32 %v2299, 1.442695
  %v2301 = vpow.pop %v2300
  %v2302 = vadd.f32 %v2301, 1.0
  %v2303 = vrcp.pop %v2302
  %v2304 = vmul.f32 1.0, %v2303
  %v2305 = vmul.f32 %v2297, %v1943
  %v2306 = vpack.c.bf16 %v2305, %v2305
  %v2323 = vunpack.c.l.b16 %v195
  %v2324 = vunpack.c.l.b16 %v196
  %v2325 = vunpack.c.l.b16 %v197
  %v2326 = vunpack.c.l.b16 %v198
  %v2327 = vunpack.c.l.b16 %v199
  %v2328 = vunpack.c.l.b16 %v200
  %v2329 = vunpack.c.l.b16 %v201
  %v2330 = vunpack.c.l.b16 %v202
  %v2331 = vunpack.c.l.b16 %v203
  %v2332 = vunpack.c.l.b16 %v204
  %v2333 = vunpack.c.l.b16 %v205
  %v2334 = vunpack.c.l.b16 %v206
  %v2335 = vunpack.c.l.b16 %v207
  %v2336 = vunpack.c.l.b16 %v208
  %v2337 = vunpack.c.l.b16 %v209
  %v2338 = vunpack.c.l.b16 %v210
  %v2339 = vpack.c.b16 %v2324, %v2323
  %v2340 = vpack.c.b16 %v2326, %v2325
  %v2341 = vpack.c.b16 %v2328, %v2327
  %v2342 = vpack.c.b16 %v2330, %v2329
  %v2343 = vpack.c.b16 %v2332, %v2331
  %v2344 = vpack.c.b16 %v2334, %v2333
  %v2345 = vpack.c.b16 %v2336, %v2335
  %v2346 = vpack.c.b16 %v2338, %v2337
  %2355 = vmatprep.subr.bf16.mxu0 0
  %2356 = vmatpush1.bf16.msra.mxu0 %v2339
  %2357 = vmatprep.subr.bf16.mxu0 0
  %2358 = vmatpush1.bf16.msra.mxu0 %v2340
  %2359 = vmatprep.subr.bf16.mxu0 0
  %2360 = vmatpush1.bf16.msra.mxu0 %v2341
  %2361 = vmatprep.subr.bf16.mxu0 0
  %2362 = vmatpush1.bf16.msra.mxu0 %v2342
  %2363 = vmatprep.subr.bf16.mxu0 0
  %2364 = vmatpush1.bf16.msra.mxu0 %v2343
  %2365 = vmatprep.subr.bf16.mxu0 0
  %2366 = vmatpush1.bf16.msra.mxu0 %v2344
  %2367 = vmatprep.subr.bf16.mxu0 0
  %2368 = vmatpush1.bf16.msra.mxu0 %v2345
  %2369 = vmatprep.subr.bf16.mxu0 0
  %2370 = vmatpush1.bf16.msra.mxu0 %v2346
  %2371 = vmatprep.subr.bf16.mxu0 0
  %2372 = vmatpush1.bf16.msra.mxu0 0
  %2373 = vmatprep.subr.bf16.mxu0 0
  %2374 = vmatpush1.bf16.msra.mxu0 0
  %2375 = vmatprep.subr.bf16.mxu0 0
  %2376 = vmatpush1.bf16.msra.mxu0 0
  %2377 = vmatprep.subr.bf16.mxu0 0
  %2378 = vmatpush1.bf16.msra.mxu0 0
  %2379 = vmatprep.subr.bf16.mxu0 0
  %2380 = vmatpush1.bf16.msra.mxu0 0
  %2381 = vmatprep.subr.bf16.mxu0 0
  %2382 = vmatpush1.bf16.msra.mxu0 0
  %2383 = vmatprep.subr.bf16.mxu0 0
  %2384 = vmatpush1.bf16.msra.mxu0 0
  %2385 = vmatprep.subr.bf16.mxu0 0
  %2386 = vmatpush1.bf16.msra.mxu0 0
  %2387 = vmatprep.mubr.bf16.mxu0 0
  %2388 = vmatmul.mubr.bf16.gmra.mrb[0].mxu0 %v2306
  %v2389 = vpop.f32.mrb[0].mxu0
  %v2390 = vadd.f32 0.0, %v2389
  %v2391 = vpop.f32.mrb[0].mxu0
  %v2392 = vpop.f32.mrb[0].mxu0
  %v2393 = vpop.f32.mrb[0].mxu0
  %2394 = vdwg.mxu0
  %v2395 = vadd.f32 %v2164, %v2390
  %v2396 = vtanh.pop %v2395
  %v2397 = vsub.f32 1.0, %v2304
  %v2398 = vmul.f32 %v2397, %v1943
  %v2399 = vmul.f32 %v2304, %v2396
  %v2400 = vadd.f32 %v2398, %v2399
  %2401 = vst [vmem:[%s11] sm:$0x3] %v2400
  %2402 = vmatprep.subr.bf16.mxu0 %v2041
  %2403 = vmatpush1.bf16.msra.mxu0 %v2040
  %2404 = vmatprep.subr.bf16.mxu0 %v2044
  %2405 = vmatpush1.bf16.msra.mxu0 %v2043
  %2406 = vmatprep.subr.bf16.mxu0 %v2047
  %2407 = vmatpush1.bf16.msra.mxu0 %v2046
  %2408 = vmatprep.subr.bf16.mxu0 %v2050
  %2409 = vmatpush1.bf16.msra.mxu0 %v2049
  %2410 = vmatprep.subr.bf16.mxu0 %v2053
  %2411 = vmatpush1.bf16.msra.mxu0 %v2052
  %2412 = vmatprep.subr.bf16.mxu0 %v2056
  %2413 = vmatpush1.bf16.msra.mxu0 %v2055
  %2414 = vmatprep.subr.bf16.mxu0 %v2059
  %2415 = vmatpush1.bf16.msra.mxu0 %v2058
  %2416 = vmatprep.subr.bf16.mxu0 %v2062
  %2417 = vmatpush1.bf16.msra.mxu0 %v2061
  %2418 = vmatprep.subr.bf16.mxu0 0
  %2419 = vmatpush1.bf16.msra.mxu0 0
  %2420 = vmatprep.subr.bf16.mxu0 0
  %2421 = vmatpush1.bf16.msra.mxu0 0
  %2422 = vmatprep.subr.bf16.mxu0 0
  %2423 = vmatpush1.bf16.msra.mxu0 0
  %2424 = vmatprep.subr.bf16.mxu0 0
  %2425 = vmatpush1.bf16.msra.mxu0 0
  %2426 = vmatprep.subr.bf16.mxu0 0
  %2427 = vmatpush1.bf16.msra.mxu0 0
  %2428 = vmatprep.subr.bf16.mxu0 0
  %2429 = vmatpush1.bf16.msra.mxu0 0
  %2430 = vmatprep.subr.bf16.mxu0 0
  %2431 = vmatpush1.bf16.msra.mxu0 0
  %2432 = vmatprep.subr.bf16.mxu0 0
  %2433 = vmatpush1.bf16.msra.mxu0 0
  %2434 = vmatprep.mubr.bf16.mxu0 0
  %2435 = vmatmul.mubr.bf16.gmra.mrb[0].mxu0 %v1429
  %v2436 = vpop.f32.mrb[0].mxu0
  %v2437 = vadd.f32 %v1948, %v2436
  %v2438 = vpop.f32.mrb[0].mxu0
  %v2439 = vadd.f32 %v1952, %v2438
  %v2440 = vpop.f32.mrb[0].mxu0
  %v2441 = vpop.f32.mrb[0].mxu0
  %2442 = vdwg.mxu0
  %2443 = vmatprep.subr.bf16.mxu0 0
  %2444 = vmatpush1.bf16.msra.mxu0 %v2042
  %2445 = vmatprep.subr.bf16.mxu0 0
  %2446 = vmatpush1.bf16.msra.mxu0 %v2045
  %2447 = vmatprep.subr.bf16.mxu0 0
  %2448 = vmatpush1.bf16.msra.mxu0 %v2048
  %2449 = vmatprep.subr.bf16.mxu0 0
  %2450 = vmatpush1.bf16.msra.mxu0 %v2051
  %2451 = vmatprep.subr.bf16.mxu0 0
  %2452 = vmatpush1.bf16.msra.mxu0 %v2054
  %2453 = vmatprep.subr.bf16.mxu0 0
  %2454 = vmatpush1.bf16.msra.mxu0 %v2057
  %2455 = vmatprep.subr.bf16.mxu0 0
  %2456 = vmatpush1.bf16.msra.mxu0 %v2060
  %2457 = vmatprep.subr.bf16.mxu0 0
  %2458 = vmatpush1.bf16.msra.mxu0 %v2063
  %2459 = vmatprep.subr.bf16.mxu0 0
  %2460 = vmatpush1.bf16.msra.mxu0 0
  %2461 = vmatprep.subr.bf16.mxu0 0
  %2462 = vmatpush1.bf16.msra.mxu0 0
  %2463 = vmatprep.subr.bf16.mxu0 0
  %2464 = vmatpush1.bf16.msra.mxu0 0
  %2465 = vmatprep.subr.bf16.mxu0 0
  %2466 = vmatpush1.bf16.msra.mxu0 0
  %2467 = vmatprep.subr.bf16.mxu0 0
  %2468 = vmatpush1.bf16.msra.mxu0 0
  %2469 = vmatprep.subr.bf16.mxu0 0
  %2470 = vmatpush1.bf16.msra.mxu0 0
  %2471 = vmatprep.subr.bf16.mxu0 0
  %2472 = vmatpush1.bf16.msra.mxu0 0
  %2473 = vmatprep.subr.bf16.mxu0 0
  %2474 = vmatpush1.bf16.msra.mxu0 0
  %2475 = vmatprep.mubr.bf16.mxu0 0
  %2476 = vmatmul.mubr.bf16.gmra.mrb[0].mxu0 %v1429
  %v2477 = vpop.f32.mrb[0].mxu0
  %v2478 = vadd.f32 %v1956, %v2477
  %v2479 = vpop.f32.mrb[0].mxu0
  %v2480 = vpop.f32.mrb[0].mxu0
  %v2481 = vpop.f32.mrb[0].mxu0
  %2482 = vdwg.mxu0
  %v2483 = vpack.c.bf16 %v2400, %v2400
  %2484 = vmatprep.subr.bf16.mxu0 %v2219
  %2485 = vmatpush1.bf16.msra.mxu0 %v2218
  %2486 = vmatprep.subr.bf16.mxu0 %v2221
  %2487 = vmatpush1.bf16.msra.mxu0 %v2220
  %2488 = vmatprep.subr.bf16.mxu0 %v2223
  %2489 = vmatpush1.bf16.msra.mxu0 %v2222
  %2490 = vmatprep.subr.bf16.mxu0 %v2225
  %2491 = vmatpush1.bf16.msra.mxu0 %v2224
  %2492 = vmatprep.subr.bf16.mxu0 %v2227
  %2493 = vmatpush1.bf16.msra.mxu0 %v2226
  %2494 = vmatprep.subr.bf16.mxu0 %v2229
  %2495 = vmatpush1.bf16.msra.mxu0 %v2228
  %2496 = vmatprep.subr.bf16.mxu0 %v2231
  %2497 = vmatpush1.bf16.msra.mxu0 %v2230
  %2498 = vmatprep.subr.bf16.mxu0 %v2233
  %2499 = vmatpush1.bf16.msra.mxu0 %v2232
  %2500 = vmatprep.subr.bf16.mxu0 0
  %2501 = vmatpush1.bf16.msra.mxu0 0
  %2502 = vmatprep.subr.bf16.mxu0 0
  %2503 = vmatpush1.bf16.msra.mxu0 0
  %2504 = vmatprep.subr.bf16.mxu0 0
  %2505 = vmatpush1.bf16.msra.mxu0 0
  %2506 = vmatprep.subr.bf16.mxu0 0
  %2507 = vmatpush1.bf16.msra.mxu0 0
  %2508 = vmatprep.subr.bf16.mxu0 0
  %2509 = vmatpush1.bf16.msra.mxu0 0
  %2510 = vmatprep.subr.bf16.mxu0 0
  %2511 = vmatpush1.bf16.msra.mxu0 0
  %2512 = vmatprep.subr.bf16.mxu0 0
  %2513 = vmatpush1.bf16.msra.mxu0 0
  %2514 = vmatprep.subr.bf16.mxu0 0
  %2515 = vmatpush1.bf16.msra.mxu0 0
  %2516 = vmatprep.mubr.bf16.mxu0 0
  %2517 = vmatmul.mubr.bf16.gmra.mrb[0].mxu0 %v2483
  %v2518 = vpop.f32.mrb[0].mxu0
  %v2519 = vadd.f32 0.0, %v2518
  %v2520 = vpop.f32.mrb[0].mxu0
  %v2521 = vadd.f32 0.0, %v2520
  %v2522 = vpop.f32.mrb[0].mxu0
  %v2523 = vpop.f32.mrb[0].mxu0
  %2524 = vdwg.mxu0
  %v2525 = vadd.f32 %v2437, %v2519
  %v2526 = vxor.u32 %v2525, 2147483648
  %v2527 = vmul.f32 %v2526, 1.442695
  %v2528 = vpow.pop %v2527
  %v2529 = vadd.f32 %v2528, 1.0
  %v2530 = vrcp.pop %v2529
  %v2531 = vmul.f32 1.0, %v2530
  %v2532 = vadd.f32 %v2439, %v2521
  %v2533 = vxor.u32 %v2532, 2147483648
  %v2534 = vmul.f32 %v2533, 1.442695
  %v2535 = vpow.pop %v2534
  %v2536 = vadd.f32 %v2535, 1.0
  %v2537 = vrcp.pop %v2536
  %v2538 = vmul.f32 1.0, %v2537
  %v2539 = vmul.f32 %v2531, %v2400
  %v2540 = vpack.c.bf16 %v2539, %v2539
  %2541 = vmatprep.subr.bf16.mxu0 0
  %2542 = vmatpush1.bf16.msra.mxu0 %v2339
  %2543 = vmatprep.subr.bf16.mxu0 0
  %2544 = vmatpush1.bf16.msra.mxu0 %v2340
  %2545 = vmatprep.subr.bf16.mxu0 0
  %2546 = vmatpush1.bf16.msra.mxu0 %v2341
  %2547 = vmatprep.subr.bf16.mxu0 0
  %2548 = vmatpush1.bf16.msra.mxu0 %v2342
  %2549 = vmatprep.subr.bf16.mxu0 0
  %2550 = vmatpush1.bf16.msra.mxu0 %v2343
  %2551 = vmatprep.subr.bf16.mxu0 0
  %2552 = vmatpush1.bf16.msra.mxu0 %v2344
  %2553 = vmatprep.subr.bf16.mxu0 0
  %2554 = vmatpush1.bf16.msra.mxu0 %v2345
  %2555 = vmatprep.subr.bf16.mxu0 0
  %2556 = vmatpush1.bf16.msra.mxu0 %v2346
  %2557 = vmatprep.subr.bf16.mxu0 0
  %2558 = vmatpush1.bf16.msra.mxu0 0
  %2559 = vmatprep.subr.bf16.mxu0 0
  %2560 = vmatpush1.bf16.msra.mxu0 0
  %2561 = vmatprep.subr.bf16.mxu0 0
  %2562 = vmatpush1.bf16.msra.mxu0 0
  %2563 = vmatprep.subr.bf16.mxu0 0
  %2564 = vmatpush1.bf16.msra.mxu0 0
  %2565 = vmatprep.subr.bf16.mxu0 0
  %2566 = vmatpush1.bf16.msra.mxu0 0
  %2567 = vmatprep.subr.bf16.mxu0 0
  %2568 = vmatpush1.bf16.msra.mxu0 0
  %2569 = vmatprep.subr.bf16.mxu0 0
  %2570 = vmatpush1.bf16.msra.mxu0 0
  %2571 = vmatprep.subr.bf16.mxu0 0
  %2572 = vmatpush1.bf16.msra.mxu0 0
  %2573 = vmatprep.mubr.bf16.mxu0 0
  %2574 = vmatmul.mubr.bf16.gmra.mrb[0].mxu0 %v2540
  %v2575 = vpop.f32.mrb[0].mxu0
  %v2576 = vadd.f32 0.0, %v2575
  %v2577 = vpop.f32.mrb[0].mxu0
  %v2578 = vpop.f32.mrb[0].mxu0
  %v2579 = vpop.f32.mrb[0].mxu0
  %2580 = vdwg.mxu0
  %v2581 = vadd.f32 %v2478, %v2576
  %v2582 = vtanh.pop %v2581
  %v2583 = vsub.f32 1.0, %v2538
  %v2584 = vmul.f32 %v2583, %v2400
  %v2585 = vmul.f32 %v2538, %v2582
  %v2586 = vadd.f32 %v2584, %v2585
  %s2587 = scalar_lea.vmem %s11, 2
  %2588 = vst [vmem:[%s2587] sm:$0x3] %v2586
  %2589 = vmatprep.subr.bf16.mxu0 %v2041
  %2590 = vmatpush1.bf16.msra.mxu0 %v2040
  %2591 = vmatprep.subr.bf16.mxu0 %v2044
  %2592 = vmatpush1.bf16.msra.mxu0 %v2043
  %2593 = vmatprep.subr.bf16.mxu0 %v2047
  %2594 = vmatpush1.bf16.msra.mxu0 %v2046
  %2595 = vmatprep.subr.bf16.mxu0 %v2050
  %2596 = vmatpush1.bf16.msra.mxu0 %v2049
  %2597 = vmatprep.subr.bf16.mxu0 %v2053
  %2598 = vmatpush1.bf16.msra.mxu0 %v2052
  %2599 = vmatprep.subr.bf16.mxu0 %v2056
  %2600 = vmatpush1.bf16.msra.mxu0 %v2055
  %2601 = vmatprep.subr.bf16.mxu0 %v2059
  %2602 = vmatpush1.bf16.msra.mxu0 %v2058
  %2603 = vmatprep.subr.bf16.mxu0 %v2062
  %2604 = vmatpush1.bf16.msra.mxu0 %v2061
  %2605 = vmatprep.subr.bf16.mxu0 0
  %2606 = vmatpush1.bf16.msra.mxu0 0
  %2607 = vmatprep.subr.bf16.mxu0 0
  %2608 = vmatpush1.bf16.msra.mxu0 0
  %2609 = vmatprep.subr.bf16.mxu0 0
  %2610 = vmatpush1.bf16.msra.mxu0 0
  %2611 = vmatprep.subr.bf16.mxu0 0
  %2612 = vmatpush1.bf16.msra.mxu0 0
  %2613 = vmatprep.subr.bf16.mxu0 0
  %2614 = vmatpush1.bf16.msra.mxu0 0
  %2615 = vmatprep.subr.bf16.mxu0 0
  %2616 = vmatpush1.bf16.msra.mxu0 0
  %2617 = vmatprep.subr.bf16.mxu0 0
  %2618 = vmatpush1.bf16.msra.mxu0 0
  %2619 = vmatprep.subr.bf16.mxu0 0
  %2620 = vmatpush1.bf16.msra.mxu0 0
  %2621 = vmatprep.mubr.bf16.mxu0 0
  %2622 = vmatmul.mubr.bf16.gmra.mrb[0].mxu0 %v1726
  %v2623 = vpop.f32.mrb[0].mxu0
  %v2624 = vadd.f32 %v1948, %v2623
  %v2625 = vpop.f32.mrb[0].mxu0
  %v2626 = vadd.f32 %v1952, %v2625
  %v2627 = vpop.f32.mrb[0].mxu0
  %v2628 = vpop.f32.mrb[0].mxu0
  %2629 = vdwg.mxu0
  %2630 = vmatprep.subr.bf16.mxu0 0
  %2631 = vmatpush1.bf16.msra.mxu0 %v2042
  %2632 = vmatprep.subr.bf16.mxu0 0
  %2633 = vmatpush1.bf16.msra.mxu0 %v2045
  %2634 = vmatprep.subr.bf16.mxu0 0
  %2635 = vmatpush1.bf16.msra.mxu0 %v2048
  %2636 = vmatprep.subr.bf16.mxu0 0
  %2637 = vmatpush1.bf16.msra.mxu0 %v2051
  %2638 = vmatprep.subr.bf16.mxu0 0
  %2639 = vmatpush1.bf16.msra.mxu0 %v2054
  %2640 = vmatprep.subr.bf16.mxu0 0
  %2641 = vmatpush1.bf16.msra.mxu0 %v2057
  %2642 = vmatprep.subr.bf16.mxu0 0
  %2643 = vmatpush1.bf16.msra.mxu0 %v2060
  %2644 = vmatprep.subr.bf16.mxu0 0
  %2645 = vmatpush1.bf16.msra.mxu0 %v2063
  %2646 = vmatprep.subr.bf16.mxu0 0
  %2647 = vmatpush1.bf16.msra.mxu0 0
  %2648 = vmatprep.subr.bf16.mxu0 0
  %2649 = vmatpush1.bf16.msra.mxu0 0
  %2650 = vmatprep.subr.bf16.mxu0 0
  %2651 = vmatpush1.bf16.msra.mxu0 0
  %2652 = vmatprep.subr.bf16.mxu0 0
  %2653 = vmatpush1.bf16.msra.mxu0 0
  %2654 = vmatprep.subr.bf16.mxu0 0
  %2655 = vmatpush1.bf16.msra.mxu0 0
  %2656 = vmatprep.subr.bf16.mxu0 0
  %2657 = vmatpush1.bf16.msra.mxu0 0
  %2658 = vmatprep.subr.bf16.mxu0 0
  %2659 = vmatpush1.bf16.msra.mxu0 0
  %2660 = vmatprep.subr.bf16.mxu0 0
  %2661 = vmatpush1.bf16.msra.mxu0 0
  %2662 = vmatprep.mubr.bf16.mxu0 0
  %2663 = vmatmul.mubr.bf16.gmra.mrb[0].mxu0 %v1726
  %v2664 = vpop.f32.mrb[0].mxu0
  %v2665 = vadd.f32 %v1956, %v2664
  %v2666 = vpop.f32.mrb[0].mxu0
  %v2667 = vpop.f32.mrb[0].mxu0
  %v2668 = vpop.f32.mrb[0].mxu0
  %2669 = vdwg.mxu0
  %v2670 = vpack.c.bf16 %v2586, %v2586
  %2671 = vmatprep.subr.bf16.mxu0 %v2219
  %2672 = vmatpush1.bf16.msra.mxu0 %v2218
  %2673 = vmatprep.subr.bf16.mxu0 %v2221
  %2674 = vmatpush1.bf16.msra.mxu0 %v2220
  %2675 = vmatprep.subr.bf16.mxu0 %v2223
  %2676 = vmatpush1.bf16.msra.mxu0 %v2222
  %2677 = vmatprep.subr.bf16.mxu0 %v2225
  %2678 = vmatpush1.bf16.msra.mxu0 %v2224
  %2679 = vmatprep.subr.bf16.mxu0 %v2227
  %2680 = vmatpush1.bf16.msra.mxu0 %v2226
  %2681 = vmatprep.subr.bf16.mxu0 %v2229
  %2682 = vmatpush1.bf16.msra.mxu0 %v2228
  %2683 = vmatprep.subr.bf16.mxu0 %v2231
  %2684 = vmatpush1.bf16.msra.mxu0 %v2230
  %2685 = vmatprep.subr.bf16.mxu0 %v2233
  %2686 = vmatpush1.bf16.msra.mxu0 %v2232
  %2687 = vmatprep.subr.bf16.mxu0 0
  %2688 = vmatpush1.bf16.msra.mxu0 0
  %2689 = vmatprep.subr.bf16.mxu0 0
  %2690 = vmatpush1.bf16.msra.mxu0 0
  %2691 = vmatprep.subr.bf16.mxu0 0
  %2692 = vmatpush1.bf16.msra.mxu0 0
  %2693 = vmatprep.subr.bf16.mxu0 0
  %2694 = vmatpush1.bf16.msra.mxu0 0
  %2695 = vmatprep.subr.bf16.mxu0 0
  %2696 = vmatpush1.bf16.msra.mxu0 0
  %2697 = vmatprep.subr.bf16.mxu0 0
  %2698 = vmatpush1.bf16.msra.mxu0 0
  %2699 = vmatprep.subr.bf16.mxu0 0
  %2700 = vmatpush1.bf16.msra.mxu0 0
  %2701 = vmatprep.subr.bf16.mxu0 0
  %2702 = vmatpush1.bf16.msra.mxu0 0
  %2703 = vmatprep.mubr.bf16.mxu0 0
  %2704 = vmatmul.mubr.bf16.gmra.mrb[0].mxu0 %v2670
  %v2705 = vpop.f32.mrb[0].mxu0
  %v2706 = vadd.f32 0.0, %v2705
  %v2707 = vpop.f32.mrb[0].mxu0
  %v2708 = vadd.f32 0.0, %v2707
  %v2709 = vpop.f32.mrb[0].mxu0
  %v2710 = vpop.f32.mrb[0].mxu0
  %2711 = vdwg.mxu0
  %v2712 = vadd.f32 %v2624, %v2706
  %v2713 = vxor.u32 %v2712, 2147483648
  %v2714 = vmul.f32 %v2713, 1.442695
  %v2715 = vpow.pop %v2714
  %v2716 = vadd.f32 %v2715, 1.0
  %v2717 = vrcp.pop %v2716
  %v2718 = vmul.f32 1.0, %v2717
  %v2719 = vadd.f32 %v2626, %v2708
  %v2720 = vxor.u32 %v2719, 2147483648
  %v2721 = vmul.f32 %v2720, 1.442695
  %v2722 = vpow.pop %v2721
  %v2723 = vadd.f32 %v2722, 1.0
  %v2724 = vrcp.pop %v2723
  %v2725 = vmul.f32 1.0, %v2724
  %v2726 = vmul.f32 %v2718, %v2586
  %v2727 = vpack.c.bf16 %v2726, %v2726
  %2728 = vmatprep.subr.bf16.mxu0 0
  %2729 = vmatpush1.bf16.msra.mxu0 %v2339
  %2730 = vmatprep.subr.bf16.mxu0 0
  %2731 = vmatpush1.bf16.msra.mxu0 %v2340
  %2732 = vmatprep.subr.bf16.mxu0 0
  %2733 = vmatpush1.bf16.msra.mxu0 %v2341
  %2734 = vmatprep.subr.bf16.mxu0 0
  %2735 = vmatpush1.bf16.msra.mxu0 %v2342
  %2736 = vmatprep.subr.bf16.mxu0 0
  %2737 = vmatpush1.bf16.msra.mxu0 %v2343
  %2738 = vmatprep.subr.bf16.mxu0 0
  %2739 = vmatpush1.bf16.msra.mxu0 %v2344
  %2740 = vmatprep.subr.bf16.mxu0 0
  %2741 = vmatpush1.bf16.msra.mxu0 %v2345
  %2742 = vmatprep.subr.bf16.mxu0 0
  %2743 = vmatpush1.bf16.msra.mxu0 %v2346
  %2744 = vmatprep.subr.bf16.mxu0 0
  %2745 = vmatpush1.bf16.msra.mxu0 0
  %2746 = vmatprep.subr.bf16.mxu0 0
  %2747 = vmatpush1.bf16.msra.mxu0 0
  %2748 = vmatprep.subr.bf16.mxu0 0
  %2749 = vmatpush1.bf16.msra.mxu0 0
  %2750 = vmatprep.subr.bf16.mxu0 0
  %2751 = vmatpush1.bf16.msra.mxu0 0
  %2752 = vmatprep.subr.bf16.mxu0 0
  %2753 = vmatpush1.bf16.msra.mxu0 0
  %2754 = vmatprep.subr.bf16.mxu0 0
  %2755 = vmatpush1.bf16.msra.mxu0 0
  %2756 = vmatprep.subr.bf16.mxu0 0
  %2757 = vmatpush1.bf16.msra.mxu0 0
  %2758 = vmatprep.subr.bf16.mxu0 0
  %2759 = vmatpush1.bf16.msra.mxu0 0
  %2760 = vmatprep.mubr.bf16.mxu0 0
  %2761 = vmatmul.mubr.bf16.gmra.mrb[0].mxu0 %v2727
  %v2762 = vpop.f32.mrb[0].mxu0
  %v2763 = vadd.f32 0.0, %v2762
  %v2764 = vpop.f32.mrb[0].mxu0
  %v2765 = vpop.f32.mrb[0].mxu0
  %v2766 = vpop.f32.mrb[0].mxu0
  %2767 = vdwg.mxu0
  %v2768 = vadd.f32 %v2665, %v2763
  %v2769 = vtanh.pop %v2768
  %v2770 = vsub.f32 1.0, %v2725
  %v2771 = vmul.f32 %v2770, %v2586
  %v2772 = vmul.f32 %v2725, %v2769
  %v2773 = vadd.f32 %v2771, %v2772
  %s2774 = scalar_lea.vmem %s11, 4
  %2775 = vst [vmem:[%s2774] sm:$0x3] %v2773
  %2776 = vmatprep.subr.bf16.mxu0 %v2041
  %2777 = vmatpush1.bf16.msra.mxu0 %v2040
  %2778 = vmatprep.subr.bf16.mxu0 %v2044
  %2779 = vmatpush1.bf16.msra.mxu0 %v2043
  %2780 = vmatprep.subr.bf16.mxu0 %v2047
  %2781 = vmatpush1.bf16.msra.mxu0 %v2046
  %2782 = vmatprep.subr.bf16.mxu0 %v2050
  %2783 = vmatpush1.bf16.msra.mxu0 %v2049
  %2784 = vmatprep.subr.bf16.mxu0 %v2053
  %2785 = vmatpush1.bf16.msra.mxu0 %v2052
  %2786 = vmatprep.subr.bf16.mxu0 %v2056
  %2787 = vmatpush1.bf16.msra.mxu0 %v2055
  %2788 = vmatprep.subr.bf16.mxu0 %v2059
  %2789 = vmatpush1.bf16.msra.mxu0 %v2058
  %2790 = vmatprep.subr.bf16.mxu0 %v2062
  %2791 = vmatpush1.bf16.msra.mxu0 %v2061
  %2792 = vmatprep.subr.bf16.mxu0 0
  %2793 = vmatpush1.bf16.msra.mxu0 0
  %2794 = vmatprep.subr.bf16.mxu0 0
  %2795 = vmatpush1.bf16.msra.mxu0 0
  %2796 = vmatprep.subr.bf16.mxu0 0
  %2797 = vmatpush1.bf16.msra.mxu0 0
  %2798 = vmatprep.subr.bf16.mxu0 0
  %2799 = vmatpush1.bf16.msra.mxu0 0
  %2800 = vmatprep.subr.bf16.mxu0 0
  %2801 = vmatpush1.bf16.msra.mxu0 0
  %2802 = vmatprep.subr.bf16.mxu0 0
  %2803 = vmatpush1.bf16.msra.mxu0 0
  %2804 = vmatprep.subr.bf16.mxu0 0
  %2805 = vmatpush1.bf16.msra.mxu0 0
  %2806 = vmatprep.subr.bf16.mxu0 0
  %2807 = vmatpush1.bf16.msra.mxu0 0
  %2808 = vmatprep.mubr.bf16.mxu0 0
  %2809 = vmatmul.mubr.bf16.gmra.mrb[0].mxu0 %v1831
  %v2810 = vpop.f32.mrb[0].mxu0
  %v2811 = vadd.f32 %v1948, %v2810
  %v2812 = vpop.f32.mrb[0].mxu0
  %v2813 = vadd.f32 %v1952, %v2812
  %v2814 = vpop.f32.mrb[0].mxu0
  %v2815 = vpop.f32.mrb[0].mxu0
  %2816 = vdwg.mxu0
  %2817 = vmatprep.subr.bf16.mxu0 0
  %2818 = vmatpush1.bf16.msra.mxu0 %v2042
  %2819 = vmatprep.subr.bf16.mxu0 0
  %2820 = vmatpush1.bf16.msra.mxu0 %v2045
  %2821 = vmatprep.subr.bf16.mxu0 0
  %2822 = vmatpush1.bf16.msra.mxu0 %v2048
  %2823 = vmatprep.subr.bf16.mxu0 0
  %2824 = vmatpush1.bf16.msra.mxu0 %v2051
  %2825 = vmatprep.subr.bf16.mxu0 0
  %2826 = vmatpush1.bf16.msra.mxu0 %v2054
  %2827 = vmatprep.subr.bf16.mxu0 0
  %2828 = vmatpush1.bf16.msra.mxu0 %v2057
  %2829 = vmatprep.subr.bf16.mxu0 0
  %2830 = vmatpush1.bf16.msra.mxu0 %v2060
  %2831 = vmatprep.subr.bf16.mxu0 0
  %2832 = vmatpush1.bf16.msra.mxu0 %v2063
  %2833 = vmatprep.subr.bf16.mxu0 0
  %2834 = vmatpush1.bf16.msra.mxu0 0
  %2835 = vmatprep.subr.bf16.mxu0 0
  %2836 = vmatpush1.bf16.msra.mxu0 0
  %2837 = vmatprep.subr.bf16.mxu0 0
  %2838 = vmatpush1.bf16.msra.mxu0 0
  %2839 = vmatprep.subr.bf16.mxu0 0
  %2840 = vmatpush1.bf16.msra.mxu0 0
  %2841 = vmatprep.subr.bf16.mxu0 0
  %2842 = vmatpush1.bf16.msra.mxu0 0
  %2843 = vmatprep.subr.bf16.mxu0 0
  %2844 = vmatpush1.bf16.msra.mxu0 0
  %2845 = vmatprep.subr.bf16.mxu0 0
  %2846 = vmatpush1.bf16.msra.mxu0 0
  %2847 = vmatprep.subr.bf16.mxu0 0
  %2848 = vmatpush1.bf16.msra.mxu0 0
  %2849 = vmatprep.mubr.bf16.mxu0 0
  %2850 = vmatmul.mubr.bf16.gmra.mrb[0].mxu0 %v1831
  %v2851 = vpop.f32.mrb[0].mxu0
  %v2852 = vadd.f32 %v1956, %v2851
  %v2853 = vpop.f32.mrb[0].mxu0
  %v2854 = vpop.f32.mrb[0].mxu0
  %v2855 = vpop.f32.mrb[0].mxu0
  %2856 = vdwg.mxu0
  %v2857 = vpack.c.bf16 %v2773, %v2773
  %2858 = vmatprep.subr.bf16.mxu0 %v2219
  %2859 = vmatpush1.bf16.msra.mxu0 %v2218
  %2860 = vmatprep.subr.bf16.mxu0 %v2221
  %2861 = vmatpush1.bf16.msra.mxu0 %v2220
  %2862 = vmatprep.subr.bf16.mxu0 %v2223
  %2863 = vmatpush1.bf16.msra.mxu0 %v2222
  %2864 = vmatprep.subr.bf16.mxu0 %v2225
  %2865 = vmatpush1.bf16.msra.mxu0 %v2224
  %2866 = vmatprep.subr.bf16.mxu0 %v2227
  %2867 = vmatpush1.bf16.msra.mxu0 %v2226
  %2868 = vmatprep.subr.bf16.mxu0 %v2229
  %2869 = vmatpush1.bf16.msra.mxu0 %v2228
  %2870 = vmatprep.subr.bf16.mxu0 %v2231
  %2871 = vmatpush1.bf16.msra.mxu0 %v2230
  %2872 = vmatprep.subr.bf16.mxu0 %v2233
  %2873 = vmatpush1.bf16.msra.mxu0 %v2232
  %2874 = vmatprep.subr.bf16.mxu0 0
  %2875 = vmatpush1.bf16.msra.mxu0 0
  %2876 = vmatprep.subr.bf16.mxu0 0
  %2877 = vmatpush1.bf16.msra.mxu0 0
  %2878 = vmatprep.subr.bf16.mxu0 0
  %2879 = vmatpush1.bf16.msra.mxu0 0
  %2880 = vmatprep.subr.bf16.mxu0 0
  %2881 = vmatpush1.bf16.msra.mxu0 0
  %2882 = vmatprep.subr.bf16.mxu0 0
  %2883 = vmatpush1.bf16.msra.mxu0 0
  %2884 = vmatprep.subr.bf16.mxu0 0
  %2885 = vmatpush1.bf16.msra.mxu0 0
  %2886 = vmatprep.subr.bf16.mxu0 0
  %2887 = vmatpush1.bf16.msra.mxu0 0
  %2888 = vmatprep.subr.bf16.mxu0 0
  %2889 = vmatpush1.bf16.msra.mxu0 0
  %2890 = vmatprep.mubr.bf16.mxu0 0
  %2891 = vmatmul.mubr.bf16.gmra.mrb[0].mxu0 %v2857
  %v2892 = vpop.f32.mrb[0].mxu0
  %v2893 = vadd.f32 0.0, %v2892
  %v2894 = vpop.f32.mrb[0].mxu0
  %v2895 = vadd.f32 0.0, %v2894
  %v2896 = vpop.f32.mrb[0].mxu0
  %v2897 = vpop.f32.mrb[0].mxu0
  %2898 = vdwg.mxu0
  %v2899 = vadd.f32 %v2811, %v2893
  %v2900 = vxor.u32 %v2899, 2147483648
  %v2901 = vmul.f32 %v2900, 1.442695
  %v2902 = vpow.pop %v2901
  %v2903 = vadd.f32 %v2902, 1.0
  %v2904 = vrcp.pop %v2903
  %v2905 = vmul.f32 1.0, %v2904
  %v2906 = vadd.f32 %v2813, %v2895
  %v2907 = vxor.u32 %v2906, 2147483648
  %v2908 = vmul.f32 %v2907, 1.442695
  %v2909 = vpow.pop %v2908
  %v2910 = vadd.f32 %v2909, 1.0
  %v2911 = vrcp.pop %v2910
  %v2912 = vmul.f32 1.0, %v2911
  %v2913 = vmul.f32 %v2905, %v2773
  %v2914 = vpack.c.bf16 %v2913, %v2913
  %2915 = vmatprep.subr.bf16.mxu0 0
  %2916 = vmatpush1.bf16.msra.mxu0 %v2339
  %2917 = vmatprep.subr.bf16.mxu0 0
  %2918 = vmatpush1.bf16.msra.mxu0 %v2340
  %2919 = vmatprep.subr.bf16.mxu0 0
  %2920 = vmatpush1.bf16.msra.mxu0 %v2341
  %2921 = vmatprep.subr.bf16.mxu0 0
  %2922 = vmatpush1.bf16.msra.mxu0 %v2342
  %2923 = vmatprep.subr.bf16.mxu0 0
  %2924 = vmatpush1.bf16.msra.mxu0 %v2343
  %2925 = vmatprep.subr.bf16.mxu0 0
  %2926 = vmatpush1.bf16.msra.mxu0 %v2344
  %2927 = vmatprep.subr.bf16.mxu0 0
  %2928 = vmatpush1.bf16.msra.mxu0 %v2345
  %2929 = vmatprep.subr.bf16.mxu0 0
  %2930 = vmatpush1.bf16.msra.mxu0 %v2346
  %2931 = vmatprep.subr.bf16.mxu0 0
  %2932 = vmatpush1.bf16.msra.mxu0 0
  %2933 = vmatprep.subr.bf16.mxu0 0
  %2934 = vmatpush1.bf16.msra.mxu0 0
  %2935 = vmatprep.subr.bf16.mxu0 0
  %2936 = vmatpush1.bf16.msra.mxu0 0
  %2937 = vmatprep.subr.bf16.mxu0 0
  %2938 = vmatpush1.bf16.msra.mxu0 0
  %2939 = vmatprep.subr.bf16.mxu0 0
  %2940 = vmatpush1.bf16.msra.mxu0 0
  %2941 = vmatprep.subr.bf16.mxu0 0
  %2942 = vmatpush1.bf16.msra.mxu0 0
  %2943 = vmatprep.subr.bf16.mxu0 0
  %2944 = vmatpush1.bf16.msra.mxu0 0
  %2945 = vmatprep.subr.bf16.mxu0 0
  %2946 = vmatpush1.bf16.msra.mxu0 0
  %2947 = vmatprep.mubr.bf16.mxu0 0
  %2948 = vmatmul.mubr.bf16.gmra.mrb[0].mxu0 %v2914
  %v2949 = vpop.f32.mrb[0].mxu0
  %v2950 = vadd.f32 0.0, %v2949
  %v2951 = vpop.f32.mrb[0].mxu0
  %v2952 = vpop.f32.mrb[0].mxu0
  %v2953 = vpop.f32.mrb[0].mxu0
  %2954 = vdwg.mxu0
  %v2955 = vadd.f32 %v2852, %v2950
  %v2956 = vtanh.pop %v2955
  %v2957 = vsub.f32 1.0, %v2912
  %v2958 = vmul.f32 %v2957, %v2773
  %v2959 = vmul.f32 %v2912, %v2956
  %v2960 = vadd.f32 %v2958, %v2959
  %s2961 = scalar_lea.vmem %s11, 6
  %2962 = vst [vmem:[%s2961] sm:$0x3] %v2960
  // Predicated region
  $region46: #{st_autoencoder_g6.7} parent=0 // pred_check
    _
  $region47: #{st_autoencoder_g6.7} parent=0 // pred_check_branch
    %2964 = sbr.rel (0) target = $region49
  $region48: #{st_autoencoder_g6.7} parent=0 // pred_region
    _
  $region49: #{st_autoencoder_g6.7} parent=0 // pred_fallthru
    _
  // Predicated region
  $region50: #{st_autoencoder_g6.7} parent=0 // pred_check
    _
  $region51: #{st_autoencoder_g6.7} parent=0 // pred_check_branch
    %2966 = sbr.rel (0) target = $region53
  $region52: #{st_autoencoder_g6.7} parent=0 // pred_region
    _
  $region53: #{st_autoencoder_g6.7} parent=0 // pred_fallthru
    _
  // Predicated region
  $region54: #{st_autoencoder_g6.7} parent=0 // pred_check
    _
  $region55: #{st_autoencoder_g6.7} parent=0 // pred_check_branch
    %2968 = sbr.rel (0) target = $region57
  $region56: #{st_autoencoder_g6.7} parent=0 // pred_region
    _
  $region57: #{st_autoencoder_g6.7} parent=0 // pred_fallthru
    _
  // Predicated region
  $region58: #{st_autoencoder_g6.7} parent=0 // pred_check
    _
  $region59: #{st_autoencoder_g6.7} parent=0 // pred_check_branch
    %2970 = sbr.rel (0) target = $region61
  $region60: #{st_autoencoder_g6.7} parent=0 // pred_region
    _
  $region61: #{st_autoencoder_g6.7} parent=0 // pred_fallthru
    _

// kernel: st_autoencoder_g6.8
$region0: #{st_autoencoder_g6.8}
  #allocation0 [shape = 'u32[]', space=smem, size = 0x4, offset = 0x4, fixed_abs, tag = 'smem constant byte address 0x4 - core index']
  #allocation1 [shape = 'u32[144,128]{1,0:T(1,128)}', space=vmem, size = 0x12000, scoped, tag = 'internal scratch']
  %s0 = inlined_call_operand.vmem [shape: bf16[1152,8], index: 0, kind: input, shape index: {}]
  %s1 = inlined_call_operand.vmem [shape: bf16[8,72], index: 1, kind: input, shape index: {}]
  %s2 = inlined_call_operand.vmem [shape: f32[1152,1], index: 2, kind: input, shape index: {}]
  %s3 = inlined_call_operand.vmem [shape: f32[1152,72], index: 3, kind: output, shape index: {}]
  %s4 = sld [smem:[#allocation0]]
  $region22: #{st_autoencoder_g6.8} parent=0
    _
  %s6 = ssub.s32 1, %s4
  %s7 = scalar_select 0, %s6, %s4
  // Predicated region
  $region2: #{st_autoencoder_g6.8} parent=0 // pred_check
    _
  $region3: #{st_autoencoder_g6.8} parent=0 // pred_check_branch
    %9 = sbr.rel (0) target = $region5
  $region4: #{st_autoencoder_g6.8} parent=0 // pred_region
    _
  $region5: #{st_autoencoder_g6.8} parent=0 // pred_fallthru
    _
  // Predicated region
  $region6: #{st_autoencoder_g6.8} parent=0 // pred_check
    _
  $region7: #{st_autoencoder_g6.8} parent=0 // pred_check_branch
    %11 = sbr.rel (0) target = $region9
  $region8: #{st_autoencoder_g6.8} parent=0 // pred_region
    _
  $region9: #{st_autoencoder_g6.8} parent=0 // pred_fallthru
    _
  // Predicated region
  $region10: #{st_autoencoder_g6.8} parent=0 // pred_check
    _
  $region11: #{st_autoencoder_g6.8} parent=0 // pred_check_branch
    %13 = sbr.rel (0) target = $region13
  $region12: #{st_autoencoder_g6.8} parent=0 // pred_region
    _
  $region13: #{st_autoencoder_g6.8} parent=0 // pred_fallthru
    _
  %v15 = vld [vmem:[%s0] sm:$0xf]
  %v16 = vld [vmem:[%s0 + $0x4] sm:$0xf]
  %v17 = vld [vmem:[%s0 + $0x8] sm:$0xf]
  %v18 = vld [vmem:[%s0 + $0xc] sm:$0xf]
  %v19 = vld [vmem:[%s0 + $0x10] sm:$0xf]
  %v20 = vld [vmem:[%s0 + $0x14] sm:$0xf]
  %v21 = vld [vmem:[%s0 + $0x18] sm:$0xf]
  %v22 = vld [vmem:[%s0 + $0x1c] sm:$0xf]
  %v23 = vld [vmem:[%s0 + $0x20] sm:$0xf]
  %v24 = vld [vmem:[%s0 + $0x24] sm:$0xf]
  %v25 = vld [vmem:[%s0 + $0x28] sm:$0xf]
  %v26 = vld [vmem:[%s0 + $0x2c] sm:$0xf]
  %v27 = vld [vmem:[%s0 + $0x30] sm:$0xf]
  %v28 = vld [vmem:[%s0 + $0x34] sm:$0xf]
  %v29 = vld [vmem:[%s0 + $0x38] sm:$0xf]
  %v30 = vld [vmem:[%s0 + $0x3c] sm:$0xf]
  %v31 = vld [vmem:[%s0 + $0x40] sm:$0xf]
  %v32 = vld [vmem:[%s0 + $0x44] sm:$0xf]
  %v33 = vld [vmem:[%s0 + $0x48] sm:$0xf]
  %v34 = vld [vmem:[%s0 + $0x4c] sm:$0xf]
  %v35 = vld [vmem:[%s0 + $0x50] sm:$0xf]
  %v36 = vld [vmem:[%s0 + $0x54] sm:$0xf]
  %v37 = vld [vmem:[%s0 + $0x58] sm:$0xf]
  %v38 = vld [vmem:[%s0 + $0x5c] sm:$0xf]
  %v39 = vld [vmem:[%s0 + $0x60] sm:$0xf]
  %v40 = vld [vmem:[%s0 + $0x64] sm:$0xf]
  %v41 = vld [vmem:[%s0 + $0x68] sm:$0xf]
  %v42 = vld [vmem:[%s0 + $0x6c] sm:$0xf]
  %v43 = vld [vmem:[%s0 + $0x70] sm:$0xf]
  %v44 = vld [vmem:[%s0 + $0x74] sm:$0xf]
  %v45 = vld [vmem:[%s0 + $0x78] sm:$0xf]
  %v46 = vld [vmem:[%s0 + $0x7c] sm:$0xf]
  %v47 = vld [vmem:[%s0 + $0x80] sm:$0xf]
  %v48 = vld [vmem:[%s0 + $0x84] sm:$0xf]
  %v49 = vld [vmem:[%s0 + $0x88] sm:$0xf]
  %v50 = vld [vmem:[%s0 + $0x8c] sm:$0xf]
  %v51 = vld [vmem:[%s0 + $0x90] sm:$0xf]
  %v52 = vld [vmem:[%s0 + $0x94] sm:$0xf]
  %v53 = vld [vmem:[%s0 + $0x98] sm:$0xf]
  %v54 = vld [vmem:[%s0 + $0x9c] sm:$0xf]
  %v55 = vld [vmem:[%s0 + $0xa0] sm:$0xf]
  %v56 = vld [vmem:[%s0 + $0xa4] sm:$0xf]
  %v57 = vld [vmem:[%s0 + $0xa8] sm:$0xf]
  %v58 = vld [vmem:[%s0 + $0xac] sm:$0xf]
  %v59 = vld [vmem:[%s0 + $0xb0] sm:$0xf]
  %v60 = vld [vmem:[%s0 + $0xb4] sm:$0xf]
  %v61 = vld [vmem:[%s0 + $0xb8] sm:$0xf]
  %v62 = vld [vmem:[%s0 + $0xbc] sm:$0xf]
  %v63 = vld [vmem:[%s0 + $0xc0] sm:$0xf]
  %v64 = vld [vmem:[%s0 + $0xc4] sm:$0xf]
  %v65 = vld [vmem:[%s0 + $0xc8] sm:$0xf]
  %v66 = vld [vmem:[%s0 + $0xcc] sm:$0xf]
  %v67 = vld [vmem:[%s0 + $0xd0] sm:$0xf]
  %v68 = vld [vmem:[%s0 + $0xd4] sm:$0xf]
  %v69 = vld [vmem:[%s0 + $0xd8] sm:$0xf]
  %v70 = vld [vmem:[%s0 + $0xdc] sm:$0xf]
  %v71 = vld [vmem:[%s0 + $0xe0] sm:$0xf]
  %v72 = vld [vmem:[%s0 + $0xe4] sm:$0xf]
  %v73 = vld [vmem:[%s0 + $0xe8] sm:$0xf]
  %v74 = vld [vmem:[%s0 + $0xec] sm:$0xf]
  %v75 = vld [vmem:[%s0 + $0xf0] sm:$0xf]
  %v76 = vld [vmem:[%s0 + $0xf4] sm:$0xf]
  %v77 = vld [vmem:[%s0 + $0xf8] sm:$0xf]
  %v78 = vld [vmem:[%s0 + $0xfc] sm:$0xf]
  %v79 = vld [vmem:[%s0 + $0x100] sm:$0xf]
  %v80 = vld [vmem:[%s0 + $0x104] sm:$0xf]
  %v81 = vld [vmem:[%s0 + $0x108] sm:$0xf]
  %v82 = vld [vmem:[%s0 + $0x10c] sm:$0xf]
  %v83 = vld [vmem:[%s0 + $0x110] sm:$0xf]
  %v84 = vld [vmem:[%s0 + $0x114] sm:$0xf]
  %v85 = vld [vmem:[%s0 + $0x118] sm:$0xf]
  %v86 = vld [vmem:[%s0 + $0x11c] sm:$0xf]
  %v87 = vld [vmem:[%s0 + $0x120] sm:$0xf]
  %v88 = vld [vmem:[%s0 + $0x124] sm:$0xf]
  %v89 = vld [vmem:[%s0 + $0x128] sm:$0xf]
  %v90 = vld [vmem:[%s0 + $0x12c] sm:$0xf]
  %v91 = vld [vmem:[%s0 + $0x130] sm:$0xf]
  %v92 = vld [vmem:[%s0 + $0x134] sm:$0xf]
  %v93 = vld [vmem:[%s0 + $0x138] sm:$0xf]
  %v94 = vld [vmem:[%s0 + $0x13c] sm:$0xf]
  %v95 = vld [vmem:[%s0 + $0x140] sm:$0xf]
  %v96 = vld [vmem:[%s0 + $0x144] sm:$0xf]
  %v97 = vld [vmem:[%s0 + $0x148] sm:$0xf]
  %v98 = vld [vmem:[%s0 + $0x14c] sm:$0xf]
  %v99 = vld [vmem:[%s0 + $0x150] sm:$0xf]
  %v100 = vld [vmem:[%s0 + $0x154] sm:$0xf]
  %v101 = vld [vmem:[%s0 + $0x158] sm:$0xf]
  %v102 = vld [vmem:[%s0 + $0x15c] sm:$0xf]
  %v103 = vld [vmem:[%s0 + $0x160] sm:$0xf]
  %v104 = vld [vmem:[%s0 + $0x164] sm:$0xf]
  %v105 = vld [vmem:[%s0 + $0x168] sm:$0xf]
  %v106 = vld [vmem:[%s0 + $0x16c] sm:$0xf]
  %v107 = vld [vmem:[%s0 + $0x170] sm:$0xf]
  %v108 = vld [vmem:[%s0 + $0x174] sm:$0xf]
  %v109 = vld [vmem:[%s0 + $0x178] sm:$0xf]
  %v110 = vld [vmem:[%s0 + $0x17c] sm:$0xf]
  %v111 = vld [vmem:[%s0 + $0x180] sm:$0xf]
  %v112 = vld [vmem:[%s0 + $0x184] sm:$0xf]
  %v113 = vld [vmem:[%s0 + $0x188] sm:$0xf]
  %v114 = vld [vmem:[%s0 + $0x18c] sm:$0xf]
  %v115 = vld [vmem:[%s0 + $0x190] sm:$0xf]
  %v116 = vld [vmem:[%s0 + $0x194] sm:$0xf]
  %v117 = vld [vmem:[%s0 + $0x198] sm:$0xf]
  %v118 = vld [vmem:[%s0 + $0x19c] sm:$0xf]
  %v119 = vld [vmem:[%s0 + $0x1a0] sm:$0xf]
  %v120 = vld [vmem:[%s0 + $0x1a4] sm:$0xf]
  %v121 = vld [vmem:[%s0 + $0x1a8] sm:$0xf]
  %v122 = vld [vmem:[%s0 + $0x1ac] sm:$0xf]
  %v123 = vld [vmem:[%s0 + $0x1b0] sm:$0xf]
  %v124 = vld [vmem:[%s0 + $0x1b4] sm:$0xf]
  %v125 = vld [vmem:[%s0 + $0x1b8] sm:$0xf]
  %v126 = vld [vmem:[%s0 + $0x1bc] sm:$0xf]
  %v127 = vld [vmem:[%s0 + $0x1c0] sm:$0xf]
  %v128 = vld [vmem:[%s0 + $0x1c4] sm:$0xf]
  %v129 = vld [vmem:[%s0 + $0x1c8] sm:$0xf]
  %v130 = vld [vmem:[%s0 + $0x1cc] sm:$0xf]
  %v131 = vld [vmem:[%s0 + $0x1d0] sm:$0xf]
  %v132 = vld [vmem:[%s0 + $0x1d4] sm:$0xf]
  %v133 = vld [vmem:[%s0 + $0x1d8] sm:$0xf]
  %v134 = vld [vmem:[%s0 + $0x1dc] sm:$0xf]
  %v135 = vld [vmem:[%s0 + $0x1e0] sm:$0xf]
  %v136 = vld [vmem:[%s0 + $0x1e4] sm:$0xf]
  %v137 = vld [vmem:[%s0 + $0x1e8] sm:$0xf]
  %v138 = vld [vmem:[%s0 + $0x1ec] sm:$0xf]
  %v139 = vld [vmem:[%s0 + $0x1f0] sm:$0xf]
  %v140 = vld [vmem:[%s0 + $0x1f4] sm:$0xf]
  %v141 = vld [vmem:[%s0 + $0x1f8] sm:$0xf]
  %v142 = vld [vmem:[%s0 + $0x1fc] sm:$0xf]
  %v143 = vld [vmem:[%s0 + $0x200] sm:$0xf]
  %v144 = vld [vmem:[%s0 + $0x204] sm:$0xf]
  %v145 = vld [vmem:[%s0 + $0x208] sm:$0xf]
  %v146 = vld [vmem:[%s0 + $0x20c] sm:$0xf]
  %v147 = vld [vmem:[%s0 + $0x210] sm:$0xf]
  %v148 = vld [vmem:[%s0 + $0x214] sm:$0xf]
  %v149 = vld [vmem:[%s0 + $0x218] sm:$0xf]
  %v150 = vld [vmem:[%s0 + $0x21c] sm:$0xf]
  %v151 = vld [vmem:[%s0 + $0x220] sm:$0xf]
  %v152 = vld [vmem:[%s0 + $0x224] sm:$0xf]
  %v153 = vld [vmem:[%s0 + $0x228] sm:$0xf]
  %v154 = vld [vmem:[%s0 + $0x22c] sm:$0xf]
  %v155 = vld [vmem:[%s0 + $0x230] sm:$0xf]
  %v156 = vld [vmem:[%s0 + $0x234] sm:$0xf]
  %v157 = vld [vmem:[%s0 + $0x238] sm:$0xf]
  %v158 = vld [vmem:[%s0 + $0x23c] sm:$0xf]
  %v159 = vld [vmem:[%s1] sm:$0xf]
  %v160 = vld [vmem:[%s2] sm:$0xff]
  %v161 = vld [vmem:[%s2 + $0x8] sm:$0xff]
  %v162 = vld [vmem:[%s2 + $0x10] sm:$0xff]
  %v163 = vld [vmem:[%s2 + $0x18] sm:$0xff]
  %v164 = vld [vmem:[%s2 + $0x20] sm:$0xff]
  %v165 = vld [vmem:[%s2 + $0x28] sm:$0xff]
  %v166 = vld [vmem:[%s2 + $0x30] sm:$0xff]
  %v167 = vld [vmem:[%s2 + $0x38] sm:$0xff]
  %v168 = vld [vmem:[%s2 + $0x40] sm:$0xff]
  %v169 = vld [vmem:[%s2 + $0x48] sm:$0xff]
  %v170 = vld [vmem:[%s2 + $0x50] sm:$0xff]
  %v171 = vld [vmem:[%s2 + $0x58] sm:$0xff]
  %v172 = vld [vmem:[%s2 + $0x60] sm:$0xff]
  %v173 = vld [vmem:[%s2 + $0x68] sm:$0xff]
  %v174 = vld [vmem:[%s2 + $0x70] sm:$0xff]
  %v175 = vld [vmem:[%s2 + $0x78] sm:$0xff]
  %v176 = vld [vmem:[%s2 + $0x80] sm:$0xff]
  %v177 = vld [vmem:[%s2 + $0x88] sm:$0xff]
  %v178 = vld [vmem:[%s2 + $0x90] sm:$0xff]
  %v179 = vld [vmem:[%s2 + $0x98] sm:$0xff]
  %v180 = vld [vmem:[%s2 + $0xa0] sm:$0xff]
  %v181 = vld [vmem:[%s2 + $0xa8] sm:$0xff]
  %v182 = vld [vmem:[%s2 + $0xb0] sm:$0xff]
  %v183 = vld [vmem:[%s2 + $0xb8] sm:$0xff]
  %v184 = vld [vmem:[%s2 + $0xc0] sm:$0xff]
  %v185 = vld [vmem:[%s2 + $0xc8] sm:$0xff]
  %v186 = vld [vmem:[%s2 + $0xd0] sm:$0xff]
  %v187 = vld [vmem:[%s2 + $0xd8] sm:$0xff]
  %v188 = vld [vmem:[%s2 + $0xe0] sm:$0xff]
  %v189 = vld [vmem:[%s2 + $0xe8] sm:$0xff]
  %v190 = vld [vmem:[%s2 + $0xf0] sm:$0xff]
  %v191 = vld [vmem:[%s2 + $0xf8] sm:$0xff]
  %v192 = vld [vmem:[%s2 + $0x100] sm:$0xff]
  %v193 = vld [vmem:[%s2 + $0x108] sm:$0xff]
  %v194 = vld [vmem:[%s2 + $0x110] sm:$0xff]
  %v195 = vld [vmem:[%s2 + $0x118] sm:$0xff]
  %v196 = vld [vmem:[%s2 + $0x120] sm:$0xff]
  %v197 = vld [vmem:[%s2 + $0x128] sm:$0xff]
  %v198 = vld [vmem:[%s2 + $0x130] sm:$0xff]
  %v199 = vld [vmem:[%s2 + $0x138] sm:$0xff]
  %v200 = vld [vmem:[%s2 + $0x140] sm:$0xff]
  %v201 = vld [vmem:[%s2 + $0x148] sm:$0xff]
  %v202 = vld [vmem:[%s2 + $0x150] sm:$0xff]
  %v203 = vld [vmem:[%s2 + $0x158] sm:$0xff]
  %v204 = vld [vmem:[%s2 + $0x160] sm:$0xff]
  %v205 = vld [vmem:[%s2 + $0x168] sm:$0xff]
  %v206 = vld [vmem:[%s2 + $0x170] sm:$0xff]
  %v207 = vld [vmem:[%s2 + $0x178] sm:$0xff]
  %v208 = vld [vmem:[%s2 + $0x180] sm:$0xff]
  %v209 = vld [vmem:[%s2 + $0x188] sm:$0xff]
  %v210 = vld [vmem:[%s2 + $0x190] sm:$0xff]
  %v211 = vld [vmem:[%s2 + $0x198] sm:$0xff]
  %v212 = vld [vmem:[%s2 + $0x1a0] sm:$0xff]
  %v213 = vld [vmem:[%s2 + $0x1a8] sm:$0xff]
  %v214 = vld [vmem:[%s2 + $0x1b0] sm:$0xff]
  %v215 = vld [vmem:[%s2 + $0x1b8] sm:$0xff]
  %v216 = vld [vmem:[%s2 + $0x1c0] sm:$0xff]
  %v217 = vld [vmem:[%s2 + $0x1c8] sm:$0xff]
  %v218 = vld [vmem:[%s2 + $0x1d0] sm:$0xff]
  %v219 = vld [vmem:[%s2 + $0x1d8] sm:$0xff]
  %v220 = vld [vmem:[%s2 + $0x1e0] sm:$0xff]
  %v221 = vld [vmem:[%s2 + $0x1e8] sm:$0xff]
  %v222 = vld [vmem:[%s2 + $0x1f0] sm:$0xff]
  %v223 = vld [vmem:[%s2 + $0x1f8] sm:$0xff]
  %v224 = vld [vmem:[%s2 + $0x200] sm:$0xff]
  %v225 = vld [vmem:[%s2 + $0x208] sm:$0xff]
  %v226 = vld [vmem:[%s2 + $0x210] sm:$0xff]
  %v227 = vld [vmem:[%s2 + $0x218] sm:$0xff]
  %v228 = vld [vmem:[%s2 + $0x220] sm:$0xff]
  %v229 = vld [vmem:[%s2 + $0x228] sm:$0xff]
  %v230 = vld [vmem:[%s2 + $0x230] sm:$0xff]
  %v231 = vld [vmem:[%s2 + $0x238] sm:$0xff]
  %v232 = vld [vmem:[%s2 + $0x240] sm:$0xff]
  %v233 = vld [vmem:[%s2 + $0x248] sm:$0xff]
  %v234 = vld [vmem:[%s2 + $0x250] sm:$0xff]
  %v235 = vld [vmem:[%s2 + $0x258] sm:$0xff]
  %v236 = vld [vmem:[%s2 + $0x260] sm:$0xff]
  %v237 = vld [vmem:[%s2 + $0x268] sm:$0xff]
  %v238 = vld [vmem:[%s2 + $0x270] sm:$0xff]
  %v239 = vld [vmem:[%s2 + $0x278] sm:$0xff]
  %v240 = vld [vmem:[%s2 + $0x280] sm:$0xff]
  %v241 = vld [vmem:[%s2 + $0x288] sm:$0xff]
  %v242 = vld [vmem:[%s2 + $0x290] sm:$0xff]
  %v243 = vld [vmem:[%s2 + $0x298] sm:$0xff]
  %v244 = vld [vmem:[%s2 + $0x2a0] sm:$0xff]
  %v245 = vld [vmem:[%s2 + $0x2a8] sm:$0xff]
  %v246 = vld [vmem:[%s2 + $0x2b0] sm:$0xff]
  %v247 = vld [vmem:[%s2 + $0x2b8] sm:$0xff]
  %v248 = vld [vmem:[%s2 + $0x2c0] sm:$0xff]
  %v249 = vld [vmem:[%s2 + $0x2c8] sm:$0xff]
  %v250 = vld [vmem:[%s2 + $0x2d0] sm:$0xff]
  %v251 = vld [vmem:[%s2 + $0x2d8] sm:$0xff]
  %v252 = vld [vmem:[%s2 + $0x2e0] sm:$0xff]
  %v253 = vld [vmem:[%s2 + $0x2e8] sm:$0xff]
  %v254 = vld [vmem:[%s2 + $0x2f0] sm:$0xff]
  %v255 = vld [vmem:[%s2 + $0x2f8] sm:$0xff]
  %v256 = vld [vmem:[%s2 + $0x300] sm:$0xff]
  %v257 = vld [vmem:[%s2 + $0x308] sm:$0xff]
  %v258 = vld [vmem:[%s2 + $0x310] sm:$0xff]
  %v259 = vld [vmem:[%s2 + $0x318] sm:$0xff]
  %v260 = vld [vmem:[%s2 + $0x320] sm:$0xff]
  %v261 = vld [vmem:[%s2 + $0x328] sm:$0xff]
  %v262 = vld [vmem:[%s2 + $0x330] sm:$0xff]
  %v263 = vld [vmem:[%s2 + $0x338] sm:$0xff]
  %v264 = vld [vmem:[%s2 + $0x340] sm:$0xff]
  %v265 = vld [vmem:[%s2 + $0x348] sm:$0xff]
  %v266 = vld [vmem:[%s2 + $0x350] sm:$0xff]
  %v267 = vld [vmem:[%s2 + $0x358] sm:$0xff]
  %v268 = vld [vmem:[%s2 + $0x360] sm:$0xff]
  %v269 = vld [vmem:[%s2 + $0x368] sm:$0xff]
  %v270 = vld [vmem:[%s2 + $0x370] sm:$0xff]
  %v271 = vld [vmem:[%s2 + $0x378] sm:$0xff]
  %v272 = vld [vmem:[%s2 + $0x380] sm:$0xff]
  %v273 = vld [vmem:[%s2 + $0x388] sm:$0xff]
  %v274 = vld [vmem:[%s2 + $0x390] sm:$0xff]
  %v275 = vld [vmem:[%s2 + $0x398] sm:$0xff]
  %v276 = vld [vmem:[%s2 + $0x3a0] sm:$0xff]
  %v277 = vld [vmem:[%s2 + $0x3a8] sm:$0xff]
  %v278 = vld [vmem:[%s2 + $0x3b0] sm:$0xff]
  %v279 = vld [vmem:[%s2 + $0x3b8] sm:$0xff]
  %v280 = vld [vmem:[%s2 + $0x3c0] sm:$0xff]
  %v281 = vld [vmem:[%s2 + $0x3c8] sm:$0xff]
  %v282 = vld [vmem:[%s2 + $0x3d0] sm:$0xff]
  %v283 = vld [vmem:[%s2 + $0x3d8] sm:$0xff]
  %v284 = vld [vmem:[%s2 + $0x3e0] sm:$0xff]
  %v285 = vld [vmem:[%s2 + $0x3e8] sm:$0xff]
  %v286 = vld [vmem:[%s2 + $0x3f0] sm:$0xff]
  %v287 = vld [vmem:[%s2 + $0x3f8] sm:$0xff]
  %v288 = vld [vmem:[%s2 + $0x400] sm:$0xff]
  %v289 = vld [vmem:[%s2 + $0x408] sm:$0xff]
  %v290 = vld [vmem:[%s2 + $0x410] sm:$0xff]
  %v291 = vld [vmem:[%s2 + $0x418] sm:$0xff]
  %v292 = vld [vmem:[%s2 + $0x420] sm:$0xff]
  %v293 = vld [vmem:[%s2 + $0x428] sm:$0xff]
  %v294 = vld [vmem:[%s2 + $0x430] sm:$0xff]
  %v295 = vld [vmem:[%s2 + $0x438] sm:$0xff]
  %v296 = vld [vmem:[%s2 + $0x440] sm:$0xff]
  %v297 = vld [vmem:[%s2 + $0x448] sm:$0xff]
  %v298 = vld [vmem:[%s2 + $0x450] sm:$0xff]
  %v299 = vld [vmem:[%s2 + $0x458] sm:$0xff]
  %v300 = vld [vmem:[%s2 + $0x460] sm:$0xff]
  %v301 = vld [vmem:[%s2 + $0x468] sm:$0xff]
  %v302 = vld [vmem:[%s2 + $0x470] sm:$0xff]
  %v303 = vld [vmem:[%s2 + $0x478] sm:$0xff]
  %305 = vset.pattern.permute.xlu0 0
  %306 = vperm.xlu0 %305, %v160
  %v307 = vpop.permute.xlu0 %306
  %310 = vset.pattern.permute.xlu0 0
  %311 = vperm.xlu0 %310, %v161
  %v312 = vpop.permute.xlu0 %311
  %315 = vset.pattern.permute.xlu0 0
  %316 = vperm.xlu0 %315, %v162
  %v317 = vpop.permute.xlu0 %316
  %320 = vset.pattern.permute.xlu0 0
  %321 = vperm.xlu0 %320, %v163
  %v322 = vpop.permute.xlu0 %321
  %325 = vset.pattern.permute.xlu0 0
  %326 = vperm.xlu0 %325, %v164
  %v327 = vpop.permute.xlu0 %326
  %330 = vset.pattern.permute.xlu0 0
  %331 = vperm.xlu0 %330, %v165
  %v332 = vpop.permute.xlu0 %331
  %335 = vset.pattern.permute.xlu0 0
  %336 = vperm.xlu0 %335, %v166
  %v337 = vpop.permute.xlu0 %336
  %340 = vset.pattern.permute.xlu0 0
  %341 = vperm.xlu0 %340, %v167
  %v342 = vpop.permute.xlu0 %341
  %345 = vset.pattern.permute.xlu0 0
  %346 = vperm.xlu0 %345, %v168
  %v347 = vpop.permute.xlu0 %346
  %350 = vset.pattern.permute.xlu0 0
  %351 = vperm.xlu0 %350, %v169
  %v352 = vpop.permute.xlu0 %351
  %355 = vset.pattern.permute.xlu0 0
  %356 = vperm.xlu0 %355, %v170
  %v357 = vpop.permute.xlu0 %356
  %360 = vset.pattern.permute.xlu0 0
  %361 = vperm.xlu0 %360, %v171
  %v362 = vpop.permute.xlu0 %361
  %365 = vset.pattern.permute.xlu0 0
  %366 = vperm.xlu0 %365, %v172
  %v367 = vpop.permute.xlu0 %366
  %370 = vset.pattern.permute.xlu0 0
  %371 = vperm.xlu0 %370, %v173
  %v372 = vpop.permute.xlu0 %371
  %375 = vset.pattern.permute.xlu0 0
  %376 = vperm.xlu0 %375, %v174
  %v377 = vpop.permute.xlu0 %376
  %380 = vset.pattern.permute.xlu0 0
  %381 = vperm.xlu0 %380, %v175
  %v382 = vpop.permute.xlu0 %381
  %385 = vset.pattern.permute.xlu0 0
  %386 = vperm.xlu0 %385, %v176
  %v387 = vpop.permute.xlu0 %386
  %390 = vset.pattern.permute.xlu0 0
  %391 = vperm.xlu0 %390, %v177
  %v392 = vpop.permute.xlu0 %391
  %395 = vset.pattern.permute.xlu0 0
  %396 = vperm.xlu0 %395, %v178
  %v397 = vpop.permute.xlu0 %396
  %400 = vset.pattern.permute.xlu0 0
  %401 = vperm.xlu0 %400, %v179
  %v402 = vpop.permute.xlu0 %401
  %405 = vset.pattern.permute.xlu0 0
  %406 = vperm.xlu0 %405, %v180
  %v407 = vpop.permute.xlu0 %406
  %410 = vset.pattern.permute.xlu0 0
  %411 = vperm.xlu0 %410, %v181
  %v412 = vpop.permute.xlu0 %411
  %415 = vset.pattern.permute.xlu0 0
  %416 = vperm.xlu0 %415, %v182
  %v417 = vpop.permute.xlu0 %416
  %420 = vset.pattern.permute.xlu0 0
  %421 = vperm.xlu0 %420, %v183
  %v422 = vpop.permute.xlu0 %421
  %425 = vset.pattern.permute.xlu0 0
  %426 = vperm.xlu0 %425, %v184
  %v427 = vpop.permute.xlu0 %426
  %430 = vset.pattern.permute.xlu0 0
  %431 = vperm.xlu0 %430, %v185
  %v432 = vpop.permute.xlu0 %431
  %435 = vset.pattern.permute.xlu0 0
  %436 = vperm.xlu0 %435, %v186
  %v437 = vpop.permute.xlu0 %436
  %440 = vset.pattern.permute.xlu0 0
  %441 = vperm.xlu0 %440, %v187
  %v442 = vpop.permute.xlu0 %441
  %445 = vset.pattern.permute.xlu0 0
  %446 = vperm.xlu0 %445, %v188
  %v447 = vpop.permute.xlu0 %446
  %450 = vset.pattern.permute.xlu0 0
  %451 = vperm.xlu0 %450, %v189
  %v452 = vpop.permute.xlu0 %451
  %455 = vset.pattern.permute.xlu0 0
  %456 = vperm.xlu0 %455, %v190
  %v457 = vpop.permute.xlu0 %456
  %460 = vset.pattern.permute.xlu0 0
  %461 = vperm.xlu0 %460, %v191
  %v462 = vpop.permute.xlu0 %461
  %465 = vset.pattern.permute.xlu0 0
  %466 = vperm.xlu0 %465, %v192
  %v467 = vpop.permute.xlu0 %466
  %470 = vset.pattern.permute.xlu0 0
  %471 = vperm.xlu0 %470, %v193
  %v472 = vpop.permute.xlu0 %471
  %475 = vset.pattern.permute.xlu0 0
  %476 = vperm.xlu0 %475, %v194
  %v477 = vpop.permute.xlu0 %476
  %480 = vset.pattern.permute.xlu0 0
  %481 = vperm.xlu0 %480, %v195
  %v482 = vpop.permute.xlu0 %481
  %485 = vset.pattern.permute.xlu0 0
  %486 = vperm.xlu0 %485, %v196
  %v487 = vpop.permute.xlu0 %486
  %490 = vset.pattern.permute.xlu0 0
  %491 = vperm.xlu0 %490, %v197
  %v492 = vpop.permute.xlu0 %491
  %495 = vset.pattern.permute.xlu0 0
  %496 = vperm.xlu0 %495, %v198
  %v497 = vpop.permute.xlu0 %496
  %500 = vset.pattern.permute.xlu0 0
  %501 = vperm.xlu0 %500, %v199
  %v502 = vpop.permute.xlu0 %501
  %505 = vset.pattern.permute.xlu0 0
  %506 = vperm.xlu0 %505, %v200
  %v507 = vpop.permute.xlu0 %506
  %510 = vset.pattern.permute.xlu0 0
  %511 = vperm.xlu0 %510, %v201
  %v512 = vpop.permute.xlu0 %511
  %515 = vset.pattern.permute.xlu0 0
  %516 = vperm.xlu0 %515, %v202
  %v517 = vpop.permute.xlu0 %516
  %520 = vset.pattern.permute.xlu0 0
  %521 = vperm.xlu0 %520, %v203
  %v522 = vpop.permute.xlu0 %521
  %525 = vset.pattern.permute.xlu0 0
  %526 = vperm.xlu0 %525, %v204
  %v527 = vpop.permute.xlu0 %526
  %530 = vset.pattern.permute.xlu0 0
  %531 = vperm.xlu0 %530, %v205
  %v532 = vpop.permute.xlu0 %531
  %535 = vset.pattern.permute.xlu0 0
  %536 = vperm.xlu0 %535, %v206
  %v537 = vpop.permute.xlu0 %536
  %540 = vset.pattern.permute.xlu0 0
  %541 = vperm.xlu0 %540, %v207
  %v542 = vpop.permute.xlu0 %541
  %545 = vset.pattern.permute.xlu0 0
  %546 = vperm.xlu0 %545, %v208
  %v547 = vpop.permute.xlu0 %546
  %550 = vset.pattern.permute.xlu0 0
  %551 = vperm.xlu0 %550, %v209
  %v552 = vpop.permute.xlu0 %551
  %555 = vset.pattern.permute.xlu0 0
  %556 = vperm.xlu0 %555, %v210
  %v557 = vpop.permute.xlu0 %556
  %560 = vset.pattern.permute.xlu0 0
  %561 = vperm.xlu0 %560, %v211
  %v562 = vpop.permute.xlu0 %561
  %565 = vset.pattern.permute.xlu0 0
  %566 = vperm.xlu0 %565, %v212
  %v567 = vpop.permute.xlu0 %566
  %570 = vset.pattern.permute.xlu0 0
  %571 = vperm.xlu0 %570, %v213
  %v572 = vpop.permute.xlu0 %571
  %575 = vset.pattern.permute.xlu0 0
  %576 = vperm.xlu0 %575, %v214
  %v577 = vpop.permute.xlu0 %576
  %580 = vset.pattern.permute.xlu0 0
  %581 = vperm.xlu0 %580, %v215
  %v582 = vpop.permute.xlu0 %581
  %585 = vset.pattern.permute.xlu0 0
  %586 = vperm.xlu0 %585, %v216
  %v587 = vpop.permute.xlu0 %586
  %590 = vset.pattern.permute.xlu0 0
  %591 = vperm.xlu0 %590, %v217
  %v592 = vpop.permute.xlu0 %591
  %595 = vset.pattern.permute.xlu0 0
  %596 = vperm.xlu0 %595, %v218
  %v597 = vpop.permute.xlu0 %596
  %600 = vset.pattern.permute.xlu0 0
  %601 = vperm.xlu0 %600, %v219
  %v602 = vpop.permute.xlu0 %601
  %605 = vset.pattern.permute.xlu0 0
  %606 = vperm.xlu0 %605, %v220
  %v607 = vpop.permute.xlu0 %606
  %610 = vset.pattern.permute.xlu0 0
  %611 = vperm.xlu0 %610, %v221
  %v612 = vpop.permute.xlu0 %611
  %615 = vset.pattern.permute.xlu0 0
  %616 = vperm.xlu0 %615, %v222
  %v617 = vpop.permute.xlu0 %616
  %620 = vset.pattern.permute.xlu0 0
  %621 = vperm.xlu0 %620, %v223
  %v622 = vpop.permute.xlu0 %621
  %625 = vset.pattern.permute.xlu0 0
  %626 = vperm.xlu0 %625, %v224
  %v627 = vpop.permute.xlu0 %626
  %630 = vset.pattern.permute.xlu0 0
  %631 = vperm.xlu0 %630, %v225
  %v632 = vpop.permute.xlu0 %631
  %635 = vset.pattern.permute.xlu0 0
  %636 = vperm.xlu0 %635, %v226
  %v637 = vpop.permute.xlu0 %636
  %640 = vset.pattern.permute.xlu0 0
  %641 = vperm.xlu0 %640, %v227
  %v642 = vpop.permute.xlu0 %641
  %645 = vset.pattern.permute.xlu0 0
  %646 = vperm.xlu0 %645, %v228
  %v647 = vpop.permute.xlu0 %646
  %650 = vset.pattern.permute.xlu0 0
  %651 = vperm.xlu0 %650, %v229
  %v652 = vpop.permute.xlu0 %651
  %655 = vset.pattern.permute.xlu0 0
  %656 = vperm.xlu0 %655, %v230
  %v657 = vpop.permute.xlu0 %656
  %660 = vset.pattern.permute.xlu0 0
  %661 = vperm.xlu0 %660, %v231
  %v662 = vpop.permute.xlu0 %661
  %665 = vset.pattern.permute.xlu0 0
  %666 = vperm.xlu0 %665, %v232
  %v667 = vpop.permute.xlu0 %666
  %670 = vset.pattern.permute.xlu0 0
  %671 = vperm.xlu0 %670, %v233
  %v672 = vpop.permute.xlu0 %671
  %675 = vset.pattern.permute.xlu0 0
  %676 = vperm.xlu0 %675, %v234
  %v677 = vpop.permute.xlu0 %676
  %680 = vset.pattern.permute.xlu0 0
  %681 = vperm.xlu0 %680, %v235
  %v682 = vpop.permute.xlu0 %681
  %685 = vset.pattern.permute.xlu0 0
  %686 = vperm.xlu0 %685, %v236
  %v687 = vpop.permute.xlu0 %686
  %690 = vset.pattern.permute.xlu0 0
  %691 = vperm.xlu0 %690, %v237
  %v692 = vpop.permute.xlu0 %691
  %695 = vset.pattern.permute.xlu0 0
  %696 = vperm.xlu0 %695, %v238
  %v697 = vpop.permute.xlu0 %696
  %700 = vset.pattern.permute.xlu0 0
  %701 = vperm.xlu0 %700, %v239
  %v702 = vpop.permute.xlu0 %701
  %705 = vset.pattern.permute.xlu0 0
  %706 = vperm.xlu0 %705, %v240
  %v707 = vpop.permute.xlu0 %706
  %710 = vset.pattern.permute.xlu0 0
  %711 = vperm.xlu0 %710, %v241
  %v712 = vpop.permute.xlu0 %711
  %715 = vset.pattern.permute.xlu0 0
  %716 = vperm.xlu0 %715, %v242
  %v717 = vpop.permute.xlu0 %716
  %720 = vset.pattern.permute.xlu0 0
  %721 = vperm.xlu0 %720, %v243
  %v722 = vpop.permute.xlu0 %721
  %725 = vset.pattern.permute.xlu0 0
  %726 = vperm.xlu0 %725, %v244
  %v727 = vpop.permute.xlu0 %726
  %730 = vset.pattern.permute.xlu0 0
  %731 = vperm.xlu0 %730, %v245
  %v732 = vpop.permute.xlu0 %731
  %735 = vset.pattern.permute.xlu0 0
  %736 = vperm.xlu0 %735, %v246
  %v737 = vpop.permute.xlu0 %736
  %740 = vset.pattern.permute.xlu0 0
  %741 = vperm.xlu0 %740, %v247
  %v742 = vpop.permute.xlu0 %741
  %745 = vset.pattern.permute.xlu0 0
  %746 = vperm.xlu0 %745, %v248
  %v747 = vpop.permute.xlu0 %746
  %750 = vset.pattern.permute.xlu0 0
  %751 = vperm.xlu0 %750, %v249
  %v752 = vpop.permute.xlu0 %751
  %755 = vset.pattern.permute.xlu0 0
  %756 = vperm.xlu0 %755, %v250
  %v757 = vpop.permute.xlu0 %756
  %760 = vset.pattern.permute.xlu0 0
  %761 = vperm.xlu0 %760, %v251
  %v762 = vpop.permute.xlu0 %761
  %765 = vset.pattern.permute.xlu0 0
  %766 = vperm.xlu0 %765, %v252
  %v767 = vpop.permute.xlu0 %766
  %770 = vset.pattern.permute.xlu0 0
  %771 = vperm.xlu0 %770, %v253
  %v772 = vpop.permute.xlu0 %771
  %775 = vset.pattern.permute.xlu0 0
  %776 = vperm.xlu0 %775, %v254
  %v777 = vpop.permute.xlu0 %776
  %780 = vset.pattern.permute.xlu0 0
  %781 = vperm.xlu0 %780, %v255
  %v782 = vpop.permute.xlu0 %781
  %785 = vset.pattern.permute.xlu0 0
  %786 = vperm.xlu0 %785, %v256
  %v787 = vpop.permute.xlu0 %786
  %790 = vset.pattern.permute.xlu0 0
  %791 = vperm.xlu0 %790, %v257
  %v792 = vpop.permute.xlu0 %791
  %795 = vset.pattern.permute.xlu0 0
  %796 = vperm.xlu0 %795, %v258
  %v797 = vpop.permute.xlu0 %796
  %800 = vset.pattern.permute.xlu0 0
  %801 = vperm.xlu0 %800, %v259
  %v802 = vpop.permute.xlu0 %801
  %805 = vset.pattern.permute.xlu0 0
  %806 = vperm.xlu0 %805, %v260
  %v807 = vpop.permute.xlu0 %806
  %810 = vset.pattern.permute.xlu0 0
  %811 = vperm.xlu0 %810, %v261
  %v812 = vpop.permute.xlu0 %811
  %815 = vset.pattern.permute.xlu0 0
  %816 = vperm.xlu0 %815, %v262
  %v817 = vpop.permute.xlu0 %816
  %820 = vset.pattern.permute.xlu0 0
  %821 = vperm.xlu0 %820, %v263
  %v822 = vpop.permute.xlu0 %821
  %825 = vset.pattern.permute.xlu0 0
  %826 = vperm.xlu0 %825, %v264
  %v827 = vpop.permute.xlu0 %826
  %830 = vset.pattern.permute.xlu0 0
  %831 = vperm.xlu0 %830, %v265
  %v832 = vpop.permute.xlu0 %831
  %835 = vset.pattern.permute.xlu0 0
  %836 = vperm.xlu0 %835, %v266
  %v837 = vpop.permute.xlu0 %836
  %840 = vset.pattern.permute.xlu0 0
  %841 = vperm.xlu0 %840, %v267
  %v842 = vpop.permute.xlu0 %841
  %845 = vset.pattern.permute.xlu0 0
  %846 = vperm.xlu0 %845, %v268
  %v847 = vpop.permute.xlu0 %846
  %850 = vset.pattern.permute.xlu0 0
  %851 = vperm.xlu0 %850, %v269
  %v852 = vpop.permute.xlu0 %851
  %855 = vset.pattern.permute.xlu0 0
  %856 = vperm.xlu0 %855, %v270
  %v857 = vpop.permute.xlu0 %856
  %860 = vset.pattern.permute.xlu0 0
  %861 = vperm.xlu0 %860, %v271
  %v862 = vpop.permute.xlu0 %861
  %865 = vset.pattern.permute.xlu0 0
  %866 = vperm.xlu0 %865, %v272
  %v867 = vpop.permute.xlu0 %866
  %870 = vset.pattern.permute.xlu0 0
  %871 = vperm.xlu0 %870, %v273
  %v872 = vpop.permute.xlu0 %871
  %875 = vset.pattern.permute.xlu0 0
  %876 = vperm.xlu0 %875, %v274
  %v877 = vpop.permute.xlu0 %876
  %880 = vset.pattern.permute.xlu0 0
  %881 = vperm.xlu0 %880, %v275
  %v882 = vpop.permute.xlu0 %881
  %885 = vset.pattern.permute.xlu0 0
  %886 = vperm.xlu0 %885, %v276
  %v887 = vpop.permute.xlu0 %886
  %890 = vset.pattern.permute.xlu0 0
  %891 = vperm.xlu0 %890, %v277
  %v892 = vpop.permute.xlu0 %891
  %895 = vset.pattern.permute.xlu0 0
  %896 = vperm.xlu0 %895, %v278
  %v897 = vpop.permute.xlu0 %896
  %900 = vset.pattern.permute.xlu0 0
  %901 = vperm.xlu0 %900, %v279
  %v902 = vpop.permute.xlu0 %901
  %905 = vset.pattern.permute.xlu0 0
  %906 = vperm.xlu0 %905, %v280
  %v907 = vpop.permute.xlu0 %906
  %910 = vset.pattern.permute.xlu0 0
  %911 = vperm.xlu0 %910, %v281
  %v912 = vpop.permute.xlu0 %911
  %915 = vset.pattern.permute.xlu0 0
  %916 = vperm.xlu0 %915, %v282
  %v917 = vpop.permute.xlu0 %916
  %920 = vset.pattern.permute.xlu0 0
  %921 = vperm.xlu0 %920, %v283
  %v922 = vpop.permute.xlu0 %921
  %925 = vset.pattern.permute.xlu0 0
  %926 = vperm.xlu0 %925, %v284
  %v927 = vpop.permute.xlu0 %926
  %930 = vset.pattern.permute.xlu0 0
  %931 = vperm.xlu0 %930, %v285
  %v932 = vpop.permute.xlu0 %931
  %935 = vset.pattern.permute.xlu0 0
  %936 = vperm.xlu0 %935, %v286
  %v937 = vpop.permute.xlu0 %936
  %940 = vset.pattern.permute.xlu0 0
  %941 = vperm.xlu0 %940, %v287
  %v942 = vpop.permute.xlu0 %941
  %945 = vset.pattern.permute.xlu0 0
  %946 = vperm.xlu0 %945, %v288
  %v947 = vpop.permute.xlu0 %946
  %950 = vset.pattern.permute.xlu0 0
  %951 = vperm.xlu0 %950, %v289
  %v952 = vpop.permute.xlu0 %951
  %955 = vset.pattern.permute.xlu0 0
  %956 = vperm.xlu0 %955, %v290
  %v957 = vpop.permute.xlu0 %956
  %960 = vset.pattern.permute.xlu0 0
  %961 = vperm.xlu0 %960, %v291
  %v962 = vpop.permute.xlu0 %961
  %965 = vset.pattern.permute.xlu0 0
  %966 = vperm.xlu0 %965, %v292
  %v967 = vpop.permute.xlu0 %966
  %970 = vset.pattern.permute.xlu0 0
  %971 = vperm.xlu0 %970, %v293
  %v972 = vpop.permute.xlu0 %971
  %975 = vset.pattern.permute.xlu0 0
  %976 = vperm.xlu0 %975, %v294
  %v977 = vpop.permute.xlu0 %976
  %980 = vset.pattern.permute.xlu0 0
  %981 = vperm.xlu0 %980, %v295
  %v982 = vpop.permute.xlu0 %981
  %985 = vset.pattern.permute.xlu0 0
  %986 = vperm.xlu0 %985, %v296
  %v987 = vpop.permute.xlu0 %986
  %990 = vset.pattern.permute.xlu0 0
  %991 = vperm.xlu0 %990, %v297
  %v992 = vpop.permute.xlu0 %991
  %995 = vset.pattern.permute.xlu0 0
  %996 = vperm.xlu0 %995, %v298
  %v997 = vpop.permute.xlu0 %996
  %1000 = vset.pattern.permute.xlu0 0
  %1001 = vperm.xlu0 %1000, %v299
  %v1002 = vpop.permute.xlu0 %1001
  %1005 = vset.pattern.permute.xlu0 0
  %1006 = vperm.xlu0 %1005, %v300
  %v1007 = vpop.permute.xlu0 %1006
  %1010 = vset.pattern.permute.xlu0 0
  %1011 = vperm.xlu0 %1010, %v301
  %v1012 = vpop.permute.xlu0 %1011
  %1015 = vset.pattern.permute.xlu0 0
  %1016 = vperm.xlu0 %1015, %v302
  %v1017 = vpop.permute.xlu0 %1016
  %1020 = vset.pattern.permute.xlu0 0
  %1021 = vperm.xlu0 %1020, %v303
  %v1022 = vpop.permute.xlu0 %1021
  %v1168 = vunpack.c.l.b16 %v15
  %v1169 = vunpack.c.l.b16 %v16
  %v1170 = vunpack.c.l.b16 %v17
  %v1171 = vunpack.c.l.b16 %v18
  %v1172 = vunpack.c.l.b16 %v19
  %v1173 = vunpack.c.l.b16 %v20
  %v1174 = vunpack.c.l.b16 %v21
  %v1175 = vunpack.c.l.b16 %v22
  %v1176 = vunpack.c.l.b16 %v23
  %v1177 = vunpack.c.l.b16 %v24
  %v1178 = vunpack.c.l.b16 %v25
  %v1179 = vunpack.c.l.b16 %v26
  %v1180 = vunpack.c.l.b16 %v27
  %v1181 = vunpack.c.l.b16 %v28
  %v1182 = vunpack.c.l.b16 %v29
  %v1183 = vunpack.c.l.b16 %v30
  %v1184 = vunpack.c.l.b16 %v31
  %v1185 = vunpack.c.l.b16 %v32
  %v1186 = vunpack.c.l.b16 %v33
  %v1187 = vunpack.c.l.b16 %v34
  %v1188 = vunpack.c.l.b16 %v35
  %v1189 = vunpack.c.l.b16 %v36
  %v1190 = vunpack.c.l.b16 %v37
  %v1191 = vunpack.c.l.b16 %v38
  %v1192 = vunpack.c.l.b16 %v39
  %v1193 = vunpack.c.l.b16 %v40
  %v1194 = vunpack.c.l.b16 %v41
  %v1195 = vunpack.c.l.b16 %v42
  %v1196 = vunpack.c.l.b16 %v43
  %v1197 = vunpack.c.l.b16 %v44
  %v1198 = vunpack.c.l.b16 %v45
  %v1199 = vunpack.c.l.b16 %v46
  %v1200 = vunpack.c.l.b16 %v47
  %v1201 = vunpack.c.l.b16 %v48
  %v1202 = vunpack.c.l.b16 %v49
  %v1203 = vunpack.c.l.b16 %v50
  %v1204 = vunpack.c.l.b16 %v51
  %v1205 = vunpack.c.l.b16 %v52
  %v1206 = vunpack.c.l.b16 %v53
  %v1207 = vunpack.c.l.b16 %v54
  %v1208 = vunpack.c.l.b16 %v55
  %v1209 = vunpack.c.l.b16 %v56
  %v1210 = vunpack.c.l.b16 %v57
  %v1211 = vunpack.c.l.b16 %v58
  %v1212 = vunpack.c.l.b16 %v59
  %v1213 = vunpack.c.l.b16 %v60
  %v1214 = vunpack.c.l.b16 %v61
  %v1215 = vunpack.c.l.b16 %v62
  %v1216 = vunpack.c.l.b16 %v63
  %v1217 = vunpack.c.l.b16 %v64
  %v1218 = vunpack.c.l.b16 %v65
  %v1219 = vunpack.c.l.b16 %v66
  %v1220 = vunpack.c.l.b16 %v67
  %v1221 = vunpack.c.l.b16 %v68
  %v1222 = vunpack.c.l.b16 %v69
  %v1223 = vunpack.c.l.b16 %v70
  %v1224 = vunpack.c.l.b16 %v71
  %v1225 = vunpack.c.l.b16 %v72
  %v1226 = vunpack.c.l.b16 %v73
  %v1227 = vunpack.c.l.b16 %v74
  %v1228 = vunpack.c.l.b16 %v75
  %v1229 = vunpack.c.l.b16 %v76
  %v1230 = vunpack.c.l.b16 %v77
  %v1231 = vunpack.c.l.b16 %v78
  %v1232 = vunpack.c.l.b16 %v79
  %v1233 = vunpack.c.l.b16 %v80
  %v1234 = vunpack.c.l.b16 %v81
  %v1235 = vunpack.c.l.b16 %v82
  %v1236 = vunpack.c.l.b16 %v83
  %v1237 = vunpack.c.l.b16 %v84
  %v1238 = vunpack.c.l.b16 %v85
  %v1239 = vunpack.c.l.b16 %v86
  %v1240 = vunpack.c.l.b16 %v87
  %v1241 = vunpack.c.l.b16 %v88
  %v1242 = vunpack.c.l.b16 %v89
  %v1243 = vunpack.c.l.b16 %v90
  %v1244 = vunpack.c.l.b16 %v91
  %v1245 = vunpack.c.l.b16 %v92
  %v1246 = vunpack.c.l.b16 %v93
  %v1247 = vunpack.c.l.b16 %v94
  %v1248 = vunpack.c.l.b16 %v95
  %v1249 = vunpack.c.l.b16 %v96
  %v1250 = vunpack.c.l.b16 %v97
  %v1251 = vunpack.c.l.b16 %v98
  %v1252 = vunpack.c.l.b16 %v99
  %v1253 = vunpack.c.l.b16 %v100
  %v1254 = vunpack.c.l.b16 %v101
  %v1255 = vunpack.c.l.b16 %v102
  %v1256 = vunpack.c.l.b16 %v103
  %v1257 = vunpack.c.l.b16 %v104
  %v1258 = vunpack.c.l.b16 %v105
  %v1259 = vunpack.c.l.b16 %v106
  %v1260 = vunpack.c.l.b16 %v107
  %v1261 = vunpack.c.l.b16 %v108
  %v1262 = vunpack.c.l.b16 %v109
  %v1263 = vunpack.c.l.b16 %v110
  %v1264 = vunpack.c.l.b16 %v111
  %v1265 = vunpack.c.l.b16 %v112
  %v1266 = vunpack.c.l.b16 %v113
  %v1267 = vunpack.c.l.b16 %v114
  %v1268 = vunpack.c.l.b16 %v115
  %v1269 = vunpack.c.l.b16 %v116
  %v1270 = vunpack.c.l.b16 %v117
  %v1271 = vunpack.c.l.b16 %v118
  %v1272 = vunpack.c.l.b16 %v119
  %v1273 = vunpack.c.l.b16 %v120
  %v1274 = vunpack.c.l.b16 %v121
  %v1275 = vunpack.c.l.b16 %v122
  %v1276 = vunpack.c.l.b16 %v123
  %v1277 = vunpack.c.l.b16 %v124
  %v1278 = vunpack.c.l.b16 %v125
  %v1279 = vunpack.c.l.b16 %v126
  %v1280 = vunpack.c.l.b16 %v127
  %v1281 = vunpack.c.l.b16 %v128
  %v1282 = vunpack.c.l.b16 %v129
  %v1283 = vunpack.c.l.b16 %v130
  %v1284 = vunpack.c.l.b16 %v131
  %v1285 = vunpack.c.l.b16 %v132
  %v1286 = vunpack.c.l.b16 %v133
  %v1287 = vunpack.c.l.b16 %v134
  %v1288 = vunpack.c.l.b16 %v135
  %v1289 = vunpack.c.l.b16 %v136
  %v1290 = vunpack.c.l.b16 %v137
  %v1291 = vunpack.c.l.b16 %v138
  %v1292 = vunpack.c.l.b16 %v139
  %v1293 = vunpack.c.l.b16 %v140
  %v1294 = vunpack.c.l.b16 %v141
  %v1295 = vunpack.c.l.b16 %v142
  %v1296 = vunpack.c.l.b16 %v143
  %v1297 = vunpack.c.l.b16 %v144
  %v1298 = vunpack.c.l.b16 %v145
  %v1299 = vunpack.c.l.b16 %v146
  %v1300 = vunpack.c.l.b16 %v147
  %v1301 = vunpack.c.l.b16 %v148
  %v1302 = vunpack.c.l.b16 %v149
  %v1303 = vunpack.c.l.b16 %v150
  %v1304 = vunpack.c.l.b16 %v151
  %v1305 = vunpack.c.l.b16 %v152
  %v1306 = vunpack.c.l.b16 %v153
  %v1307 = vunpack.c.l.b16 %v154
  %v1308 = vunpack.c.l.b16 %v155
  %v1309 = vunpack.c.l.b16 %v156
  %v1310 = vunpack.c.l.b16 %v157
  %v1311 = vunpack.c.l.b16 %v158
  %v1312 = vpack.c.b16 %v1169, %v1168
  %v1313 = vpack.c.b16 %v1171, %v1170
  %v1314 = vpack.c.b16 %v1173, %v1172
  %v1315 = vpack.c.b16 %v1175, %v1174
  %v1316 = vpack.c.b16 %v1177, %v1176
  %v1317 = vpack.c.b16 %v1179, %v1178
  %v1318 = vpack.c.b16 %v1181, %v1180
  %v1319 = vpack.c.b16 %v1183, %v1182
  %v1320 = vpack.c.b16 %v1185, %v1184
  %v1321 = vpack.c.b16 %v1187, %v1186
  %v1322 = vpack.c.b16 %v1189, %v1188
  %v1323 = vpack.c.b16 %v1191, %v1190
  %v1324 = vpack.c.b16 %v1193, %v1192
  %v1325 = vpack.c.b16 %v1195, %v1194
  %v1326 = vpack.c.b16 %v1197, %v1196
  %v1327 = vpack.c.b16 %v1199, %v1198
  %v1328 = vpack.c.b16 %v1201, %v1200
  %v1329 = vpack.c.b16 %v1203, %v1202
  %v1330 = vpack.c.b16 %v1205, %v1204
  %v1331 = vpack.c.b16 %v1207, %v1206
  %v1332 = vpack.c.b16 %v1209, %v1208
  %v1333 = vpack.c.b16 %v1211, %v1210
  %v1334 = vpack.c.b16 %v1213, %v1212
  %v1335 = vpack.c.b16 %v1215, %v1214
  %v1336 = vpack.c.b16 %v1217, %v1216
  %v1337 = vpack.c.b16 %v1219, %v1218
  %v1338 = vpack.c.b16 %v1221, %v1220
  %v1339 = vpack.c.b16 %v1223, %v1222
  %v1340 = vpack.c.b16 %v1225, %v1224
  %v1341 = vpack.c.b16 %v1227, %v1226
  %v1342 = vpack.c.b16 %v1229, %v1228
  %v1343 = vpack.c.b16 %v1231, %v1230
  %v1344 = vpack.c.b16 %v1233, %v1232
  %v1345 = vpack.c.b16 %v1235, %v1234
  %v1346 = vpack.c.b16 %v1237, %v1236
  %v1347 = vpack.c.b16 %v1239, %v1238
  %v1348 = vpack.c.b16 %v1241, %v1240
  %v1349 = vpack.c.b16 %v1243, %v1242
  %v1350 = vpack.c.b16 %v1245, %v1244
  %v1351 = vpack.c.b16 %v1247, %v1246
  %v1352 = vpack.c.b16 %v1249, %v1248
  %v1353 = vpack.c.b16 %v1251, %v1250
  %v1354 = vpack.c.b16 %v1253, %v1252
  %v1355 = vpack.c.b16 %v1255, %v1254
  %v1356 = vpack.c.b16 %v1257, %v1256
  %v1357 = vpack.c.b16 %v1259, %v1258
  %v1358 = vpack.c.b16 %v1261, %v1260
  %v1359 = vpack.c.b16 %v1263, %v1262
  %v1360 = vpack.c.b16 %v1265, %v1264
  %v1361 = vpack.c.b16 %v1267, %v1266
  %v1362 = vpack.c.b16 %v1269, %v1268
  %v1363 = vpack.c.b16 %v1271, %v1270
  %v1364 = vpack.c.b16 %v1273, %v1272
  %v1365 = vpack.c.b16 %v1275, %v1274
  %v1366 = vpack.c.b16 %v1277, %v1276
  %v1367 = vpack.c.b16 %v1279, %v1278
  %v1368 = vpack.c.b16 %v1281, %v1280
  %v1369 = vpack.c.b16 %v1283, %v1282
  %v1370 = vpack.c.b16 %v1285, %v1284
  %v1371 = vpack.c.b16 %v1287, %v1286
  %v1372 = vpack.c.b16 %v1289, %v1288
  %v1373 = vpack.c.b16 %v1291, %v1290
  %v1374 = vpack.c.b16 %v1293, %v1292
  %v1375 = vpack.c.b16 %v1295, %v1294
  %v1376 = vpack.c.b16 %v1297, %v1296
  %v1377 = vpack.c.b16 %v1299, %v1298
  %v1378 = vpack.c.b16 %v1301, %v1300
  %v1379 = vpack.c.b16 %v1303, %v1302
  %v1380 = vpack.c.b16 %v1305, %v1304
  %v1381 = vpack.c.b16 %v1307, %v1306
  %v1382 = vpack.c.b16 %v1309, %v1308
  %v1383 = vpack.c.b16 %v1311, %v1310
  %vm1384 = vcmask 64512
  %v1386 = vsel %vm1384, %v1312, 0
  %v1389 = vsel %vm1384, %v1313, 0
  %v1392 = vsel %vm1384, %v1314, 0
  %v1395 = vsel %vm1384, %v1315, 0
  %v1398 = vsel %vm1384, %v1316, 0
  %v1401 = vsel %vm1384, %v1317, 0
  %v1404 = vsel %vm1384, %v1318, 0
  %v1407 = vsel %vm1384, %v1319, 0
  %v1410 = vsel %vm1384, %v1320, 0
  %v1413 = vsel %vm1384, %v1321, 0
  %v1416 = vsel %vm1384, %v1322, 0
  %v1419 = vsel %vm1384, %v1323, 0
  %v1422 = vsel %vm1384, %v1324, 0
  %v1425 = vsel %vm1384, %v1325, 0
  %v1428 = vsel %vm1384, %v1326, 0
  %v1431 = vsel %vm1384, %v1327, 0
  %v1434 = vsel %vm1384, %v1328, 0
  %v1437 = vsel %vm1384, %v1329, 0
  %v1440 = vsel %vm1384, %v1330, 0
  %v1443 = vsel %vm1384, %v1331, 0
  %v1446 = vsel %vm1384, %v1332, 0
  %v1449 = vsel %vm1384, %v1333, 0
  %v1452 = vsel %vm1384, %v1334, 0
  %v1455 = vsel %vm1384, %v1335, 0
  %v1458 = vsel %vm1384, %v1336, 0
  %v1461 = vsel %vm1384, %v1337, 0
  %v1464 = vsel %vm1384, %v1338, 0
  %v1467 = vsel %vm1384, %v1339, 0
  %v1470 = vsel %vm1384, %v1340, 0
  %v1473 = vsel %vm1384, %v1341, 0
  %v1476 = vsel %vm1384, %v1342, 0
  %v1479 = vsel %vm1384, %v1343, 0
  %v1482 = vsel %vm1384, %v1344, 0
  %v1485 = vsel %vm1384, %v1345, 0
  %v1488 = vsel %vm1384, %v1346, 0
  %v1491 = vsel %vm1384, %v1347, 0
  %v1494 = vsel %vm1384, %v1348, 0
  %v1497 = vsel %vm1384, %v1349, 0
  %v1500 = vsel %vm1384, %v1350, 0
  %v1503 = vsel %vm1384, %v1351, 0
  %v1506 = vsel %vm1384, %v1352, 0
  %v1509 = vsel %vm1384, %v1353, 0
  %v1512 = vsel %vm1384, %v1354, 0
  %v1515 = vsel %vm1384, %v1355, 0
  %v1518 = vsel %vm1384, %v1356, 0
  %v1521 = vsel %vm1384, %v1357, 0
  %v1524 = vsel %vm1384, %v1358, 0
  %v1527 = vsel %vm1384, %v1359, 0
  %v1530 = vsel %vm1384, %v1360, 0
  %v1533 = vsel %vm1384, %v1361, 0
  %v1536 = vsel %vm1384, %v1362, 0
  %v1539 = vsel %vm1384, %v1363, 0
  %v1542 = vsel %vm1384, %v1364, 0
  %v1545 = vsel %vm1384, %v1365, 0
  %v1548 = vsel %vm1384, %v1366, 0
  %v1551 = vsel %vm1384, %v1367, 0
  %v1554 = vsel %vm1384, %v1368, 0
  %v1557 = vsel %vm1384, %v1369, 0
  %v1560 = vsel %vm1384, %v1370, 0
  %v1563 = vsel %vm1384, %v1371, 0
  %v1566 = vsel %vm1384, %v1372, 0
  %v1569 = vsel %vm1384, %v1373, 0
  %v1572 = vsel %vm1384, %v1374, 0
  %v1575 = vsel %vm1384, %v1375, 0
  %v1578 = vsel %vm1384, %v1376, 0
  %v1581 = vsel %vm1384, %v1377, 0
  %v1584 = vsel %vm1384, %v1378, 0
  %v1587 = vsel %vm1384, %v1379, 0
  %v1590 = vsel %vm1384, %v1380, 0
  %v1593 = vsel %vm1384, %v1381, 0
  %v1596 = vsel %vm1384, %v1382, 0
  %v1599 = vsel %vm1384, %v1383, 0
  %vm1601 = vcmask 1043456
  %v1603 = vsel %vm1601, %v159, 0
  %1605 = vmatprep.subr.bf16.mxu0 0
  %1606 = vmatpush1.bf16.msra.mxu0 %v1603
  %1607 = vmatprep.subr.bf16.mxu0 0
  %1608 = vmatpush1.bf16.msra.mxu0 0
  %1609 = vmatprep.subr.bf16.mxu0 0
  %1610 = vmatpush1.bf16.msra.mxu0 0
  %1611 = vmatprep.subr.bf16.mxu0 0
  %1612 = vmatpush1.bf16.msra.mxu0 0
  %1613 = vmatprep.subr.bf16.mxu0 0
  %1614 = vmatpush1.bf16.msra.mxu0 0
  %1615 = vmatprep.subr.bf16.mxu0 0
  %1616 = vmatpush1.bf16.msra.mxu0 0
  %1617 = vmatprep.subr.bf16.mxu0 0
  %1618 = vmatpush1.bf16.msra.mxu0 0
  %1619 = vmatprep.subr.bf16.mxu0 0
  %1620 = vmatpush1.bf16.msra.mxu0 0
  %1621 = vmatprep.subr.bf16.mxu0 0
  %1622 = vmatpush1.bf16.msra.mxu0 0
  %1623 = vmatprep.subr.bf16.mxu0 0
  %1624 = vmatpush1.bf16.msra.mxu0 0
  %1625 = vmatprep.subr.bf16.mxu0 0
  %1626 = vmatpush1.bf16.msra.mxu0 0
  %1627 = vmatprep.subr.bf16.mxu0 0
  %1628 = vmatpush1.bf16.msra.mxu0 0
  %1629 = vmatprep.subr.bf16.mxu0 0
  %1630 = vmatpush1.bf16.msra.mxu0 0
  %1631 = vmatprep.subr.bf16.mxu0 0
  %1632 = vmatpush1.bf16.msra.mxu0 0
  %1633 = vmatprep.subr.bf16.mxu0 0
  %1634 = vmatpush1.bf16.msra.mxu0 0
  %1635 = vmatprep.subr.bf16.mxu0 0
  %1636 = vmatpush1.bf16.msra.mxu0 0
  %1637 = vmatprep.mubr.bf16.mxu0 0
  %1638 = vmatmul.mubr.bf16.gmra.mrb[0].mxu0 %v1386
  %v1639 = vpop.f32.mrb[0].mxu0
  %v1640 = vadd.f32 %v307, %v1639
  %v1641 = vpop.f32.mrb[0].mxu0
  %v1642 = vpop.f32.mrb[0].mxu0
  %v1643 = vadd.f32 %v312, %v1642
  %v1644 = vpop.f32.mrb[0].mxu0
  %1645 = vmatprep.mubr.bf16.mxu0 0
  %1646 = vmatmul.mubr.bf16.gmra.mrb[0].mxu0 %v1389
  %v1647 = vpop.f32.mrb[0].mxu0
  %v1648 = vadd.f32 %v317, %v1647
  %v1649 = vpop.f32.mrb[0].mxu0
  %v1650 = vpop.f32.mrb[0].mxu0
  %v1651 = vadd.f32 %v322, %v1650
  %v1652 = vpop.f32.mrb[0].mxu0
  %1653 = vmatprep.mubr.bf16.mxu0 0
  %1654 = vmatmul.mubr.bf16.gmra.mrb[0].mxu0 %v1392
  %v1655 = vpop.f32.mrb[0].mxu0
  %v1656 = vadd.f32 %v327, %v1655
  %v1657 = vpop.f32.mrb[0].mxu0
  %v1658 = vpop.f32.mrb[0].mxu0
  %v1659 = vadd.f32 %v332, %v1658
  %v1660 = vpop.f32.mrb[0].mxu0
  %1661 = vmatprep.mubr.bf16.mxu0 0
  %1662 = vmatmul.mubr.bf16.gmra.mrb[0].mxu0 %v1395
  %v1663 = vpop.f32.mrb[0].mxu0
  %v1664 = vadd.f32 %v337, %v1663
  %v1665 = vpop.f32.mrb[0].mxu0
  %v1666 = vpop.f32.mrb[0].mxu0
  %v1667 = vadd.f32 %v342, %v1666
  %v1668 = vpop.f32.mrb[0].mxu0
  %1669 = vmatprep.mubr.bf16.mxu0 0
  %1670 = vmatmul.mubr.bf16.gmra.mrb[0].mxu0 %v1398
  %v1671 = vpop.f32.mrb[0].mxu0
  %v1672 = vadd.f32 %v347, %v1671
  %v1673 = vpop.f32.mrb[0].mxu0
  %v1674 = vpop.f32.mrb[0].mxu0
  %v1675 = vadd.f32 %v352, %v1674
  %v1676 = vpop.f32.mrb[0].mxu0
  %1677 = vmatprep.mubr.bf16.mxu0 0
  %1678 = vmatmul.mubr.bf16.gmra.mrb[0].mxu0 %v1401
  %v1679 = vpop.f32.mrb[0].mxu0
  %v1680 = vadd.f32 %v357, %v1679
  %v1681 = vpop.f32.mrb[0].mxu0
  %v1682 = vpop.f32.mrb[0].mxu0
  %v1683 = vadd.f32 %v362, %v1682
  %v1684 = vpop.f32.mrb[0].mxu0
  %1685 = vmatprep.mubr.bf16.mxu0 0
  %1686 = vmatmul.mubr.bf16.gmra.mrb[0].mxu0 %v1404
  %v1687 = vpop.f32.mrb[0].mxu0
  %v1688 = vadd.f32 %v367, %v1687
  %v1689 = vpop.f32.mrb[0].mxu0
  %v1690 = vpop.f32.mrb[0].mxu0
  %v1691 = vadd.f32 %v372, %v1690
  %v1692 = vpop.f32.mrb[0].mxu0
  %1693 = vmatprep.mubr.bf16.mxu0 0
  %1694 = vmatmul.mubr.bf16.gmra.mrb[0].mxu0 %v1407
  %v1695 = vpop.f32.mrb[0].mxu0
  %v1696 = vadd.f32 %v377, %v1695
  %v1697 = vpop.f32.mrb[0].mxu0
  %v1698 = vpop.f32.mrb[0].mxu0
  %v1699 = vadd.f32 %v382, %v1698
  %v1700 = vpop.f32.mrb[0].mxu0
  %1701 = vmatprep.mubr.bf16.mxu0 0
  %1702 = vmatmul.mubr.bf16.gmra.mrb[0].mxu0 %v1410
  %v1703 = vpop.f32.mrb[0].mxu0
  %v1704 = vadd.f32 %v387, %v1703
  %v1705 = vpop.f32.mrb[0].mxu0
  %v1706 = vpop.f32.mrb[0].mxu0
  %v1707 = vadd.f32 %v392, %v1706
  %v1708 = vpop.f32.mrb[0].mxu0
  %1709 = vmatprep.mubr.bf16.mxu0 0
  %1710 = vmatmul.mubr.bf16.gmra.mrb[0].mxu0 %v1413
  %v1711 = vpop.f32.mrb[0].mxu0
  %v1712 = vadd.f32 %v397, %v1711
  %v1713 = vpop.f32.mrb[0].mxu0
  %v1714 = vpop.f32.mrb[0].mxu0
  %v1715 = vadd.f32 %v402, %v1714
  %v1716 = vpop.f32.mrb[0].mxu0
  %1717 = vmatprep.mubr.bf16.mxu0 0
  %1718 = vmatmul.mubr.bf16.gmra.mrb[0].mxu0 %v1416
  %v1719 = vpop.f32.mrb[0].mxu0
  %v1720 = vadd.f32 %v407, %v1719
  %v1721 = vpop.f32.mrb[0].mxu0
  %v1722 = vpop.f32.mrb[0].mxu0
  %v1723 = vadd.f32 %v412, %v1722
  %v1724 = vpop.f32.mrb[0].mxu0
  %1725 = vmatprep.mubr.bf16.mxu0 0
  %1726 = vmatmul.mubr.bf16.gmra.mrb[0].mxu0 %v1419
  %v1727 = vpop.f32.mrb[0].mxu0
  %v1728 = vadd.f32 %v417, %v1727
  %v1729 = vpop.f32.mrb[0].mxu0
  %v1730 = vpop.f32.mrb[0].mxu0
  %v1731 = vadd.f32 %v422, %v1730
  %v1732 = vpop.f32.mrb[0].mxu0
  %1733 = vmatprep.mubr.bf16.mxu0 0
  %1734 = vmatmul.mubr.bf16.gmra.mrb[0].mxu0 %v1422
  %v1735 = vpop.f32.mrb[0].mxu0
  %v1736 = vadd.f32 %v427, %v1735
  %v1737 = vpop.f32.mrb[0].mxu0
  %v1738 = vpop.f32.mrb[0].mxu0
  %v1739 = vadd.f32 %v432, %v1738
  %v1740 = vpop.f32.mrb[0].mxu0
  %1741 = vmatprep.mubr.bf16.mxu0 0
  %1742 = vmatmul.mubr.bf16.gmra.mrb[0].mxu0 %v1425
  %v1743 = vpop.f32.mrb[0].mxu0
  %v1744 = vadd.f32 %v437, %v1743
  %v1745 = vpop.f32.mrb[0].mxu0
  %v1746 = vpop.f32.mrb[0].mxu0
  %v1747 = vadd.f32 %v442, %v1746
  %v1748 = vpop.f32.mrb[0].mxu0
  %1749 = vmatprep.mubr.bf16.mxu0 0
  %1750 = vmatmul.mubr.bf16.gmra.mrb[0].mxu0 %v1428
  %v1751 = vpop.f32.mrb[0].mxu0
  %v1752 = vadd.f32 %v447, %v1751
  %v1753 = vpop.f32.mrb[0].mxu0
  %v1754 = vpop.f32.mrb[0].mxu0
  %v1755 = vadd.f32 %v452, %v1754
  %v1756 = vpop.f32.mrb[0].mxu0
  %1757 = vmatprep.mubr.bf16.mxu0 0
  %1758 = vmatmul.mubr.bf16.gmra.mrb[0].mxu0 %v1431
  %v1759 = vpop.f32.mrb[0].mxu0
  %v1760 = vadd.f32 %v457, %v1759
  %v1761 = vpop.f32.mrb[0].mxu0
  %v1762 = vpop.f32.mrb[0].mxu0
  %v1763 = vadd.f32 %v462, %v1762
  %v1764 = vpop.f32.mrb[0].mxu0
  %1765 = vmatprep.mubr.bf16.mxu0 0
  %1766 = vmatmul.mubr.bf16.gmra.mrb[0].mxu0 %v1434
  %v1767 = vpop.f32.mrb[0].mxu0
  %v1768 = vadd.f32 %v467, %v1767
  %v1769 = vpop.f32.mrb[0].mxu0
  %v1770 = vpop.f32.mrb[0].mxu0
  %v1771 = vadd.f32 %v472, %v1770
  %v1772 = vpop.f32.mrb[0].mxu0
  %1773 = vmatprep.mubr.bf16.mxu0 0
  %1774 = vmatmul.mubr.bf16.gmra.mrb[0].mxu0 %v1437
  %v1775 = vpop.f32.mrb[0].mxu0
  %v1776 = vadd.f32 %v477, %v1775
  %v1777 = vpop.f32.mrb[0].mxu0
  %v1778 = vpop.f32.mrb[0].mxu0
  %v1779 = vadd.f32 %v482, %v1778
  %v1780 = vpop.f32.mrb[0].mxu0
  %1781 = vmatprep.mubr.bf16.mxu0 0
  %1782 = vmatmul.mubr.bf16.gmra.mrb[0].mxu0 %v1440
  %v1783 = vpop.f32.mrb[0].mxu0
  %v1784 = vadd.f32 %v487, %v1783
  %v1785 = vpop.f32.mrb[0].mxu0
  %v1786 = vpop.f32.mrb[0].mxu0
  %v1787 = vadd.f32 %v492, %v1786
  %v1788 = vpop.f32.mrb[0].mxu0
  %1789 = vmatprep.mubr.bf16.mxu0 0
  %1790 = vmatmul.mubr.bf16.gmra.mrb[0].mxu0 %v1443
  %v1791 = vpop.f32.mrb[0].mxu0
  %v1792 = vadd.f32 %v497, %v1791
  %v1793 = vpop.f32.mrb[0].mxu0
  %v1794 = vpop.f32.mrb[0].mxu0
  %v1795 = vadd.f32 %v502, %v1794
  %v1796 = vpop.f32.mrb[0].mxu0
  %1797 = vmatprep.mubr.bf16.mxu0 0
  %1798 = vmatmul.mubr.bf16.gmra.mrb[0].mxu0 %v1446
  %v1799 = vpop.f32.mrb[0].mxu0
  %v1800 = vadd.f32 %v507, %v1799
  %v1801 = vpop.f32.mrb[0].mxu0
  %v1802 = vpop.f32.mrb[0].mxu0
  %v1803 = vadd.f32 %v512, %v1802
  %v1804 = vpop.f32.mrb[0].mxu0
  %1805 = vmatprep.mubr.bf16.mxu0 0
  %1806 = vmatmul.mubr.bf16.gmra.mrb[0].mxu0 %v1449
  %v1807 = vpop.f32.mrb[0].mxu0
  %v1808 = vadd.f32 %v517, %v1807
  %v1809 = vpop.f32.mrb[0].mxu0
  %v1810 = vpop.f32.mrb[0].mxu0
  %v1811 = vadd.f32 %v522, %v1810
  %v1812 = vpop.f32.mrb[0].mxu0
  %1813 = vmatprep.mubr.bf16.mxu0 0
  %1814 = vmatmul.mubr.bf16.gmra.mrb[0].mxu0 %v1452
  %v1815 = vpop.f32.mrb[0].mxu0
  %v1816 = vadd.f32 %v527, %v1815
  %v1817 = vpop.f32.mrb[0].mxu0
  %v1818 = vpop.f32.mrb[0].mxu0
  %v1819 = vadd.f32 %v532, %v1818
  %v1820 = vpop.f32.mrb[0].mxu0
  %1821 = vmatprep.mubr.bf16.mxu0 0
  %1822 = vmatmul.mubr.bf16.gmra.mrb[0].mxu0 %v1455
  %v1823 = vpop.f32.mrb[0].mxu0
  %v1824 = vadd.f32 %v537, %v1823
  %v1825 = vpop.f32.mrb[0].mxu0
  %v1826 = vpop.f32.mrb[0].mxu0
  %v1827 = vadd.f32 %v542, %v1826
  %v1828 = vpop.f32.mrb[0].mxu0
  %1829 = vmatprep.mubr.bf16.mxu0 0
  %1830 = vmatmul.mubr.bf16.gmra.mrb[0].mxu0 %v1458
  %v1831 = vpop.f32.mrb[0].mxu0
  %v1832 = vadd.f32 %v547, %v1831
  %v1833 = vpop.f32.mrb[0].mxu0
  %v1834 = vpop.f32.mrb[0].mxu0
  %v1835 = vadd.f32 %v552, %v1834
  %v1836 = vpop.f32.mrb[0].mxu0
  %1837 = vmatprep.mubr.bf16.mxu0 0
  %1838 = vmatmul.mubr.bf16.gmra.mrb[0].mxu0 %v1461
  %v1839 = vpop.f32.mrb[0].mxu0
  %v1840 = vadd.f32 %v557, %v1839
  %v1841 = vpop.f32.mrb[0].mxu0
  %v1842 = vpop.f32.mrb[0].mxu0
  %v1843 = vadd.f32 %v562, %v1842
  %v1844 = vpop.f32.mrb[0].mxu0
  %1845 = vmatprep.mubr.bf16.mxu0 0
  %1846 = vmatmul.mubr.bf16.gmra.mrb[0].mxu0 %v1464
  %v1847 = vpop.f32.mrb[0].mxu0
  %v1848 = vadd.f32 %v567, %v1847
  %v1849 = vpop.f32.mrb[0].mxu0
  %v1850 = vpop.f32.mrb[0].mxu0
  %v1851 = vadd.f32 %v572, %v1850
  %v1852 = vpop.f32.mrb[0].mxu0
  %1853 = vmatprep.mubr.bf16.mxu0 0
  %1854 = vmatmul.mubr.bf16.gmra.mrb[0].mxu0 %v1467
  %v1855 = vpop.f32.mrb[0].mxu0
  %v1856 = vadd.f32 %v577, %v1855
  %v1857 = vpop.f32.mrb[0].mxu0
  %v1858 = vpop.f32.mrb[0].mxu0
  %v1859 = vadd.f32 %v582, %v1858
  %v1860 = vpop.f32.mrb[0].mxu0
  %1861 = vmatprep.mubr.bf16.mxu0 0
  %1862 = vmatmul.mubr.bf16.gmra.mrb[0].mxu0 %v1470
  %v1863 = vpop.f32.mrb[0].mxu0
  %v1864 = vadd.f32 %v587, %v1863
  %v1865 = vpop.f32.mrb[0].mxu0
  %v1866 = vpop.f32.mrb[0].mxu0
  %v1867 = vadd.f32 %v592, %v1866
  %v1868 = vpop.f32.mrb[0].mxu0
  %1869 = vmatprep.mubr.bf16.mxu0 0
  %1870 = vmatmul.mubr.bf16.gmra.mrb[0].mxu0 %v1473
  %v1871 = vpop.f32.mrb[0].mxu0
  %v1872 = vadd.f32 %v597, %v1871
  %v1873 = vpop.f32.mrb[0].mxu0
  %v1874 = vpop.f32.mrb[0].mxu0
  %v1875 = vadd.f32 %v602, %v1874
  %v1876 = vpop.f32.mrb[0].mxu0
  %1877 = vmatprep.mubr.bf16.mxu0 0
  %1878 = vmatmul.mubr.bf16.gmra.mrb[0].mxu0 %v1476
  %v1879 = vpop.f32.mrb[0].mxu0
  %v1880 = vadd.f32 %v607, %v1879
  %v1881 = vpop.f32.mrb[0].mxu0
  %v1882 = vpop.f32.mrb[0].mxu0
  %v1883 = vadd.f32 %v612, %v1882
  %v1884 = vpop.f32.mrb[0].mxu0
  %1885 = vmatprep.mubr.bf16.mxu0 0
  %1886 = vmatmul.mubr.bf16.gmra.mrb[0].mxu0 %v1479
  %v1887 = vpop.f32.mrb[0].mxu0
  %v1888 = vadd.f32 %v617, %v1887
  %v1889 = vpop.f32.mrb[0].mxu0
  %v1890 = vpop.f32.mrb[0].mxu0
  %v1891 = vadd.f32 %v622, %v1890
  %v1892 = vpop.f32.mrb[0].mxu0
  %1893 = vmatprep.mubr.bf16.mxu0 0
  %1894 = vmatmul.mubr.bf16.gmra.mrb[0].mxu0 %v1482
  %v1895 = vpop.f32.mrb[0].mxu0
  %v1896 = vadd.f32 %v627, %v1895
  %v1897 = vpop.f32.mrb[0].mxu0
  %v1898 = vpop.f32.mrb[0].mxu0
  %v1899 = vadd.f32 %v632, %v1898
  %v1900 = vpop.f32.mrb[0].mxu0
  %1901 = vmatprep.mubr.bf16.mxu0 0
  %1902 = vmatmul.mubr.bf16.gmra.mrb[0].mxu0 %v1485
  %v1903 = vpop.f32.mrb[0].mxu0
  %v1904 = vadd.f32 %v637, %v1903
  %v1905 = vpop.f32.mrb[0].mxu0
  %v1906 = vpop.f32.mrb[0].mxu0
  %v1907 = vadd.f32 %v642, %v1906
  %v1908 = vpop.f32.mrb[0].mxu0
  %1909 = vmatprep.mubr.bf16.mxu0 0
  %1910 = vmatmul.mubr.bf16.gmra.mrb[0].mxu0 %v1488
  %v1911 = vpop.f32.mrb[0].mxu0
  %v1912 = vadd.f32 %v647, %v1911
  %v1913 = vpop.f32.mrb[0].mxu0
  %v1914 = vpop.f32.mrb[0].mxu0
  %v1915 = vadd.f32 %v652, %v1914
  %v1916 = vpop.f32.mrb[0].mxu0
  %1917 = vmatprep.mubr.bf16.mxu0 0
  %1918 = vmatmul.mubr.bf16.gmra.mrb[0].mxu0 %v1491
  %v1919 = vpop.f32.mrb[0].mxu0
  %v1920 = vadd.f32 %v657, %v1919
  %v1921 = vpop.f32.mrb[0].mxu0
  %v1922 = vpop.f32.mrb[0].mxu0
  %v1923 = vadd.f32 %v662, %v1922
  %v1924 = vpop.f32.mrb[0].mxu0
  %1925 = vmatprep.mubr.bf16.mxu0 0
  %1926 = vmatmul.mubr.bf16.gmra.mrb[0].mxu0 %v1494
  %v1927 = vpop.f32.mrb[0].mxu0
  %v1928 = vadd.f32 %v667, %v1927
  %v1929 = vpop.f32.mrb[0].mxu0
  %v1930 = vpop.f32.mrb[0].mxu0
  %v1931 = vadd.f32 %v672, %v1930
  %v1932 = vpop.f32.mrb[0].mxu0
  %1933 = vmatprep.mubr.bf16.mxu0 0
  %1934 = vmatmul.mubr.bf16.gmra.mrb[0].mxu0 %v1497
  %v1935 = vpop.f32.mrb[0].mxu0
  %v1936 = vadd.f32 %v677, %v1935
  %v1937 = vpop.f32.mrb[0].mxu0
  %v1938 = vpop.f32.mrb[0].mxu0
  %v1939 = vadd.f32 %v682, %v1938
  %v1940 = vpop.f32.mrb[0].mxu0
  %1941 = vmatprep.mubr.bf16.mxu0 0
  %1942 = vmatmul.mubr.bf16.gmra.mrb[0].mxu0 %v1500
  %v1943 = vpop.f32.mrb[0].mxu0
  %v1944 = vadd.f32 %v687, %v1943
  %v1945 = vpop.f32.mrb[0].mxu0
  %v1946 = vpop.f32.mrb[0].mxu0
  %v1947 = vadd.f32 %v692, %v1946
  %v1948 = vpop.f32.mrb[0].mxu0
  %1949 = vmatprep.mubr.bf16.mxu0 0
  %1950 = vmatmul.mubr.bf16.gmra.mrb[0].mxu0 %v1503
  %v1951 = vpop.f32.mrb[0].mxu0
  %v1952 = vadd.f32 %v697, %v1951
  %v1953 = vpop.f32.mrb[0].mxu0
  %v1954 = vpop.f32.mrb[0].mxu0
  %v1955 = vadd.f32 %v702, %v1954
  %v1956 = vpop.f32.mrb[0].mxu0
  %1957 = vmatprep.mubr.bf16.mxu0 0
  %1958 = vmatmul.mubr.bf16.gmra.mrb[0].mxu0 %v1506
  %v1959 = vpop.f32.mrb[0].mxu0
  %v1960 = vadd.f32 %v707, %v1959
  %v1961 = vpop.f32.mrb[0].mxu0
  %v1962 = vpop.f32.mrb[0].mxu0
  %v1963 = vadd.f32 %v712, %v1962
  %v1964 = vpop.f32.mrb[0].mxu0
  %1965 = vmatprep.mubr.bf16.mxu0 0
  %1966 = vmatmul.mubr.bf16.gmra.mrb[0].mxu0 %v1509
  %v1967 = vpop.f32.mrb[0].mxu0
  %v1968 = vadd.f32 %v717, %v1967
  %v1969 = vpop.f32.mrb[0].mxu0
  %v1970 = vpop.f32.mrb[0].mxu0
  %v1971 = vadd.f32 %v722, %v1970
  %v1972 = vpop.f32.mrb[0].mxu0
  %1973 = vmatprep.mubr.bf16.mxu0 0
  %1974 = vmatmul.mubr.bf16.gmra.mrb[0].mxu0 %v1512
  %v1975 = vpop.f32.mrb[0].mxu0
  %v1976 = vadd.f32 %v727, %v1975
  %v1977 = vpop.f32.mrb[0].mxu0
  %v1978 = vpop.f32.mrb[0].mxu0
  %v1979 = vadd.f32 %v732, %v1978
  %v1980 = vpop.f32.mrb[0].mxu0
  %1981 = vmatprep.mubr.bf16.mxu0 0
  %1982 = vmatmul.mubr.bf16.gmra.mrb[0].mxu0 %v1515
  %v1983 = vpop.f32.mrb[0].mxu0
  %v1984 = vadd.f32 %v737, %v1983
  %v1985 = vpop.f32.mrb[0].mxu0
  %v1986 = vpop.f32.mrb[0].mxu0
  %v1987 = vadd.f32 %v742, %v1986
  %v1988 = vpop.f32.mrb[0].mxu0
  %1989 = vmatprep.mubr.bf16.mxu0 0
  %1990 = vmatmul.mubr.bf16.gmra.mrb[0].mxu0 %v1518
  %v1991 = vpop.f32.mrb[0].mxu0
  %v1992 = vadd.f32 %v747, %v1991
  %v1993 = vpop.f32.mrb[0].mxu0
  %v1994 = vpop.f32.mrb[0].mxu0
  %v1995 = vadd.f32 %v752, %v1994
  %v1996 = vpop.f32.mrb[0].mxu0
  %1997 = vmatprep.mubr.bf16.mxu0 0
  %1998 = vmatmul.mubr.bf16.gmra.mrb[0].mxu0 %v1521
  %v1999 = vpop.f32.mrb[0].mxu0
  %v2000 = vadd.f32 %v757, %v1999
  %v2001 = vpop.f32.mrb[0].mxu0
  %v2002 = vpop.f32.mrb[0].mxu0
  %v2003 = vadd.f32 %v762, %v2002
  %v2004 = vpop.f32.mrb[0].mxu0
  %2005 = vmatprep.mubr.bf16.mxu0 0
  %2006 = vmatmul.mubr.bf16.gmra.mrb[0].mxu0 %v1524
  %v2007 = vpop.f32.mrb[0].mxu0
  %v2008 = vadd.f32 %v767, %v2007
  %v2009 = vpop.f32.mrb[0].mxu0
  %v2010 = vpop.f32.mrb[0].mxu0
  %v2011 = vadd.f32 %v772, %v2010
  %v2012 = vpop.f32.mrb[0].mxu0
  %2013 = vmatprep.mubr.bf16.mxu0 0
  %2014 = vmatmul.mubr.bf16.gmra.mrb[0].mxu0 %v1527
  %v2015 = vpop.f32.mrb[0].mxu0
  %v2016 = vadd.f32 %v777, %v2015
  %v2017 = vpop.f32.mrb[0].mxu0
  %v2018 = vpop.f32.mrb[0].mxu0
  %v2019 = vadd.f32 %v782, %v2018
  %v2020 = vpop.f32.mrb[0].mxu0
  %2021 = vmatprep.mubr.bf16.mxu0 0
  %2022 = vmatmul.mubr.bf16.gmra.mrb[0].mxu0 %v1530
  %v2023 = vpop.f32.mrb[0].mxu0
  %v2024 = vadd.f32 %v787, %v2023
  %v2025 = vpop.f32.mrb[0].mxu0
  %v2026 = vpop.f32.mrb[0].mxu0
  %v2027 = vadd.f32 %v792, %v2026
  %v2028 = vpop.f32.mrb[0].mxu0
  %2029 = vmatprep.mubr.bf16.mxu0 0
  %2030 = vmatmul.mubr.bf16.gmra.mrb[0].mxu0 %v1533
  %v2031 = vpop.f32.mrb[0].mxu0
  %v2032 = vadd.f32 %v797, %v2031
  %v2033 = vpop.f32.mrb[0].mxu0
  %v2034 = vpop.f32.mrb[0].mxu0
  %v2035 = vadd.f32 %v802, %v2034
  %v2036 = vpop.f32.mrb[0].mxu0
  %2037 = vmatprep.mubr.bf16.mxu0 0
  %2038 = vmatmul.mubr.bf16.gmra.mrb[0].mxu0 %v1536
  %v2039 = vpop.f32.mrb[0].mxu0
  %v2040 = vadd.f32 %v807, %v2039
  %v2041 = vpop.f32.mrb[0].mxu0
  %v2042 = vpop.f32.mrb[0].mxu0
  %v2043 = vadd.f32 %v812, %v2042
  %v2044 = vpop.f32.mrb[0].mxu0
  %2045 = vmatprep.mubr.bf16.mxu0 0
  %2046 = vmatmul.mubr.bf16.gmra.mrb[0].mxu0 %v1539
  %v2047 = vpop.f32.mrb[0].mxu0
  %v2048 = vadd.f32 %v817, %v2047
  %v2049 = vpop.f32.mrb[0].mxu0
  %v2050 = vpop.f32.mrb[0].mxu0
  %v2051 = vadd.f32 %v822, %v2050
  %v2052 = vpop.f32.mrb[0].mxu0
  %2053 = vmatprep.mubr.bf16.mxu0 0
  %2054 = vmatmul.mubr.bf16.gmra.mrb[0].mxu0 %v1542
  %v2055 = vpop.f32.mrb[0].mxu0
  %v2056 = vadd.f32 %v827, %v2055
  %v2057 = vpop.f32.mrb[0].mxu0
  %v2058 = vpop.f32.mrb[0].mxu0
  %v2059 = vadd.f32 %v832, %v2058
  %v2060 = vpop.f32.mrb[0].mxu0
  %2061 = vmatprep.mubr.bf16.mxu0 0
  %2062 = vmatmul.mubr.bf16.gmra.mrb[0].mxu0 %v1545
  %v2063 = vpop.f32.mrb[0].mxu0
  %v2064 = vadd.f32 %v837, %v2063
  %v2065 = vpop.f32.mrb[0].mxu0
  %v2066 = vpop.f32.mrb[0].mxu0
  %v2067 = vadd.f32 %v842, %v2066
  %v2068 = vpop.f32.mrb[0].mxu0
  %2069 = vmatprep.mubr.bf16.mxu0 0
  %2070 = vmatmul.mubr.bf16.gmra.mrb[0].mxu0 %v1548
  %v2071 = vpop.f32.mrb[0].mxu0
  %v2072 = vadd.f32 %v847, %v2071
  %v2073 = vpop.f32.mrb[0].mxu0
  %v2074 = vpop.f32.mrb[0].mxu0
  %v2075 = vadd.f32 %v852, %v2074
  %v2076 = vpop.f32.mrb[0].mxu0
  %2077 = vmatprep.mubr.bf16.mxu0 0
  %2078 = vmatmul.mubr.bf16.gmra.mrb[0].mxu0 %v1551
  %v2079 = vpop.f32.mrb[0].mxu0
  %v2080 = vadd.f32 %v857, %v2079
  %v2081 = vpop.f32.mrb[0].mxu0
  %v2082 = vpop.f32.mrb[0].mxu0
  %v2083 = vadd.f32 %v862, %v2082
  %v2084 = vpop.f32.mrb[0].mxu0
  %2085 = vmatprep.mubr.bf16.mxu0 0
  %2086 = vmatmul.mubr.bf16.gmra.mrb[0].mxu0 %v1554
  %v2087 = vpop.f32.mrb[0].mxu0
  %v2088 = vadd.f32 %v867, %v2087
  %v2089 = vpop.f32.mrb[0].mxu0
  %v2090 = vpop.f32.mrb[0].mxu0
  %v2091 = vadd.f32 %v872, %v2090
  %v2092 = vpop.f32.mrb[0].mxu0
  %2093 = vmatprep.mubr.bf16.mxu0 0
  %2094 = vmatmul.mubr.bf16.gmra.mrb[0].mxu0 %v1557
  %v2095 = vpop.f32.mrb[0].mxu0
  %v2096 = vadd.f32 %v877, %v2095
  %v2097 = vpop.f32.mrb[0].mxu0
  %v2098 = vpop.f32.mrb[0].mxu0
  %v2099 = vadd.f32 %v882, %v2098
  %v2100 = vpop.f32.mrb[0].mxu0
  %2101 = vmatprep.mubr.bf16.mxu0 0
  %2102 = vmatmul.mubr.bf16.gmra.mrb[0].mxu0 %v1560
  %v2103 = vpop.f32.mrb[0].mxu0
  %v2104 = vadd.f32 %v887, %v2103
  %v2105 = vpop.f32.mrb[0].mxu0
  %v2106 = vpop.f32.mrb[0].mxu0
  %v2107 = vadd.f32 %v892, %v2106
  %v2108 = vpop.f32.mrb[0].mxu0
  %2109 = vmatprep.mubr.bf16.mxu0 0
  %2110 = vmatmul.mubr.bf16.gmra.mrb[0].mxu0 %v1563
  %v2111 = vpop.f32.mrb[0].mxu0
  %v2112 = vadd.f32 %v897, %v2111
  %v2113 = vpop.f32.mrb[0].mxu0
  %v2114 = vpop.f32.mrb[0].mxu0
  %v2115 = vadd.f32 %v902, %v2114
  %v2116 = vpop.f32.mrb[0].mxu0
  %2117 = vmatprep.mubr.bf16.mxu0 0
  %2118 = vmatmul.mubr.bf16.gmra.mrb[0].mxu0 %v1566
  %v2119 = vpop.f32.mrb[0].mxu0
  %v2120 = vadd.f32 %v907, %v2119
  %v2121 = vpop.f32.mrb[0].mxu0
  %v2122 = vpop.f32.mrb[0].mxu0
  %v2123 = vadd.f32 %v912, %v2122
  %v2124 = vpop.f32.mrb[0].mxu0
  %2125 = vmatprep.mubr.bf16.mxu0 0
  %2126 = vmatmul.mubr.bf16.gmra.mrb[0].mxu0 %v1569
  %v2127 = vpop.f32.mrb[0].mxu0
  %v2128 = vadd.f32 %v917, %v2127
  %v2129 = vpop.f32.mrb[0].mxu0
  %v2130 = vpop.f32.mrb[0].mxu0
  %v2131 = vadd.f32 %v922, %v2130
  %v2132 = vpop.f32.mrb[0].mxu0
  %2133 = vmatprep.mubr.bf16.mxu0 0
  %2134 = vmatmul.mubr.bf16.gmra.mrb[0].mxu0 %v1572
  %v2135 = vpop.f32.mrb[0].mxu0
  %v2136 = vadd.f32 %v927, %v2135
  %v2137 = vpop.f32.mrb[0].mxu0
  %v2138 = vpop.f32.mrb[0].mxu0
  %v2139 = vadd.f32 %v932, %v2138
  %v2140 = vpop.f32.mrb[0].mxu0
  %2141 = vmatprep.mubr.bf16.mxu0 0
  %2142 = vmatmul.mubr.bf16.gmra.mrb[0].mxu0 %v1575
  %v2143 = vpop.f32.mrb[0].mxu0
  %v2144 = vadd.f32 %v937, %v2143
  %v2145 = vpop.f32.mrb[0].mxu0
  %v2146 = vpop.f32.mrb[0].mxu0
  %v2147 = vadd.f32 %v942, %v2146
  %v2148 = vpop.f32.mrb[0].mxu0
  %2149 = vmatprep.mubr.bf16.mxu0 0
  %2150 = vmatmul.mubr.bf16.gmra.mrb[0].mxu0 %v1578
  %v2151 = vpop.f32.mrb[0].mxu0
  %v2152 = vadd.f32 %v947, %v2151
  %v2153 = vpop.f32.mrb[0].mxu0
  %v2154 = vpop.f32.mrb[0].mxu0
  %v2155 = vadd.f32 %v952, %v2154
  %v2156 = vpop.f32.mrb[0].mxu0
  %2157 = vmatprep.mubr.bf16.mxu0 0
  %2158 = vmatmul.mubr.bf16.gmra.mrb[0].mxu0 %v1581
  %v2159 = vpop.f32.mrb[0].mxu0
  %v2160 = vadd.f32 %v957, %v2159
  %v2161 = vpop.f32.mrb[0].mxu0
  %v2162 = vpop.f32.mrb[0].mxu0
  %v2163 = vadd.f32 %v962, %v2162
  %v2164 = vpop.f32.mrb[0].mxu0
  %2165 = vmatprep.mubr.bf16.mxu0 0
  %2166 = vmatmul.mubr.bf16.gmra.mrb[0].mxu0 %v1584
  %v2167 = vpop.f32.mrb[0].mxu0
  %v2168 = vadd.f32 %v967, %v2167
  %v2169 = vpop.f32.mrb[0].mxu0
  %v2170 = vpop.f32.mrb[0].mxu0
  %v2171 = vadd.f32 %v972, %v2170
  %v2172 = vpop.f32.mrb[0].mxu0
  %2173 = vmatprep.mubr.bf16.mxu0 0
  %2174 = vmatmul.mubr.bf16.gmra.mrb[0].mxu0 %v1587
  %v2175 = vpop.f32.mrb[0].mxu0
  %v2176 = vadd.f32 %v977, %v2175
  %v2177 = vpop.f32.mrb[0].mxu0
  %v2178 = vpop.f32.mrb[0].mxu0
  %v2179 = vadd.f32 %v982, %v2178
  %v2180 = vpop.f32.mrb[0].mxu0
  %2181 = vmatprep.mubr.bf16.mxu0 0
  %2182 = vmatmul.mubr.bf16.gmra.mrb[0].mxu0 %v1590
  %v2183 = vpop.f32.mrb[0].mxu0
  %v2184 = vadd.f32 %v987, %v2183
  %v2185 = vpop.f32.mrb[0].mxu0
  %v2186 = vpop.f32.mrb[0].mxu0
  %v2187 = vadd.f32 %v992, %v2186
  %v2188 = vpop.f32.mrb[0].mxu0
  %2189 = vmatprep.mubr.bf16.mxu0 0
  %2190 = vmatmul.mubr.bf16.gmra.mrb[0].mxu0 %v1593
  %v2191 = vpop.f32.mrb[0].mxu0
  %v2192 = vadd.f32 %v997, %v2191
  %v2193 = vpop.f32.mrb[0].mxu0
  %v2194 = vpop.f32.mrb[0].mxu0
  %v2195 = vadd.f32 %v1002, %v2194
  %v2196 = vpop.f32.mrb[0].mxu0
  %2197 = vmatprep.mubr.bf16.mxu0 0
  %2198 = vmatmul.mubr.bf16.gmra.mrb[0].mxu0 %v1596
  %v2199 = vpop.f32.mrb[0].mxu0
  %v2200 = vadd.f32 %v1007, %v2199
  %v2201 = vpop.f32.mrb[0].mxu0
  %v2202 = vpop.f32.mrb[0].mxu0
  %v2203 = vadd.f32 %v1012, %v2202
  %v2204 = vpop.f32.mrb[0].mxu0
  %2205 = vmatprep.mubr.bf16.mxu0 0
  %2206 = vmatmul.mubr.bf16.gmra.mrb[0].mxu0 %v1599
  %v2207 = vpop.f32.mrb[0].mxu0
  %v2208 = vadd.f32 %v1017, %v2207
  %v2209 = vpop.f32.mrb[0].mxu0
  %v2210 = vpop.f32.mrb[0].mxu0
  %v2211 = vadd.f32 %v1022, %v2210
  %v2212 = vpop.f32.mrb[0].mxu0
  %2213 = vdwg.mxu0
  %vm2214 = vcmask 588800
  %2215 = vst.msk [vmem:[%s3] sm:$0xff] %vm2214, %v1640
  %2216 = vst.msk [vmem:[%s3 + $0x8] sm:$0xff] %vm2214, %v1643
  %2217 = vst.msk [vmem:[%s3 + $0x10] sm:$0xff] %vm2214, %v1648
  %2218 = vst.msk [vmem:[%s3 + $0x18] sm:$0xff] %vm2214, %v1651
  %2219 = vst.msk [vmem:[%s3 + $0x20] sm:$0xff] %vm2214, %v1656
  %2220 = vst.msk [vmem:[%s3 + $0x28] sm:$0xff] %vm2214, %v1659
  %2221 = vst.msk [vmem:[%s3 + $0x30] sm:$0xff] %vm2214, %v1664
  %2222 = vst.msk [vmem:[%s3 + $0x38] sm:$0xff] %vm2214, %v1667
  %2223 = vst.msk [vmem:[%s3 + $0x40] sm:$0xff] %vm2214, %v1672
  %2224 = vst.msk [vmem:[%s3 + $0x48] sm:$0xff] %vm2214, %v1675
  %2225 = vst.msk [vmem:[%s3 + $0x50] sm:$0xff] %vm2214, %v1680
  %2226 = vst.msk [vmem:[%s3 + $0x58] sm:$0xff] %vm2214, %v1683
  %2227 = vst.msk [vmem:[%s3 + $0x60] sm:$0xff] %vm2214, %v1688
  %2228 = vst.msk [vmem:[%s3 + $0x68] sm:$0xff] %vm2214, %v1691
  %2229 = vst.msk [vmem:[%s3 + $0x70] sm:$0xff] %vm2214, %v1696
  %2230 = vst.msk [vmem:[%s3 + $0x78] sm:$0xff] %vm2214, %v1699
  %2231 = vst.msk [vmem:[%s3 + $0x80] sm:$0xff] %vm2214, %v1704
  %2232 = vst.msk [vmem:[%s3 + $0x88] sm:$0xff] %vm2214, %v1707
  %2233 = vst.msk [vmem:[%s3 + $0x90] sm:$0xff] %vm2214, %v1712
  %2234 = vst.msk [vmem:[%s3 + $0x98] sm:$0xff] %vm2214, %v1715
  %2235 = vst.msk [vmem:[%s3 + $0xa0] sm:$0xff] %vm2214, %v1720
  %2236 = vst.msk [vmem:[%s3 + $0xa8] sm:$0xff] %vm2214, %v1723
  %2237 = vst.msk [vmem:[%s3 + $0xb0] sm:$0xff] %vm2214, %v1728
  %2238 = vst.msk [vmem:[%s3 + $0xb8] sm:$0xff] %vm2214, %v1731
  %2239 = vst.msk [vmem:[%s3 + $0xc0] sm:$0xff] %vm2214, %v1736
  %2240 = vst.msk [vmem:[%s3 + $0xc8] sm:$0xff] %vm2214, %v1739
  %2241 = vst.msk [vmem:[%s3 + $0xd0] sm:$0xff] %vm2214, %v1744
  %2242 = vst.msk [vmem:[%s3 + $0xd8] sm:$0xff] %vm2214, %v1747
  %2243 = vst.msk [vmem:[%s3 + $0xe0] sm:$0xff] %vm2214, %v1752
  %2244 = vst.msk [vmem:[%s3 + $0xe8] sm:$0xff] %vm2214, %v1755
  %2245 = vst.msk [vmem:[%s3 + $0xf0] sm:$0xff] %vm2214, %v1760
  %2246 = vst.msk [vmem:[%s3 + $0xf8] sm:$0xff] %vm2214, %v1763
  %2247 = vst.msk [vmem:[%s3 + $0x100] sm:$0xff] %vm2214, %v1768
  %2248 = vst.msk [vmem:[%s3 + $0x108] sm:$0xff] %vm2214, %v1771
  %2249 = vst.msk [vmem:[%s3 + $0x110] sm:$0xff] %vm2214, %v1776
  %2250 = vst.msk [vmem:[%s3 + $0x118] sm:$0xff] %vm2214, %v1779
  %2251 = vst.msk [vmem:[%s3 + $0x120] sm:$0xff] %vm2214, %v1784
  %2252 = vst.msk [vmem:[%s3 + $0x128] sm:$0xff] %vm2214, %v1787
  %2253 = vst.msk [vmem:[%s3 + $0x130] sm:$0xff] %vm2214, %v1792
  %2254 = vst.msk [vmem:[%s3 + $0x138] sm:$0xff] %vm2214, %v1795
  %2255 = vst.msk [vmem:[%s3 + $0x140] sm:$0xff] %vm2214, %v1800
  %2256 = vst.msk [vmem:[%s3 + $0x148] sm:$0xff] %vm2214, %v1803
  %2257 = vst.msk [vmem:[%s3 + $0x150] sm:$0xff] %vm2214, %v1808
  %2258 = vst.msk [vmem:[%s3 + $0x158] sm:$0xff] %vm2214, %v1811
  %2259 = vst.msk [vmem:[%s3 + $0x160] sm:$0xff] %vm2214, %v1816
  %2260 = vst.msk [vmem:[%s3 + $0x168] sm:$0xff] %vm2214, %v1819
  %2261 = vst.msk [vmem:[%s3 + $0x170] sm:$0xff] %vm2214, %v1824
  %2262 = vst.msk [vmem:[%s3 + $0x178] sm:$0xff] %vm2214, %v1827
  %2263 = vst.msk [vmem:[%s3 + $0x180] sm:$0xff] %vm2214, %v1832
  %2264 = vst.msk [vmem:[%s3 + $0x188] sm:$0xff] %vm2214, %v1835
  %2265 = vst.msk [vmem:[%s3 + $0x190] sm:$0xff] %vm2214, %v1840
  %2266 = vst.msk [vmem:[%s3 + $0x198] sm:$0xff] %vm2214, %v1843
  %2267 = vst.msk [vmem:[%s3 + $0x1a0] sm:$0xff] %vm2214, %v1848
  %2268 = vst.msk [vmem:[%s3 + $0x1a8] sm:$0xff] %vm2214, %v1851
  %2269 = vst.msk [vmem:[%s3 + $0x1b0] sm:$0xff] %vm2214, %v1856
  %2270 = vst.msk [vmem:[%s3 + $0x1b8] sm:$0xff] %vm2214, %v1859
  %2271 = vst.msk [vmem:[%s3 + $0x1c0] sm:$0xff] %vm2214, %v1864
  %2272 = vst.msk [vmem:[%s3 + $0x1c8] sm:$0xff] %vm2214, %v1867
  %2273 = vst.msk [vmem:[%s3 + $0x1d0] sm:$0xff] %vm2214, %v1872
  %2274 = vst.msk [vmem:[%s3 + $0x1d8] sm:$0xff] %vm2214, %v1875
  %2275 = vst.msk [vmem:[%s3 + $0x1e0] sm:$0xff] %vm2214, %v1880
  %2276 = vst.msk [vmem:[%s3 + $0x1e8] sm:$0xff] %vm2214, %v1883
  %2277 = vst.msk [vmem:[%s3 + $0x1f0] sm:$0xff] %vm2214, %v1888
  %2278 = vst.msk [vmem:[%s3 + $0x1f8] sm:$0xff] %vm2214, %v1891
  %2279 = vst.msk [vmem:[%s3 + $0x200] sm:$0xff] %vm2214, %v1896
  %2280 = vst.msk [vmem:[%s3 + $0x208] sm:$0xff] %vm2214, %v1899
  %2281 = vst.msk [vmem:[%s3 + $0x210] sm:$0xff] %vm2214, %v1904
  %2282 = vst.msk [vmem:[%s3 + $0x218] sm:$0xff] %vm2214, %v1907
  %2283 = vst.msk [vmem:[%s3 + $0x220] sm:$0xff] %vm2214, %v1912
  %2284 = vst.msk [vmem:[%s3 + $0x228] sm:$0xff] %vm2214, %v1915
  %2285 = vst.msk [vmem:[%s3 + $0x230] sm:$0xff] %vm2214, %v1920
  %2286 = vst.msk [vmem:[%s3 + $0x238] sm:$0xff] %vm2214, %v1923
  %2287 = vst.msk [vmem:[%s3 + $0x240] sm:$0xff] %vm2214, %v1928
  %2288 = vst.msk [vmem:[%s3 + $0x248] sm:$0xff] %vm2214, %v1931
  %2289 = vst.msk [vmem:[%s3 + $0x250] sm:$0xff] %vm2214, %v1936
  %2290 = vst.msk [vmem:[%s3 + $0x258] sm:$0xff] %vm2214, %v1939
  %2291 = vst.msk [vmem:[%s3 + $0x260] sm:$0xff] %vm2214, %v1944
  %2292 = vst.msk [vmem:[%s3 + $0x268] sm:$0xff] %vm2214, %v1947
  %2293 = vst.msk [vmem:[%s3 + $0x270] sm:$0xff] %vm2214, %v1952
  %2294 = vst.msk [vmem:[%s3 + $0x278] sm:$0xff] %vm2214, %v1955
  %2295 = vst.msk [vmem:[%s3 + $0x280] sm:$0xff] %vm2214, %v1960
  %2296 = vst.msk [vmem:[%s3 + $0x288] sm:$0xff] %vm2214, %v1963
  %2297 = vst.msk [vmem:[%s3 + $0x290] sm:$0xff] %vm2214, %v1968
  %2298 = vst.msk [vmem:[%s3 + $0x298] sm:$0xff] %vm2214, %v1971
  %2299 = vst.msk [vmem:[%s3 + $0x2a0] sm:$0xff] %vm2214, %v1976
  %2300 = vst.msk [vmem:[%s3 + $0x2a8] sm:$0xff] %vm2214, %v1979
  %2301 = vst.msk [vmem:[%s3 + $0x2b0] sm:$0xff] %vm2214, %v1984
  %2302 = vst.msk [vmem:[%s3 + $0x2b8] sm:$0xff] %vm2214, %v1987
  %2303 = vst.msk [vmem:[%s3 + $0x2c0] sm:$0xff] %vm2214, %v1992
  %2304 = vst.msk [vmem:[%s3 + $0x2c8] sm:$0xff] %vm2214, %v1995
  %2305 = vst.msk [vmem:[%s3 + $0x2d0] sm:$0xff] %vm2214, %v2000
  %2306 = vst.msk [vmem:[%s3 + $0x2d8] sm:$0xff] %vm2214, %v2003
  %2307 = vst.msk [vmem:[%s3 + $0x2e0] sm:$0xff] %vm2214, %v2008
  %2308 = vst.msk [vmem:[%s3 + $0x2e8] sm:$0xff] %vm2214, %v2011
  %2309 = vst.msk [vmem:[%s3 + $0x2f0] sm:$0xff] %vm2214, %v2016
  %2310 = vst.msk [vmem:[%s3 + $0x2f8] sm:$0xff] %vm2214, %v2019
  %2311 = vst.msk [vmem:[%s3 + $0x300] sm:$0xff] %vm2214, %v2024
  %2312 = vst.msk [vmem:[%s3 + $0x308] sm:$0xff] %vm2214, %v2027
  %2313 = vst.msk [vmem:[%s3 + $0x310] sm:$0xff] %vm2214, %v2032
  %2314 = vst.msk [vmem:[%s3 + $0x318] sm:$0xff] %vm2214, %v2035
  %2315 = vst.msk [vmem:[%s3 + $0x320] sm:$0xff] %vm2214, %v2040
  %2316 = vst.msk [vmem:[%s3 + $0x328] sm:$0xff] %vm2214, %v2043
  %2317 = vst.msk [vmem:[%s3 + $0x330] sm:$0xff] %vm2214, %v2048
  %2318 = vst.msk [vmem:[%s3 + $0x338] sm:$0xff] %vm2214, %v2051
  %2319 = vst.msk [vmem:[%s3 + $0x340] sm:$0xff] %vm2214, %v2056
  %2320 = vst.msk [vmem:[%s3 + $0x348] sm:$0xff] %vm2214, %v2059
  %2321 = vst.msk [vmem:[%s3 + $0x350] sm:$0xff] %vm2214, %v2064
  %2322 = vst.msk [vmem:[%s3 + $0x358] sm:$0xff] %vm2214, %v2067
  %2323 = vst.msk [vmem:[%s3 + $0x360] sm:$0xff] %vm2214, %v2072
  %2324 = vst.msk [vmem:[%s3 + $0x368] sm:$0xff] %vm2214, %v2075
  %2325 = vst.msk [vmem:[%s3 + $0x370] sm:$0xff] %vm2214, %v2080
  %2326 = vst.msk [vmem:[%s3 + $0x378] sm:$0xff] %vm2214, %v2083
  %2327 = vst.msk [vmem:[%s3 + $0x380] sm:$0xff] %vm2214, %v2088
  %2328 = vst.msk [vmem:[%s3 + $0x388] sm:$0xff] %vm2214, %v2091
  %2329 = vst.msk [vmem:[%s3 + $0x390] sm:$0xff] %vm2214, %v2096
  %2330 = vst.msk [vmem:[%s3 + $0x398] sm:$0xff] %vm2214, %v2099
  %2331 = vst.msk [vmem:[%s3 + $0x3a0] sm:$0xff] %vm2214, %v2104
  %2332 = vst.msk [vmem:[%s3 + $0x3a8] sm:$0xff] %vm2214, %v2107
  %2333 = vst.msk [vmem:[%s3 + $0x3b0] sm:$0xff] %vm2214, %v2112
  %2334 = vst.msk [vmem:[%s3 + $0x3b8] sm:$0xff] %vm2214, %v2115
  %2335 = vst.msk [vmem:[%s3 + $0x3c0] sm:$0xff] %vm2214, %v2120
  %2336 = vst.msk [vmem:[%s3 + $0x3c8] sm:$0xff] %vm2214, %v2123
  %2337 = vst.msk [vmem:[%s3 + $0x3d0] sm:$0xff] %vm2214, %v2128
  %2338 = vst.msk [vmem:[%s3 + $0x3d8] sm:$0xff] %vm2214, %v2131
  %2339 = vst.msk [vmem:[%s3 + $0x3e0] sm:$0xff] %vm2214, %v2136
  %2340 = vst.msk [vmem:[%s3 + $0x3e8] sm:$0xff] %vm2214, %v2139
  %2341 = vst.msk [vmem:[%s3 + $0x3f0] sm:$0xff] %vm2214, %v2144
  %2342 = vst.msk [vmem:[%s3 + $0x3f8] sm:$0xff] %vm2214, %v2147
  %2343 = vst.msk [vmem:[%s3 + $0x400] sm:$0xff] %vm2214, %v2152
  %2344 = vst.msk [vmem:[%s3 + $0x408] sm:$0xff] %vm2214, %v2155
  %2345 = vst.msk [vmem:[%s3 + $0x410] sm:$0xff] %vm2214, %v2160
  %2346 = vst.msk [vmem:[%s3 + $0x418] sm:$0xff] %vm2214, %v2163
  %2347 = vst.msk [vmem:[%s3 + $0x420] sm:$0xff] %vm2214, %v2168
  %2348 = vst.msk [vmem:[%s3 + $0x428] sm:$0xff] %vm2214, %v2171
  %2349 = vst.msk [vmem:[%s3 + $0x430] sm:$0xff] %vm2214, %v2176
  %2350 = vst.msk [vmem:[%s3 + $0x438] sm:$0xff] %vm2214, %v2179
  %2351 = vst.msk [vmem:[%s3 + $0x440] sm:$0xff] %vm2214, %v2184
  %2352 = vst.msk [vmem:[%s3 + $0x448] sm:$0xff] %vm2214, %v2187
  %2353 = vst.msk [vmem:[%s3 + $0x450] sm:$0xff] %vm2214, %v2192
  %2354 = vst.msk [vmem:[%s3 + $0x458] sm:$0xff] %vm2214, %v2195
  %2355 = vst.msk [vmem:[%s3 + $0x460] sm:$0xff] %vm2214, %v2200
  %2356 = vst.msk [vmem:[%s3 + $0x468] sm:$0xff] %vm2214, %v2203
  %2357 = vst.msk [vmem:[%s3 + $0x470] sm:$0xff] %vm2214, %v2208
  %2358 = vst.msk [vmem:[%s3 + $0x478] sm:$0xff] %vm2214, %v2211
  // Predicated region
  $region14: #{st_autoencoder_g6.8} parent=0 // pred_check
    _
  $region15: #{st_autoencoder_g6.8} parent=0 // pred_check_branch
    %2360 = sbr.rel (0) target = $region17
  $region16: #{st_autoencoder_g6.8} parent=0 // pred_region
    _
  $region17: #{st_autoencoder_g6.8} parent=0 // pred_fallthru
    _
  // Predicated region
  $region18: #{st_autoencoder_g6.8} parent=0 // pred_check
    _
  $region19: #{st_autoencoder_g6.8} parent=0 // pred_check_branch
    %2362 = sbr.rel (0) target = $region21
  $region20: #{st_autoencoder_g6.8} parent=0 // pred_region
    _
  $region21: #{st_autoencoder_g6.8} parent=0 // pred_fallthru
    _

// kernel: st_autoencoder_g6.9
$region0: #{st_autoencoder_g6.9}
  #allocation0 [shape = 'u32[]', space=smem, size = 0x4, offset = 0x4, fixed_abs, tag = 'smem constant byte address 0x4 - core index']
  #allocation1 [shape = 'u32[144,128]{1,0:T(1,128)}', space=vmem, size = 0x12000, scoped, tag = 'internal scratch']
  %s0 = inlined_call_operand.vmem [shape: bf16[9,128], index: 0, kind: input, shape index: {}]
  %s1 = inlined_call_operand.vmem [shape: bf16[128,392], index: 1, kind: input, shape index: {}]
  %s2 = inlined_call_operand.vmem [shape: f32[9,1], index: 2, kind: input, shape index: {}]
  %s3 = inlined_call_operand.vmem [shape: f32[9,392], index: 3, kind: output, shape index: {}]
  %s4 = sld [smem:[#allocation0]]
  $region22: #{st_autoencoder_g6.9} parent=0
    _
  %s6 = ssub.s32 1, %s4
  %s7 = scalar_select 0, %s6, %s4
  // Predicated region
  $region2: #{st_autoencoder_g6.9} parent=0 // pred_check
    _
  $region3: #{st_autoencoder_g6.9} parent=0 // pred_check_branch
    %9 = sbr.rel (0) target = $region5
  $region4: #{st_autoencoder_g6.9} parent=0 // pred_region
    _
  $region5: #{st_autoencoder_g6.9} parent=0 // pred_fallthru
    _
  // Predicated region
  $region6: #{st_autoencoder_g6.9} parent=0 // pred_check
    _
  $region7: #{st_autoencoder_g6.9} parent=0 // pred_check_branch
    %11 = sbr.rel (0) target = $region9
  $region8: #{st_autoencoder_g6.9} parent=0 // pred_region
    _
  $region9: #{st_autoencoder_g6.9} parent=0 // pred_fallthru
    _
  // Predicated region
  $region10: #{st_autoencoder_g6.9} parent=0 // pred_check
    _
  $region11: #{st_autoencoder_g6.9} parent=0 // pred_check_branch
    %13 = sbr.rel (0) target = $region13
  $region12: #{st_autoencoder_g6.9} parent=0 // pred_region
    _
  $region13: #{st_autoencoder_g6.9} parent=0 // pred_fallthru
    _
  %v15 = vld [vmem:[%s0] sm:$0xf]
  %v16 = vld [vmem:[%s0 + $0x4] sm:$0x1]
  %v17 = vld [vmem:[%s1] sm:$0xff]
  %v18 = vld [vmem:[%s1 + $0x8] sm:$0xff]
  %v19 = vld [vmem:[%s1 + $0x10] sm:$0xff]
  %v20 = vld [vmem:[%s1 + $0x18] sm:$0xff]
  %v21 = vld [vmem:[%s1 + $0x20] sm:$0xff]
  %v22 = vld [vmem:[%s1 + $0x28] sm:$0xff]
  %v23 = vld [vmem:[%s1 + $0x30] sm:$0xff]
  %v24 = vld [vmem:[%s1 + $0x38] sm:$0xff]
  %v25 = vld [vmem:[%s1 + $0x40] sm:$0xff]
  %v26 = vld [vmem:[%s1 + $0x48] sm:$0xff]
  %v27 = vld [vmem:[%s1 + $0x50] sm:$0xff]
  %v28 = vld [vmem:[%s1 + $0x58] sm:$0xff]
  %v29 = vld [vmem:[%s1 + $0x60] sm:$0xff]
  %v30 = vld [vmem:[%s1 + $0x68] sm:$0xff]
  %v31 = vld [vmem:[%s1 + $0x70] sm:$0xff]
  %v32 = vld [vmem:[%s1 + $0x78] sm:$0xff]
  %v33 = vld [vmem:[%s1 + $0x80] sm:$0xff]
  %v34 = vld [vmem:[%s1 + $0x88] sm:$0xff]
  %v35 = vld [vmem:[%s1 + $0x90] sm:$0xff]
  %v36 = vld [vmem:[%s1 + $0x98] sm:$0xff]
  %v37 = vld [vmem:[%s1 + $0xa0] sm:$0xff]
  %v38 = vld [vmem:[%s1 + $0xa8] sm:$0xff]
  %v39 = vld [vmem:[%s1 + $0xb0] sm:$0xff]
  %v40 = vld [vmem:[%s1 + $0xb8] sm:$0xff]
  %v41 = vld [vmem:[%s1 + $0xc0] sm:$0xff]
  %v42 = vld [vmem:[%s1 + $0xc8] sm:$0xff]
  %v43 = vld [vmem:[%s1 + $0xd0] sm:$0xff]
  %v44 = vld [vmem:[%s1 + $0xd8] sm:$0xff]
  %v45 = vld [vmem:[%s1 + $0xe0] sm:$0xff]
  %v46 = vld [vmem:[%s1 + $0xe8] sm:$0xff]
  %v47 = vld [vmem:[%s1 + $0xf0] sm:$0xff]
  %v48 = vld [vmem:[%s1 + $0xf8] sm:$0xff]
  %v49 = vld [vmem:[%s2] sm:$0xff]
  %v50 = vld [vmem:[%s2 + $0x8] sm:$0x1]
  %52 = vset.pattern.permute.xlu0 0
  %53 = vperm.xlu0 %52, %v49
  %v54 = vpop.permute.xlu0 %53
  %57 = vset.pattern.permute.xlu0 0
  %58 = vperm.xlu0 %57, %v50
  %v59 = vpop.permute.xlu0 %58
  %v63 = vunpack.c.l.b16 %v15
  %v64 = vunpack.c.l.b16 %v16
  %v65 = vpack.c.b16 %v64, %v63
  %v99 = vunpack.c.l.b16 %v17
  %v100 = vunpack.c.h.b16 %v17
  %v101 = vunpack.c.l.b16 %v18
  %v102 = vunpack.c.h.b16 %v18
  %v103 = vunpack.c.l.b16 %v19
  %v104 = vunpack.c.h.b16 %v19
  %v105 = vunpack.c.l.b16 %v20
  %v106 = vunpack.c.h.b16 %v20
  %v107 = vunpack.c.l.b16 %v21
  %v108 = vunpack.c.h.b16 %v21
  %v109 = vunpack.c.l.b16 %v22
  %v110 = vunpack.c.h.b16 %v22
  %v111 = vunpack.c.l.b16 %v23
  %v112 = vunpack.c.h.b16 %v23
  %v113 = vunpack.c.l.b16 %v24
  %v114 = vunpack.c.h.b16 %v24
  %v115 = vunpack.c.l.b16 %v25
  %v116 = vunpack.c.h.b16 %v25
  %v117 = vunpack.c.l.b16 %v26
  %v118 = vunpack.c.h.b16 %v26
  %v119 = vunpack.c.l.b16 %v27
  %v120 = vunpack.c.h.b16 %v27
  %v121 = vunpack.c.l.b16 %v28
  %v122 = vunpack.c.h.b16 %v28
  %v123 = vunpack.c.l.b16 %v29
  %v124 = vunpack.c.h.b16 %v29
  %v125 = vunpack.c.l.b16 %v30
  %v126 = vunpack.c.h.b16 %v30
  %v127 = vunpack.c.l.b16 %v31
  %v128 = vunpack.c.h.b16 %v31
  %v129 = vunpack.c.l.b16 %v32
  %v130 = vunpack.c.h.b16 %v32
  %v131 = vunpack.c.l.b16 %v33
  %v132 = vunpack.c.h.b16 %v33
  %v133 = vunpack.c.l.b16 %v34
  %v134 = vunpack.c.h.b16 %v34
  %v135 = vunpack.c.l.b16 %v35
  %v136 = vunpack.c.h.b16 %v35
  %v137 = vunpack.c.l.b16 %v36
  %v138 = vunpack.c.h.b16 %v36
  %v139 = vunpack.c.l.b16 %v37
  %v140 = vunpack.c.h.b16 %v37
  %v141 = vunpack.c.l.b16 %v38
  %v142 = vunpack.c.h.b16 %v38
  %v143 = vunpack.c.l.b16 %v39
  %v144 = vunpack.c.h.b16 %v39
  %v145 = vunpack.c.l.b16 %v40
  %v146 = vunpack.c.h.b16 %v40
  %v147 = vunpack.c.l.b16 %v41
  %v148 = vunpack.c.h.b16 %v41
  %v149 = vunpack.c.l.b16 %v42
  %v150 = vunpack.c.h.b16 %v42
  %v151 = vunpack.c.l.b16 %v43
  %v152 = vunpack.c.h.b16 %v43
  %v153 = vunpack.c.l.b16 %v44
  %v154 = vunpack.c.h.b16 %v44
  %v155 = vunpack.c.l.b16 %v45
  %v156 = vunpack.c.h.b16 %v45
  %v157 = vunpack.c.l.b16 %v46
  %v158 = vunpack.c.h.b16 %v46
  %v159 = vunpack.c.l.b16 %v47
  %v160 = vunpack.c.h.b16 %v47
  %v161 = vunpack.c.l.b16 %v48
  %v162 = vunpack.c.h.b16 %v48
  %v163 = vpack.c.b16 %v103, %v99
  %v164 = vpack.c.b16 %v104, %v100
  %v165 = vpack.c.b16 %v105, %v101
  %v166 = vpack.c.b16 %v106, %v102
  %v167 = vpack.c.b16 %v111, %v107
  %v168 = vpack.c.b16 %v112, %v108
  %v169 = vpack.c.b16 %v113, %v109
  %v170 = vpack.c.b16 %v114, %v110
  %v171 = vpack.c.b16 %v119, %v115
  %v172 = vpack.c.b16 %v120, %v116
  %v173 = vpack.c.b16 %v121, %v117
  %v174 = vpack.c.b16 %v122, %v118
  %v175 = vpack.c.b16 %v127, %v123
  %v176 = vpack.c.b16 %v128, %v124
  %v177 = vpack.c.b16 %v129, %v125
  %v178 = vpack.c.b16 %v130, %v126
  %v179 = vpack.c.b16 %v135, %v131
  %v180 = vpack.c.b16 %v136, %v132
  %v181 = vpack.c.b16 %v137, %v133
  %v182 = vpack.c.b16 %v138, %v134
  %v183 = vpack.c.b16 %v143, %v139
  %v184 = vpack.c.b16 %v144, %v140
  %v185 = vpack.c.b16 %v145, %v141
  %v186 = vpack.c.b16 %v146, %v142
  %v187 = vpack.c.b16 %v151, %v147
  %v188 = vpack.c.b16 %v152, %v148
  %v189 = vpack.c.b16 %v153, %v149
  %v190 = vpack.c.b16 %v154, %v150
  %v191 = vpack.c.b16 %v159, %v155
  %v192 = vpack.c.b16 %v160, %v156
  %v193 = vpack.c.b16 %v161, %v157
  %v194 = vpack.c.b16 %v162, %v158
  %227 = vmatprep.subr.bf16.mxu0 %v164
  %228 = vmatpush1.bf16.msra.mxu0 %v163
  %229 = vmatprep.subr.bf16.mxu0 %v168
  %230 = vmatpush1.bf16.msra.mxu0 %v167
  %231 = vmatprep.subr.bf16.mxu0 %v172
  %232 = vmatpush1.bf16.msra.mxu0 %v171
  %233 = vmatprep.subr.bf16.mxu0 %v176
  %234 = vmatpush1.bf16.msra.mxu0 %v175
  %235 = vmatprep.subr.bf16.mxu0 %v180
  %236 = vmatpush1.bf16.msra.mxu0 %v179
  %237 = vmatprep.subr.bf16.mxu0 %v184
  %238 = vmatpush1.bf16.msra.mxu0 %v183
  %239 = vmatprep.subr.bf16.mxu0 %v188
  %240 = vmatpush1.bf16.msra.mxu0 %v187
  %241 = vmatprep.subr.bf16.mxu0 %v192
  %242 = vmatpush1.bf16.msra.mxu0 %v191
  %243 = vmatprep.subr.bf16.mxu0 0
  %244 = vmatpush1.bf16.msra.mxu0 0
  %245 = vmatprep.subr.bf16.mxu0 0
  %246 = vmatpush1.bf16.msra.mxu0 0
  %247 = vmatprep.subr.bf16.mxu0 0
  %248 = vmatpush1.bf16.msra.mxu0 0
  %249 = vmatprep.subr.bf16.mxu0 0
  %250 = vmatpush1.bf16.msra.mxu0 0
  %251 = vmatprep.subr.bf16.mxu0 0
  %252 = vmatpush1.bf16.msra.mxu0 0
  %253 = vmatprep.subr.bf16.mxu0 0
  %254 = vmatpush1.bf16.msra.mxu0 0
  %255 = vmatprep.subr.bf16.mxu0 0
  %256 = vmatpush1.bf16.msra.mxu0 0
  %257 = vmatprep.subr.bf16.mxu0 0
  %258 = vmatpush1.bf16.msra.mxu0 0
  %259 = vmatprep.mubr.bf16.mxu0 0
  %260 = vmatmul.mubr.bf16.gmra.mrb[0].mxu0 %v65
  %v261 = vpop.f32.mrb[0].mxu0
  %v262 = vadd.f32 %v54, %v261
  %v263 = vpop.f32.mrb[0].mxu0
  %v264 = vadd.f32 %v54, %v263
  %v265 = vpop.f32.mrb[0].mxu0
  %v266 = vadd.f32 %v59, %v265
  %v267 = vpop.f32.mrb[0].mxu0
  %v268 = vadd.f32 %v59, %v267
  %269 = vdwg.mxu0
  %270 = vmatprep.subr.bf16.mxu0 %v166
  %271 = vmatpush1.bf16.msra.mxu0 %v165
  %272 = vmatprep.subr.bf16.mxu0 %v170
  %273 = vmatpush1.bf16.msra.mxu0 %v169
  %274 = vmatprep.subr.bf16.mxu0 %v174
  %275 = vmatpush1.bf16.msra.mxu0 %v173
  %276 = vmatprep.subr.bf16.mxu0 %v178
  %277 = vmatpush1.bf16.msra.mxu0 %v177
  %278 = vmatprep.subr.bf16.mxu0 %v182
  %279 = vmatpush1.bf16.msra.mxu0 %v181
  %280 = vmatprep.subr.bf16.mxu0 %v186
  %281 = vmatpush1.bf16.msra.mxu0 %v185
  %282 = vmatprep.subr.bf16.mxu0 %v190
  %283 = vmatpush1.bf16.msra.mxu0 %v189
  %284 = vmatprep.subr.bf16.mxu0 %v194
  %285 = vmatpush1.bf16.msra.mxu0 %v193
  %286 = vmatprep.subr.bf16.mxu0 0
  %287 = vmatpush1.bf16.msra.mxu0 0
  %288 = vmatprep.subr.bf16.mxu0 0
  %289 = vmatpush1.bf16.msra.mxu0 0
  %290 = vmatprep.subr.bf16.mxu0 0
  %291 = vmatpush1.bf16.msra.mxu0 0
  %292 = vmatprep.subr.bf16.mxu0 0
  %293 = vmatpush1.bf16.msra.mxu0 0
  %294 = vmatprep.subr.bf16.mxu0 0
  %295 = vmatpush1.bf16.msra.mxu0 0
  %296 = vmatprep.subr.bf16.mxu0 0
  %297 = vmatpush1.bf16.msra.mxu0 0
  %298 = vmatprep.subr.bf16.mxu0 0
  %299 = vmatpush1.bf16.msra.mxu0 0
  %300 = vmatprep.subr.bf16.mxu0 0
  %301 = vmatpush1.bf16.msra.mxu0 0
  %302 = vmatprep.mubr.bf16.mxu0 0
  %303 = vmatmul.mubr.bf16.gmra.mrb[0].mxu0 %v65
  %v304 = vpop.f32.mrb[0].mxu0
  %v305 = vadd.f32 %v54, %v304
  %v306 = vpop.f32.mrb[0].mxu0
  %v307 = vadd.f32 %v54, %v306
  %v308 = vpop.f32.mrb[0].mxu0
  %v309 = vadd.f32 %v59, %v308
  %v310 = vpop.f32.mrb[0].mxu0
  %v311 = vadd.f32 %v59, %v310
  %312 = vdwg.mxu0
  %313 = vst [vmem:[%s3] sm:$0xff] %v262
  %314 = vst [vmem:[%s3 + $0x8] sm:$0xff] %v264
  %315 = vst [vmem:[%s3 + $0x10] sm:$0xff] %v305
  %vm316 = vcmask 64512
  %317 = vst.msk [vmem:[%s3 + $0x18] sm:$0xff] %vm316, %v307
  %318 = vst [vmem:[%s3 + $0x20] sm:$0x1] %v266
  %319 = vst [vmem:[%s3 + $0x28] sm:$0x1] %v268
  %320 = vst [vmem:[%s3 + $0x30] sm:$0x1] %v309
  %vm321 = vcmask 57344
  %322 = vst.msk [vmem:[%s3 + $0x38] sm:$0x1] %vm321, %v311
  // Predicated region
  $region14: #{st_autoencoder_g6.9} parent=0 // pred_check
    _
  $region15: #{st_autoencoder_g6.9} parent=0 // pred_check_branch
    %324 = sbr.rel (0) target = $region17
  $region16: #{st_autoencoder_g6.9} parent=0 // pred_region
    _
  $region17: #{st_autoencoder_g6.9} parent=0 // pred_fallthru
    _
  // Predicated region
  $region18: #{st_autoencoder_g6.9} parent=0 // pred_check
    _
  $region19: #{st_autoencoder_g6.9} parent=0 // pred_check_branch
    %326 = sbr.rel (0) target = $region21
  $region20: #{st_autoencoder_g6.9} parent=0 // pred_region
    _
  $region21: #{st_autoencoder_g6.9} parent=0 // pred_fallthru
    _

</llo_original>
